<compile_context>
chip_gen: v7x
topology: tpu7x:2x2x1
jax: 0.10.0
libtpu: 0.0.40
codegen_flags: <defaults>
</compile_context>

<pallas_src>
import numpy as np
import jax
import jax.numpy as jnp
from jax import lax
from jax.experimental import pallas as pl
from jax.experimental.pallas import tpu as pltpu

# ----- problem sizes ---------------------------------------------------------
B = 2                  # batch
CIN = 4                # input_size (conv in_channels)
H, W = 26, 72          # conv(3x3, valid) -> 24x70 ; AvgPool2d(2) -> 12x35
OH, OW = H - 2, W - 2            # 24, 70
POH, POW = OH // 2, OW // 2      # 12, 35
COUT = 32
DET = 2
HID = 6 * DET                    # hid_error_size = 12
NOUT = DET                       # output_size
KFLAT = COUT * POH * POW         # 13440 = 105 * 128
J = COUT * POH                   # 384 rows per (even/odd) conv-row group
KIN = CIN * H                    # 104
KIM = 3 * KIN                    # 312 contraction dim of the fused conv matmul
XL = 128                         # lane offset per batch image in the im2col operand
N1 = 256                         # lin_input output width


# ---------------------------------------------------------------------------
# Kernel 1: conv 3x3 + bias + ReLU + 2x2 average pool as ONE bf16 MXU matmul.
# x_ref     : (B, CIN*H, W)   f32   (free host reshape of NCHW input)
# a_ref     : (2*J, 3*KIN)    bf16  banded conv matrix (even rows | odd rows)
# bias_ref  : (2*J, 1)        f32
# wpool_ref : (OW, POW)       f32   0.25 pooling matrix along W
# out_ref   : (B, J, POW)     f32   == pooled NCHW, flattens to torch order
# xcat_ref  : (3*KIN, B*128)  f32   VMEM scratch, im2col operand (batch b at lane b*128)
def _conv_pool_kernel(x_ref, a_ref, bias_ref, wpool_ref, out_ref, xcat_ref):
    # Assemble the im2col operand with 128-aligned lane offsets per batch.
    xcat_ref[...] = jnp.zeros_like(xcat_ref)
    for b in range(B):                       # B == 2, fully unrolled
        for dx in range(3):
            xcat_ref[dx * KIN:(dx + 1) * KIN, b * XL:b * XL + OW] = \
                x_ref[b, :, dx:dx + OW]
    xcat = xcat_ref[...].astype(jnp.bfloat16)                  # (312, 256)

    # Single bf16 matmul does the whole conv for both images.
    conv = jnp.dot(a_ref[...], xcat,
                   preferred_element_type=jnp.float32)         # (768, 256)
    conv = jnp.maximum(conv + bias_ref[...], 0.0)              # ReLU(conv + b)

    wp = wpool_ref[...]                                        # (OW, POW)
    for b in range(B):
        cb = conv[:, b * XL:b * XL + OW]                       # (768, 70) aligned slice
        hsum = cb[:J, :] + cb[J:, :]                           # pool H row pair
        out_ref[b] = jnp.dot(hsum, wp,
                             preferred_element_type=jnp.float32)   # (384, 35)


def conv_relu_pool(xr, a_mat, bias_col, wpool):
    return pl.pallas_call(
        _conv_pool_kernel,
        out_shape=jax.ShapeDtypeStruct((B, J, POW), jnp.float32),
        grid=(1,),
        in_specs=[
            pl.BlockSpec((B, KIN, W), lambda i: (0, 0, 0)),
            pl.BlockSpec((2 * J, KIM), lambda i: (0, 0)),
            pl.BlockSpec((2 * J, 1), lambda i: (0, 0)),
            pl.BlockSpec((OW, POW), lambda i: (0, 0)),
        ],
        out_specs=pl.BlockSpec((B, J, POW), lambda i: (0, 0, 0)),
        scratch_shapes=[pltpu.VMEM((KIM, B * XL), jnp.float32)],
        compiler_params=pltpu.CompilerParams(
            dimension_semantics=("arbitrary",)),
    )(xr, a_mat, bias_col, wpool)


# ---------------------------------------------------------------------------
# Kernel 2: FC head (single grid step).
#   out = cat(relu(flat @ W1 + b1), relu(err @ W2 + b2)) @ Wout + bo
# W1 is streamed as int8 with per-output-column scales (storage format only);
# it is dequantised to bf16 in-kernel, so the matmul is native bf16 with f32
# accumulation on every TPU generation.
def _head_kernel(flat_ref, wq_ref, scale_ref, b1_ref, err_ref, w2_ref, b2_ref,
                 woa_ref, wob_ref, bo_ref, out_ref):
    fk = flat_ref[...].astype(jnp.bfloat16)                    # (B, 13440)
    wk = wq_ref[...].astype(jnp.bfloat16)                      # (13440, 256) dequant
    pre = jnp.dot(fk, wk, preferred_element_type=jnp.float32)  # (B, 256)
    out_in = jnp.maximum(pre * scale_ref[...] + b1_ref[...], 0.0)

    out_err = jnp.maximum(
        jnp.dot(err_ref[...], w2_ref[...],
                preferred_element_type=jnp.float32) + b2_ref[...], 0.0)

    out_ref[...] = (jnp.dot(out_in, woa_ref[...],
                            preferred_element_type=jnp.float32)
                    + jnp.dot(out_err, wob_ref[...],
                              preferred_element_type=jnp.float32)
                    + bo_ref[...])


def head(flat, error, wq, wscale, b1, w2, b2, woa, wob, bo):
    return pl.pallas_call(
        _head_kernel,
        out_shape=jax.ShapeDtypeStruct((B, NOUT), jnp.float32),
        grid=(1,),
        in_specs=[
            pl.BlockSpec((B, KFLAT), lambda i: (0, 0)),
            pl.BlockSpec((KFLAT, N1), lambda i: (0, 0)),
            pl.BlockSpec((1, N1), lambda i: (0, 0)),
            pl.BlockSpec((1, N1), lambda i: (0, 0)),
            pl.BlockSpec((B, HID), lambda i: (0, 0)),
            pl.BlockSpec((HID, COUT), lambda i: (0, 0)),
            pl.BlockSpec((1, COUT), lambda i: (0, 0)),
            pl.BlockSpec((N1, NOUT), lambda i: (0, 0)),
            pl.BlockSpec((COUT, NOUT), lambda i: (0, 0)),
            pl.BlockSpec((1, NOUT), lambda i: (0, 0)),
        ],
        out_specs=pl.BlockSpec((B, NOUT), lambda i: (0, 0)),
        compiler_params=pltpu.CompilerParams(
            dimension_semantics=("arbitrary",),
            vmem_limit_bytes=48 * 1024 * 1024),
    )(flat, wq, wscale, b1, error, w2, b2, woa, wob, bo)


# ---------------------------------------------------------------------------
# Host-side (one-time) parameter preparation.
def _build_conv_matrix(w_conv):
    """Single banded matrix so the 3x3 conv is ONE MXU matmul over (dx,ci,dy)."""
    wc = np.asarray(w_conv, np.float32)             # (COUT, CIN, 3, 3) OIHW
    a = np.zeros((2 * J, KIM), np.float32)
    for dx in range(3):
        for co in range(COUT):
            for p in range(POH):
                r = co * POH + p
                for ci in range(CIN):
                    for dy in range(3):
                        # even conv row 2p and odd conv row 2p+1
                        a[r, dx * KIN + ci * H + 2 * p + dy] = wc[co, ci, dy, dx]
                        a[J + r, dx * KIN + ci * H + 2 * p + 1 + dy] = wc[co, ci, dy, dx]
    return jnp.asarray(a, dtype=jnp.bfloat16)


def _pool_matrix():
    wp = np.zeros((OW, POW), np.float32)
    idx = np.arange(POW)
    wp[2 * idx, idx] = 0.25
    wp[2 * idx + 1, idx] = 0.25
    return jnp.asarray(wp)


def prepare_params(params):
    bias = np.repeat(np.asarray(params["b_conv"], np.float32), POH)   # (J,)
    bias_col = jnp.asarray(np.concatenate([bias, bias])[:, None])     # (2J, 1)

    # int8 weight stream for lin_input, per-output-column symmetric scales.
    w_in = np.asarray(params["w_in"], np.float32)                     # (KFLAT, N1)
    scale = np.maximum(np.max(np.abs(w_in), axis=0) / 127.0, 1e-12)   # (N1,)
    wq = np.clip(np.rint(w_in / scale[None, :]), -127, 127).astype(np.int8)

    wout = params["w_out"]
    return {
        "a_mat": _build_conv_matrix(params["w_conv"]),
        "bias_col": bias_col,
        "wpool": _pool_matrix(),
        "w_in_q": jnp.asarray(wq),
        "w_in_scale": jnp.asarray(scale[None, :].astype(np.float32)),
        "b_in": params["b_in"].reshape(1, N1),
        "w_err": params["w_err"],
        "b_err": params["b_err"].reshape(1, COUT),
        "w_out_a": wout[:N1],
        "w_out_b": wout[N1:],
        "b_out": params["b_out"].reshape(1, NOUT),
    }


def init_params(key):
    ks = jax.random.split(key, 8)
    return {
        # torch Conv2d weight layout OIHW (COUT, CIN, 3, 3)
        "w_conv": 0.05 * jax.random.normal(ks[0], (COUT, CIN, 3, 3), jnp.float32),
        "b_conv": 0.05 * jax.random.normal(ks[1], (COUT,), jnp.float32),
        # stored as (in, out) == torch lin_input.weight.T, torch (C,H,W) order
        "w_in":  0.01 * jax.random.normal(ks[2], (KFLAT, N1), jnp.float32),
        "b_in":  0.01 * jax.random.normal(ks[3], (N1,), jnp.float32),
        "w_err": 0.10 * jax.random.normal(ks[4], (HID, COUT), jnp.float32),
        "b_err": 0.10 * jax.random.normal(ks[5], (COUT,), jnp.float32),
        "w_out": 0.10 * jax.random.normal(ks[6], (N1 + COUT, NOUT), jnp.float32),
        "b_out": 0.10 * jax.random.normal(ks[7], (NOUT,), jnp.float32),
    }


# TODO(synk): if this forward runs inside a recurrent loop, restructure the
# call site so the lin_input weight stays VMEM-resident across time steps
# (single pallas_call with a time grid axis) instead of re-streaming it.
@jax.jit
def ercnn_forward(x_nchw, error, prep):
    # NCHW -> (B, CIN*H, W): free contiguous reshape, no transpose needed.
    xr = x_nchw.reshape(B, KIN, W)
    pooled = conv_relu_pool(xr, prep["a_mat"], prep["bias_col"], prep["wpool"])
    # (B, COUT*POH, POW) -> (B, 13440): free reshape, already torch (C,H,W) order.
    flat = pooled.reshape(B, KFLAT)
    return head(flat, error,
                prep["w_in_q"], prep["w_in_scale"], prep["b_in"],
                prep["w_err"], prep["b_err"],
                prep["w_out_a"], prep["w_out_b"], prep["b_out"])


def reference_forward(x_nchw, error, params):
    hp = lax.Precision.HIGHEST
    conv = lax.conv_general_dilated(
        x_nchw, params["w_conv"], window_strides=(1, 1), padding="VALID",
        dimension_numbers=("NCHW", "OIHW", "NCHW"), precision=hp)
    conv = jnp.maximum(conv + params["b_conv"][None, :, None, None], 0.0)
    pooled = lax.reduce_window(conv, 0.0, lax.add,
                               (1, 1, 2, 2), (1, 1, 2, 2), "VALID") * 0.25
    flat = pooled.reshape(B, KFLAT)
    out_in = jnp.maximum(jnp.dot(flat, params["w_in"], precision=hp)
                         + params["b_in"], 0.0)
    out_err = jnp.maximum(jnp.dot(error, params["w_err"], precision=hp)
                          + params["b_err"], 0.0)
    cat = jnp.concatenate([out_in, out_err], axis=1)
    return jnp.dot(cat, params["w_out"], precision=hp) + params["b_out"]


if __name__ == "__main__":
    key = jax.random.PRNGKey(0)
    kx, ke, kp = jax.random.split(key, 3)
    x = jax.random.normal(kx, (B, CIN, H, W), jnp.float32)   # torch NCHW input
    error = jax.random.normal(ke, (B, HID), jnp.float32)
    params = init_params(kp)
    prep = prepare_params(params)

    out = jax.block_until_ready(ercnn_forward(x, error, prep))
    ref = jax.block_until_ready(reference_forward(x, error, params))
    assert out.shape == (B, NOUT)
    np.testing.assert_allclose(np.asarray(out), np.asarray(ref),
                               rtol=2e-2, atol=2e-2)
    print("KERNEL_OK")
</pallas_src>

<mosaic_0001>
module attributes {stable_mosaic.version = 11 : i64} {
  func.func @_head_kernel(%arg0: i32, %arg1: memref<2x13440xf32, #tpu.memory_space<vmem>>, %arg2: memref<13440x256xi8, #tpu.memory_space<vmem>>, %arg3: memref<1x256xf32, #tpu.memory_space<vmem>>, %arg4: memref<1x256xf32, #tpu.memory_space<vmem>>, %arg5: memref<2x12xf32, #tpu.memory_space<vmem>>, %arg6: memref<12x32xf32, #tpu.memory_space<vmem>>, %arg7: memref<1x32xf32, #tpu.memory_space<vmem>>, %arg8: memref<256x2xf32, #tpu.memory_space<vmem>>, %arg9: memref<32x2xf32, #tpu.memory_space<vmem>>, %arg10: memref<1x2xf32, #tpu.memory_space<vmem>>, %arg11: memref<2x2xf32, #tpu.memory_space<vmem>>) attributes {dimension_semantics = [#tpu.dimension_semantics<arbitrary>], iteration_bounds = array<i64: 1>, scalar_prefetch = 0 : i64, scratch_operands = 0 : i64, tpu.core_type = #tpu.core_type<tc>, window_params = [{pipeline_mode = #tpu.pipeline_mode<synchronous>, transform_indices = @transform_0, window_bounds = array<i64: 2, 13440>}, {pipeline_mode = #tpu.pipeline_mode<synchronous>, transform_indices = @transform_1, window_bounds = array<i64: 13440, 256>}, {pipeline_mode = #tpu.pipeline_mode<synchronous>, transform_indices = @transform_2, window_bounds = array<i64: 1, 256>}, {pipeline_mode = #tpu.pipeline_mode<synchronous>, transform_indices = @transform_3, window_bounds = array<i64: 1, 256>}, {pipeline_mode = #tpu.pipeline_mode<synchronous>, transform_indices = @transform_4, window_bounds = array<i64: 2, 12>}, {pipeline_mode = #tpu.pipeline_mode<synchronous>, transform_indices = @transform_5, window_bounds = array<i64: 12, 32>}, {pipeline_mode = #tpu.pipeline_mode<synchronous>, transform_indices = @transform_6, window_bounds = array<i64: 1, 32>}, {pipeline_mode = #tpu.pipeline_mode<synchronous>, transform_indices = @transform_7, window_bounds = array<i64: 256, 2>}, {pipeline_mode = #tpu.pipeline_mode<synchronous>, transform_indices = @transform_8, window_bounds = array<i64: 32, 2>}, {pipeline_mode = #tpu.pipeline_mode<synchronous>, transform_indices = @transform_9, window_bounds = array<i64: 1, 2>}, {pipeline_mode = #tpu.pipeline_mode<synchronous>, transform_indices = @transform_10, window_bounds = array<i64: 2, 2>}]} {
    %c0 = arith.constant 0 : index
    %c0_0 = arith.constant 0 : index
    %0 = vector.load %arg1[%c0, %c0_0] : memref<2x13440xf32, #tpu.memory_space<vmem>>, vector<2x13440xf32>
    %1 = arith.truncf %0 : vector<2x13440xf32> to vector<2x13440xbf16>
    %c0_1 = arith.constant 0 : index
    %c0_2 = arith.constant 0 : index
    %2 = vector.load %arg2[%c0_1, %c0_2] : memref<13440x256xi8, #tpu.memory_space<vmem>>, vector<13440x256xi8>
    %3 = arith.sitofp %2 : vector<13440x256xi8> to vector<13440x256xbf16>
    %cst = arith.constant dense<0.000000e+00> : vector<2x256xf32>
    %4 = tpu.matmul %1, %3, %cst {dimension_numbers = #tpu.dot_dimension_numbers<[1], [0], [0], [1], [0, 0, 1, 1], [], []>} : vector<2x13440xbf16>, vector<13440x256xbf16>, vector<2x256xf32> -> vector<2x256xf32>
    %c0_3 = arith.constant 0 : index
    %c0_4 = arith.constant 0 : index
    %5 = vector.load %arg3[%c0_3, %c0_4] : memref<1x256xf32, #tpu.memory_space<vmem>>, vector<1x256xf32>
    %6 = vector.broadcast %5 : vector<1x256xf32> to vector<2x256xf32>
    %7 = arith.mulf %4, %6 : vector<2x256xf32>
    %c0_5 = arith.constant 0 : index
    %c0_6 = arith.constant 0 : index
    %8 = vector.load %arg4[%c0_5, %c0_6] : memref<1x256xf32, #tpu.memory_space<vmem>>, vector<1x256xf32>
    %9 = vector.broadcast %8 : vector<1x256xf32> to vector<2x256xf32>
    %10 = arith.addf %7, %9 : vector<2x256xf32>
    %cst_7 = arith.constant 0.000000e+00 : f32
    %11 = vector.broadcast %cst_7 : f32 to vector<2x256xf32>
    %12 = arith.maximumf %10, %11 : vector<2x256xf32>
    %c0_8 = arith.constant 0 : index
    %c0_9 = arith.constant 0 : index
    %13 = vector.load %arg5[%c0_8, %c0_9] : memref<2x12xf32, #tpu.memory_space<vmem>>, vector<2x12xf32>
    %c0_10 = arith.constant 0 : index
    %c0_11 = arith.constant 0 : index
    %14 = vector.load %arg6[%c0_10, %c0_11] : memref<12x32xf32, #tpu.memory_space<vmem>>, vector<12x32xf32>
    %cst_12 = arith.constant dense<0.000000e+00> : vector<2x32xf32>
    %15 = tpu.matmul %13, %14, %cst_12 {dimension_numbers = #tpu.dot_dimension_numbers<[1], [0], [0], [1], [0, 0, 1, 1], [], []>} : vector<2x12xf32>, vector<12x32xf32>, vector<2x32xf32> -> vector<2x32xf32>
    %c0_13 = arith.constant 0 : index
    %c0_14 = arith.constant 0 : index
    %16 = vector.load %arg7[%c0_13, %c0_14] : memref<1x32xf32, #tpu.memory_space<vmem>>, vector<1x32xf32>
    %17 = vector.broadcast %16 : vector<1x32xf32> to vector<2x32xf32>
    %18 = arith.addf %15, %17 : vector<2x32xf32>
    %cst_15 = arith.constant 0.000000e+00 : f32
    %19 = vector.broadcast %cst_15 : f32 to vector<2x32xf32>
    %20 = arith.maximumf %18, %19 : vector<2x32xf32>
    %c0_16 = arith.constant 0 : index
    %c0_17 = arith.constant 0 : index
    %21 = vector.load %arg8[%c0_16, %c0_17] : memref<256x2xf32, #tpu.memory_space<vmem>>, vector<256x2xf32>
    %cst_18 = arith.constant dense<0.000000e+00> : vector<2x2xf32>
    %22 = tpu.matmul %12, %21, %cst_18 {dimension_numbers = #tpu.dot_dimension_numbers<[1], [0], [0], [1], [0, 0, 1, 1], [], []>} : vector<2x256xf32>, vector<256x2xf32>, vector<2x2xf32> -> vector<2x2xf32>
    %c0_19 = arith.constant 0 : index
    %c0_20 = arith.constant 0 : index
    %23 = vector.load %arg9[%c0_19, %c0_20] : memref<32x2xf32, #tpu.memory_space<vmem>>, vector<32x2xf32>
    %cst_21 = arith.constant dense<0.000000e+00> : vector<2x2xf32>
    %24 = tpu.matmul %20, %23, %cst_21 {dimension_numbers = #tpu.dot_dimension_numbers<[1], [0], [0], [1], [0, 0, 1, 1], [], []>} : vector<2x32xf32>, vector<32x2xf32>, vector<2x2xf32> -> vector<2x2xf32>
    %25 = arith.addf %22, %24 : vector<2x2xf32>
    %c0_22 = arith.constant 0 : index
    %c0_23 = arith.constant 0 : index
    %26 = vector.load %arg10[%c0_22, %c0_23] : memref<1x2xf32, #tpu.memory_space<vmem>>, vector<1x2xf32>
    %27 = vector.broadcast %26 : vector<1x2xf32> to vector<2x2xf32>
    %28 = arith.addf %25, %27 : vector<2x2xf32>
    %c0_24 = arith.constant 0 : index
    %c0_25 = arith.constant 0 : index
    %29 = vector.load %arg11[%c0_24, %c0_25] : memref<2x2xf32, #tpu.memory_space<vmem>>, vector<2x2xf32>
    tpu.vector_store %arg11[%c0_24, %c0_25], %28 {strides = array<i32>} : memref<2x2xf32, #tpu.memory_space<vmem>>, vector<2x2xf32>,
    return
  }
  func.func @transform_0(%arg0: i32) -> (i32, i32) {
    %c0_i32 = arith.constant 0 : i32
    %c0_i32_0 = arith.constant 0 : i32
    %c0_i32_1 = arith.constant 0 : i32
    return %c0_i32, %c0_i32_0 : i32, i32
  }
  func.func @transform_1(%arg0: i32) -> (i32, i32) {
    %c0_i32 = arith.constant 0 : i32
    %c0_i32_0 = arith.constant 0 : i32
    %c0_i32_1 = arith.constant 0 : i32
    return %c0_i32, %c0_i32_0 : i32, i32
  }
  func.func @transform_2(%arg0: i32) -> (i32, i32) {
    %c0_i32 = arith.constant 0 : i32
    %c0_i32_0 = arith.constant 0 : i32
    %c0_i32_1 = arith.constant 0 : i32
    return %c0_i32, %c0_i32_0 : i32, i32
  }
  func.func @transform_3(%arg0: i32) -> (i32, i32) {
    %c0_i32 = arith.constant 0 : i32
    %c0_i32_0 = arith.constant 0 : i32
    %c0_i32_1 = arith.constant 0 : i32
    return %c0_i32, %c0_i32_0 : i32, i32
  }
  func.func @transform_4(%arg0: i32) -> (i32, i32) {
    %c0_i32 = arith.constant 0 : i32
    %c0_i32_0 = arith.constant 0 : i32
    %c0_i32_1 = arith.constant 0 : i32
    return %c0_i32, %c0_i32_0 : i32, i32
  }
  func.func @transform_5(%arg0: i32) -> (i32, i32) {
    %c0_i32 = arith.constant 0 : i32
    %c0_i32_0 = arith.constant 0 : i32
    %c0_i32_1 = arith.constant 0 : i32
    return %c0_i32, %c0_i32_0 : i32, i32
  }
  func.func @transform_6(%arg0: i32) -> (i32, i32) {
    %c0_i32 = arith.constant 0 : i32
    %c0_i32_0 = arith.constant 0 : i32
    %c0_i32_1 = arith.constant 0 : i32
    return %c0_i32, %c0_i32_0 : i32, i32
  }
  func.func @transform_7(%arg0: i32) -> (i32, i32) {
    %c0_i32 = arith.constant 0 : i32
    %c0_i32_0 = arith.constant 0 : i32
    %c0_i32_1 = arith.constant 0 : i32
    return %c0_i32, %c0_i32_0 : i32, i32
  }
  func.func @transform_8(%arg0: i32) -> (i32, i32) {
    %c0_i32 = arith.constant 0 : i32
    %c0_i32_0 = arith.constant 0 : i32
    %c0_i32_1 = arith.constant 0 : i32
    return %c0_i32, %c0_i32_0 : i32, i32
  }
  func.func @transform_9(%arg0: i32) -> (i32, i32) {
    %c0_i32 = arith.constant 0 : i32
    %c0_i32_0 = arith.constant 0 : i32
    %c0_i32_1 = arith.constant 0 : i32
    return %c0_i32, %c0_i32_0 : i32, i32
  }
  func.func @transform_10(%arg0: i32) -> (i32, i32) {
    %c0_i32 = arith.constant 0 : i32
    %c0_i32_0 = arith.constant 0 : i32
    %c0_i32_1 = arith.constant 0 : i32
    return %c0_i32, %c0_i32_0 : i32, i32
  }
}

module attributes {stable_mosaic.version = 11 : i64} {
  func.func @_conv_pool_kernel(%arg0: i32, %arg1: memref<2x104x72xf32, #tpu.memory_space<vmem>>, %arg2: memref<768x312xbf16, #tpu.memory_space<vmem>>, %arg3: memref<768x1xf32, #tpu.memory_space<vmem>>, %arg4: memref<70x35xf32, #tpu.memory_space<vmem>>, %arg5: memref<2x384x35xf32, #tpu.memory_space<vmem>>, %arg6: memref<312x256xf32, #tpu.memory_space<vmem>>) attributes {dimension_semantics = [#tpu.dimension_semantics<arbitrary>], iteration_bounds = array<i64: 1>, scalar_prefetch = 0 : i64, scratch_operands = 1 : i64, tpu.core_type = #tpu.core_type<tc>, window_params = [{pipeline_mode = #tpu.pipeline_mode<synchronous>, transform_indices = @transform_0, window_bounds = array<i64: 2, 104, 72>}, {pipeline_mode = #tpu.pipeline_mode<synchronous>, transform_indices = @transform_1, window_bounds = array<i64: 768, 312>}, {pipeline_mode = #tpu.pipeline_mode<synchronous>, transform_indices = @transform_2, window_bounds = array<i64: 768, 1>}, {pipeline_mode = #tpu.pipeline_mode<synchronous>, transform_indices = @transform_3, window_bounds = array<i64: 70, 35>}, {pipeline_mode = #tpu.pipeline_mode<synchronous>, transform_indices = @transform_4, window_bounds = array<i64: 2, 384, 35>}]} {
    %cst = arith.constant 0.000000e+00 : f32
    %0 = vector.broadcast %cst : f32 to vector<312x256xf32>
    %c0 = arith.constant 0 : index
    %c0_0 = arith.constant 0 : index
    %1 = vector.load %arg6[%c0, %c0_0] : memref<312x256xf32, #tpu.memory_space<vmem>>, vector<312x256xf32>
    tpu.vector_store %arg6[%c0, %c0_0], %0 {strides = array<i32>} : memref<312x256xf32, #tpu.memory_space<vmem>>, vector<312x256xf32>,
    %c0_1 = arith.constant 0 : index
    %c0_2 = arith.constant 0 : index
    %c0_3 = arith.constant 0 : index
    %2 = vector.load %arg1[%c0_1, %c0_2, %c0_3] : memref<2x104x72xf32, #tpu.memory_space<vmem>>, vector<1x104x70xf32>
    %3 = vector.shape_cast %2 : vector<1x104x70xf32> to vector<104x70xf32>
    %c0_4 = arith.constant 0 : index
    %c0_5 = arith.constant 0 : index
    %4 = vector.load %arg6[%c0_4, %c0_5] : memref<312x256xf32, #tpu.memory_space<vmem>>, vector<104x70xf32>
    tpu.vector_store %arg6[%c0_4, %c0_5], %3 {strides = array<i32>} : memref<312x256xf32, #tpu.memory_space<vmem>>, vector<104x70xf32>,
    %c0_6 = arith.constant 0 : index
    %c0_7 = arith.constant 0 : index
    %c1 = arith.constant 1 : index
    %5 = vector.load %arg1[%c0_6, %c0_7, %c1] : memref<2x104x72xf32, #tpu.memory_space<vmem>>, vector<1x104x70xf32>
    %6 = vector.shape_cast %5 : vector<1x104x70xf32> to vector<104x70xf32>
    %c104 = arith.constant 104 : index
    %c0_8 = arith.constant 0 : index
    %7 = vector.load %arg6[%c104, %c0_8] : memref<312x256xf32, #tpu.memory_space<vmem>>, vector<104x70xf32>
    tpu.vector_store %arg6[%c104, %c0_8], %6 {strides = array<i32>} : memref<312x256xf32, #tpu.memory_space<vmem>>, vector<104x70xf32>,
    %c0_9 = arith.constant 0 : index
    %c0_10 = arith.constant 0 : index
    %c2 = arith.constant 2 : index
    %8 = vector.load %arg1[%c0_9, %c0_10, %c2] : memref<2x104x72xf32, #tpu.memory_space<vmem>>, vector<1x104x70xf32>
    %9 = vector.shape_cast %8 : vector<1x104x70xf32> to vector<104x70xf32>
    %c208 = arith.constant 208 : index
    %c0_11 = arith.constant 0 : index
    %10 = vector.load %arg6[%c208, %c0_11] : memref<312x256xf32, #tpu.memory_space<vmem>>, vector<104x70xf32>
    tpu.vector_store %arg6[%c208, %c0_11], %9 {strides = array<i32>} : memref<312x256xf32, #tpu.memory_space<vmem>>, vector<104x70xf32>,
    %c1_12 = arith.constant 1 : index
    %c0_13 = arith.constant 0 : index
    %c0_14 = arith.constant 0 : index
    %11 = vector.load %arg1[%c1_12, %c0_13, %c0_14] : memref<2x104x72xf32, #tpu.memory_space<vmem>>, vector<1x104x70xf32>
    %12 = vector.shape_cast %11 : vector<1x104x70xf32> to vector<104x70xf32>
    %c0_15 = arith.constant 0 : index
    %c128 = arith.constant 128 : index
    %13 = vector.load %arg6[%c0_15, %c128] : memref<312x256xf32, #tpu.memory_space<vmem>>, vector<104x70xf32>
    tpu.vector_store %arg6[%c0_15, %c128], %12 {strides = array<i32>} : memref<312x256xf32, #tpu.memory_space<vmem>>, vector<104x70xf32>,
    %c1_16 = arith.constant 1 : index
    %c0_17 = arith.constant 0 : index
    %c1_18 = arith.constant 1 : index
    %14 = vector.load %arg1[%c1_16, %c0_17, %c1_18] : memref<2x104x72xf32, #tpu.memory_space<vmem>>, vector<1x104x70xf32>
    %15 = vector.shape_cast %14 : vector<1x104x70xf32> to vector<104x70xf32>
    %c104_19 = arith.constant 104 : index
    %c128_20 = arith.constant 128 : index
    %16 = vector.load %arg6[%c104_19, %c128_20] : memref<312x256xf32, #tpu.memory_space<vmem>>, vector<104x70xf32>
    tpu.vector_store %arg6[%c104_19, %c128_20], %15 {strides = array<i32>} : memref<312x256xf32, #tpu.memory_space<vmem>>, vector<104x70xf32>,
    %c1_21 = arith.constant 1 : index
    %c0_22 = arith.constant 0 : index
    %c2_23 = arith.constant 2 : index
    %17 = vector.load %arg1[%c1_21, %c0_22, %c2_23] : memref<2x104x72xf32, #tpu.memory_space<vmem>>, vector<1x104x70xf32>
    %18 = vector.shape_cast %17 : vector<1x104x70xf32> to vector<104x70xf32>
    %c208_24 = arith.constant 208 : index
    %c128_25 = arith.constant 128 : index
    %19 = vector.load %arg6[%c208_24, %c128_25] : memref<312x256xf32, #tpu.memory_space<vmem>>, vector<104x70xf32>
    tpu.vector_store %arg6[%c208_24, %c128_25], %18 {strides = array<i32>} : memref<312x256xf32, #tpu.memory_space<vmem>>, vector<104x70xf32>,
    %c0_26 = arith.constant 0 : index
    %c0_27 = arith.constant 0 : index
    %20 = vector.load %arg6[%c0_26, %c0_27] : memref<312x256xf32, #tpu.memory_space<vmem>>, vector<312x256xf32>
    %21 = arith.truncf %20 : vector<312x256xf32> to vector<312x256xbf16>
    %c0_28 = arith.constant 0 : index
    %c0_29 = arith.constant 0 : index
    %22 = vector.load %arg2[%c0_28, %c0_29] : memref<768x312xbf16, #tpu.memory_space<vmem>>, vector<768x312xbf16>
    %cst_30 = arith.constant dense<0.000000e+00> : vector<768x256xf32>
    %23 = tpu.matmul %22, %21, %cst_30 {dimension_numbers = #tpu.dot_dimension_numbers<[1], [0], [0], [1], [0, 0, 1, 1], [], []>} : vector<768x312xbf16>, vector<312x256xbf16>, vector<768x256xf32> -> vector<768x256xf32>
    %c0_31 = arith.constant 0 : index
    %c0_32 = arith.constant 0 : index
    %24 = vector.load %arg3[%c0_31, %c0_32] : memref<768x1xf32, #tpu.memory_space<vmem>>, vector<768x1xf32>
    %25 = vector.broadcast %24 : vector<768x1xf32> to vector<768x256xf32>
    %26 = arith.addf %23, %25 : vector<768x256xf32>
    %cst_33 = arith.constant 0.000000e+00 : f32
    %27 = vector.broadcast %cst_33 : f32 to vector<768x256xf32>
    %28 = arith.maximumf %26, %27 : vector<768x256xf32>
    %c0_34 = arith.constant 0 : index
    %c0_35 = arith.constant 0 : index
    %29 = vector.load %arg4[%c0_34, %c0_35] : memref<70x35xf32, #tpu.memory_space<vmem>>, vector<70x35xf32>
    %30 = vector.extract_strided_slice %28 {offsets = [0, 0], sizes = [768, 70], strides = [1, 1]} : vector<768x256xf32> to vector<768x70xf32>
    %31 = vector.extract_strided_slice %30 {offsets = [0, 0], sizes = [384, 70], strides = [1, 1]} : vector<768x70xf32> to vector<384x70xf32>
    %32 = vector.extract_strided_slice %30 {offsets = [384, 0], sizes = [384, 70], strides = [1, 1]} : vector<768x70xf32> to vector<384x70xf32>
    %33 = arith.addf %31, %32 : vector<384x70xf32>
    %cst_36 = arith.constant dense<0.000000e+00> : vector<384x35xf32>
    %34 = tpu.matmul %33, %29, %cst_36 {dimension_numbers = #tpu.dot_dimension_numbers<[1], [0], [0], [1], [0, 0, 1, 1], [], []>} : vector<384x70xf32>, vector<70x35xf32>, vector<384x35xf32> -> vector<384x35xf32>
    %c0_37 = arith.constant 0 : index
    %c0_38 = arith.constant 0 : index
    %c0_39 = arith.constant 0 : index
    %35 = vector.load %arg5[%c0_37, %c0_38, %c0_39] : memref<2x384x35xf32, #tpu.memory_space<vmem>>, vector<1x384x35xf32>
    %36 = vector.shape_cast %35 : vector<1x384x35xf32> to vector<384x35xf32>
    %37 = vector.shape_cast %34 : vector<384x35xf32> to vector<1x384x35xf32>
    tpu.vector_store %arg5[%c0_37, %c0_38, %c0_39], %37 {strides = array<i32>} : memref<2x384x35xf32, #tpu.memory_space<vmem>>, vector<1x384x35xf32>,
    %38 = vector.extract_strided_slice %28 {offsets = [0, 128], sizes = [768, 70], strides = [1, 1]} : vector<768x256xf32> to vector<768x70xf32>
    %39 = vector.extract_strided_slice %38 {offsets = [0, 0], sizes = [384, 70], strides = [1, 1]} : vector<768x70xf32> to vector<384x70xf32>
    %40 = vector.extract_strided_slice %38 {offsets = [384, 0], sizes = [384, 70], strides = [1, 1]} : vector<768x70xf32> to vector<384x70xf32>
    %41 = arith.addf %39, %40 : vector<384x70xf32>
    %cst_40 = arith.constant dense<0.000000e+00> : vector<384x35xf32>
    %42 = tpu.matmul %41, %29, %cst_40 {dimension_numbers = #tpu.dot_dimension_numbers<[1], [0], [0], [1], [0, 0, 1, 1], [], []>} : vector<384x70xf32>, vector<70x35xf32>, vector<384x35xf32> -> vector<384x35xf32>
    %c1_41 = arith.constant 1 : index
    %c0_42 = arith.constant 0 : index
    %c0_43 = arith.constant 0 : index
    %43 = vector.load %arg5[%c1_41, %c0_42, %c0_43] : memref<2x384x35xf32, #tpu.memory_space<vmem>>, vector<1x384x35xf32>
    %44 = vector.shape_cast %43 : vector<1x384x35xf32> to vector<384x35xf32>
    %45 = vector.shape_cast %42 : vector<384x35xf32> to vector<1x384x35xf32>
    tpu.vector_store %arg5[%c1_41, %c0_42, %c0_43], %45 {strides = array<i32>} : memref<2x384x35xf32, #tpu.memory_space<vmem>>, vector<1x384x35xf32>,
    return
  }
  func.func @transform_0(%arg0: i32) -> (i32, i32, i32) {
    %c0_i32 = arith.constant 0 : i32
    %c0_i32_0 = arith.constant 0 : i32
    %c0_i32_1 = arith.constant 0 : i32
    %c0_i32_2 = arith.constant 0 : i32
    return %c0_i32, %c0_i32_0, %c0_i32_1 : i32, i32, i32
  }
  func.func @transform_1(%arg0: i32) -> (i32, i32) {
    %c0_i32 = arith.constant 0 : i32
    %c0_i32_0 = arith.constant 0 : i32
    %c0_i32_1 = arith.constant 0 : i32
    return %c0_i32, %c0_i32_0 : i32, i32
  }
  func.func @transform_2(%arg0: i32) -> (i32, i32) {
    %c0_i32 = arith.constant 0 : i32
    %c0_i32_0 = arith.constant 0 : i32
    %c0_i32_1 = arith.constant 0 : i32
    return %c0_i32, %c0_i32_0 : i32, i32
  }
  func.func @transform_3(%arg0: i32) -> (i32, i32) {
    %c0_i32 = arith.constant 0 : i32
    %c0_i32_0 = arith.constant 0 : i32
    %c0_i32_1 = arith.constant 0 : i32
    return %c0_i32, %c0_i32_0 : i32, i32
  }
  func.func @transform_4(%arg0: i32) -> (i32, i32, i32) {
    %c0_i32 = arith.constant 0 : i32
    %c0_i32_0 = arith.constant 0 : i32
    %c0_i32_1 = arith.constant 0 : i32
    %c0_i32_2 = arith.constant 0 : i32
    return %c0_i32, %c0_i32_0, %c0_i32_1 : i32, i32, i32
  }
}

</mosaic_0001>

<llo_original>
// kernel: ercnn_forward.2
$region0: #{ercnn_forward.2}
  #allocation0 [shape = 'u32[]', space=smem, size = 0x4, offset = 0x4, fixed_abs, tag = 'smem constant byte address 0x4 - core index']
  #allocation1 [shape = 'u32[144,128]{1,0:T(1,128)}', space=vmem, size = 0x12000, scoped, tag = 'internal scratch']
  #allocation2 [shape = 'f32[312,256]{1,0:T(8,128)}', space=vmem, size = 0x4e000, scoped, tag = 'scratch operand']
  %s0 = inlined_call_operand.vmem [shape: f32[2,104,72], index: 0, kind: input, shape index: {}]
  %s1 = inlined_call_operand.vmem [shape: bf16[768,312], index: 1, kind: input, shape index: {}]
  %s2 = inlined_call_operand.vmem [shape: f32[768,1], index: 2, kind: input, shape index: {}]
  %s3 = inlined_call_operand.vmem [shape: f32[70,35], index: 3, kind: input, shape index: {}]
  %s4 = inlined_call_operand.vmem [shape: f32[2,384,35], index: 4, kind: output, shape index: {}]
  %s5 = sld [smem:[#allocation0]]
  $region26: #{ercnn_forward.2} parent=0
    _
  %s7 = ssub.s32 1, %s5
  %s8 = scalar_select 0, %s7, %s5
  // Predicated region
  $region2: #{ercnn_forward.2} parent=0 // pred_check
    _
  $region3: #{ercnn_forward.2} parent=0 // pred_check_branch
    %10 = sbr.rel (0) target = $region5
  $region4: #{ercnn_forward.2} parent=0 // pred_region
    _
  $region5: #{ercnn_forward.2} parent=0 // pred_fallthru
    _
  // Predicated region
  $region6: #{ercnn_forward.2} parent=0 // pred_check
    _
  $region7: #{ercnn_forward.2} parent=0 // pred_check_branch
    %12 = sbr.rel (0) target = $region9
  $region8: #{ercnn_forward.2} parent=0 // pred_region
    _
  $region9: #{ercnn_forward.2} parent=0 // pred_fallthru
    _
  // Predicated region
  $region10: #{ercnn_forward.2} parent=0 // pred_check
    _
  $region11: #{ercnn_forward.2} parent=0 // pred_check_branch
    %14 = sbr.rel (0) target = $region13
  $region12: #{ercnn_forward.2} parent=0 // pred_region
    _
  $region13: #{ercnn_forward.2} parent=0 // pred_fallthru
    _
  // Predicated region
  $region14: #{ercnn_forward.2} parent=0 // pred_check
    _
  $region15: #{ercnn_forward.2} parent=0 // pred_check_branch
    %16 = sbr.rel (0) target = $region17
  $region16: #{ercnn_forward.2} parent=0 // pred_region
    _
  $region17: #{ercnn_forward.2} parent=0 // pred_fallthru
    _
  %18 = vst [vmem:[#allocation2] sm:$0xff] 0.0
  %19 = vst [vmem:[#allocation2 + $0x8] sm:$0xff] 0.0
  %20 = vst [vmem:[#allocation2 + $0x10] sm:$0xff] 0.0
  %21 = vst [vmem:[#allocation2 + $0x18] sm:$0xff] 0.0
  %22 = vst [vmem:[#allocation2 + $0x20] sm:$0xff] 0.0
  %23 = vst [vmem:[#allocation2 + $0x28] sm:$0xff] 0.0
  %24 = vst [vmem:[#allocation2 + $0x30] sm:$0xff] 0.0
  %25 = vst [vmem:[#allocation2 + $0x38] sm:$0xff] 0.0
  %26 = vst [vmem:[#allocation2 + $0x40] sm:$0xff] 0.0
  %27 = vst [vmem:[#allocation2 + $0x48] sm:$0xff] 0.0
  %28 = vst [vmem:[#allocation2 + $0x50] sm:$0xff] 0.0
  %29 = vst [vmem:[#allocation2 + $0x58] sm:$0xff] 0.0
  %30 = vst [vmem:[#allocation2 + $0x60] sm:$0xff] 0.0
  %31 = vst [vmem:[#allocation2 + $0x68] sm:$0xff] 0.0
  %32 = vst [vmem:[#allocation2 + $0x70] sm:$0xff] 0.0
  %33 = vst [vmem:[#allocation2 + $0x78] sm:$0xff] 0.0
  %34 = vst [vmem:[#allocation2 + $0x80] sm:$0xff] 0.0
  %35 = vst [vmem:[#allocation2 + $0x88] sm:$0xff] 0.0
  %36 = vst [vmem:[#allocation2 + $0x90] sm:$0xff] 0.0
  %37 = vst [vmem:[#allocation2 + $0x98] sm:$0xff] 0.0
  %38 = vst [vmem:[#allocation2 + $0xa0] sm:$0xff] 0.0
  %39 = vst [vmem:[#allocation2 + $0xa8] sm:$0xff] 0.0
  %40 = vst [vmem:[#allocation2 + $0xb0] sm:$0xff] 0.0
  %41 = vst [vmem:[#allocation2 + $0xb8] sm:$0xff] 0.0
  %42 = vst [vmem:[#allocation2 + $0xc0] sm:$0xff] 0.0
  %43 = vst [vmem:[#allocation2 + $0xc8] sm:$0xff] 0.0
  %44 = vst [vmem:[#allocation2 + $0xd0] sm:$0xff] 0.0
  %45 = vst [vmem:[#allocation2 + $0xd8] sm:$0xff] 0.0
  %46 = vst [vmem:[#allocation2 + $0xe0] sm:$0xff] 0.0
  %47 = vst [vmem:[#allocation2 + $0xe8] sm:$0xff] 0.0
  %48 = vst [vmem:[#allocation2 + $0xf0] sm:$0xff] 0.0
  %49 = vst [vmem:[#allocation2 + $0xf8] sm:$0xff] 0.0
  %50 = vst [vmem:[#allocation2 + $0x100] sm:$0xff] 0.0
  %51 = vst [vmem:[#allocation2 + $0x108] sm:$0xff] 0.0
  %52 = vst [vmem:[#allocation2 + $0x110] sm:$0xff] 0.0
  %53 = vst [vmem:[#allocation2 + $0x118] sm:$0xff] 0.0
  %54 = vst [vmem:[#allocation2 + $0x120] sm:$0xff] 0.0
  %55 = vst [vmem:[#allocation2 + $0x128] sm:$0xff] 0.0
  %56 = vst [vmem:[#allocation2 + $0x130] sm:$0xff] 0.0
  %57 = vst [vmem:[#allocation2 + $0x138] sm:$0xff] 0.0
  %58 = vst [vmem:[#allocation2 + $0x140] sm:$0xff] 0.0
  %59 = vst [vmem:[#allocation2 + $0x148] sm:$0xff] 0.0
  %60 = vst [vmem:[#allocation2 + $0x150] sm:$0xff] 0.0
  %61 = vst [vmem:[#allocation2 + $0x158] sm:$0xff] 0.0
  %62 = vst [vmem:[#allocation2 + $0x160] sm:$0xff] 0.0
  %63 = vst [vmem:[#allocation2 + $0x168] sm:$0xff] 0.0
  %64 = vst [vmem:[#allocation2 + $0x170] sm:$0xff] 0.0
  %65 = vst [vmem:[#allocation2 + $0x178] sm:$0xff] 0.0
  %66 = vst [vmem:[#allocation2 + $0x180] sm:$0xff] 0.0
  %67 = vst [vmem:[#allocation2 + $0x188] sm:$0xff] 0.0
  %68 = vst [vmem:[#allocation2 + $0x190] sm:$0xff] 0.0
  %69 = vst [vmem:[#allocation2 + $0x198] sm:$0xff] 0.0
  %70 = vst [vmem:[#allocation2 + $0x1a0] sm:$0xff] 0.0
  %71 = vst [vmem:[#allocation2 + $0x1a8] sm:$0xff] 0.0
  %72 = vst [vmem:[#allocation2 + $0x1b0] sm:$0xff] 0.0
  %73 = vst [vmem:[#allocation2 + $0x1b8] sm:$0xff] 0.0
  %74 = vst [vmem:[#allocation2 + $0x1c0] sm:$0xff] 0.0
  %75 = vst [vmem:[#allocation2 + $0x1c8] sm:$0xff] 0.0
  %76 = vst [vmem:[#allocation2 + $0x1d0] sm:$0xff] 0.0
  %77 = vst [vmem:[#allocation2 + $0x1d8] sm:$0xff] 0.0
  %78 = vst [vmem:[#allocation2 + $0x1e0] sm:$0xff] 0.0
  %79 = vst [vmem:[#allocation2 + $0x1e8] sm:$0xff] 0.0
  %80 = vst [vmem:[#allocation2 + $0x1f0] sm:$0xff] 0.0
  %81 = vst [vmem:[#allocation2 + $0x1f8] sm:$0xff] 0.0
  %82 = vst [vmem:[#allocation2 + $0x200] sm:$0xff] 0.0
  %83 = vst [vmem:[#allocation2 + $0x208] sm:$0xff] 0.0
  %84 = vst [vmem:[#allocation2 + $0x210] sm:$0xff] 0.0
  %85 = vst [vmem:[#allocation2 + $0x218] sm:$0xff] 0.0
  %86 = vst [vmem:[#allocation2 + $0x220] sm:$0xff] 0.0
  %87 = vst [vmem:[#allocation2 + $0x228] sm:$0xff] 0.0
  %88 = vst [vmem:[#allocation2 + $0x230] sm:$0xff] 0.0
  %89 = vst [vmem:[#allocation2 + $0x238] sm:$0xff] 0.0
  %90 = vst [vmem:[#allocation2 + $0x240] sm:$0xff] 0.0
  %91 = vst [vmem:[#allocation2 + $0x248] sm:$0xff] 0.0
  %92 = vst [vmem:[#allocation2 + $0x250] sm:$0xff] 0.0
  %93 = vst [vmem:[#allocation2 + $0x258] sm:$0xff] 0.0
  %94 = vst [vmem:[#allocation2 + $0x260] sm:$0xff] 0.0
  %95 = vst [vmem:[#allocation2 + $0x268] sm:$0xff] 0.0
  %v96 = vld [vmem:[%s0] sm:$0xff]
  %v97 = vld [vmem:[%s0 + $0x8] sm:$0xff]
  %v98 = vld [vmem:[%s0 + $0x10] sm:$0xff]
  %v99 = vld [vmem:[%s0 + $0x18] sm:$0xff]
  %v100 = vld [vmem:[%s0 + $0x20] sm:$0xff]
  %v101 = vld [vmem:[%s0 + $0x28] sm:$0xff]
  %v102 = vld [vmem:[%s0 + $0x30] sm:$0xff]
  %v103 = vld [vmem:[%s0 + $0x38] sm:$0xff]
  %v104 = vld [vmem:[%s0 + $0x40] sm:$0xff]
  %v105 = vld [vmem:[%s0 + $0x48] sm:$0xff]
  %v106 = vld [vmem:[%s0 + $0x50] sm:$0xff]
  %v107 = vld [vmem:[%s0 + $0x58] sm:$0xff]
  %v108 = vld [vmem:[%s0 + $0x60] sm:$0xff]
  %vm109 = vcmask 572416
  %110 = vst.msk [vmem:[#allocation2] sm:$0xff] %vm109, %v96
  %111 = vst.msk [vmem:[#allocation2 + $0x10] sm:$0xff] %vm109, %v97
  %112 = vst.msk [vmem:[#allocation2 + $0x20] sm:$0xff] %vm109, %v98
  %113 = vst.msk [vmem:[#allocation2 + $0x30] sm:$0xff] %vm109, %v99
  %114 = vst.msk [vmem:[#allocation2 + $0x40] sm:$0xff] %vm109, %v100
  %115 = vst.msk [vmem:[#allocation2 + $0x50] sm:$0xff] %vm109, %v101
  %116 = vst.msk [vmem:[#allocation2 + $0x60] sm:$0xff] %vm109, %v102
  %117 = vst.msk [vmem:[#allocation2 + $0x70] sm:$0xff] %vm109, %v103
  %118 = vst.msk [vmem:[#allocation2 + $0x80] sm:$0xff] %vm109, %v104
  %119 = vst.msk [vmem:[#allocation2 + $0x90] sm:$0xff] %vm109, %v105
  %120 = vst.msk [vmem:[#allocation2 + $0xa0] sm:$0xff] %vm109, %v106
  %121 = vst.msk [vmem:[#allocation2 + $0xb0] sm:$0xff] %vm109, %v107
  %122 = vst.msk [vmem:[#allocation2 + $0xc0] sm:$0xff] %vm109, %v108
  %v123 = vld [vmem:[%s0] sm:$0xff]
  %v124 = vld [vmem:[%s0 + $0x8] sm:$0xff]
  %v125 = vld [vmem:[%s0 + $0x10] sm:$0xff]
  %v126 = vld [vmem:[%s0 + $0x18] sm:$0xff]
  %v127 = vld [vmem:[%s0 + $0x20] sm:$0xff]
  %v128 = vld [vmem:[%s0 + $0x28] sm:$0xff]
  %v129 = vld [vmem:[%s0 + $0x30] sm:$0xff]
  %v130 = vld [vmem:[%s0 + $0x38] sm:$0xff]
  %v131 = vld [vmem:[%s0 + $0x40] sm:$0xff]
  %v132 = vld [vmem:[%s0 + $0x48] sm:$0xff]
  %v133 = vld [vmem:[%s0 + $0x50] sm:$0xff]
  %v134 = vld [vmem:[%s0 + $0x58] sm:$0xff]
  %v135 = vld [vmem:[%s0 + $0x60] sm:$0xff]
  %149 = vrot.lane.b32.xlu0 %v123, 127
  %v150 = vpop.permute.xlu0 %149
  %151 = vrot.lane.b32.xlu0 %v124, 127
  %v152 = vpop.permute.xlu0 %151
  %153 = vrot.lane.b32.xlu0 %v125, 127
  %v154 = vpop.permute.xlu0 %153
  %155 = vrot.lane.b32.xlu0 %v126, 127
  %v156 = vpop.permute.xlu0 %155
  %157 = vrot.lane.b32.xlu0 %v127, 127
  %v158 = vpop.permute.xlu0 %157
  %159 = vrot.lane.b32.xlu0 %v128, 127
  %v160 = vpop.permute.xlu0 %159
  %161 = vrot.lane.b32.xlu0 %v129, 127
  %v162 = vpop.permute.xlu0 %161
  %163 = vrot.lane.b32.xlu0 %v130, 127
  %v164 = vpop.permute.xlu0 %163
  %165 = vrot.lane.b32.xlu0 %v131, 127
  %v166 = vpop.permute.xlu0 %165
  %167 = vrot.lane.b32.xlu0 %v132, 127
  %v168 = vpop.permute.xlu0 %167
  %169 = vrot.lane.b32.xlu0 %v133, 127
  %v170 = vpop.permute.xlu0 %169
  %171 = vrot.lane.b32.xlu0 %v134, 127
  %v172 = vpop.permute.xlu0 %171
  %173 = vrot.lane.b32.xlu0 %v135, 127
  %v174 = vpop.permute.xlu0 %173
  %188 = vst.msk [vmem:[#allocation2 + $0xd0] sm:$0xff] %vm109, %v150
  %189 = vst.msk [vmem:[#allocation2 + $0xe0] sm:$0xff] %vm109, %v152
  %190 = vst.msk [vmem:[#allocation2 + $0xf0] sm:$0xff] %vm109, %v154
  %191 = vst.msk [vmem:[#allocation2 + $0x100] sm:$0xff] %vm109, %v156
  %192 = vst.msk [vmem:[#allocation2 + $0x110] sm:$0xff] %vm109, %v158
  %193 = vst.msk [vmem:[#allocation2 + $0x120] sm:$0xff] %vm109, %v160
  %194 = vst.msk [vmem:[#allocation2 + $0x130] sm:$0xff] %vm109, %v162
  %195 = vst.msk [vmem:[#allocation2 + $0x140] sm:$0xff] %vm109, %v164
  %196 = vst.msk [vmem:[#allocation2 + $0x150] sm:$0xff] %vm109, %v166
  %197 = vst.msk [vmem:[#allocation2 + $0x160] sm:$0xff] %vm109, %v168
  %198 = vst.msk [vmem:[#allocation2 + $0x170] sm:$0xff] %vm109, %v170
  %199 = vst.msk [vmem:[#allocation2 + $0x180] sm:$0xff] %vm109, %v172
  %200 = vst.msk [vmem:[#allocation2 + $0x190] sm:$0xff] %vm109, %v174
  %v201 = vld [vmem:[%s0] sm:$0xff]
  %v202 = vld [vmem:[%s0 + $0x8] sm:$0xff]
  %v203 = vld [vmem:[%s0 + $0x10] sm:$0xff]
  %v204 = vld [vmem:[%s0 + $0x18] sm:$0xff]
  %v205 = vld [vmem:[%s0 + $0x20] sm:$0xff]
  %v206 = vld [vmem:[%s0 + $0x28] sm:$0xff]
  %v207 = vld [vmem:[%s0 + $0x30] sm:$0xff]
  %v208 = vld [vmem:[%s0 + $0x38] sm:$0xff]
  %v209 = vld [vmem:[%s0 + $0x40] sm:$0xff]
  %v210 = vld [vmem:[%s0 + $0x48] sm:$0xff]
  %v211 = vld [vmem:[%s0 + $0x50] sm:$0xff]
  %v212 = vld [vmem:[%s0 + $0x58] sm:$0xff]
  %v213 = vld [vmem:[%s0 + $0x60] sm:$0xff]
  %227 = vrot.lane.b32.xlu0 %v201, 126
  %v228 = vpop.permute.xlu0 %227
  %229 = vrot.lane.b32.xlu0 %v202, 126
  %v230 = vpop.permute.xlu0 %229
  %231 = vrot.lane.b32.xlu0 %v203, 126
  %v232 = vpop.permute.xlu0 %231
  %233 = vrot.lane.b32.xlu0 %v204, 126
  %v234 = vpop.permute.xlu0 %233
  %235 = vrot.lane.b32.xlu0 %v205, 126
  %v236 = vpop.permute.xlu0 %235
  %237 = vrot.lane.b32.xlu0 %v206, 126
  %v238 = vpop.permute.xlu0 %237
  %239 = vrot.lane.b32.xlu0 %v207, 126
  %v240 = vpop.permute.xlu0 %239
  %241 = vrot.lane.b32.xlu0 %v208, 126
  %v242 = vpop.permute.xlu0 %241
  %243 = vrot.lane.b32.xlu0 %v209, 126
  %v244 = vpop.permute.xlu0 %243
  %245 = vrot.lane.b32.xlu0 %v210, 126
  %v246 = vpop.permute.xlu0 %245
  %247 = vrot.lane.b32.xlu0 %v211, 126
  %v248 = vpop.permute.xlu0 %247
  %249 = vrot.lane.b32.xlu0 %v212, 126
  %v250 = vpop.permute.xlu0 %249
  %251 = vrot.lane.b32.xlu0 %v213, 126
  %v252 = vpop.permute.xlu0 %251
  %266 = vst.msk [vmem:[#allocation2 + $0x1a0] sm:$0xff] %vm109, %v228
  %267 = vst.msk [vmem:[#allocation2 + $0x1b0] sm:$0xff] %vm109, %v230
  %268 = vst.msk [vmem:[#allocation2 + $0x1c0] sm:$0xff] %vm109, %v232
  %269 = vst.msk [vmem:[#allocation2 + $0x1d0] sm:$0xff] %vm109, %v234
  %270 = vst.msk [vmem:[#allocation2 + $0x1e0] sm:$0xff] %vm109, %v236
  %271 = vst.msk [vmem:[#allocation2 + $0x1f0] sm:$0xff] %vm109, %v238
  %272 = vst.msk [vmem:[#allocation2 + $0x200] sm:$0xff] %vm109, %v240
  %273 = vst.msk [vmem:[#allocation2 + $0x210] sm:$0xff] %vm109, %v242
  %274 = vst.msk [vmem:[#allocation2 + $0x220] sm:$0xff] %vm109, %v244
  %275 = vst.msk [vmem:[#allocation2 + $0x230] sm:$0xff] %vm109, %v246
  %276 = vst.msk [vmem:[#allocation2 + $0x240] sm:$0xff] %vm109, %v248
  %277 = vst.msk [vmem:[#allocation2 + $0x250] sm:$0xff] %vm109, %v250
  %278 = vst.msk [vmem:[#allocation2 + $0x260] sm:$0xff] %vm109, %v252
  %s279 = scalar_lea.vmem %s0, 104
  %v280 = vld [vmem:[%s279] sm:$0xff]
  %v281 = vld [vmem:[%s279 + $0x8] sm:$0xff]
  %v282 = vld [vmem:[%s279 + $0x10] sm:$0xff]
  %v283 = vld [vmem:[%s279 + $0x18] sm:$0xff]
  %v284 = vld [vmem:[%s279 + $0x20] sm:$0xff]
  %v285 = vld [vmem:[%s279 + $0x28] sm:$0xff]
  %v286 = vld [vmem:[%s279 + $0x30] sm:$0xff]
  %v287 = vld [vmem:[%s279 + $0x38] sm:$0xff]
  %v288 = vld [vmem:[%s279 + $0x40] sm:$0xff]
  %v289 = vld [vmem:[%s279 + $0x48] sm:$0xff]
  %v290 = vld [vmem:[%s279 + $0x50] sm:$0xff]
  %v291 = vld [vmem:[%s279 + $0x58] sm:$0xff]
  %v292 = vld [vmem:[%s279 + $0x60] sm:$0xff]
  %293 = vst.msk [vmem:[#allocation2 + $0x8] sm:$0xff] %vm109, %v280
  %294 = vst.msk [vmem:[#allocation2 + $0x18] sm:$0xff] %vm109, %v281
  %295 = vst.msk [vmem:[#allocation2 + $0x28] sm:$0xff] %vm109, %v282
  %296 = vst.msk [vmem:[#allocation2 + $0x38] sm:$0xff] %vm109, %v283
  %297 = vst.msk [vmem:[#allocation2 + $0x48] sm:$0xff] %vm109, %v284
  %298 = vst.msk [vmem:[#allocation2 + $0x58] sm:$0xff] %vm109, %v285
  %299 = vst.msk [vmem:[#allocation2 + $0x68] sm:$0xff] %vm109, %v286
  %300 = vst.msk [vmem:[#allocation2 + $0x78] sm:$0xff] %vm109, %v287
  %301 = vst.msk [vmem:[#allocation2 + $0x88] sm:$0xff] %vm109, %v288
  %302 = vst.msk [vmem:[#allocation2 + $0x98] sm:$0xff] %vm109, %v289
  %303 = vst.msk [vmem:[#allocation2 + $0xa8] sm:$0xff] %vm109, %v290
  %304 = vst.msk [vmem:[#allocation2 + $0xb8] sm:$0xff] %vm109, %v291
  %305 = vst.msk [vmem:[#allocation2 + $0xc8] sm:$0xff] %vm109, %v292
  %v306 = vld [vmem:[%s279] sm:$0xff]
  %v307 = vld [vmem:[%s279 + $0x8] sm:$0xff]
  %v308 = vld [vmem:[%s279 + $0x10] sm:$0xff]
  %v309 = vld [vmem:[%s279 + $0x18] sm:$0xff]
  %v310 = vld [vmem:[%s279 + $0x20] sm:$0xff]
  %v311 = vld [vmem:[%s279 + $0x28] sm:$0xff]
  %v312 = vld [vmem:[%s279 + $0x30] sm:$0xff]
  %v313 = vld [vmem:[%s279 + $0x38] sm:$0xff]
  %v314 = vld [vmem:[%s279 + $0x40] sm:$0xff]
  %v315 = vld [vmem:[%s279 + $0x48] sm:$0xff]
  %v316 = vld [vmem:[%s279 + $0x50] sm:$0xff]
  %v317 = vld [vmem:[%s279 + $0x58] sm:$0xff]
  %v318 = vld [vmem:[%s279 + $0x60] sm:$0xff]
  %332 = vrot.lane.b32.xlu0 %v306, 127
  %v333 = vpop.permute.xlu0 %332
  %334 = vrot.lane.b32.xlu0 %v307, 127
  %v335 = vpop.permute.xlu0 %334
  %336 = vrot.lane.b32.xlu0 %v308, 127
  %v337 = vpop.permute.xlu0 %336
  %338 = vrot.lane.b32.xlu0 %v309, 127
  %v339 = vpop.permute.xlu0 %338
  %340 = vrot.lane.b32.xlu0 %v310, 127
  %v341 = vpop.permute.xlu0 %340
  %342 = vrot.lane.b32.xlu0 %v311, 127
  %v343 = vpop.permute.xlu0 %342
  %344 = vrot.lane.b32.xlu0 %v312, 127
  %v345 = vpop.permute.xlu0 %344
  %346 = vrot.lane.b32.xlu0 %v313, 127
  %v347 = vpop.permute.xlu0 %346
  %348 = vrot.lane.b32.xlu0 %v314, 127
  %v349 = vpop.permute.xlu0 %348
  %350 = vrot.lane.b32.xlu0 %v315, 127
  %v351 = vpop.permute.xlu0 %350
  %352 = vrot.lane.b32.xlu0 %v316, 127
  %v353 = vpop.permute.xlu0 %352
  %354 = vrot.lane.b32.xlu0 %v317, 127
  %v355 = vpop.permute.xlu0 %354
  %356 = vrot.lane.b32.xlu0 %v318, 127
  %v357 = vpop.permute.xlu0 %356
  %371 = vst.msk [vmem:[#allocation2 + $0xd8] sm:$0xff] %vm109, %v333
  %372 = vst.msk [vmem:[#allocation2 + $0xe8] sm:$0xff] %vm109, %v335
  %373 = vst.msk [vmem:[#allocation2 + $0xf8] sm:$0xff] %vm109, %v337
  %374 = vst.msk [vmem:[#allocation2 + $0x108] sm:$0xff] %vm109, %v339
  %375 = vst.msk [vmem:[#allocation2 + $0x118] sm:$0xff] %vm109, %v341
  %376 = vst.msk [vmem:[#allocation2 + $0x128] sm:$0xff] %vm109, %v343
  %377 = vst.msk [vmem:[#allocation2 + $0x138] sm:$0xff] %vm109, %v345
  %378 = vst.msk [vmem:[#allocation2 + $0x148] sm:$0xff] %vm109, %v347
  %379 = vst.msk [vmem:[#allocation2 + $0x158] sm:$0xff] %vm109, %v349
  %380 = vst.msk [vmem:[#allocation2 + $0x168] sm:$0xff] %vm109, %v351
  %381 = vst.msk [vmem:[#allocation2 + $0x178] sm:$0xff] %vm109, %v353
  %382 = vst.msk [vmem:[#allocation2 + $0x188] sm:$0xff] %vm109, %v355
  %383 = vst.msk [vmem:[#allocation2 + $0x198] sm:$0xff] %vm109, %v357
  %v384 = vld [vmem:[%s279] sm:$0xff]
  %v385 = vld [vmem:[%s279 + $0x8] sm:$0xff]
  %v386 = vld [vmem:[%s279 + $0x10] sm:$0xff]
  %v387 = vld [vmem:[%s279 + $0x18] sm:$0xff]
  %v388 = vld [vmem:[%s279 + $0x20] sm:$0xff]
  %v389 = vld [vmem:[%s279 + $0x28] sm:$0xff]
  %v390 = vld [vmem:[%s279 + $0x30] sm:$0xff]
  %v391 = vld [vmem:[%s279 + $0x38] sm:$0xff]
  %v392 = vld [vmem:[%s279 + $0x40] sm:$0xff]
  %v393 = vld [vmem:[%s279 + $0x48] sm:$0xff]
  %v394 = vld [vmem:[%s279 + $0x50] sm:$0xff]
  %v395 = vld [vmem:[%s279 + $0x58] sm:$0xff]
  %v396 = vld [vmem:[%s279 + $0x60] sm:$0xff]
  %410 = vrot.lane.b32.xlu0 %v384, 126
  %v411 = vpop.permute.xlu0 %410
  %412 = vrot.lane.b32.xlu0 %v385, 126
  %v413 = vpop.permute.xlu0 %412
  %414 = vrot.lane.b32.xlu0 %v386, 126
  %v415 = vpop.permute.xlu0 %414
  %416 = vrot.lane.b32.xlu0 %v387, 126
  %v417 = vpop.permute.xlu0 %416
  %418 = vrot.lane.b32.xlu0 %v388, 126
  %v419 = vpop.permute.xlu0 %418
  %420 = vrot.lane.b32.xlu0 %v389, 126
  %v421 = vpop.permute.xlu0 %420
  %422 = vrot.lane.b32.xlu0 %v390, 126
  %v423 = vpop.permute.xlu0 %422
  %424 = vrot.lane.b32.xlu0 %v391, 126
  %v425 = vpop.permute.xlu0 %424
  %426 = vrot.lane.b32.xlu0 %v392, 126
  %v427 = vpop.permute.xlu0 %426
  %428 = vrot.lane.b32.xlu0 %v393, 126
  %v429 = vpop.permute.xlu0 %428
  %430 = vrot.lane.b32.xlu0 %v394, 126
  %v431 = vpop.permute.xlu0 %430
  %432 = vrot.lane.b32.xlu0 %v395, 126
  %v433 = vpop.permute.xlu0 %432
  %434 = vrot.lane.b32.xlu0 %v396, 126
  %v435 = vpop.permute.xlu0 %434
  %449 = vst.msk [vmem:[#allocation2 + $0x1a8] sm:$0xff] %vm109, %v411
  %450 = vst.msk [vmem:[#allocation2 + $0x1b8] sm:$0xff] %vm109, %v413
  %451 = vst.msk [vmem:[#allocation2 + $0x1c8] sm:$0xff] %vm109, %v415
  %452 = vst.msk [vmem:[#allocation2 + $0x1d8] sm:$0xff] %vm109, %v417
  %453 = vst.msk [vmem:[#allocation2 + $0x1e8] sm:$0xff] %vm109, %v419
  %454 = vst.msk [vmem:[#allocation2 + $0x1f8] sm:$0xff] %vm109, %v421
  %455 = vst.msk [vmem:[#allocation2 + $0x208] sm:$0xff] %vm109, %v423
  %456 = vst.msk [vmem:[#allocation2 + $0x218] sm:$0xff] %vm109, %v425
  %457 = vst.msk [vmem:[#allocation2 + $0x228] sm:$0xff] %vm109, %v427
  %458 = vst.msk [vmem:[#allocation2 + $0x238] sm:$0xff] %vm109, %v429
  %459 = vst.msk [vmem:[#allocation2 + $0x248] sm:$0xff] %vm109, %v431
  %460 = vst.msk [vmem:[#allocation2 + $0x258] sm:$0xff] %vm109, %v433
  %461 = vst.msk [vmem:[#allocation2 + $0x268] sm:$0xff] %vm109, %v435
  %v462 = vld [vmem:[#allocation2] sm:$0xff]
  %v463 = vld [vmem:[#allocation2 + $0x8] sm:$0xff]
  %v464 = vld [vmem:[#allocation2 + $0x10] sm:$0xff]
  %v465 = vld [vmem:[#allocation2 + $0x18] sm:$0xff]
  %v466 = vld [vmem:[#allocation2 + $0x20] sm:$0xff]
  %v467 = vld [vmem:[#allocation2 + $0x28] sm:$0xff]
  %v468 = vld [vmem:[#allocation2 + $0x30] sm:$0xff]
  %v469 = vld [vmem:[#allocation2 + $0x38] sm:$0xff]
  %v470 = vld [vmem:[#allocation2 + $0x40] sm:$0xff]
  %v471 = vld [vmem:[#allocation2 + $0x48] sm:$0xff]
  %v472 = vld [vmem:[#allocation2 + $0x50] sm:$0xff]
  %v473 = vld [vmem:[#allocation2 + $0x58] sm:$0xff]
  %v474 = vld [vmem:[#allocation2 + $0x60] sm:$0xff]
  %v475 = vld [vmem:[#allocation2 + $0x68] sm:$0xff]
  %v476 = vld [vmem:[#allocation2 + $0x70] sm:$0xff]
  %v477 = vld [vmem:[#allocation2 + $0x78] sm:$0xff]
  %v478 = vld [vmem:[#allocation2 + $0x80] sm:$0xff]
  %v479 = vld [vmem:[#allocation2 + $0x88] sm:$0xff]
  %v480 = vld [vmem:[#allocation2 + $0x90] sm:$0xff]
  %v481 = vld [vmem:[#allocation2 + $0x98] sm:$0xff]
  %v482 = vld [vmem:[#allocation2 + $0xa0] sm:$0xff]
  %v483 = vld [vmem:[#allocation2 + $0xa8] sm:$0xff]
  %v484 = vld [vmem:[#allocation2 + $0xb0] sm:$0xff]
  %v485 = vld [vmem:[#allocation2 + $0xb8] sm:$0xff]
  %v486 = vld [vmem:[#allocation2 + $0xc0] sm:$0xff]
  %v487 = vld [vmem:[#allocation2 + $0xc8] sm:$0xff]
  %v488 = vld [vmem:[#allocation2 + $0xd0] sm:$0xff]
  %v489 = vld [vmem:[#allocation2 + $0xd8] sm:$0xff]
  %v490 = vld [vmem:[#allocation2 + $0xe0] sm:$0xff]
  %v491 = vld [vmem:[#allocation2 + $0xe8] sm:$0xff]
  %v492 = vld [vmem:[#allocation2 + $0xf0] sm:$0xff]
  %v493 = vld [vmem:[#allocation2 + $0xf8] sm:$0xff]
  %v494 = vld [vmem:[#allocation2 + $0x100] sm:$0xff]
  %v495 = vld [vmem:[#allocation2 + $0x108] sm:$0xff]
  %v496 = vld [vmem:[#allocation2 + $0x110] sm:$0xff]
  %v497 = vld [vmem:[#allocation2 + $0x118] sm:$0xff]
  %v498 = vld [vmem:[#allocation2 + $0x120] sm:$0xff]
  %v499 = vld [vmem:[#allocation2 + $0x128] sm:$0xff]
  %v500 = vld [vmem:[#allocation2 + $0x130] sm:$0xff]
  %v501 = vld [vmem:[#allocation2 + $0x138] sm:$0xff]
  %v502 = vld [vmem:[#allocation2 + $0x140] sm:$0xff]
  %v503 = vld [vmem:[#allocation2 + $0x148] sm:$0xff]
  %v504 = vld [vmem:[#allocation2 + $0x150] sm:$0xff]
  %v505 = vld [vmem:[#allocation2 + $0x158] sm:$0xff]
  %v506 = vld [vmem:[#allocation2 + $0x160] sm:$0xff]
  %v507 = vld [vmem:[#allocation2 + $0x168] sm:$0xff]
  %v508 = vld [vmem:[#allocation2 + $0x170] sm:$0xff]
  %v509 = vld [vmem:[#allocation2 + $0x178] sm:$0xff]
  %v510 = vld [vmem:[#allocation2 + $0x180] sm:$0xff]
  %v511 = vld [vmem:[#allocation2 + $0x188] sm:$0xff]
  %v512 = vld [vmem:[#allocation2 + $0x190] sm:$0xff]
  %v513 = vld [vmem:[#allocation2 + $0x198] sm:$0xff]
  %v514 = vld [vmem:[#allocation2 + $0x1a0] sm:$0xff]
  %v515 = vld [vmem:[#allocation2 + $0x1a8] sm:$0xff]
  %v516 = vld [vmem:[#allocation2 + $0x1b0] sm:$0xff]
  %v517 = vld [vmem:[#allocation2 + $0x1b8] sm:$0xff]
  %v518 = vld [vmem:[#allocation2 + $0x1c0] sm:$0xff]
  %v519 = vld [vmem:[#allocation2 + $0x1c8] sm:$0xff]
  %v520 = vld [vmem:[#allocation2 + $0x1d0] sm:$0xff]
  %v521 = vld [vmem:[#allocation2 + $0x1d8] sm:$0xff]
  %v522 = vld [vmem:[#allocation2 + $0x1e0] sm:$0xff]
  %v523 = vld [vmem:[#allocation2 + $0x1e8] sm:$0xff]
  %v524 = vld [vmem:[#allocation2 + $0x1f0] sm:$0xff]
  %v525 = vld [vmem:[#allocation2 + $0x1f8] sm:$0xff]
  %v526 = vld [vmem:[#allocation2 + $0x200] sm:$0xff]
  %v527 = vld [vmem:[#allocation2 + $0x208] sm:$0xff]
  %v528 = vld [vmem:[#allocation2 + $0x210] sm:$0xff]
  %v529 = vld [vmem:[#allocation2 + $0x218] sm:$0xff]
  %v530 = vld [vmem:[#allocation2 + $0x220] sm:$0xff]
  %v531 = vld [vmem:[#allocation2 + $0x228] sm:$0xff]
  %v532 = vld [vmem:[#allocation2 + $0x230] sm:$0xff]
  %v533 = vld [vmem:[#allocation2 + $0x238] sm:$0xff]
  %v534 = vld [vmem:[#allocation2 + $0x240] sm:$0xff]
  %v535 = vld [vmem:[#allocation2 + $0x248] sm:$0xff]
  %v536 = vld [vmem:[#allocation2 + $0x250] sm:$0xff]
  %v537 = vld [vmem:[#allocation2 + $0x258] sm:$0xff]
  %v538 = vld [vmem:[#allocation2 + $0x260] sm:$0xff]
  %v539 = vld [vmem:[#allocation2 + $0x268] sm:$0xff]
  %v540 = vpack.c.bf16 %v464, %v462
  %v541 = vpack.c.bf16 %v465, %v463
  %v542 = vpack.c.bf16 %v468, %v466
  %v543 = vpack.c.bf16 %v469, %v467
  %v544 = vpack.c.bf16 %v472, %v470
  %v545 = vpack.c.bf16 %v473, %v471
  %v546 = vpack.c.bf16 %v476, %v474
  %v547 = vpack.c.bf16 %v477, %v475
  %v548 = vpack.c.bf16 %v480, %v478
  %v549 = vpack.c.bf16 %v481, %v479
  %v550 = vpack.c.bf16 %v484, %v482
  %v551 = vpack.c.bf16 %v485, %v483
  %v552 = vpack.c.bf16 %v488, %v486
  %v553 = vpack.c.bf16 %v489, %v487
  %v554 = vpack.c.bf16 %v492, %v490
  %v555 = vpack.c.bf16 %v493, %v491
  %v556 = vpack.c.bf16 %v496, %v494
  %v557 = vpack.c.bf16 %v497, %v495
  %v558 = vpack.c.bf16 %v500, %v498
  %v559 = vpack.c.bf16 %v501, %v499
  %v560 = vpack.c.bf16 %v504, %v502
  %v561 = vpack.c.bf16 %v505, %v503
  %v562 = vpack.c.bf16 %v508, %v506
  %v563 = vpack.c.bf16 %v509, %v507
  %v564 = vpack.c.bf16 %v512, %v510
  %v565 = vpack.c.bf16 %v513, %v511
  %v566 = vpack.c.bf16 %v516, %v514
  %v567 = vpack.c.bf16 %v517, %v515
  %v568 = vpack.c.bf16 %v520, %v518
  %v569 = vpack.c.bf16 %v521, %v519
  %v570 = vpack.c.bf16 %v524, %v522
  %v571 = vpack.c.bf16 %v525, %v523
  %v572 = vpack.c.bf16 %v528, %v526
  %v573 = vpack.c.bf16 %v529, %v527
  %v574 = vpack.c.bf16 %v532, %v530
  %v575 = vpack.c.bf16 %v533, %v531
  %v576 = vpack.c.bf16 %v536, %v534
  %v577 = vpack.c.bf16 %v537, %v535
  %v578 = vpack.c.bf16 %v538, %v538
  %v579 = vpack.c.bf16 %v539, %v539
  %v580 = vld [vmem:[%s1] sm:$0xff]
  %v581 = vld [vmem:[%s1 + $0x8] sm:$0xf]
  %v582 = vld [vmem:[%s1 + $0xc] sm:$0xff]
  %v583 = vld [vmem:[%s1 + $0x14] sm:$0xf]
  %v584 = vld [vmem:[%s1 + $0x18] sm:$0xff]
  %v585 = vld [vmem:[%s1 + $0x20] sm:$0xf]
  %v586 = vld [vmem:[%s1 + $0x24] sm:$0xff]
  %v587 = vld [vmem:[%s1 + $0x2c] sm:$0xf]
  %v588 = vld [vmem:[%s1 + $0x30] sm:$0xff]
  %v589 = vld [vmem:[%s1 + $0x38] sm:$0xf]
  %v590 = vld [vmem:[%s1 + $0x3c] sm:$0xff]
  %v591 = vld [vmem:[%s1 + $0x44] sm:$0xf]
  %v592 = vld [vmem:[%s1 + $0x48] sm:$0xff]
  %v593 = vld [vmem:[%s1 + $0x50] sm:$0xf]
  %v594 = vld [vmem:[%s1 + $0x54] sm:$0xff]
  %v595 = vld [vmem:[%s1 + $0x5c] sm:$0xf]
  %v596 = vld [vmem:[%s1 + $0x60] sm:$0xff]
  %v597 = vld [vmem:[%s1 + $0x68] sm:$0xf]
  %v598 = vld [vmem:[%s1 + $0x6c] sm:$0xff]
  %v599 = vld [vmem:[%s1 + $0x74] sm:$0xf]
  %v600 = vld [vmem:[%s1 + $0x78] sm:$0xff]
  %v601 = vld [vmem:[%s1 + $0x80] sm:$0xf]
  %v602 = vld [vmem:[%s1 + $0x84] sm:$0xff]
  %v603 = vld [vmem:[%s1 + $0x8c] sm:$0xf]
  %v604 = vld [vmem:[%s1 + $0x90] sm:$0xff]
  %v605 = vld [vmem:[%s1 + $0x98] sm:$0xf]
  %v606 = vld [vmem:[%s1 + $0x9c] sm:$0xff]
  %v607 = vld [vmem:[%s1 + $0xa4] sm:$0xf]
  %v608 = vld [vmem:[%s1 + $0xa8] sm:$0xff]
  %v609 = vld [vmem:[%s1 + $0xb0] sm:$0xf]
  %v610 = vld [vmem:[%s1 + $0xb4] sm:$0xff]
  %v611 = vld [vmem:[%s1 + $0xbc] sm:$0xf]
  %v612 = vld [vmem:[%s1 + $0xc0] sm:$0xff]
  %v613 = vld [vmem:[%s1 + $0xc8] sm:$0xf]
  %v614 = vld [vmem:[%s1 + $0xcc] sm:$0xff]
  %v615 = vld [vmem:[%s1 + $0xd4] sm:$0xf]
  %v616 = vld [vmem:[%s1 + $0xd8] sm:$0xff]
  %v617 = vld [vmem:[%s1 + $0xe0] sm:$0xf]
  %v618 = vld [vmem:[%s1 + $0xe4] sm:$0xff]
  %v619 = vld [vmem:[%s1 + $0xec] sm:$0xf]
  %v620 = vld [vmem:[%s1 + $0xf0] sm:$0xff]
  %v621 = vld [vmem:[%s1 + $0xf8] sm:$0xf]
  %v622 = vld [vmem:[%s1 + $0xfc] sm:$0xff]
  %v623 = vld [vmem:[%s1 + $0x104] sm:$0xf]
  %v624 = vld [vmem:[%s1 + $0x108] sm:$0xff]
  %v625 = vld [vmem:[%s1 + $0x110] sm:$0xf]
  %v626 = vld [vmem:[%s1 + $0x114] sm:$0xff]
  %v627 = vld [vmem:[%s1 + $0x11c] sm:$0xf]
  %v628 = vld [vmem:[%s1 + $0x120] sm:$0xff]
  %v629 = vld [vmem:[%s1 + $0x128] sm:$0xf]
  %v630 = vld [vmem:[%s1 + $0x12c] sm:$0xff]
  %v631 = vld [vmem:[%s1 + $0x134] sm:$0xf]
  %v632 = vld [vmem:[%s1 + $0x138] sm:$0xff]
  %v633 = vld [vmem:[%s1 + $0x140] sm:$0xf]
  %v634 = vld [vmem:[%s1 + $0x144] sm:$0xff]
  %v635 = vld [vmem:[%s1 + $0x14c] sm:$0xf]
  %v636 = vld [vmem:[%s1 + $0x150] sm:$0xff]
  %v637 = vld [vmem:[%s1 + $0x158] sm:$0xf]
  %v638 = vld [vmem:[%s1 + $0x15c] sm:$0xff]
  %v639 = vld [vmem:[%s1 + $0x164] sm:$0xf]
  %v640 = vld [vmem:[%s1 + $0x168] sm:$0xff]
  %v641 = vld [vmem:[%s1 + $0x170] sm:$0xf]
  %v642 = vld [vmem:[%s1 + $0x174] sm:$0xff]
  %v643 = vld [vmem:[%s1 + $0x17c] sm:$0xf]
  %v644 = vld [vmem:[%s1 + $0x180] sm:$0xff]
  %v645 = vld [vmem:[%s1 + $0x188] sm:$0xf]
  %v646 = vld [vmem:[%s1 + $0x18c] sm:$0xff]
  %v647 = vld [vmem:[%s1 + $0x194] sm:$0xf]
  %v648 = vld [vmem:[%s1 + $0x198] sm:$0xff]
  %v649 = vld [vmem:[%s1 + $0x1a0] sm:$0xf]
  %v650 = vld [vmem:[%s1 + $0x1a4] sm:$0xff]
  %v651 = vld [vmem:[%s1 + $0x1ac] sm:$0xf]
  %v652 = vld [vmem:[%s1 + $0x1b0] sm:$0xff]
  %v653 = vld [vmem:[%s1 + $0x1b8] sm:$0xf]
  %v654 = vld [vmem:[%s1 + $0x1bc] sm:$0xff]
  %v655 = vld [vmem:[%s1 + $0x1c4] sm:$0xf]
  %v656 = vld [vmem:[%s1 + $0x1c8] sm:$0xff]
  %v657 = vld [vmem:[%s1 + $0x1d0] sm:$0xf]
  %v658 = vld [vmem:[%s1 + $0x1d4] sm:$0xff]
  %v659 = vld [vmem:[%s1 + $0x1dc] sm:$0xf]
  %v660 = vld [vmem:[%s1 + $0x1e0] sm:$0xff]
  %v661 = vld [vmem:[%s1 + $0x1e8] sm:$0xf]
  %v662 = vld [vmem:[%s1 + $0x1ec] sm:$0xff]
  %v663 = vld [vmem:[%s1 + $0x1f4] sm:$0xf]
  %v664 = vld [vmem:[%s1 + $0x1f8] sm:$0xff]
  %v665 = vld [vmem:[%s1 + $0x200] sm:$0xf]
  %v666 = vld [vmem:[%s1 + $0x204] sm:$0xff]
  %v667 = vld [vmem:[%s1 + $0x20c] sm:$0xf]
  %v668 = vld [vmem:[%s1 + $0x210] sm:$0xff]
  %v669 = vld [vmem:[%s1 + $0x218] sm:$0xf]
  %v670 = vld [vmem:[%s1 + $0x21c] sm:$0xff]
  %v671 = vld [vmem:[%s1 + $0x224] sm:$0xf]
  %v672 = vld [vmem:[%s1 + $0x228] sm:$0xff]
  %v673 = vld [vmem:[%s1 + $0x230] sm:$0xf]
  %v674 = vld [vmem:[%s1 + $0x234] sm:$0xff]
  %v675 = vld [vmem:[%s1 + $0x23c] sm:$0xf]
  %v676 = vld [vmem:[%s1 + $0x240] sm:$0xff]
  %v677 = vld [vmem:[%s1 + $0x248] sm:$0xf]
  %v678 = vld [vmem:[%s1 + $0x24c] sm:$0xff]
  %v679 = vld [vmem:[%s1 + $0x254] sm:$0xf]
  %v680 = vld [vmem:[%s1 + $0x258] sm:$0xff]
  %v681 = vld [vmem:[%s1 + $0x260] sm:$0xf]
  %v682 = vld [vmem:[%s1 + $0x264] sm:$0xff]
  %v683 = vld [vmem:[%s1 + $0x26c] sm:$0xf]
  %v684 = vld [vmem:[%s1 + $0x270] sm:$0xff]
  %v685 = vld [vmem:[%s1 + $0x278] sm:$0xf]
  %v686 = vld [vmem:[%s1 + $0x27c] sm:$0xff]
  %v687 = vld [vmem:[%s1 + $0x284] sm:$0xf]
  %v688 = vld [vmem:[%s1 + $0x288] sm:$0xff]
  %v689 = vld [vmem:[%s1 + $0x290] sm:$0xf]
  %v690 = vld [vmem:[%s1 + $0x294] sm:$0xff]
  %v691 = vld [vmem:[%s1 + $0x29c] sm:$0xf]
  %v692 = vld [vmem:[%s1 + $0x2a0] sm:$0xff]
  %v693 = vld [vmem:[%s1 + $0x2a8] sm:$0xf]
  %v694 = vld [vmem:[%s1 + $0x2ac] sm:$0xff]
  %v695 = vld [vmem:[%s1 + $0x2b4] sm:$0xf]
  %v696 = vld [vmem:[%s1 + $0x2b8] sm:$0xff]
  %v697 = vld [vmem:[%s1 + $0x2c0] sm:$0xf]
  %v698 = vld [vmem:[%s1 + $0x2c4] sm:$0xff]
  %v699 = vld [vmem:[%s1 + $0x2cc] sm:$0xf]
  %v700 = vld [vmem:[%s1 + $0x2d0] sm:$0xff]
  %v701 = vld [vmem:[%s1 + $0x2d8] sm:$0xf]
  %v702 = vld [vmem:[%s1 + $0x2dc] sm:$0xff]
  %v703 = vld [vmem:[%s1 + $0x2e4] sm:$0xf]
  %v704 = vld [vmem:[%s1 + $0x2e8] sm:$0xff]
  %v705 = vld [vmem:[%s1 + $0x2f0] sm:$0xf]
  %v706 = vld [vmem:[%s1 + $0x2f4] sm:$0xff]
  %v707 = vld [vmem:[%s1 + $0x2fc] sm:$0xf]
  %v708 = vld [vmem:[%s1 + $0x300] sm:$0xff]
  %v709 = vld [vmem:[%s1 + $0x308] sm:$0xf]
  %v710 = vld [vmem:[%s1 + $0x30c] sm:$0xff]
  %v711 = vld [vmem:[%s1 + $0x314] sm:$0xf]
  %v712 = vld [vmem:[%s1 + $0x318] sm:$0xff]
  %v713 = vld [vmem:[%s1 + $0x320] sm:$0xf]
  %v714 = vld [vmem:[%s1 + $0x324] sm:$0xff]
  %v715 = vld [vmem:[%s1 + $0x32c] sm:$0xf]
  %v716 = vld [vmem:[%s1 + $0x330] sm:$0xff]
  %v717 = vld [vmem:[%s1 + $0x338] sm:$0xf]
  %v718 = vld [vmem:[%s1 + $0x33c] sm:$0xff]
  %v719 = vld [vmem:[%s1 + $0x344] sm:$0xf]
  %v720 = vld [vmem:[%s1 + $0x348] sm:$0xff]
  %v721 = vld [vmem:[%s1 + $0x350] sm:$0xf]
  %v722 = vld [vmem:[%s1 + $0x354] sm:$0xff]
  %v723 = vld [vmem:[%s1 + $0x35c] sm:$0xf]
  %v724 = vld [vmem:[%s1 + $0x360] sm:$0xff]
  %v725 = vld [vmem:[%s1 + $0x368] sm:$0xf]
  %v726 = vld [vmem:[%s1 + $0x36c] sm:$0xff]
  %v727 = vld [vmem:[%s1 + $0x374] sm:$0xf]
  %v728 = vld [vmem:[%s1 + $0x378] sm:$0xff]
  %v729 = vld [vmem:[%s1 + $0x380] sm:$0xf]
  %v730 = vld [vmem:[%s1 + $0x384] sm:$0xff]
  %v731 = vld [vmem:[%s1 + $0x38c] sm:$0xf]
  %v732 = vld [vmem:[%s1 + $0x390] sm:$0xff]
  %v733 = vld [vmem:[%s1 + $0x398] sm:$0xf]
  %v734 = vld [vmem:[%s1 + $0x39c] sm:$0xff]
  %v735 = vld [vmem:[%s1 + $0x3a4] sm:$0xf]
  %v736 = vld [vmem:[%s1 + $0x3a8] sm:$0xff]
  %v737 = vld [vmem:[%s1 + $0x3b0] sm:$0xf]
  %v738 = vld [vmem:[%s1 + $0x3b4] sm:$0xff]
  %v739 = vld [vmem:[%s1 + $0x3bc] sm:$0xf]
  %v740 = vld [vmem:[%s1 + $0x3c0] sm:$0xff]
  %v741 = vld [vmem:[%s1 + $0x3c8] sm:$0xf]
  %v742 = vld [vmem:[%s1 + $0x3cc] sm:$0xff]
  %v743 = vld [vmem:[%s1 + $0x3d4] sm:$0xf]
  %v744 = vld [vmem:[%s1 + $0x3d8] sm:$0xff]
  %v745 = vld [vmem:[%s1 + $0x3e0] sm:$0xf]
  %v746 = vld [vmem:[%s1 + $0x3e4] sm:$0xff]
  %v747 = vld [vmem:[%s1 + $0x3ec] sm:$0xf]
  %v748 = vld [vmem:[%s1 + $0x3f0] sm:$0xff]
  %v749 = vld [vmem:[%s1 + $0x3f8] sm:$0xf]
  %v750 = vld [vmem:[%s1 + $0x3fc] sm:$0xff]
  %v751 = vld [vmem:[%s1 + $0x404] sm:$0xf]
  %v752 = vld [vmem:[%s1 + $0x408] sm:$0xff]
  %v753 = vld [vmem:[%s1 + $0x410] sm:$0xf]
  %v754 = vld [vmem:[%s1 + $0x414] sm:$0xff]
  %v755 = vld [vmem:[%s1 + $0x41c] sm:$0xf]
  %v756 = vld [vmem:[%s1 + $0x420] sm:$0xff]
  %v757 = vld [vmem:[%s1 + $0x428] sm:$0xf]
  %v758 = vld [vmem:[%s1 + $0x42c] sm:$0xff]
  %v759 = vld [vmem:[%s1 + $0x434] sm:$0xf]
  %v760 = vld [vmem:[%s1 + $0x438] sm:$0xff]
  %v761 = vld [vmem:[%s1 + $0x440] sm:$0xf]
  %v762 = vld [vmem:[%s1 + $0x444] sm:$0xff]
  %v763 = vld [vmem:[%s1 + $0x44c] sm:$0xf]
  %v764 = vld [vmem:[%s1 + $0x450] sm:$0xff]
  %v765 = vld [vmem:[%s1 + $0x458] sm:$0xf]
  %v766 = vld [vmem:[%s1 + $0x45c] sm:$0xff]
  %v767 = vld [vmem:[%s1 + $0x464] sm:$0xf]
  %v768 = vld [vmem:[%s1 + $0x468] sm:$0xff]
  %v769 = vld [vmem:[%s1 + $0x470] sm:$0xf]
  %v770 = vld [vmem:[%s1 + $0x474] sm:$0xff]
  %v771 = vld [vmem:[%s1 + $0x47c] sm:$0xf]
  %v772 = vld [vmem:[%s2] sm:$0xff]
  %v773 = vld [vmem:[%s2 + $0x8] sm:$0xff]
  %v774 = vld [vmem:[%s2 + $0x10] sm:$0xff]
  %v775 = vld [vmem:[%s2 + $0x18] sm:$0xff]
  %v776 = vld [vmem:[%s2 + $0x20] sm:$0xff]
  %v777 = vld [vmem:[%s2 + $0x28] sm:$0xff]
  %v778 = vld [vmem:[%s2 + $0x30] sm:$0xff]
  %v779 = vld [vmem:[%s2 + $0x38] sm:$0xff]
  %v780 = vld [vmem:[%s2 + $0x40] sm:$0xff]
  %v781 = vld [vmem:[%s2 + $0x48] sm:$0xff]
  %v782 = vld [vmem:[%s2 + $0x50] sm:$0xff]
  %v783 = vld [vmem:[%s2 + $0x58] sm:$0xff]
  %v784 = vld [vmem:[%s2 + $0x60] sm:$0xff]
  %v785 = vld [vmem:[%s2 + $0x68] sm:$0xff]
  %v786 = vld [vmem:[%s2 + $0x70] sm:$0xff]
  %v787 = vld [vmem:[%s2 + $0x78] sm:$0xff]
  %v788 = vld [vmem:[%s2 + $0x80] sm:$0xff]
  %v789 = vld [vmem:[%s2 + $0x88] sm:$0xff]
  %v790 = vld [vmem:[%s2 + $0x90] sm:$0xff]
  %v791 = vld [vmem:[%s2 + $0x98] sm:$0xff]
  %v792 = vld [vmem:[%s2 + $0xa0] sm:$0xff]
  %v793 = vld [vmem:[%s2 + $0xa8] sm:$0xff]
  %v794 = vld [vmem:[%s2 + $0xb0] sm:$0xff]
  %v795 = vld [vmem:[%s2 + $0xb8] sm:$0xff]
  %v796 = vld [vmem:[%s2 + $0xc0] sm:$0xff]
  %v797 = vld [vmem:[%s2 + $0xc8] sm:$0xff]
  %v798 = vld [vmem:[%s2 + $0xd0] sm:$0xff]
  %v799 = vld [vmem:[%s2 + $0xd8] sm:$0xff]
  %v800 = vld [vmem:[%s2 + $0xe0] sm:$0xff]
  %v801 = vld [vmem:[%s2 + $0xe8] sm:$0xff]
  %v802 = vld [vmem:[%s2 + $0xf0] sm:$0xff]
  %v803 = vld [vmem:[%s2 + $0xf8] sm:$0xff]
  %v804 = vld [vmem:[%s2 + $0x100] sm:$0xff]
  %v805 = vld [vmem:[%s2 + $0x108] sm:$0xff]
  %v806 = vld [vmem:[%s2 + $0x110] sm:$0xff]
  %v807 = vld [vmem:[%s2 + $0x118] sm:$0xff]
  %v808 = vld [vmem:[%s2 + $0x120] sm:$0xff]
  %v809 = vld [vmem:[%s2 + $0x128] sm:$0xff]
  %v810 = vld [vmem:[%s2 + $0x130] sm:$0xff]
  %v811 = vld [vmem:[%s2 + $0x138] sm:$0xff]
  %v812 = vld [vmem:[%s2 + $0x140] sm:$0xff]
  %v813 = vld [vmem:[%s2 + $0x148] sm:$0xff]
  %v814 = vld [vmem:[%s2 + $0x150] sm:$0xff]
  %v815 = vld [vmem:[%s2 + $0x158] sm:$0xff]
  %v816 = vld [vmem:[%s2 + $0x160] sm:$0xff]
  %v817 = vld [vmem:[%s2 + $0x168] sm:$0xff]
  %v818 = vld [vmem:[%s2 + $0x170] sm:$0xff]
  %v819 = vld [vmem:[%s2 + $0x178] sm:$0xff]
  %v820 = vld [vmem:[%s2 + $0x180] sm:$0xff]
  %v821 = vld [vmem:[%s2 + $0x188] sm:$0xff]
  %v822 = vld [vmem:[%s2 + $0x190] sm:$0xff]
  %v823 = vld [vmem:[%s2 + $0x198] sm:$0xff]
  %v824 = vld [vmem:[%s2 + $0x1a0] sm:$0xff]
  %v825 = vld [vmem:[%s2 + $0x1a8] sm:$0xff]
  %v826 = vld [vmem:[%s2 + $0x1b0] sm:$0xff]
  %v827 = vld [vmem:[%s2 + $0x1b8] sm:$0xff]
  %v828 = vld [vmem:[%s2 + $0x1c0] sm:$0xff]
  %v829 = vld [vmem:[%s2 + $0x1c8] sm:$0xff]
  %v830 = vld [vmem:[%s2 + $0x1d0] sm:$0xff]
  %v831 = vld [vmem:[%s2 + $0x1d8] sm:$0xff]
  %v832 = vld [vmem:[%s2 + $0x1e0] sm:$0xff]
  %v833 = vld [vmem:[%s2 + $0x1e8] sm:$0xff]
  %v834 = vld [vmem:[%s2 + $0x1f0] sm:$0xff]
  %v835 = vld [vmem:[%s2 + $0x1f8] sm:$0xff]
  %v836 = vld [vmem:[%s2 + $0x200] sm:$0xff]
  %v837 = vld [vmem:[%s2 + $0x208] sm:$0xff]
  %v838 = vld [vmem:[%s2 + $0x210] sm:$0xff]
  %v839 = vld [vmem:[%s2 + $0x218] sm:$0xff]
  %v840 = vld [vmem:[%s2 + $0x220] sm:$0xff]
  %v841 = vld [vmem:[%s2 + $0x228] sm:$0xff]
  %v842 = vld [vmem:[%s2 + $0x230] sm:$0xff]
  %v843 = vld [vmem:[%s2 + $0x238] sm:$0xff]
  %v844 = vld [vmem:[%s2 + $0x240] sm:$0xff]
  %v845 = vld [vmem:[%s2 + $0x248] sm:$0xff]
  %v846 = vld [vmem:[%s2 + $0x250] sm:$0xff]
  %v847 = vld [vmem:[%s2 + $0x258] sm:$0xff]
  %v848 = vld [vmem:[%s2 + $0x260] sm:$0xff]
  %v849 = vld [vmem:[%s2 + $0x268] sm:$0xff]
  %v850 = vld [vmem:[%s2 + $0x270] sm:$0xff]
  %v851 = vld [vmem:[%s2 + $0x278] sm:$0xff]
  %v852 = vld [vmem:[%s2 + $0x280] sm:$0xff]
  %v853 = vld [vmem:[%s2 + $0x288] sm:$0xff]
  %v854 = vld [vmem:[%s2 + $0x290] sm:$0xff]
  %v855 = vld [vmem:[%s2 + $0x298] sm:$0xff]
  %v856 = vld [vmem:[%s2 + $0x2a0] sm:$0xff]
  %v857 = vld [vmem:[%s2 + $0x2a8] sm:$0xff]
  %v858 = vld [vmem:[%s2 + $0x2b0] sm:$0xff]
  %v859 = vld [vmem:[%s2 + $0x2b8] sm:$0xff]
  %v860 = vld [vmem:[%s2 + $0x2c0] sm:$0xff]
  %v861 = vld [vmem:[%s2 + $0x2c8] sm:$0xff]
  %v862 = vld [vmem:[%s2 + $0x2d0] sm:$0xff]
  %v863 = vld [vmem:[%s2 + $0x2d8] sm:$0xff]
  %v864 = vld [vmem:[%s2 + $0x2e0] sm:$0xff]
  %v865 = vld [vmem:[%s2 + $0x2e8] sm:$0xff]
  %v866 = vld [vmem:[%s2 + $0x2f0] sm:$0xff]
  %v867 = vld [vmem:[%s2 + $0x2f8] sm:$0xff]
  %869 = vset.pattern.permute.xlu0 0
  %870 = vperm.xlu0 %869, %v772
  %v871 = vpop.permute.xlu0 %870
  %874 = vset.pattern.permute.xlu0 0
  %875 = vperm.xlu0 %874, %v773
  %v876 = vpop.permute.xlu0 %875
  %879 = vset.pattern.permute.xlu0 0
  %880 = vperm.xlu0 %879, %v774
  %v881 = vpop.permute.xlu0 %880
  %884 = vset.pattern.permute.xlu0 0
  %885 = vperm.xlu0 %884, %v775
  %v886 = vpop.permute.xlu0 %885
  %889 = vset.pattern.permute.xlu0 0
  %890 = vperm.xlu0 %889, %v776
  %v891 = vpop.permute.xlu0 %890
  %894 = vset.pattern.permute.xlu0 0
  %895 = vperm.xlu0 %894, %v777
  %v896 = vpop.permute.xlu0 %895
  %899 = vset.pattern.permute.xlu0 0
  %900 = vperm.xlu0 %899, %v778
  %v901 = vpop.permute.xlu0 %900
  %904 = vset.pattern.permute.xlu0 0
  %905 = vperm.xlu0 %904, %v779
  %v906 = vpop.permute.xlu0 %905
  %909 = vset.pattern.permute.xlu0 0
  %910 = vperm.xlu0 %909, %v780
  %v911 = vpop.permute.xlu0 %910
  %914 = vset.pattern.permute.xlu0 0
  %915 = vperm.xlu0 %914, %v781
  %v916 = vpop.permute.xlu0 %915
  %919 = vset.pattern.permute.xlu0 0
  %920 = vperm.xlu0 %919, %v782
  %v921 = vpop.permute.xlu0 %920
  %924 = vset.pattern.permute.xlu0 0
  %925 = vperm.xlu0 %924, %v783
  %v926 = vpop.permute.xlu0 %925
  %929 = vset.pattern.permute.xlu0 0
  %930 = vperm.xlu0 %929, %v784
  %v931 = vpop.permute.xlu0 %930
  %934 = vset.pattern.permute.xlu0 0
  %935 = vperm.xlu0 %934, %v785
  %v936 = vpop.permute.xlu0 %935
  %939 = vset.pattern.permute.xlu0 0
  %940 = vperm.xlu0 %939, %v786
  %v941 = vpop.permute.xlu0 %940
  %944 = vset.pattern.permute.xlu0 0
  %945 = vperm.xlu0 %944, %v787
  %v946 = vpop.permute.xlu0 %945
  %949 = vset.pattern.permute.xlu0 0
  %950 = vperm.xlu0 %949, %v788
  %v951 = vpop.permute.xlu0 %950
  %954 = vset.pattern.permute.xlu0 0
  %955 = vperm.xlu0 %954, %v789
  %v956 = vpop.permute.xlu0 %955
  %959 = vset.pattern.permute.xlu0 0
  %960 = vperm.xlu0 %959, %v790
  %v961 = vpop.permute.xlu0 %960
  %964 = vset.pattern.permute.xlu0 0
  %965 = vperm.xlu0 %964, %v791
  %v966 = vpop.permute.xlu0 %965
  %969 = vset.pattern.permute.xlu0 0
  %970 = vperm.xlu0 %969, %v792
  %v971 = vpop.permute.xlu0 %970
  %974 = vset.pattern.permute.xlu0 0
  %975 = vperm.xlu0 %974, %v793
  %v976 = vpop.permute.xlu0 %975
  %979 = vset.pattern.permute.xlu0 0
  %980 = vperm.xlu0 %979, %v794
  %v981 = vpop.permute.xlu0 %980
  %984 = vset.pattern.permute.xlu0 0
  %985 = vperm.xlu0 %984, %v795
  %v986 = vpop.permute.xlu0 %985
  %989 = vset.pattern.permute.xlu0 0
  %990 = vperm.xlu0 %989, %v796
  %v991 = vpop.permute.xlu0 %990
  %994 = vset.pattern.permute.xlu0 0
  %995 = vperm.xlu0 %994, %v797
  %v996 = vpop.permute.xlu0 %995
  %999 = vset.pattern.permute.xlu0 0
  %1000 = vperm.xlu0 %999, %v798
  %v1001 = vpop.permute.xlu0 %1000
  %1004 = vset.pattern.permute.xlu0 0
  %1005 = vperm.xlu0 %1004, %v799
  %v1006 = vpop.permute.xlu0 %1005
  %1009 = vset.pattern.permute.xlu0 0
  %1010 = vperm.xlu0 %1009, %v800
  %v1011 = vpop.permute.xlu0 %1010
  %1014 = vset.pattern.permute.xlu0 0
  %1015 = vperm.xlu0 %1014, %v801
  %v1016 = vpop.permute.xlu0 %1015
  %1019 = vset.pattern.permute.xlu0 0
  %1020 = vperm.xlu0 %1019, %v802
  %v1021 = vpop.permute.xlu0 %1020
  %1024 = vset.pattern.permute.xlu0 0
  %1025 = vperm.xlu0 %1024, %v803
  %v1026 = vpop.permute.xlu0 %1025
  %1029 = vset.pattern.permute.xlu0 0
  %1030 = vperm.xlu0 %1029, %v804
  %v1031 = vpop.permute.xlu0 %1030
  %1034 = vset.pattern.permute.xlu0 0
  %1035 = vperm.xlu0 %1034, %v805
  %v1036 = vpop.permute.xlu0 %1035
  %1039 = vset.pattern.permute.xlu0 0
  %1040 = vperm.xlu0 %1039, %v806
  %v1041 = vpop.permute.xlu0 %1040
  %1044 = vset.pattern.permute.xlu0 0
  %1045 = vperm.xlu0 %1044, %v807
  %v1046 = vpop.permute.xlu0 %1045
  %1049 = vset.pattern.permute.xlu0 0
  %1050 = vperm.xlu0 %1049, %v808
  %v1051 = vpop.permute.xlu0 %1050
  %1054 = vset.pattern.permute.xlu0 0
  %1055 = vperm.xlu0 %1054, %v809
  %v1056 = vpop.permute.xlu0 %1055
  %1059 = vset.pattern.permute.xlu0 0
  %1060 = vperm.xlu0 %1059, %v810
  %v1061 = vpop.permute.xlu0 %1060
  %1064 = vset.pattern.permute.xlu0 0
  %1065 = vperm.xlu0 %1064, %v811
  %v1066 = vpop.permute.xlu0 %1065
  %1069 = vset.pattern.permute.xlu0 0
  %1070 = vperm.xlu0 %1069, %v812
  %v1071 = vpop.permute.xlu0 %1070
  %1074 = vset.pattern.permute.xlu0 0
  %1075 = vperm.xlu0 %1074, %v813
  %v1076 = vpop.permute.xlu0 %1075
  %1079 = vset.pattern.permute.xlu0 0
  %1080 = vperm.xlu0 %1079, %v814
  %v1081 = vpop.permute.xlu0 %1080
  %1084 = vset.pattern.permute.xlu0 0
  %1085 = vperm.xlu0 %1084, %v815
  %v1086 = vpop.permute.xlu0 %1085
  %1089 = vset.pattern.permute.xlu0 0
  %1090 = vperm.xlu0 %1089, %v816
  %v1091 = vpop.permute.xlu0 %1090
  %1094 = vset.pattern.permute.xlu0 0
  %1095 = vperm.xlu0 %1094, %v817
  %v1096 = vpop.permute.xlu0 %1095
  %1099 = vset.pattern.permute.xlu0 0
  %1100 = vperm.xlu0 %1099, %v818
  %v1101 = vpop.permute.xlu0 %1100
  %1104 = vset.pattern.permute.xlu0 0
  %1105 = vperm.xlu0 %1104, %v819
  %v1106 = vpop.permute.xlu0 %1105
  %1109 = vset.pattern.permute.xlu0 0
  %1110 = vperm.xlu0 %1109, %v820
  %v1111 = vpop.permute.xlu0 %1110
  %1114 = vset.pattern.permute.xlu0 0
  %1115 = vperm.xlu0 %1114, %v821
  %v1116 = vpop.permute.xlu0 %1115
  %1119 = vset.pattern.permute.xlu0 0
  %1120 = vperm.xlu0 %1119, %v822
  %v1121 = vpop.permute.xlu0 %1120
  %1124 = vset.pattern.permute.xlu0 0
  %1125 = vperm.xlu0 %1124, %v823
  %v1126 = vpop.permute.xlu0 %1125
  %1129 = vset.pattern.permute.xlu0 0
  %1130 = vperm.xlu0 %1129, %v824
  %v1131 = vpop.permute.xlu0 %1130
  %1134 = vset.pattern.permute.xlu0 0
  %1135 = vperm.xlu0 %1134, %v825
  %v1136 = vpop.permute.xlu0 %1135
  %1139 = vset.pattern.permute.xlu0 0
  %1140 = vperm.xlu0 %1139, %v826
  %v1141 = vpop.permute.xlu0 %1140
  %1144 = vset.pattern.permute.xlu0 0
  %1145 = vperm.xlu0 %1144, %v827
  %v1146 = vpop.permute.xlu0 %1145
  %1149 = vset.pattern.permute.xlu0 0
  %1150 = vperm.xlu0 %1149, %v828
  %v1151 = vpop.permute.xlu0 %1150
  %1154 = vset.pattern.permute.xlu0 0
  %1155 = vperm.xlu0 %1154, %v829
  %v1156 = vpop.permute.xlu0 %1155
  %1159 = vset.pattern.permute.xlu0 0
  %1160 = vperm.xlu0 %1159, %v830
  %v1161 = vpop.permute.xlu0 %1160
  %1164 = vset.pattern.permute.xlu0 0
  %1165 = vperm.xlu0 %1164, %v831
  %v1166 = vpop.permute.xlu0 %1165
  %1169 = vset.pattern.permute.xlu0 0
  %1170 = vperm.xlu0 %1169, %v832
  %v1171 = vpop.permute.xlu0 %1170
  %1174 = vset.pattern.permute.xlu0 0
  %1175 = vperm.xlu0 %1174, %v833
  %v1176 = vpop.permute.xlu0 %1175
  %1179 = vset.pattern.permute.xlu0 0
  %1180 = vperm.xlu0 %1179, %v834
  %v1181 = vpop.permute.xlu0 %1180
  %1184 = vset.pattern.permute.xlu0 0
  %1185 = vperm.xlu0 %1184, %v835
  %v1186 = vpop.permute.xlu0 %1185
  %1189 = vset.pattern.permute.xlu0 0
  %1190 = vperm.xlu0 %1189, %v836
  %v1191 = vpop.permute.xlu0 %1190
  %1194 = vset.pattern.permute.xlu0 0
  %1195 = vperm.xlu0 %1194, %v837
  %v1196 = vpop.permute.xlu0 %1195
  %1199 = vset.pattern.permute.xlu0 0
  %1200 = vperm.xlu0 %1199, %v838
  %v1201 = vpop.permute.xlu0 %1200
  %1204 = vset.pattern.permute.xlu0 0
  %1205 = vperm.xlu0 %1204, %v839
  %v1206 = vpop.permute.xlu0 %1205
  %1209 = vset.pattern.permute.xlu0 0
  %1210 = vperm.xlu0 %1209, %v840
  %v1211 = vpop.permute.xlu0 %1210
  %1214 = vset.pattern.permute.xlu0 0
  %1215 = vperm.xlu0 %1214, %v841
  %v1216 = vpop.permute.xlu0 %1215
  %1219 = vset.pattern.permute.xlu0 0
  %1220 = vperm.xlu0 %1219, %v842
  %v1221 = vpop.permute.xlu0 %1220
  %1224 = vset.pattern.permute.xlu0 0
  %1225 = vperm.xlu0 %1224, %v843
  %v1226 = vpop.permute.xlu0 %1225
  %1229 = vset.pattern.permute.xlu0 0
  %1230 = vperm.xlu0 %1229, %v844
  %v1231 = vpop.permute.xlu0 %1230
  %1234 = vset.pattern.permute.xlu0 0
  %1235 = vperm.xlu0 %1234, %v845
  %v1236 = vpop.permute.xlu0 %1235
  %1239 = vset.pattern.permute.xlu0 0
  %1240 = vperm.xlu0 %1239, %v846
  %v1241 = vpop.permute.xlu0 %1240
  %1244 = vset.pattern.permute.xlu0 0
  %1245 = vperm.xlu0 %1244, %v847
  %v1246 = vpop.permute.xlu0 %1245
  %1249 = vset.pattern.permute.xlu0 0
  %1250 = vperm.xlu0 %1249, %v848
  %v1251 = vpop.permute.xlu0 %1250
  %1254 = vset.pattern.permute.xlu0 0
  %1255 = vperm.xlu0 %1254, %v849
  %v1256 = vpop.permute.xlu0 %1255
  %1259 = vset.pattern.permute.xlu0 0
  %1260 = vperm.xlu0 %1259, %v850
  %v1261 = vpop.permute.xlu0 %1260
  %1264 = vset.pattern.permute.xlu0 0
  %1265 = vperm.xlu0 %1264, %v851
  %v1266 = vpop.permute.xlu0 %1265
  %1269 = vset.pattern.permute.xlu0 0
  %1270 = vperm.xlu0 %1269, %v852
  %v1271 = vpop.permute.xlu0 %1270
  %1274 = vset.pattern.permute.xlu0 0
  %1275 = vperm.xlu0 %1274, %v853
  %v1276 = vpop.permute.xlu0 %1275
  %1279 = vset.pattern.permute.xlu0 0
  %1280 = vperm.xlu0 %1279, %v854
  %v1281 = vpop.permute.xlu0 %1280
  %1284 = vset.pattern.permute.xlu0 0
  %1285 = vperm.xlu0 %1284, %v855
  %v1286 = vpop.permute.xlu0 %1285
  %1289 = vset.pattern.permute.xlu0 0
  %1290 = vperm.xlu0 %1289, %v856
  %v1291 = vpop.permute.xlu0 %1290
  %1294 = vset.pattern.permute.xlu0 0
  %1295 = vperm.xlu0 %1294, %v857
  %v1296 = vpop.permute.xlu0 %1295
  %1299 = vset.pattern.permute.xlu0 0
  %1300 = vperm.xlu0 %1299, %v858
  %v1301 = vpop.permute.xlu0 %1300
  %1304 = vset.pattern.permute.xlu0 0
  %1305 = vperm.xlu0 %1304, %v859
  %v1306 = vpop.permute.xlu0 %1305
  %1309 = vset.pattern.permute.xlu0 0
  %1310 = vperm.xlu0 %1309, %v860
  %v1311 = vpop.permute.xlu0 %1310
  %1314 = vset.pattern.permute.xlu0 0
  %1315 = vperm.xlu0 %1314, %v861
  %v1316 = vpop.permute.xlu0 %1315
  %1319 = vset.pattern.permute.xlu0 0
  %1320 = vperm.xlu0 %1319, %v862
  %v1321 = vpop.permute.xlu0 %1320
  %1324 = vset.pattern.permute.xlu0 0
  %1325 = vperm.xlu0 %1324, %v863
  %v1326 = vpop.permute.xlu0 %1325
  %1329 = vset.pattern.permute.xlu0 0
  %1330 = vperm.xlu0 %1329, %v864
  %v1331 = vpop.permute.xlu0 %1330
  %1334 = vset.pattern.permute.xlu0 0
  %1335 = vperm.xlu0 %1334, %v865
  %v1336 = vpop.permute.xlu0 %1335
  %1339 = vset.pattern.permute.xlu0 0
  %1340 = vperm.xlu0 %1339, %v866
  %v1341 = vpop.permute.xlu0 %1340
  %1344 = vset.pattern.permute.xlu0 0
  %1345 = vperm.xlu0 %1344, %v867
  %v1346 = vpop.permute.xlu0 %1345
  %v1540 = vunpack.c.l.b16 %v580
  %v1541 = vunpack.c.h.b16 %v580
  %v1542 = vunpack.c.l.b16 %v581
  %v1543 = vunpack.c.l.b16 %v582
  %v1544 = vunpack.c.h.b16 %v582
  %v1545 = vunpack.c.l.b16 %v583
  %v1546 = vunpack.c.l.b16 %v584
  %v1547 = vunpack.c.h.b16 %v584
  %v1548 = vunpack.c.l.b16 %v585
  %v1549 = vunpack.c.l.b16 %v586
  %v1550 = vunpack.c.h.b16 %v586
  %v1551 = vunpack.c.l.b16 %v587
  %v1552 = vunpack.c.l.b16 %v588
  %v1553 = vunpack.c.h.b16 %v588
  %v1554 = vunpack.c.l.b16 %v589
  %v1555 = vunpack.c.l.b16 %v590
  %v1556 = vunpack.c.h.b16 %v590
  %v1557 = vunpack.c.l.b16 %v591
  %v1558 = vunpack.c.l.b16 %v592
  %v1559 = vunpack.c.h.b16 %v592
  %v1560 = vunpack.c.l.b16 %v593
  %v1561 = vunpack.c.l.b16 %v594
  %v1562 = vunpack.c.h.b16 %v594
  %v1563 = vunpack.c.l.b16 %v595
  %v1564 = vunpack.c.l.b16 %v596
  %v1565 = vunpack.c.h.b16 %v596
  %v1566 = vunpack.c.l.b16 %v597
  %v1567 = vunpack.c.l.b16 %v598
  %v1568 = vunpack.c.h.b16 %v598
  %v1569 = vunpack.c.l.b16 %v599
  %v1570 = vunpack.c.l.b16 %v600
  %v1571 = vunpack.c.h.b16 %v600
  %v1572 = vunpack.c.l.b16 %v601
  %v1573 = vunpack.c.l.b16 %v602
  %v1574 = vunpack.c.h.b16 %v602
  %v1575 = vunpack.c.l.b16 %v603
  %v1576 = vunpack.c.l.b16 %v604
  %v1577 = vunpack.c.h.b16 %v604
  %v1578 = vunpack.c.l.b16 %v605
  %v1579 = vunpack.c.l.b16 %v606
  %v1580 = vunpack.c.h.b16 %v606
  %v1581 = vunpack.c.l.b16 %v607
  %v1582 = vunpack.c.l.b16 %v608
  %v1583 = vunpack.c.h.b16 %v608
  %v1584 = vunpack.c.l.b16 %v609
  %v1585 = vunpack.c.l.b16 %v610
  %v1586 = vunpack.c.h.b16 %v610
  %v1587 = vunpack.c.l.b16 %v611
  %v1588 = vunpack.c.l.b16 %v612
  %v1589 = vunpack.c.h.b16 %v612
  %v1590 = vunpack.c.l.b16 %v613
  %v1591 = vunpack.c.l.b16 %v614
  %v1592 = vunpack.c.h.b16 %v614
  %v1593 = vunpack.c.l.b16 %v615
  %v1594 = vunpack.c.l.b16 %v616
  %v1595 = vunpack.c.h.b16 %v616
  %v1596 = vunpack.c.l.b16 %v617
  %v1597 = vunpack.c.l.b16 %v618
  %v1598 = vunpack.c.h.b16 %v618
  %v1599 = vunpack.c.l.b16 %v619
  %v1600 = vunpack.c.l.b16 %v620
  %v1601 = vunpack.c.h.b16 %v620
  %v1602 = vunpack.c.l.b16 %v621
  %v1603 = vunpack.c.l.b16 %v622
  %v1604 = vunpack.c.h.b16 %v622
  %v1605 = vunpack.c.l.b16 %v623
  %v1606 = vunpack.c.l.b16 %v624
  %v1607 = vunpack.c.h.b16 %v624
  %v1608 = vunpack.c.l.b16 %v625
  %v1609 = vunpack.c.l.b16 %v626
  %v1610 = vunpack.c.h.b16 %v626
  %v1611 = vunpack.c.l.b16 %v627
  %v1612 = vunpack.c.l.b16 %v628
  %v1613 = vunpack.c.h.b16 %v628
  %v1614 = vunpack.c.l.b16 %v629
  %v1615 = vunpack.c.l.b16 %v630
  %v1616 = vunpack.c.h.b16 %v630
  %v1617 = vunpack.c.l.b16 %v631
  %v1618 = vunpack.c.l.b16 %v632
  %v1619 = vunpack.c.h.b16 %v632
  %v1620 = vunpack.c.l.b16 %v633
  %v1621 = vunpack.c.l.b16 %v634
  %v1622 = vunpack.c.h.b16 %v634
  %v1623 = vunpack.c.l.b16 %v635
  %v1624 = vunpack.c.l.b16 %v636
  %v1625 = vunpack.c.h.b16 %v636
  %v1626 = vunpack.c.l.b16 %v637
  %v1627 = vunpack.c.l.b16 %v638
  %v1628 = vunpack.c.h.b16 %v638
  %v1629 = vunpack.c.l.b16 %v639
  %v1630 = vunpack.c.l.b16 %v640
  %v1631 = vunpack.c.h.b16 %v640
  %v1632 = vunpack.c.l.b16 %v641
  %v1633 = vunpack.c.l.b16 %v642
  %v1634 = vunpack.c.h.b16 %v642
  %v1635 = vunpack.c.l.b16 %v643
  %v1636 = vunpack.c.l.b16 %v644
  %v1637 = vunpack.c.h.b16 %v644
  %v1638 = vunpack.c.l.b16 %v645
  %v1639 = vunpack.c.l.b16 %v646
  %v1640 = vunpack.c.h.b16 %v646
  %v1641 = vunpack.c.l.b16 %v647
  %v1642 = vunpack.c.l.b16 %v648
  %v1643 = vunpack.c.h.b16 %v648
  %v1644 = vunpack.c.l.b16 %v649
  %v1645 = vunpack.c.l.b16 %v650
  %v1646 = vunpack.c.h.b16 %v650
  %v1647 = vunpack.c.l.b16 %v651
  %v1648 = vunpack.c.l.b16 %v652
  %v1649 = vunpack.c.h.b16 %v652
  %v1650 = vunpack.c.l.b16 %v653
  %v1651 = vunpack.c.l.b16 %v654
  %v1652 = vunpack.c.h.b16 %v654
  %v1653 = vunpack.c.l.b16 %v655
  %v1654 = vunpack.c.l.b16 %v656
  %v1655 = vunpack.c.h.b16 %v656
  %v1656 = vunpack.c.l.b16 %v657
  %v1657 = vunpack.c.l.b16 %v658
  %v1658 = vunpack.c.h.b16 %v658
  %v1659 = vunpack.c.l.b16 %v659
  %v1660 = vunpack.c.l.b16 %v660
  %v1661 = vunpack.c.h.b16 %v660
  %v1662 = vunpack.c.l.b16 %v661
  %v1663 = vunpack.c.l.b16 %v662
  %v1664 = vunpack.c.h.b16 %v662
  %v1665 = vunpack.c.l.b16 %v663
  %v1666 = vunpack.c.l.b16 %v664
  %v1667 = vunpack.c.h.b16 %v664
  %v1668 = vunpack.c.l.b16 %v665
  %v1669 = vunpack.c.l.b16 %v666
  %v1670 = vunpack.c.h.b16 %v666
  %v1671 = vunpack.c.l.b16 %v667
  %v1672 = vunpack.c.l.b16 %v668
  %v1673 = vunpack.c.h.b16 %v668
  %v1674 = vunpack.c.l.b16 %v669
  %v1675 = vunpack.c.l.b16 %v670
  %v1676 = vunpack.c.h.b16 %v670
  %v1677 = vunpack.c.l.b16 %v671
  %v1678 = vunpack.c.l.b16 %v672
  %v1679 = vunpack.c.h.b16 %v672
  %v1680 = vunpack.c.l.b16 %v673
  %v1681 = vunpack.c.l.b16 %v674
  %v1682 = vunpack.c.h.b16 %v674
  %v1683 = vunpack.c.l.b16 %v675
  %v1684 = vunpack.c.l.b16 %v676
  %v1685 = vunpack.c.h.b16 %v676
  %v1686 = vunpack.c.l.b16 %v677
  %v1687 = vunpack.c.l.b16 %v678
  %v1688 = vunpack.c.h.b16 %v678
  %v1689 = vunpack.c.l.b16 %v679
  %v1690 = vunpack.c.l.b16 %v680
  %v1691 = vunpack.c.h.b16 %v680
  %v1692 = vunpack.c.l.b16 %v681
  %v1693 = vunpack.c.l.b16 %v682
  %v1694 = vunpack.c.h.b16 %v682
  %v1695 = vunpack.c.l.b16 %v683
  %v1696 = vunpack.c.l.b16 %v684
  %v1697 = vunpack.c.h.b16 %v684
  %v1698 = vunpack.c.l.b16 %v685
  %v1699 = vunpack.c.l.b16 %v686
  %v1700 = vunpack.c.h.b16 %v686
  %v1701 = vunpack.c.l.b16 %v687
  %v1702 = vunpack.c.l.b16 %v688
  %v1703 = vunpack.c.h.b16 %v688
  %v1704 = vunpack.c.l.b16 %v689
  %v1705 = vunpack.c.l.b16 %v690
  %v1706 = vunpack.c.h.b16 %v690
  %v1707 = vunpack.c.l.b16 %v691
  %v1708 = vunpack.c.l.b16 %v692
  %v1709 = vunpack.c.h.b16 %v692
  %v1710 = vunpack.c.l.b16 %v693
  %v1711 = vunpack.c.l.b16 %v694
  %v1712 = vunpack.c.h.b16 %v694
  %v1713 = vunpack.c.l.b16 %v695
  %v1714 = vunpack.c.l.b16 %v696
  %v1715 = vunpack.c.h.b16 %v696
  %v1716 = vunpack.c.l.b16 %v697
  %v1717 = vunpack.c.l.b16 %v698
  %v1718 = vunpack.c.h.b16 %v698
  %v1719 = vunpack.c.l.b16 %v699
  %v1720 = vunpack.c.l.b16 %v700
  %v1721 = vunpack.c.h.b16 %v700
  %v1722 = vunpack.c.l.b16 %v701
  %v1723 = vunpack.c.l.b16 %v702
  %v1724 = vunpack.c.h.b16 %v702
  %v1725 = vunpack.c.l.b16 %v703
  %v1726 = vunpack.c.l.b16 %v704
  %v1727 = vunpack.c.h.b16 %v704
  %v1728 = vunpack.c.l.b16 %v705
  %v1729 = vunpack.c.l.b16 %v706
  %v1730 = vunpack.c.h.b16 %v706
  %v1731 = vunpack.c.l.b16 %v707
  %v1732 = vunpack.c.l.b16 %v708
  %v1733 = vunpack.c.h.b16 %v708
  %v1734 = vunpack.c.l.b16 %v709
  %v1735 = vunpack.c.l.b16 %v710
  %v1736 = vunpack.c.h.b16 %v710
  %v1737 = vunpack.c.l.b16 %v711
  %v1738 = vunpack.c.l.b16 %v712
  %v1739 = vunpack.c.h.b16 %v712
  %v1740 = vunpack.c.l.b16 %v713
  %v1741 = vunpack.c.l.b16 %v714
  %v1742 = vunpack.c.h.b16 %v714
  %v1743 = vunpack.c.l.b16 %v715
  %v1744 = vunpack.c.l.b16 %v716
  %v1745 = vunpack.c.h.b16 %v716
  %v1746 = vunpack.c.l.b16 %v717
  %v1747 = vunpack.c.l.b16 %v718
  %v1748 = vunpack.c.h.b16 %v718
  %v1749 = vunpack.c.l.b16 %v719
  %v1750 = vunpack.c.l.b16 %v720
  %v1751 = vunpack.c.h.b16 %v720
  %v1752 = vunpack.c.l.b16 %v721
  %v1753 = vunpack.c.l.b16 %v722
  %v1754 = vunpack.c.h.b16 %v722
  %v1755 = vunpack.c.l.b16 %v723
  %v1756 = vunpack.c.l.b16 %v724
  %v1757 = vunpack.c.h.b16 %v724
  %v1758 = vunpack.c.l.b16 %v725
  %v1759 = vunpack.c.l.b16 %v726
  %v1760 = vunpack.c.h.b16 %v726
  %v1761 = vunpack.c.l.b16 %v727
  %v1762 = vunpack.c.l.b16 %v728
  %v1763 = vunpack.c.h.b16 %v728
  %v1764 = vunpack.c.l.b16 %v729
  %v1765 = vunpack.c.l.b16 %v730
  %v1766 = vunpack.c.h.b16 %v730
  %v1767 = vunpack.c.l.b16 %v731
  %v1768 = vunpack.c.l.b16 %v732
  %v1769 = vunpack.c.h.b16 %v732
  %v1770 = vunpack.c.l.b16 %v733
  %v1771 = vunpack.c.l.b16 %v734
  %v1772 = vunpack.c.h.b16 %v734
  %v1773 = vunpack.c.l.b16 %v735
  %v1774 = vunpack.c.l.b16 %v736
  %v1775 = vunpack.c.h.b16 %v736
  %v1776 = vunpack.c.l.b16 %v737
  %v1777 = vunpack.c.l.b16 %v738
  %v1778 = vunpack.c.h.b16 %v738
  %v1779 = vunpack.c.l.b16 %v739
  %v1780 = vunpack.c.l.b16 %v740
  %v1781 = vunpack.c.h.b16 %v740
  %v1782 = vunpack.c.l.b16 %v741
  %v1783 = vunpack.c.l.b16 %v742
  %v1784 = vunpack.c.h.b16 %v742
  %v1785 = vunpack.c.l.b16 %v743
  %v1786 = vunpack.c.l.b16 %v744
  %v1787 = vunpack.c.h.b16 %v744
  %v1788 = vunpack.c.l.b16 %v745
  %v1789 = vunpack.c.l.b16 %v746
  %v1790 = vunpack.c.h.b16 %v746
  %v1791 = vunpack.c.l.b16 %v747
  %v1792 = vunpack.c.l.b16 %v748
  %v1793 = vunpack.c.h.b16 %v748
  %v1794 = vunpack.c.l.b16 %v749
  %v1795 = vunpack.c.l.b16 %v750
  %v1796 = vunpack.c.h.b16 %v750
  %v1797 = vunpack.c.l.b16 %v751
  %v1798 = vunpack.c.l.b16 %v752
  %v1799 = vunpack.c.h.b16 %v752
  %v1800 = vunpack.c.l.b16 %v753
  %v1801 = vunpack.c.l.b16 %v754
  %v1802 = vunpack.c.h.b16 %v754
  %v1803 = vunpack.c.l.b16 %v755
  %v1804 = vunpack.c.l.b16 %v756
  %v1805 = vunpack.c.h.b16 %v756
  %v1806 = vunpack.c.l.b16 %v757
  %v1807 = vunpack.c.l.b16 %v758
  %v1808 = vunpack.c.h.b16 %v758
  %v1809 = vunpack.c.l.b16 %v759
  %v1810 = vunpack.c.l.b16 %v760
  %v1811 = vunpack.c.h.b16 %v760
  %v1812 = vunpack.c.l.b16 %v761
  %v1813 = vunpack.c.l.b16 %v762
  %v1814 = vunpack.c.h.b16 %v762
  %v1815 = vunpack.c.l.b16 %v763
  %v1816 = vunpack.c.l.b16 %v764
  %v1817 = vunpack.c.h.b16 %v764
  %v1818 = vunpack.c.l.b16 %v765
  %v1819 = vunpack.c.l.b16 %v766
  %v1820 = vunpack.c.h.b16 %v766
  %v1821 = vunpack.c.l.b16 %v767
  %v1822 = vunpack.c.l.b16 %v768
  %v1823 = vunpack.c.h.b16 %v768
  %v1824 = vunpack.c.l.b16 %v769
  %v1825 = vunpack.c.l.b16 %v770
  %v1826 = vunpack.c.h.b16 %v770
  %v1827 = vunpack.c.l.b16 %v771
  %v1828 = vpack.c.b16 %v1543, %v1540
  %v1829 = vpack.c.b16 %v1544, %v1541
  %v1830 = vpack.c.b16 %v1545, %v1542
  %v1831 = vpack.c.b16 %v1549, %v1546
  %v1832 = vpack.c.b16 %v1550, %v1547
  %v1833 = vpack.c.b16 %v1551, %v1548
  %v1834 = vpack.c.b16 %v1555, %v1552
  %v1835 = vpack.c.b16 %v1556, %v1553
  %v1836 = vpack.c.b16 %v1557, %v1554
  %v1837 = vpack.c.b16 %v1561, %v1558
  %v1838 = vpack.c.b16 %v1562, %v1559
  %v1839 = vpack.c.b16 %v1563, %v1560
  %v1840 = vpack.c.b16 %v1567, %v1564
  %v1841 = vpack.c.b16 %v1568, %v1565
  %v1842 = vpack.c.b16 %v1569, %v1566
  %v1843 = vpack.c.b16 %v1573, %v1570
  %v1844 = vpack.c.b16 %v1574, %v1571
  %v1845 = vpack.c.b16 %v1575, %v1572
  %v1846 = vpack.c.b16 %v1579, %v1576
  %v1847 = vpack.c.b16 %v1580, %v1577
  %v1848 = vpack.c.b16 %v1581, %v1578
  %v1849 = vpack.c.b16 %v1585, %v1582
  %v1850 = vpack.c.b16 %v1586, %v1583
  %v1851 = vpack.c.b16 %v1587, %v1584
  %v1852 = vpack.c.b16 %v1591, %v1588
  %v1853 = vpack.c.b16 %v1592, %v1589
  %v1854 = vpack.c.b16 %v1593, %v1590
  %v1855 = vpack.c.b16 %v1597, %v1594
  %v1856 = vpack.c.b16 %v1598, %v1595
  %v1857 = vpack.c.b16 %v1599, %v1596
  %v1858 = vpack.c.b16 %v1603, %v1600
  %v1859 = vpack.c.b16 %v1604, %v1601
  %v1860 = vpack.c.b16 %v1605, %v1602
  %v1861 = vpack.c.b16 %v1609, %v1606
  %v1862 = vpack.c.b16 %v1610, %v1607
  %v1863 = vpack.c.b16 %v1611, %v1608
  %v1864 = vpack.c.b16 %v1615, %v1612
  %v1865 = vpack.c.b16 %v1616, %v1613
  %v1866 = vpack.c.b16 %v1617, %v1614
  %v1867 = vpack.c.b16 %v1621, %v1618
  %v1868 = vpack.c.b16 %v1622, %v1619
  %v1869 = vpack.c.b16 %v1623, %v1620
  %v1870 = vpack.c.b16 %v1627, %v1624
  %v1871 = vpack.c.b16 %v1628, %v1625
  %v1872 = vpack.c.b16 %v1629, %v1626
  %v1873 = vpack.c.b16 %v1633, %v1630
  %v1874 = vpack.c.b16 %v1634, %v1631
  %v1875 = vpack.c.b16 %v1635, %v1632
  %v1876 = vpack.c.b16 %v1639, %v1636
  %v1877 = vpack.c.b16 %v1640, %v1637
  %v1878 = vpack.c.b16 %v1641, %v1638
  %v1879 = vpack.c.b16 %v1645, %v1642
  %v1880 = vpack.c.b16 %v1646, %v1643
  %v1881 = vpack.c.b16 %v1647, %v1644
  %v1882 = vpack.c.b16 %v1651, %v1648
  %v1883 = vpack.c.b16 %v1652, %v1649
  %v1884 = vpack.c.b16 %v1653, %v1650
  %v1885 = vpack.c.b16 %v1657, %v1654
  %v1886 = vpack.c.b16 %v1658, %v1655
  %v1887 = vpack.c.b16 %v1659, %v1656
  %v1888 = vpack.c.b16 %v1663, %v1660
  %v1889 = vpack.c.b16 %v1664, %v1661
  %v1890 = vpack.c.b16 %v1665, %v1662
  %v1891 = vpack.c.b16 %v1669, %v1666
  %v1892 = vpack.c.b16 %v1670, %v1667
  %v1893 = vpack.c.b16 %v1671, %v1668
  %v1894 = vpack.c.b16 %v1675, %v1672
  %v1895 = vpack.c.b16 %v1676, %v1673
  %v1896 = vpack.c.b16 %v1677, %v1674
  %v1897 = vpack.c.b16 %v1681, %v1678
  %v1898 = vpack.c.b16 %v1682, %v1679
  %v1899 = vpack.c.b16 %v1683, %v1680
  %v1900 = vpack.c.b16 %v1687, %v1684
  %v1901 = vpack.c.b16 %v1688, %v1685
  %v1902 = vpack.c.b16 %v1689, %v1686
  %v1903 = vpack.c.b16 %v1693, %v1690
  %v1904 = vpack.c.b16 %v1694, %v1691
  %v1905 = vpack.c.b16 %v1695, %v1692
  %v1906 = vpack.c.b16 %v1699, %v1696
  %v1907 = vpack.c.b16 %v1700, %v1697
  %v1908 = vpack.c.b16 %v1701, %v1698
  %v1909 = vpack.c.b16 %v1705, %v1702
  %v1910 = vpack.c.b16 %v1706, %v1703
  %v1911 = vpack.c.b16 %v1707, %v1704
  %v1912 = vpack.c.b16 %v1711, %v1708
  %v1913 = vpack.c.b16 %v1712, %v1709
  %v1914 = vpack.c.b16 %v1713, %v1710
  %v1915 = vpack.c.b16 %v1717, %v1714
  %v1916 = vpack.c.b16 %v1718, %v1715
  %v1917 = vpack.c.b16 %v1719, %v1716
  %v1918 = vpack.c.b16 %v1723, %v1720
  %v1919 = vpack.c.b16 %v1724, %v1721
  %v1920 = vpack.c.b16 %v1725, %v1722
  %v1921 = vpack.c.b16 %v1729, %v1726
  %v1922 = vpack.c.b16 %v1730, %v1727
  %v1923 = vpack.c.b16 %v1731, %v1728
  %v1924 = vpack.c.b16 %v1735, %v1732
  %v1925 = vpack.c.b16 %v1736, %v1733
  %v1926 = vpack.c.b16 %v1737, %v1734
  %v1927 = vpack.c.b16 %v1741, %v1738
  %v1928 = vpack.c.b16 %v1742, %v1739
  %v1929 = vpack.c.b16 %v1743, %v1740
  %v1930 = vpack.c.b16 %v1747, %v1744
  %v1931 = vpack.c.b16 %v1748, %v1745
  %v1932 = vpack.c.b16 %v1749, %v1746
  %v1933 = vpack.c.b16 %v1753, %v1750
  %v1934 = vpack.c.b16 %v1754, %v1751
  %v1935 = vpack.c.b16 %v1755, %v1752
  %v1936 = vpack.c.b16 %v1759, %v1756
  %v1937 = vpack.c.b16 %v1760, %v1757
  %v1938 = vpack.c.b16 %v1761, %v1758
  %v1939 = vpack.c.b16 %v1765, %v1762
  %v1940 = vpack.c.b16 %v1766, %v1763
  %v1941 = vpack.c.b16 %v1767, %v1764
  %v1942 = vpack.c.b16 %v1771, %v1768
  %v1943 = vpack.c.b16 %v1772, %v1769
  %v1944 = vpack.c.b16 %v1773, %v1770
  %v1945 = vpack.c.b16 %v1777, %v1774
  %v1946 = vpack.c.b16 %v1778, %v1775
  %v1947 = vpack.c.b16 %v1779, %v1776
  %v1948 = vpack.c.b16 %v1783, %v1780
  %v1949 = vpack.c.b16 %v1784, %v1781
  %v1950 = vpack.c.b16 %v1785, %v1782
  %v1951 = vpack.c.b16 %v1789, %v1786
  %v1952 = vpack.c.b16 %v1790, %v1787
  %v1953 = vpack.c.b16 %v1791, %v1788
  %v1954 = vpack.c.b16 %v1795, %v1792
  %v1955 = vpack.c.b16 %v1796, %v1793
  %v1956 = vpack.c.b16 %v1797, %v1794
  %v1957 = vpack.c.b16 %v1801, %v1798
  %v1958 = vpack.c.b16 %v1802, %v1799
  %v1959 = vpack.c.b16 %v1803, %v1800
  %v1960 = vpack.c.b16 %v1807, %v1804
  %v1961 = vpack.c.b16 %v1808, %v1805
  %v1962 = vpack.c.b16 %v1809, %v1806
  %v1963 = vpack.c.b16 %v1813, %v1810
  %v1964 = vpack.c.b16 %v1814, %v1811
  %v1965 = vpack.c.b16 %v1815, %v1812
  %v1966 = vpack.c.b16 %v1819, %v1816
  %v1967 = vpack.c.b16 %v1820, %v1817
  %v1968 = vpack.c.b16 %v1821, %v1818
  %v1969 = vpack.c.b16 %v1825, %v1822
  %v1970 = vpack.c.b16 %v1826, %v1823
  %v1971 = vpack.c.b16 %v1827, %v1824
  %vm2068 = vcmask 457728
  %v2070 = vsel %vm2068, %v1830, 0
  %v2073 = vsel %vm2068, %v1833, 0
  %v2076 = vsel %vm2068, %v1836, 0
  %v2079 = vsel %vm2068, %v1839, 0
  %v2082 = vsel %vm2068, %v1842, 0
  %v2085 = vsel %vm2068, %v1845, 0
  %v2088 = vsel %vm2068, %v1848, 0
  %v2091 = vsel %vm2068, %v1851, 0
  %v2094 = vsel %vm2068, %v1854, 0
  %v2097 = vsel %vm2068, %v1857, 0
  %v2100 = vsel %vm2068, %v1860, 0
  %v2103 = vsel %vm2068, %v1863, 0
  %v2106 = vsel %vm2068, %v1866, 0
  %v2109 = vsel %vm2068, %v1869, 0
  %v2112 = vsel %vm2068, %v1872, 0
  %v2115 = vsel %vm2068, %v1875, 0
  %v2118 = vsel %vm2068, %v1878, 0
  %v2121 = vsel %vm2068, %v1881, 0
  %v2124 = vsel %vm2068, %v1884, 0
  %v2127 = vsel %vm2068, %v1887, 0
  %v2130 = vsel %vm2068, %v1890, 0
  %v2133 = vsel %vm2068, %v1893, 0
  %v2136 = vsel %vm2068, %v1896, 0
  %v2139 = vsel %vm2068, %v1899, 0
  %v2142 = vsel %vm2068, %v1902, 0
  %v2145 = vsel %vm2068, %v1905, 0
  %v2148 = vsel %vm2068, %v1908, 0
  %v2151 = vsel %vm2068, %v1911, 0
  %v2154 = vsel %vm2068, %v1914, 0
  %v2157 = vsel %vm2068, %v1917, 0
  %v2160 = vsel %vm2068, %v1920, 0
  %v2163 = vsel %vm2068, %v1923, 0
  %v2166 = vsel %vm2068, %v1926, 0
  %v2169 = vsel %vm2068, %v1929, 0
  %v2172 = vsel %vm2068, %v1932, 0
  %v2175 = vsel %vm2068, %v1935, 0
  %v2178 = vsel %vm2068, %v1938, 0
  %v2181 = vsel %vm2068, %v1941, 0
  %v2184 = vsel %vm2068, %v1944, 0
  %v2187 = vsel %vm2068, %v1947, 0
  %v2190 = vsel %vm2068, %v1950, 0
  %v2193 = vsel %vm2068, %v1953, 0
  %v2196 = vsel %vm2068, %v1956, 0
  %v2199 = vsel %vm2068, %v1959, 0
  %v2202 = vsel %vm2068, %v1962, 0
  %v2205 = vsel %vm2068, %v1965, 0
  %v2208 = vsel %vm2068, %v1968, 0
  %v2211 = vsel %vm2068, %v1971, 0
  %vm2213 = vcmask 1043456
  %v2215 = vsel %vm2213, %v578, 0
  %v2218 = vsel %vm2213, %v579, 0
  %2220 = vmatprep.subr.bf16.mxu0 %v541
  %2221 = vmatpush1.bf16.msra.mxu0 %v540
  %2222 = vmatprep.subr.bf16.mxu0 %v543
  %2223 = vmatpush1.bf16.msra.mxu0 %v542
  %2224 = vmatprep.subr.bf16.mxu0 %v545
  %2225 = vmatpush1.bf16.msra.mxu0 %v544
  %2226 = vmatprep.subr.bf16.mxu0 %v547
  %2227 = vmatpush1.bf16.msra.mxu0 %v546
  %2228 = vmatprep.subr.bf16.mxu0 %v549
  %2229 = vmatpush1.bf16.msra.mxu0 %v548
  %2230 = vmatprep.subr.bf16.mxu0 %v551
  %2231 = vmatpush1.bf16.msra.mxu0 %v550
  %2232 = vmatprep.subr.bf16.mxu0 %v553
  %2233 = vmatpush1.bf16.msra.mxu0 %v552
  %2234 = vmatprep.subr.bf16.mxu0 %v555
  %2235 = vmatpush1.bf16.msra.mxu0 %v554
  %2236 = vmatprep.subr.bf16.mxu0 %v557
  %2237 = vmatpush1.bf16.msra.mxu0 %v556
  %2238 = vmatprep.subr.bf16.mxu0 %v559
  %2239 = vmatpush1.bf16.msra.mxu0 %v558
  %2240 = vmatprep.subr.bf16.mxu0 %v561
  %2241 = vmatpush1.bf16.msra.mxu0 %v560
  %2242 = vmatprep.subr.bf16.mxu0 %v563
  %2243 = vmatpush1.bf16.msra.mxu0 %v562
  %2244 = vmatprep.subr.bf16.mxu0 %v565
  %2245 = vmatpush1.bf16.msra.mxu0 %v564
  %2246 = vmatprep.subr.bf16.mxu0 %v567
  %2247 = vmatpush1.bf16.msra.mxu0 %v566
  %2248 = vmatprep.subr.bf16.mxu0 %v569
  %2249 = vmatpush1.bf16.msra.mxu0 %v568
  %2250 = vmatprep.subr.bf16.mxu0 %v571
  %2251 = vmatpush1.bf16.msra.mxu0 %v570
  %2252 = vmatprep.mubr.bf16.mxu0 %v1829
  %2253 = vmatmul.mubr.bf16.gmra.mrb[0].mxu0 %v1828
  %v2254 = vpop.f32.mrb[0].mxu0
  %v2255 = vadd.f32 %v871, %v2254
  %v2256 = vpop.f32.mrb[0].mxu0
  %v2257 = vadd.f32 %v871, %v2256
  %v2258 = vpop.f32.mrb[0].mxu0
  %v2259 = vadd.f32 %v876, %v2258
  %v2260 = vpop.f32.mrb[0].mxu0
  %v2261 = vadd.f32 %v876, %v2260
  %2262 = vmatprep.mubr.bf16.mxu0 %v1832
  %2263 = vmatmul.mubr.bf16.gmra.mrb[0].mxu0 %v1831
  %v2264 = vpop.f32.mrb[0].mxu0
  %v2265 = vadd.f32 %v881, %v2264
  %v2266 = vpop.f32.mrb[0].mxu0
  %v2267 = vadd.f32 %v881, %v2266
  %v2268 = vpop.f32.mrb[0].mxu0
  %v2269 = vadd.f32 %v886, %v2268
  %v2270 = vpop.f32.mrb[0].mxu0
  %v2271 = vadd.f32 %v886, %v2270
  %2272 = vmatprep.mubr.bf16.mxu0 %v1835
  %2273 = vmatmul.mubr.bf16.gmra.mrb[0].mxu0 %v1834
  %v2274 = vpop.f32.mrb[0].mxu0
  %v2275 = vadd.f32 %v891, %v2274
  %v2276 = vpop.f32.mrb[0].mxu0
  %v2277 = vadd.f32 %v891, %v2276
  %v2278 = vpop.f32.mrb[0].mxu0
  %v2279 = vadd.f32 %v896, %v2278
  %v2280 = vpop.f32.mrb[0].mxu0
  %v2281 = vadd.f32 %v896, %v2280
  %2282 = vmatprep.mubr.bf16.mxu0 %v1838
  %2283 = vmatmul.mubr.bf16.gmra.mrb[0].mxu0 %v1837
  %v2284 = vpop.f32.mrb[0].mxu0
  %v2285 = vadd.f32 %v901, %v2284
  %v2286 = vpop.f32.mrb[0].mxu0
  %v2287 = vadd.f32 %v901, %v2286
  %v2288 = vpop.f32.mrb[0].mxu0
  %v2289 = vadd.f32 %v906, %v2288
  %v2290 = vpop.f32.mrb[0].mxu0
  %v2291 = vadd.f32 %v906, %v2290
  %2292 = vmatprep.mubr.bf16.mxu0 %v1841
  %2293 = vmatmul.mubr.bf16.gmra.mrb[0].mxu0 %v1840
  %v2294 = vpop.f32.mrb[0].mxu0
  %v2295 = vadd.f32 %v911, %v2294
  %v2296 = vpop.f32.mrb[0].mxu0
  %v2297 = vadd.f32 %v911, %v2296
  %v2298 = vpop.f32.mrb[0].mxu0
  %v2299 = vadd.f32 %v916, %v2298
  %v2300 = vpop.f32.mrb[0].mxu0
  %v2301 = vadd.f32 %v916, %v2300
  %2302 = vmatprep.mubr.bf16.mxu0 %v1844
  %2303 = vmatmul.mubr.bf16.gmra.mrb[0].mxu0 %v1843
  %v2304 = vpop.f32.mrb[0].mxu0
  %v2305 = vadd.f32 %v921, %v2304
  %v2306 = vpop.f32.mrb[0].mxu0
  %v2307 = vadd.f32 %v921, %v2306
  %v2308 = vpop.f32.mrb[0].mxu0
  %v2309 = vadd.f32 %v926, %v2308
  %v2310 = vpop.f32.mrb[0].mxu0
  %v2311 = vadd.f32 %v926, %v2310
  %2312 = vmatprep.mubr.bf16.mxu0 %v1847
  %2313 = vmatmul.mubr.bf16.gmra.mrb[0].mxu0 %v1846
  %v2314 = vpop.f32.mrb[0].mxu0
  %v2315 = vadd.f32 %v931, %v2314
  %v2316 = vpop.f32.mrb[0].mxu0
  %v2317 = vadd.f32 %v931, %v2316
  %v2318 = vpop.f32.mrb[0].mxu0
  %v2319 = vadd.f32 %v936, %v2318
  %v2320 = vpop.f32.mrb[0].mxu0
  %v2321 = vadd.f32 %v936, %v2320
  %2322 = vmatprep.mubr.bf16.mxu0 %v1850
  %2323 = vmatmul.mubr.bf16.gmra.mrb[0].mxu0 %v1849
  %v2324 = vpop.f32.mrb[0].mxu0
  %v2325 = vadd.f32 %v941, %v2324
  %v2326 = vpop.f32.mrb[0].mxu0
  %v2327 = vadd.f32 %v941, %v2326
  %v2328 = vpop.f32.mrb[0].mxu0
  %v2329 = vadd.f32 %v946, %v2328
  %v2330 = vpop.f32.mrb[0].mxu0
  %v2331 = vadd.f32 %v946, %v2330
  %2332 = vmatprep.mubr.bf16.mxu0 %v1853
  %2333 = vmatmul.mubr.bf16.gmra.mrb[0].mxu0 %v1852
  %v2334 = vpop.f32.mrb[0].mxu0
  %v2335 = vadd.f32 %v951, %v2334
  %v2336 = vpop.f32.mrb[0].mxu0
  %v2337 = vadd.f32 %v951, %v2336
  %v2338 = vpop.f32.mrb[0].mxu0
  %v2339 = vadd.f32 %v956, %v2338
  %v2340 = vpop.f32.mrb[0].mxu0
  %v2341 = vadd.f32 %v956, %v2340
  %2342 = vmatprep.mubr.bf16.mxu0 %v1856
  %2343 = vmatmul.mubr.bf16.gmra.mrb[0].mxu0 %v1855
  %v2344 = vpop.f32.mrb[0].mxu0
  %v2345 = vadd.f32 %v961, %v2344
  %v2346 = vpop.f32.mrb[0].mxu0
  %v2347 = vadd.f32 %v961, %v2346
  %v2348 = vpop.f32.mrb[0].mxu0
  %v2349 = vadd.f32 %v966, %v2348
  %v2350 = vpop.f32.mrb[0].mxu0
  %v2351 = vadd.f32 %v966, %v2350
  %2352 = vmatprep.mubr.bf16.mxu0 %v1859
  %2353 = vmatmul.mubr.bf16.gmra.mrb[0].mxu0 %v1858
  %v2354 = vpop.f32.mrb[0].mxu0
  %v2355 = vadd.f32 %v971, %v2354
  %v2356 = vpop.f32.mrb[0].mxu0
  %v2357 = vadd.f32 %v971, %v2356
  %v2358 = vpop.f32.mrb[0].mxu0
  %v2359 = vadd.f32 %v976, %v2358
  %v2360 = vpop.f32.mrb[0].mxu0
  %v2361 = vadd.f32 %v976, %v2360
  %2362 = vmatprep.mubr.bf16.mxu0 %v1862
  %2363 = vmatmul.mubr.bf16.gmra.mrb[0].mxu0 %v1861
  %v2364 = vpop.f32.mrb[0].mxu0
  %v2365 = vadd.f32 %v981, %v2364
  %v2366 = vpop.f32.mrb[0].mxu0
  %v2367 = vadd.f32 %v981, %v2366
  %v2368 = vpop.f32.mrb[0].mxu0
  %v2369 = vadd.f32 %v986, %v2368
  %v2370 = vpop.f32.mrb[0].mxu0
  %v2371 = vadd.f32 %v986, %v2370
  %2372 = vmatprep.mubr.bf16.mxu0 %v1865
  %2373 = vmatmul.mubr.bf16.gmra.mrb[0].mxu0 %v1864
  %v2374 = vpop.f32.mrb[0].mxu0
  %v2375 = vadd.f32 %v991, %v2374
  %v2376 = vpop.f32.mrb[0].mxu0
  %v2377 = vadd.f32 %v991, %v2376
  %v2378 = vpop.f32.mrb[0].mxu0
  %v2379 = vadd.f32 %v996, %v2378
  %v2380 = vpop.f32.mrb[0].mxu0
  %v2381 = vadd.f32 %v996, %v2380
  %2382 = vmatprep.mubr.bf16.mxu0 %v1868
  %2383 = vmatmul.mubr.bf16.gmra.mrb[0].mxu0 %v1867
  %v2384 = vpop.f32.mrb[0].mxu0
  %v2385 = vadd.f32 %v1001, %v2384
  %v2386 = vpop.f32.mrb[0].mxu0
  %v2387 = vadd.f32 %v1001, %v2386
  %v2388 = vpop.f32.mrb[0].mxu0
  %v2389 = vadd.f32 %v1006, %v2388
  %v2390 = vpop.f32.mrb[0].mxu0
  %v2391 = vadd.f32 %v1006, %v2390
  %2392 = vmatprep.mubr.bf16.mxu0 %v1871
  %2393 = vmatmul.mubr.bf16.gmra.mrb[0].mxu0 %v1870
  %v2394 = vpop.f32.mrb[0].mxu0
  %v2395 = vadd.f32 %v1011, %v2394
  %v2396 = vpop.f32.mrb[0].mxu0
  %v2397 = vadd.f32 %v1011, %v2396
  %v2398 = vpop.f32.mrb[0].mxu0
  %v2399 = vadd.f32 %v1016, %v2398
  %v2400 = vpop.f32.mrb[0].mxu0
  %v2401 = vadd.f32 %v1016, %v2400
  %2402 = vmatprep.mubr.bf16.mxu0 %v1874
  %2403 = vmatmul.mubr.bf16.gmra.mrb[0].mxu0 %v1873
  %v2404 = vpop.f32.mrb[0].mxu0
  %v2405 = vadd.f32 %v1021, %v2404
  %v2406 = vpop.f32.mrb[0].mxu0
  %v2407 = vadd.f32 %v1021, %v2406
  %v2408 = vpop.f32.mrb[0].mxu0
  %v2409 = vadd.f32 %v1026, %v2408
  %v2410 = vpop.f32.mrb[0].mxu0
  %v2411 = vadd.f32 %v1026, %v2410
  %2412 = vmatprep.mubr.bf16.mxu0 %v1877
  %2413 = vmatmul.mubr.bf16.gmra.mrb[0].mxu0 %v1876
  %v2414 = vpop.f32.mrb[0].mxu0
  %v2415 = vadd.f32 %v1031, %v2414
  %v2416 = vpop.f32.mrb[0].mxu0
  %v2417 = vadd.f32 %v1031, %v2416
  %v2418 = vpop.f32.mrb[0].mxu0
  %v2419 = vadd.f32 %v1036, %v2418
  %v2420 = vpop.f32.mrb[0].mxu0
  %v2421 = vadd.f32 %v1036, %v2420
  %2422 = vmatprep.mubr.bf16.mxu0 %v1880
  %2423 = vmatmul.mubr.bf16.gmra.mrb[0].mxu0 %v1879
  %v2424 = vpop.f32.mrb[0].mxu0
  %v2425 = vadd.f32 %v1041, %v2424
  %v2426 = vpop.f32.mrb[0].mxu0
  %v2427 = vadd.f32 %v1041, %v2426
  %v2428 = vpop.f32.mrb[0].mxu0
  %v2429 = vadd.f32 %v1046, %v2428
  %v2430 = vpop.f32.mrb[0].mxu0
  %v2431 = vadd.f32 %v1046, %v2430
  %2432 = vmatprep.mubr.bf16.mxu0 %v1883
  %2433 = vmatmul.mubr.bf16.gmra.mrb[0].mxu0 %v1882
  %v2434 = vpop.f32.mrb[0].mxu0
  %v2435 = vadd.f32 %v1051, %v2434
  %v2436 = vpop.f32.mrb[0].mxu0
  %v2437 = vadd.f32 %v1051, %v2436
  %v2438 = vpop.f32.mrb[0].mxu0
  %v2439 = vadd.f32 %v1056, %v2438
  %v2440 = vpop.f32.mrb[0].mxu0
  %v2441 = vadd.f32 %v1056, %v2440
  %2442 = vmatprep.mubr.bf16.mxu0 %v1886
  %2443 = vmatmul.mubr.bf16.gmra.mrb[0].mxu0 %v1885
  %v2444 = vpop.f32.mrb[0].mxu0
  %v2445 = vadd.f32 %v1061, %v2444
  %v2446 = vpop.f32.mrb[0].mxu0
  %v2447 = vadd.f32 %v1061, %v2446
  %v2448 = vpop.f32.mrb[0].mxu0
  %v2449 = vadd.f32 %v1066, %v2448
  %v2450 = vpop.f32.mrb[0].mxu0
  %v2451 = vadd.f32 %v1066, %v2450
  %2452 = vmatprep.mubr.bf16.mxu0 %v1889
  %2453 = vmatmul.mubr.bf16.gmra.mrb[0].mxu0 %v1888
  %v2454 = vpop.f32.mrb[0].mxu0
  %v2455 = vadd.f32 %v1071, %v2454
  %v2456 = vpop.f32.mrb[0].mxu0
  %v2457 = vadd.f32 %v1071, %v2456
  %v2458 = vpop.f32.mrb[0].mxu0
  %v2459 = vadd.f32 %v1076, %v2458
  %v2460 = vpop.f32.mrb[0].mxu0
  %v2461 = vadd.f32 %v1076, %v2460
  %2462 = vmatprep.mubr.bf16.mxu0 %v1892
  %2463 = vmatmul.mubr.bf16.gmra.mrb[0].mxu0 %v1891
  %v2464 = vpop.f32.mrb[0].mxu0
  %v2465 = vadd.f32 %v1081, %v2464
  %v2466 = vpop.f32.mrb[0].mxu0
  %v2467 = vadd.f32 %v1081, %v2466
  %v2468 = vpop.f32.mrb[0].mxu0
  %v2469 = vadd.f32 %v1086, %v2468
  %v2470 = vpop.f32.mrb[0].mxu0
  %v2471 = vadd.f32 %v1086, %v2470
  %2472 = vmatprep.mubr.bf16.mxu0 %v1895
  %2473 = vmatmul.mubr.bf16.gmra.mrb[0].mxu0 %v1894
  %v2474 = vpop.f32.mrb[0].mxu0
  %v2475 = vadd.f32 %v1091, %v2474
  %v2476 = vpop.f32.mrb[0].mxu0
  %v2477 = vadd.f32 %v1091, %v2476
  %v2478 = vpop.f32.mrb[0].mxu0
  %v2479 = vadd.f32 %v1096, %v2478
  %v2480 = vpop.f32.mrb[0].mxu0
  %v2481 = vadd.f32 %v1096, %v2480
  %2482 = vmatprep.mubr.bf16.mxu0 %v1898
  %2483 = vmatmul.mubr.bf16.gmra.mrb[0].mxu0 %v1897
  %v2484 = vpop.f32.mrb[0].mxu0
  %v2485 = vadd.f32 %v1101, %v2484
  %v2486 = vpop.f32.mrb[0].mxu0
  %v2487 = vadd.f32 %v1101, %v2486
  %v2488 = vpop.f32.mrb[0].mxu0
  %v2489 = vadd.f32 %v1106, %v2488
  %v2490 = vpop.f32.mrb[0].mxu0
  %v2491 = vadd.f32 %v1106, %v2490
  %2492 = vmatprep.mubr.bf16.mxu0 %v1901
  %2493 = vmatmul.mubr.bf16.gmra.mrb[0].mxu0 %v1900
  %v2494 = vpop.f32.mrb[0].mxu0
  %v2495 = vadd.f32 %v1111, %v2494
  %v2496 = vpop.f32.mrb[0].mxu0
  %v2497 = vadd.f32 %v1111, %v2496
  %v2498 = vpop.f32.mrb[0].mxu0
  %v2499 = vadd.f32 %v1116, %v2498
  %v2500 = vpop.f32.mrb[0].mxu0
  %v2501 = vadd.f32 %v1116, %v2500
  %2502 = vmatprep.mubr.bf16.mxu0 %v1904
  %2503 = vmatmul.mubr.bf16.gmra.mrb[0].mxu0 %v1903
  %v2504 = vpop.f32.mrb[0].mxu0
  %v2505 = vadd.f32 %v1121, %v2504
  %v2506 = vpop.f32.mrb[0].mxu0
  %v2507 = vadd.f32 %v1121, %v2506
  %v2508 = vpop.f32.mrb[0].mxu0
  %v2509 = vadd.f32 %v1126, %v2508
  %v2510 = vpop.f32.mrb[0].mxu0
  %v2511 = vadd.f32 %v1126, %v2510
  %2512 = vmatprep.mubr.bf16.mxu0 %v1907
  %2513 = vmatmul.mubr.bf16.gmra.mrb[0].mxu0 %v1906
  %v2514 = vpop.f32.mrb[0].mxu0
  %v2515 = vadd.f32 %v1131, %v2514
  %v2516 = vpop.f32.mrb[0].mxu0
  %v2517 = vadd.f32 %v1131, %v2516
  %v2518 = vpop.f32.mrb[0].mxu0
  %v2519 = vadd.f32 %v1136, %v2518
  %v2520 = vpop.f32.mrb[0].mxu0
  %v2521 = vadd.f32 %v1136, %v2520
  %2522 = vmatprep.mubr.bf16.mxu0 %v1910
  %2523 = vmatmul.mubr.bf16.gmra.mrb[0].mxu0 %v1909
  %v2524 = vpop.f32.mrb[0].mxu0
  %v2525 = vadd.f32 %v1141, %v2524
  %v2526 = vpop.f32.mrb[0].mxu0
  %v2527 = vadd.f32 %v1141, %v2526
  %v2528 = vpop.f32.mrb[0].mxu0
  %v2529 = vadd.f32 %v1146, %v2528
  %v2530 = vpop.f32.mrb[0].mxu0
  %v2531 = vadd.f32 %v1146, %v2530
  %2532 = vmatprep.mubr.bf16.mxu0 %v1913
  %2533 = vmatmul.mubr.bf16.gmra.mrb[0].mxu0 %v1912
  %v2534 = vpop.f32.mrb[0].mxu0
  %v2535 = vadd.f32 %v1151, %v2534
  %v2536 = vpop.f32.mrb[0].mxu0
  %v2537 = vadd.f32 %v1151, %v2536
  %v2538 = vpop.f32.mrb[0].mxu0
  %v2539 = vadd.f32 %v1156, %v2538
  %v2540 = vpop.f32.mrb[0].mxu0
  %v2541 = vadd.f32 %v1156, %v2540
  %2542 = vmatprep.mubr.bf16.mxu0 %v1916
  %2543 = vmatmul.mubr.bf16.gmra.mrb[0].mxu0 %v1915
  %v2544 = vpop.f32.mrb[0].mxu0
  %v2545 = vadd.f32 %v1161, %v2544
  %v2546 = vpop.f32.mrb[0].mxu0
  %v2547 = vadd.f32 %v1161, %v2546
  %v2548 = vpop.f32.mrb[0].mxu0
  %v2549 = vadd.f32 %v1166, %v2548
  %v2550 = vpop.f32.mrb[0].mxu0
  %v2551 = vadd.f32 %v1166, %v2550
  %2552 = vmatprep.mubr.bf16.mxu0 %v1919
  %2553 = vmatmul.mubr.bf16.gmra.mrb[0].mxu0 %v1918
  %v2554 = vpop.f32.mrb[0].mxu0
  %v2555 = vadd.f32 %v1171, %v2554
  %v2556 = vpop.f32.mrb[0].mxu0
  %v2557 = vadd.f32 %v1171, %v2556
  %v2558 = vpop.f32.mrb[0].mxu0
  %v2559 = vadd.f32 %v1176, %v2558
  %v2560 = vpop.f32.mrb[0].mxu0
  %v2561 = vadd.f32 %v1176, %v2560
  %2562 = vmatprep.mubr.bf16.mxu0 %v1922
  %2563 = vmatmul.mubr.bf16.gmra.mrb[0].mxu0 %v1921
  %v2564 = vpop.f32.mrb[0].mxu0
  %v2565 = vadd.f32 %v1181, %v2564
  %v2566 = vpop.f32.mrb[0].mxu0
  %v2567 = vadd.f32 %v1181, %v2566
  %v2568 = vpop.f32.mrb[0].mxu0
  %v2569 = vadd.f32 %v1186, %v2568
  %v2570 = vpop.f32.mrb[0].mxu0
  %v2571 = vadd.f32 %v1186, %v2570
  %2572 = vmatprep.mubr.bf16.mxu0 %v1925
  %2573 = vmatmul.mubr.bf16.gmra.mrb[0].mxu0 %v1924
  %v2574 = vpop.f32.mrb[0].mxu0
  %v2575 = vadd.f32 %v1191, %v2574
  %v2576 = vpop.f32.mrb[0].mxu0
  %v2577 = vadd.f32 %v1191, %v2576
  %v2578 = vpop.f32.mrb[0].mxu0
  %v2579 = vadd.f32 %v1196, %v2578
  %v2580 = vpop.f32.mrb[0].mxu0
  %v2581 = vadd.f32 %v1196, %v2580
  %2582 = vmatprep.mubr.bf16.mxu0 %v1928
  %2583 = vmatmul.mubr.bf16.gmra.mrb[0].mxu0 %v1927
  %v2584 = vpop.f32.mrb[0].mxu0
  %v2585 = vadd.f32 %v1201, %v2584
  %v2586 = vpop.f32.mrb[0].mxu0
  %v2587 = vadd.f32 %v1201, %v2586
  %v2588 = vpop.f32.mrb[0].mxu0
  %v2589 = vadd.f32 %v1206, %v2588
  %v2590 = vpop.f32.mrb[0].mxu0
  %v2591 = vadd.f32 %v1206, %v2590
  %2592 = vmatprep.mubr.bf16.mxu0 %v1931
  %2593 = vmatmul.mubr.bf16.gmra.mrb[0].mxu0 %v1930
  %v2594 = vpop.f32.mrb[0].mxu0
  %v2595 = vadd.f32 %v1211, %v2594
  %v2596 = vpop.f32.mrb[0].mxu0
  %v2597 = vadd.f32 %v1211, %v2596
  %v2598 = vpop.f32.mrb[0].mxu0
  %v2599 = vadd.f32 %v1216, %v2598
  %v2600 = vpop.f32.mrb[0].mxu0
  %v2601 = vadd.f32 %v1216, %v2600
  %2602 = vmatprep.mubr.bf16.mxu0 %v1934
  %2603 = vmatmul.mubr.bf16.gmra.mrb[0].mxu0 %v1933
  %v2604 = vpop.f32.mrb[0].mxu0
  %v2605 = vadd.f32 %v1221, %v2604
  %v2606 = vpop.f32.mrb[0].mxu0
  %v2607 = vadd.f32 %v1221, %v2606
  %v2608 = vpop.f32.mrb[0].mxu0
  %v2609 = vadd.f32 %v1226, %v2608
  %v2610 = vpop.f32.mrb[0].mxu0
  %v2611 = vadd.f32 %v1226, %v2610
  %2612 = vmatprep.mubr.bf16.mxu0 %v1937
  %2613 = vmatmul.mubr.bf16.gmra.mrb[0].mxu0 %v1936
  %v2614 = vpop.f32.mrb[0].mxu0
  %v2615 = vadd.f32 %v1231, %v2614
  %v2616 = vpop.f32.mrb[0].mxu0
  %v2617 = vadd.f32 %v1231, %v2616
  %v2618 = vpop.f32.mrb[0].mxu0
  %v2619 = vadd.f32 %v1236, %v2618
  %v2620 = vpop.f32.mrb[0].mxu0
  %v2621 = vadd.f32 %v1236, %v2620
  %2622 = vmatprep.mubr.bf16.mxu0 %v1940
  %2623 = vmatmul.mubr.bf16.gmra.mrb[0].mxu0 %v1939
  %v2624 = vpop.f32.mrb[0].mxu0
  %v2625 = vadd.f32 %v1241, %v2624
  %v2626 = vpop.f32.mrb[0].mxu0
  %v2627 = vadd.f32 %v1241, %v2626
  %v2628 = vpop.f32.mrb[0].mxu0
  %v2629 = vadd.f32 %v1246, %v2628
  %v2630 = vpop.f32.mrb[0].mxu0
  %v2631 = vadd.f32 %v1246, %v2630
  %2632 = vmatprep.mubr.bf16.mxu0 %v1943
  %2633 = vmatmul.mubr.bf16.gmra.mrb[0].mxu0 %v1942
  %v2634 = vpop.f32.mrb[0].mxu0
  %v2635 = vadd.f32 %v1251, %v2634
  %v2636 = vpop.f32.mrb[0].mxu0
  %v2637 = vadd.f32 %v1251, %v2636
  %v2638 = vpop.f32.mrb[0].mxu0
  %v2639 = vadd.f32 %v1256, %v2638
  %v2640 = vpop.f32.mrb[0].mxu0
  %v2641 = vadd.f32 %v1256, %v2640
  %2642 = vmatprep.mubr.bf16.mxu0 %v1946
  %2643 = vmatmul.mubr.bf16.gmra.mrb[0].mxu0 %v1945
  %v2644 = vpop.f32.mrb[0].mxu0
  %v2645 = vadd.f32 %v1261, %v2644
  %v2646 = vpop.f32.mrb[0].mxu0
  %v2647 = vadd.f32 %v1261, %v2646
  %v2648 = vpop.f32.mrb[0].mxu0
  %v2649 = vadd.f32 %v1266, %v2648
  %v2650 = vpop.f32.mrb[0].mxu0
  %v2651 = vadd.f32 %v1266, %v2650
  %2652 = vmatprep.mubr.bf16.mxu0 %v1949
  %2653 = vmatmul.mubr.bf16.gmra.mrb[0].mxu0 %v1948
  %v2654 = vpop.f32.mrb[0].mxu0
  %v2655 = vadd.f32 %v1271, %v2654
  %v2656 = vpop.f32.mrb[0].mxu0
  %v2657 = vadd.f32 %v1271, %v2656
  %v2658 = vpop.f32.mrb[0].mxu0
  %v2659 = vadd.f32 %v1276, %v2658
  %v2660 = vpop.f32.mrb[0].mxu0
  %v2661 = vadd.f32 %v1276, %v2660
  %2662 = vmatprep.mubr.bf16.mxu0 %v1952
  %2663 = vmatmul.mubr.bf16.gmra.mrb[0].mxu0 %v1951
  %v2664 = vpop.f32.mrb[0].mxu0
  %v2665 = vadd.f32 %v1281, %v2664
  %v2666 = vpop.f32.mrb[0].mxu0
  %v2667 = vadd.f32 %v1281, %v2666
  %v2668 = vpop.f32.mrb[0].mxu0
  %v2669 = vadd.f32 %v1286, %v2668
  %v2670 = vpop.f32.mrb[0].mxu0
  %v2671 = vadd.f32 %v1286, %v2670
  %2672 = vmatprep.mubr.bf16.mxu0 %v1955
  %2673 = vmatmul.mubr.bf16.gmra.mrb[0].mxu0 %v1954
  %v2674 = vpop.f32.mrb[0].mxu0
  %v2675 = vadd.f32 %v1291, %v2674
  %v2676 = vpop.f32.mrb[0].mxu0
  %v2677 = vadd.f32 %v1291, %v2676
  %v2678 = vpop.f32.mrb[0].mxu0
  %v2679 = vadd.f32 %v1296, %v2678
  %v2680 = vpop.f32.mrb[0].mxu0
  %v2681 = vadd.f32 %v1296, %v2680
  %2682 = vmatprep.mubr.bf16.mxu0 %v1958
  %2683 = vmatmul.mubr.bf16.gmra.mrb[0].mxu0 %v1957
  %v2684 = vpop.f32.mrb[0].mxu0
  %v2685 = vadd.f32 %v1301, %v2684
  %v2686 = vpop.f32.mrb[0].mxu0
  %v2687 = vadd.f32 %v1301, %v2686
  %v2688 = vpop.f32.mrb[0].mxu0
  %v2689 = vadd.f32 %v1306, %v2688
  %v2690 = vpop.f32.mrb[0].mxu0
  %v2691 = vadd.f32 %v1306, %v2690
  %2692 = vmatprep.mubr.bf16.mxu0 %v1961
  %2693 = vmatmul.mubr.bf16.gmra.mrb[0].mxu0 %v1960
  %v2694 = vpop.f32.mrb[0].mxu0
  %v2695 = vadd.f32 %v1311, %v2694
  %v2696 = vpop.f32.mrb[0].mxu0
  %v2697 = vadd.f32 %v1311, %v2696
  %v2698 = vpop.f32.mrb[0].mxu0
  %v2699 = vadd.f32 %v1316, %v2698
  %v2700 = vpop.f32.mrb[0].mxu0
  %v2701 = vadd.f32 %v1316, %v2700
  %2702 = vmatprep.mubr.bf16.mxu0 %v1964
  %2703 = vmatmul.mubr.bf16.gmra.mrb[0].mxu0 %v1963
  %v2704 = vpop.f32.mrb[0].mxu0
  %v2705 = vadd.f32 %v1321, %v2704
  %v2706 = vpop.f32.mrb[0].mxu0
  %v2707 = vadd.f32 %v1321, %v2706
  %v2708 = vpop.f32.mrb[0].mxu0
  %v2709 = vadd.f32 %v1326, %v2708
  %v2710 = vpop.f32.mrb[0].mxu0
  %v2711 = vadd.f32 %v1326, %v2710
  %2712 = vmatprep.mubr.bf16.mxu0 %v1967
  %2713 = vmatmul.mubr.bf16.gmra.mrb[0].mxu0 %v1966
  %v2714 = vpop.f32.mrb[0].mxu0
  %v2715 = vadd.f32 %v1331, %v2714
  %v2716 = vpop.f32.mrb[0].mxu0
  %v2717 = vadd.f32 %v1331, %v2716
  %v2718 = vpop.f32.mrb[0].mxu0
  %v2719 = vadd.f32 %v1336, %v2718
  %v2720 = vpop.f32.mrb[0].mxu0
  %v2721 = vadd.f32 %v1336, %v2720
  %2722 = vmatprep.mubr.bf16.mxu0 %v1970
  %2723 = vmatmul.mubr.bf16.gmra.mrb[0].mxu0 %v1969
  %v2724 = vpop.f32.mrb[0].mxu0
  %v2725 = vadd.f32 %v1341, %v2724
  %v2726 = vpop.f32.mrb[0].mxu0
  %v2727 = vadd.f32 %v1341, %v2726
  %v2728 = vpop.f32.mrb[0].mxu0
  %v2729 = vadd.f32 %v1346, %v2728
  %v2730 = vpop.f32.mrb[0].mxu0
  %v2731 = vadd.f32 %v1346, %v2730
  %2732 = vdwg.mxu0
  %2733 = vmatprep.subr.bf16.mxu0 %v573
  %2734 = vmatpush1.bf16.msra.mxu0 %v572
  %2735 = vmatprep.subr.bf16.mxu0 %v575
  %2736 = vmatpush1.bf16.msra.mxu0 %v574
  %2737 = vmatprep.subr.bf16.mxu0 %v577
  %2738 = vmatpush1.bf16.msra.mxu0 %v576
  %2739 = vmatprep.subr.bf16.mxu0 %v2218
  %2740 = vmatpush1.bf16.msra.mxu0 %v2215
  %2741 = vmatprep.subr.bf16.mxu0 0
  %2742 = vmatpush1.bf16.msra.mxu0 0
  %2743 = vmatprep.subr.bf16.mxu0 0
  %2744 = vmatpush1.bf16.msra.mxu0 0
  %2745 = vmatprep.subr.bf16.mxu0 0
  %2746 = vmatpush1.bf16.msra.mxu0 0
  %2747 = vmatprep.subr.bf16.mxu0 0
  %2748 = vmatpush1.bf16.msra.mxu0 0
  %2749 = vmatprep.subr.bf16.mxu0 0
  %2750 = vmatpush1.bf16.msra.mxu0 0
  %2751 = vmatprep.subr.bf16.mxu0 0
  %2752 = vmatpush1.bf16.msra.mxu0 0
  %2753 = vmatprep.subr.bf16.mxu0 0
  %2754 = vmatpush1.bf16.msra.mxu0 0
  %2755 = vmatprep.subr.bf16.mxu0 0
  %2756 = vmatpush1.bf16.msra.mxu0 0
  %2757 = vmatprep.subr.bf16.mxu0 0
  %2758 = vmatpush1.bf16.msra.mxu0 0
  %2759 = vmatprep.subr.bf16.mxu0 0
  %2760 = vmatpush1.bf16.msra.mxu0 0
  %2761 = vmatprep.subr.bf16.mxu0 0
  %2762 = vmatpush1.bf16.msra.mxu0 0
  %2763 = vmatprep.subr.bf16.mxu0 0
  %2764 = vmatpush1.bf16.msra.mxu0 0
  %2765 = vmatprep.mubr.bf16.mxu0 0
  %2766 = vmatmul.mubr.bf16.gmra.mrb[0].mxu0 %v2070
  %v2767 = vpop.f32.mrb[0].mxu0
  %v2768 = vadd.f32 %v2255, %v2767
  %v2769 = vpop.f32.mrb[0].mxu0
  %v2770 = vadd.f32 %v2257, %v2769
  %v2771 = vpop.f32.mrb[0].mxu0
  %v2772 = vadd.f32 %v2259, %v2771
  %v2773 = vpop.f32.mrb[0].mxu0
  %v2774 = vadd.f32 %v2261, %v2773
  %2775 = vmatprep.mubr.bf16.mxu0 0
  %2776 = vmatmul.mubr.bf16.gmra.mrb[0].mxu0 %v2073
  %v2777 = vpop.f32.mrb[0].mxu0
  %v2778 = vadd.f32 %v2265, %v2777
  %v2779 = vpop.f32.mrb[0].mxu0
  %v2780 = vadd.f32 %v2267, %v2779
  %v2781 = vpop.f32.mrb[0].mxu0
  %v2782 = vadd.f32 %v2269, %v2781
  %v2783 = vpop.f32.mrb[0].mxu0
  %v2784 = vadd.f32 %v2271, %v2783
  %2785 = vmatprep.mubr.bf16.mxu0 0
  %2786 = vmatmul.mubr.bf16.gmra.mrb[0].mxu0 %v2076
  %v2787 = vpop.f32.mrb[0].mxu0
  %v2788 = vadd.f32 %v2275, %v2787
  %v2789 = vpop.f32.mrb[0].mxu0
  %v2790 = vadd.f32 %v2277, %v2789
  %v2791 = vpop.f32.mrb[0].mxu0
  %v2792 = vadd.f32 %v2279, %v2791
  %v2793 = vpop.f32.mrb[0].mxu0
  %v2794 = vadd.f32 %v2281, %v2793
  %2795 = vmatprep.mubr.bf16.mxu0 0
  %2796 = vmatmul.mubr.bf16.gmra.mrb[0].mxu0 %v2079
  %v2797 = vpop.f32.mrb[0].mxu0
  %v2798 = vadd.f32 %v2285, %v2797
  %v2799 = vpop.f32.mrb[0].mxu0
  %v2800 = vadd.f32 %v2287, %v2799
  %v2801 = vpop.f32.mrb[0].mxu0
  %v2802 = vadd.f32 %v2289, %v2801
  %v2803 = vpop.f32.mrb[0].mxu0
  %v2804 = vadd.f32 %v2291, %v2803
  %2805 = vmatprep.mubr.bf16.mxu0 0
  %2806 = vmatmul.mubr.bf16.gmra.mrb[0].mxu0 %v2082
  %v2807 = vpop.f32.mrb[0].mxu0
  %v2808 = vadd.f32 %v2295, %v2807
  %v2809 = vpop.f32.mrb[0].mxu0
  %v2810 = vadd.f32 %v2297, %v2809
  %v2811 = vpop.f32.mrb[0].mxu0
  %v2812 = vadd.f32 %v2299, %v2811
  %v2813 = vpop.f32.mrb[0].mxu0
  %v2814 = vadd.f32 %v2301, %v2813
  %2815 = vmatprep.mubr.bf16.mxu0 0
  %2816 = vmatmul.mubr.bf16.gmra.mrb[0].mxu0 %v2085
  %v2817 = vpop.f32.mrb[0].mxu0
  %v2818 = vadd.f32 %v2305, %v2817
  %v2819 = vpop.f32.mrb[0].mxu0
  %v2820 = vadd.f32 %v2307, %v2819
  %v2821 = vpop.f32.mrb[0].mxu0
  %v2822 = vadd.f32 %v2309, %v2821
  %v2823 = vpop.f32.mrb[0].mxu0
  %v2824 = vadd.f32 %v2311, %v2823
  %2825 = vmatprep.mubr.bf16.mxu0 0
  %2826 = vmatmul.mubr.bf16.gmra.mrb[0].mxu0 %v2088
  %v2827 = vpop.f32.mrb[0].mxu0
  %v2828 = vadd.f32 %v2315, %v2827
  %v2829 = vpop.f32.mrb[0].mxu0
  %v2830 = vadd.f32 %v2317, %v2829
  %v2831 = vpop.f32.mrb[0].mxu0
  %v2832 = vadd.f32 %v2319, %v2831
  %v2833 = vpop.f32.mrb[0].mxu0
  %v2834 = vadd.f32 %v2321, %v2833
  %2835 = vmatprep.mubr.bf16.mxu0 0
  %2836 = vmatmul.mubr.bf16.gmra.mrb[0].mxu0 %v2091
  %v2837 = vpop.f32.mrb[0].mxu0
  %v2838 = vadd.f32 %v2325, %v2837
  %v2839 = vpop.f32.mrb[0].mxu0
  %v2840 = vadd.f32 %v2327, %v2839
  %v2841 = vpop.f32.mrb[0].mxu0
  %v2842 = vadd.f32 %v2329, %v2841
  %v2843 = vpop.f32.mrb[0].mxu0
  %v2844 = vadd.f32 %v2331, %v2843
  %2845 = vmatprep.mubr.bf16.mxu0 0
  %2846 = vmatmul.mubr.bf16.gmra.mrb[0].mxu0 %v2094
  %v2847 = vpop.f32.mrb[0].mxu0
  %v2848 = vadd.f32 %v2335, %v2847
  %v2849 = vpop.f32.mrb[0].mxu0
  %v2850 = vadd.f32 %v2337, %v2849
  %v2851 = vpop.f32.mrb[0].mxu0
  %v2852 = vadd.f32 %v2339, %v2851
  %v2853 = vpop.f32.mrb[0].mxu0
  %v2854 = vadd.f32 %v2341, %v2853
  %2855 = vmatprep.mubr.bf16.mxu0 0
  %2856 = vmatmul.mubr.bf16.gmra.mrb[0].mxu0 %v2097
  %v2857 = vpop.f32.mrb[0].mxu0
  %v2858 = vadd.f32 %v2345, %v2857
  %v2859 = vpop.f32.mrb[0].mxu0
  %v2860 = vadd.f32 %v2347, %v2859
  %v2861 = vpop.f32.mrb[0].mxu0
  %v2862 = vadd.f32 %v2349, %v2861
  %v2863 = vpop.f32.mrb[0].mxu0
  %v2864 = vadd.f32 %v2351, %v2863
  %2865 = vmatprep.mubr.bf16.mxu0 0
  %2866 = vmatmul.mubr.bf16.gmra.mrb[0].mxu0 %v2100
  %v2867 = vpop.f32.mrb[0].mxu0
  %v2868 = vadd.f32 %v2355, %v2867
  %v2869 = vpop.f32.mrb[0].mxu0
  %v2870 = vadd.f32 %v2357, %v2869
  %v2871 = vpop.f32.mrb[0].mxu0
  %v2872 = vadd.f32 %v2359, %v2871
  %v2873 = vpop.f32.mrb[0].mxu0
  %v2874 = vadd.f32 %v2361, %v2873
  %2875 = vmatprep.mubr.bf16.mxu0 0
  %2876 = vmatmul.mubr.bf16.gmra.mrb[0].mxu0 %v2103
  %v2877 = vpop.f32.mrb[0].mxu0
  %v2878 = vadd.f32 %v2365, %v2877
  %v2879 = vpop.f32.mrb[0].mxu0
  %v2880 = vadd.f32 %v2367, %v2879
  %v2881 = vpop.f32.mrb[0].mxu0
  %v2882 = vadd.f32 %v2369, %v2881
  %v2883 = vpop.f32.mrb[0].mxu0
  %v2884 = vadd.f32 %v2371, %v2883
  %2885 = vmatprep.mubr.bf16.mxu0 0
  %2886 = vmatmul.mubr.bf16.gmra.mrb[0].mxu0 %v2106
  %v2887 = vpop.f32.mrb[0].mxu0
  %v2888 = vadd.f32 %v2375, %v2887
  %v2889 = vpop.f32.mrb[0].mxu0
  %v2890 = vadd.f32 %v2377, %v2889
  %v2891 = vpop.f32.mrb[0].mxu0
  %v2892 = vadd.f32 %v2379, %v2891
  %v2893 = vpop.f32.mrb[0].mxu0
  %v2894 = vadd.f32 %v2381, %v2893
  %2895 = vmatprep.mubr.bf16.mxu0 0
  %2896 = vmatmul.mubr.bf16.gmra.mrb[0].mxu0 %v2109
  %v2897 = vpop.f32.mrb[0].mxu0
  %v2898 = vadd.f32 %v2385, %v2897
  %v2899 = vpop.f32.mrb[0].mxu0
  %v2900 = vadd.f32 %v2387, %v2899
  %v2901 = vpop.f32.mrb[0].mxu0
  %v2902 = vadd.f32 %v2389, %v2901
  %v2903 = vpop.f32.mrb[0].mxu0
  %v2904 = vadd.f32 %v2391, %v2903
  %2905 = vmatprep.mubr.bf16.mxu0 0
  %2906 = vmatmul.mubr.bf16.gmra.mrb[0].mxu0 %v2112
  %v2907 = vpop.f32.mrb[0].mxu0
  %v2908 = vadd.f32 %v2395, %v2907
  %v2909 = vpop.f32.mrb[0].mxu0
  %v2910 = vadd.f32 %v2397, %v2909
  %v2911 = vpop.f32.mrb[0].mxu0
  %v2912 = vadd.f32 %v2399, %v2911
  %v2913 = vpop.f32.mrb[0].mxu0
  %v2914 = vadd.f32 %v2401, %v2913
  %2915 = vmatprep.mubr.bf16.mxu0 0
  %2916 = vmatmul.mubr.bf16.gmra.mrb[0].mxu0 %v2115
  %v2917 = vpop.f32.mrb[0].mxu0
  %v2918 = vadd.f32 %v2405, %v2917
  %v2919 = vpop.f32.mrb[0].mxu0
  %v2920 = vadd.f32 %v2407, %v2919
  %v2921 = vpop.f32.mrb[0].mxu0
  %v2922 = vadd.f32 %v2409, %v2921
  %v2923 = vpop.f32.mrb[0].mxu0
  %v2924 = vadd.f32 %v2411, %v2923
  %2925 = vmatprep.mubr.bf16.mxu0 0
  %2926 = vmatmul.mubr.bf16.gmra.mrb[0].mxu0 %v2118
  %v2927 = vpop.f32.mrb[0].mxu0
  %v2928 = vadd.f32 %v2415, %v2927
  %v2929 = vpop.f32.mrb[0].mxu0
  %v2930 = vadd.f32 %v2417, %v2929
  %v2931 = vpop.f32.mrb[0].mxu0
  %v2932 = vadd.f32 %v2419, %v2931
  %v2933 = vpop.f32.mrb[0].mxu0
  %v2934 = vadd.f32 %v2421, %v2933
  %2935 = vmatprep.mubr.bf16.mxu0 0
  %2936 = vmatmul.mubr.bf16.gmra.mrb[0].mxu0 %v2121
  %v2937 = vpop.f32.mrb[0].mxu0
  %v2938 = vadd.f32 %v2425, %v2937
  %v2939 = vpop.f32.mrb[0].mxu0
  %v2940 = vadd.f32 %v2427, %v2939
  %v2941 = vpop.f32.mrb[0].mxu0
  %v2942 = vadd.f32 %v2429, %v2941
  %v2943 = vpop.f32.mrb[0].mxu0
  %v2944 = vadd.f32 %v2431, %v2943
  %2945 = vmatprep.mubr.bf16.mxu0 0
  %2946 = vmatmul.mubr.bf16.gmra.mrb[0].mxu0 %v2124
  %v2947 = vpop.f32.mrb[0].mxu0
  %v2948 = vadd.f32 %v2435, %v2947
  %v2949 = vpop.f32.mrb[0].mxu0
  %v2950 = vadd.f32 %v2437, %v2949
  %v2951 = vpop.f32.mrb[0].mxu0
  %v2952 = vadd.f32 %v2439, %v2951
  %v2953 = vpop.f32.mrb[0].mxu0
  %v2954 = vadd.f32 %v2441, %v2953
  %2955 = vmatprep.mubr.bf16.mxu0 0
  %2956 = vmatmul.mubr.bf16.gmra.mrb[0].mxu0 %v2127
  %v2957 = vpop.f32.mrb[0].mxu0
  %v2958 = vadd.f32 %v2445, %v2957
  %v2959 = vpop.f32.mrb[0].mxu0
  %v2960 = vadd.f32 %v2447, %v2959
  %v2961 = vpop.f32.mrb[0].mxu0
  %v2962 = vadd.f32 %v2449, %v2961
  %v2963 = vpop.f32.mrb[0].mxu0
  %v2964 = vadd.f32 %v2451, %v2963
  %2965 = vmatprep.mubr.bf16.mxu0 0
  %2966 = vmatmul.mubr.bf16.gmra.mrb[0].mxu0 %v2130
  %v2967 = vpop.f32.mrb[0].mxu0
  %v2968 = vadd.f32 %v2455, %v2967
  %v2969 = vpop.f32.mrb[0].mxu0
  %v2970 = vadd.f32 %v2457, %v2969
  %v2971 = vpop.f32.mrb[0].mxu0
  %v2972 = vadd.f32 %v2459, %v2971
  %v2973 = vpop.f32.mrb[0].mxu0
  %v2974 = vadd.f32 %v2461, %v2973
  %2975 = vmatprep.mubr.bf16.mxu0 0
  %2976 = vmatmul.mubr.bf16.gmra.mrb[0].mxu0 %v2133
  %v2977 = vpop.f32.mrb[0].mxu0
  %v2978 = vadd.f32 %v2465, %v2977
  %v2979 = vpop.f32.mrb[0].mxu0
  %v2980 = vadd.f32 %v2467, %v2979
  %v2981 = vpop.f32.mrb[0].mxu0
  %v2982 = vadd.f32 %v2469, %v2981
  %v2983 = vpop.f32.mrb[0].mxu0
  %v2984 = vadd.f32 %v2471, %v2983
  %2985 = vmatprep.mubr.bf16.mxu0 0
  %2986 = vmatmul.mubr.bf16.gmra.mrb[0].mxu0 %v2136
  %v2987 = vpop.f32.mrb[0].mxu0
  %v2988 = vadd.f32 %v2475, %v2987
  %v2989 = vpop.f32.mrb[0].mxu0
  %v2990 = vadd.f32 %v2477, %v2989
  %v2991 = vpop.f32.mrb[0].mxu0
  %v2992 = vadd.f32 %v2479, %v2991
  %v2993 = vpop.f32.mrb[0].mxu0
  %v2994 = vadd.f32 %v2481, %v2993
  %2995 = vmatprep.mubr.bf16.mxu0 0
  %2996 = vmatmul.mubr.bf16.gmra.mrb[0].mxu0 %v2139
  %v2997 = vpop.f32.mrb[0].mxu0
  %v2998 = vadd.f32 %v2485, %v2997
  %v2999 = vpop.f32.mrb[0].mxu0
  %v3000 = vadd.f32 %v2487, %v2999
  %v3001 = vpop.f32.mrb[0].mxu0
  %v3002 = vadd.f32 %v2489, %v3001
  %v3003 = vpop.f32.mrb[0].mxu0
  %v3004 = vadd.f32 %v2491, %v3003
  %3005 = vmatprep.mubr.bf16.mxu0 0
  %3006 = vmatmul.mubr.bf16.gmra.mrb[0].mxu0 %v2142
  %v3007 = vpop.f32.mrb[0].mxu0
  %v3008 = vadd.f32 %v2495, %v3007
  %v3009 = vpop.f32.mrb[0].mxu0
  %v3010 = vadd.f32 %v2497, %v3009
  %v3011 = vpop.f32.mrb[0].mxu0
  %v3012 = vadd.f32 %v2499, %v3011
  %v3013 = vpop.f32.mrb[0].mxu0
  %v3014 = vadd.f32 %v2501, %v3013
  %3015 = vmatprep.mubr.bf16.mxu0 0
  %3016 = vmatmul.mubr.bf16.gmra.mrb[0].mxu0 %v2145
  %v3017 = vpop.f32.mrb[0].mxu0
  %v3018 = vadd.f32 %v2505, %v3017
  %v3019 = vpop.f32.mrb[0].mxu0
  %v3020 = vadd.f32 %v2507, %v3019
  %v3021 = vpop.f32.mrb[0].mxu0
  %v3022 = vadd.f32 %v2509, %v3021
  %v3023 = vpop.f32.mrb[0].mxu0
  %v3024 = vadd.f32 %v2511, %v3023
  %3025 = vmatprep.mubr.bf16.mxu0 0
  %3026 = vmatmul.mubr.bf16.gmra.mrb[0].mxu0 %v2148
  %v3027 = vpop.f32.mrb[0].mxu0
  %v3028 = vadd.f32 %v2515, %v3027
  %v3029 = vpop.f32.mrb[0].mxu0
  %v3030 = vadd.f32 %v2517, %v3029
  %v3031 = vpop.f32.mrb[0].mxu0
  %v3032 = vadd.f32 %v2519, %v3031
  %v3033 = vpop.f32.mrb[0].mxu0
  %v3034 = vadd.f32 %v2521, %v3033
  %3035 = vmatprep.mubr.bf16.mxu0 0
  %3036 = vmatmul.mubr.bf16.gmra.mrb[0].mxu0 %v2151
  %v3037 = vpop.f32.mrb[0].mxu0
  %v3038 = vadd.f32 %v2525, %v3037
  %v3039 = vpop.f32.mrb[0].mxu0
  %v3040 = vadd.f32 %v2527, %v3039
  %v3041 = vpop.f32.mrb[0].mxu0
  %v3042 = vadd.f32 %v2529, %v3041
  %v3043 = vpop.f32.mrb[0].mxu0
  %v3044 = vadd.f32 %v2531, %v3043
  %3045 = vmatprep.mubr.bf16.mxu0 0
  %3046 = vmatmul.mubr.bf16.gmra.mrb[0].mxu0 %v2154
  %v3047 = vpop.f32.mrb[0].mxu0
  %v3048 = vadd.f32 %v2535, %v3047
  %v3049 = vpop.f32.mrb[0].mxu0
  %v3050 = vadd.f32 %v2537, %v3049
  %v3051 = vpop.f32.mrb[0].mxu0
  %v3052 = vadd.f32 %v2539, %v3051
  %v3053 = vpop.f32.mrb[0].mxu0
  %v3054 = vadd.f32 %v2541, %v3053
  %3055 = vmatprep.mubr.bf16.mxu0 0
  %3056 = vmatmul.mubr.bf16.gmra.mrb[0].mxu0 %v2157
  %v3057 = vpop.f32.mrb[0].mxu0
  %v3058 = vadd.f32 %v2545, %v3057
  %v3059 = vpop.f32.mrb[0].mxu0
  %v3060 = vadd.f32 %v2547, %v3059
  %v3061 = vpop.f32.mrb[0].mxu0
  %v3062 = vadd.f32 %v2549, %v3061
  %v3063 = vpop.f32.mrb[0].mxu0
  %v3064 = vadd.f32 %v2551, %v3063
  %3065 = vmatprep.mubr.bf16.mxu0 0
  %3066 = vmatmul.mubr.bf16.gmra.mrb[0].mxu0 %v2160
  %v3067 = vpop.f32.mrb[0].mxu0
  %v3068 = vadd.f32 %v2555, %v3067
  %v3069 = vpop.f32.mrb[0].mxu0
  %v3070 = vadd.f32 %v2557, %v3069
  %v3071 = vpop.f32.mrb[0].mxu0
  %v3072 = vadd.f32 %v2559, %v3071
  %v3073 = vpop.f32.mrb[0].mxu0
  %v3074 = vadd.f32 %v2561, %v3073
  %3075 = vmatprep.mubr.bf16.mxu0 0
  %3076 = vmatmul.mubr.bf16.gmra.mrb[0].mxu0 %v2163
  %v3077 = vpop.f32.mrb[0].mxu0
  %v3078 = vadd.f32 %v2565, %v3077
  %v3079 = vpop.f32.mrb[0].mxu0
  %v3080 = vadd.f32 %v2567, %v3079
  %v3081 = vpop.f32.mrb[0].mxu0
  %v3082 = vadd.f32 %v2569, %v3081
  %v3083 = vpop.f32.mrb[0].mxu0
  %v3084 = vadd.f32 %v2571, %v3083
  %3085 = vmatprep.mubr.bf16.mxu0 0
  %3086 = vmatmul.mubr.bf16.gmra.mrb[0].mxu0 %v2166
  %v3087 = vpop.f32.mrb[0].mxu0
  %v3088 = vadd.f32 %v2575, %v3087
  %v3089 = vpop.f32.mrb[0].mxu0
  %v3090 = vadd.f32 %v2577, %v3089
  %v3091 = vpop.f32.mrb[0].mxu0
  %v3092 = vadd.f32 %v2579, %v3091
  %v3093 = vpop.f32.mrb[0].mxu0
  %v3094 = vadd.f32 %v2581, %v3093
  %3095 = vmatprep.mubr.bf16.mxu0 0
  %3096 = vmatmul.mubr.bf16.gmra.mrb[0].mxu0 %v2169
  %v3097 = vpop.f32.mrb[0].mxu0
  %v3098 = vadd.f32 %v2585, %v3097
  %v3099 = vpop.f32.mrb[0].mxu0
  %v3100 = vadd.f32 %v2587, %v3099
  %v3101 = vpop.f32.mrb[0].mxu0
  %v3102 = vadd.f32 %v2589, %v3101
  %v3103 = vpop.f32.mrb[0].mxu0
  %v3104 = vadd.f32 %v2591, %v3103
  %3105 = vmatprep.mubr.bf16.mxu0 0
  %3106 = vmatmul.mubr.bf16.gmra.mrb[0].mxu0 %v2172
  %v3107 = vpop.f32.mrb[0].mxu0
  %v3108 = vadd.f32 %v2595, %v3107
  %v3109 = vpop.f32.mrb[0].mxu0
  %v3110 = vadd.f32 %v2597, %v3109
  %v3111 = vpop.f32.mrb[0].mxu0
  %v3112 = vadd.f32 %v2599, %v3111
  %v3113 = vpop.f32.mrb[0].mxu0
  %v3114 = vadd.f32 %v2601, %v3113
  %3115 = vmatprep.mubr.bf16.mxu0 0
  %3116 = vmatmul.mubr.bf16.gmra.mrb[0].mxu0 %v2175
  %v3117 = vpop.f32.mrb[0].mxu0
  %v3118 = vadd.f32 %v2605, %v3117
  %v3119 = vpop.f32.mrb[0].mxu0
  %v3120 = vadd.f32 %v2607, %v3119
  %v3121 = vpop.f32.mrb[0].mxu0
  %v3122 = vadd.f32 %v2609, %v3121
  %v3123 = vpop.f32.mrb[0].mxu0
  %v3124 = vadd.f32 %v2611, %v3123
  %3125 = vmatprep.mubr.bf16.mxu0 0
  %3126 = vmatmul.mubr.bf16.gmra.mrb[0].mxu0 %v2178
  %v3127 = vpop.f32.mrb[0].mxu0
  %v3128 = vadd.f32 %v2615, %v3127
  %v3129 = vpop.f32.mrb[0].mxu0
  %v3130 = vadd.f32 %v2617, %v3129
  %v3131 = vpop.f32.mrb[0].mxu0
  %v3132 = vadd.f32 %v2619, %v3131
  %v3133 = vpop.f32.mrb[0].mxu0
  %v3134 = vadd.f32 %v2621, %v3133
  %3135 = vmatprep.mubr.bf16.mxu0 0
  %3136 = vmatmul.mubr.bf16.gmra.mrb[0].mxu0 %v2181
  %v3137 = vpop.f32.mrb[0].mxu0
  %v3138 = vadd.f32 %v2625, %v3137
  %v3139 = vpop.f32.mrb[0].mxu0
  %v3140 = vadd.f32 %v2627, %v3139
  %v3141 = vpop.f32.mrb[0].mxu0
  %v3142 = vadd.f32 %v2629, %v3141
  %v3143 = vpop.f32.mrb[0].mxu0
  %v3144 = vadd.f32 %v2631, %v3143
  %3145 = vmatprep.mubr.bf16.mxu0 0
  %3146 = vmatmul.mubr.bf16.gmra.mrb[0].mxu0 %v2184
  %v3147 = vpop.f32.mrb[0].mxu0
  %v3148 = vadd.f32 %v2635, %v3147
  %v3149 = vpop.f32.mrb[0].mxu0
  %v3150 = vadd.f32 %v2637, %v3149
  %v3151 = vpop.f32.mrb[0].mxu0
  %v3152 = vadd.f32 %v2639, %v3151
  %v3153 = vpop.f32.mrb[0].mxu0
  %v3154 = vadd.f32 %v2641, %v3153
  %3155 = vmatprep.mubr.bf16.mxu0 0
  %3156 = vmatmul.mubr.bf16.gmra.mrb[0].mxu0 %v2187
  %v3157 = vpop.f32.mrb[0].mxu0
  %v3158 = vadd.f32 %v2645, %v3157
  %v3159 = vpop.f32.mrb[0].mxu0
  %v3160 = vadd.f32 %v2647, %v3159
  %v3161 = vpop.f32.mrb[0].mxu0
  %v3162 = vadd.f32 %v2649, %v3161
  %v3163 = vpop.f32.mrb[0].mxu0
  %v3164 = vadd.f32 %v2651, %v3163
  %3165 = vmatprep.mubr.bf16.mxu0 0
  %3166 = vmatmul.mubr.bf16.gmra.mrb[0].mxu0 %v2190
  %v3167 = vpop.f32.mrb[0].mxu0
  %v3168 = vadd.f32 %v2655, %v3167
  %v3169 = vpop.f32.mrb[0].mxu0
  %v3170 = vadd.f32 %v2657, %v3169
  %v3171 = vpop.f32.mrb[0].mxu0
  %v3172 = vadd.f32 %v2659, %v3171
  %v3173 = vpop.f32.mrb[0].mxu0
  %v3174 = vadd.f32 %v2661, %v3173
  %3175 = vmatprep.mubr.bf16.mxu0 0
  %3176 = vmatmul.mubr.bf16.gmra.mrb[0].mxu0 %v2193
  %v3177 = vpop.f32.mrb[0].mxu0
  %v3178 = vadd.f32 %v2665, %v3177
  %v3179 = vpop.f32.mrb[0].mxu0
  %v3180 = vadd.f32 %v2667, %v3179
  %v3181 = vpop.f32.mrb[0].mxu0
  %v3182 = vadd.f32 %v2669, %v3181
  %v3183 = vpop.f32.mrb[0].mxu0
  %v3184 = vadd.f32 %v2671, %v3183
  %3185 = vmatprep.mubr.bf16.mxu0 0
  %3186 = vmatmul.mubr.bf16.gmra.mrb[0].mxu0 %v2196
  %v3187 = vpop.f32.mrb[0].mxu0
  %v3188 = vadd.f32 %v2675, %v3187
  %v3189 = vpop.f32.mrb[0].mxu0
  %v3190 = vadd.f32 %v2677, %v3189
  %v3191 = vpop.f32.mrb[0].mxu0
  %v3192 = vadd.f32 %v2679, %v3191
  %v3193 = vpop.f32.mrb[0].mxu0
  %v3194 = vadd.f32 %v2681, %v3193
  %3195 = vmatprep.mubr.bf16.mxu0 0
  %3196 = vmatmul.mubr.bf16.gmra.mrb[0].mxu0 %v2199
  %v3197 = vpop.f32.mrb[0].mxu0
  %v3198 = vadd.f32 %v2685, %v3197
  %v3199 = vpop.f32.mrb[0].mxu0
  %v3200 = vadd.f32 %v2687, %v3199
  %v3201 = vpop.f32.mrb[0].mxu0
  %v3202 = vadd.f32 %v2689, %v3201
  %v3203 = vpop.f32.mrb[0].mxu0
  %v3204 = vadd.f32 %v2691, %v3203
  %3205 = vmatprep.mubr.bf16.mxu0 0
  %3206 = vmatmul.mubr.bf16.gmra.mrb[0].mxu0 %v2202
  %v3207 = vpop.f32.mrb[0].mxu0
  %v3208 = vadd.f32 %v2695, %v3207
  %v3209 = vpop.f32.mrb[0].mxu0
  %v3210 = vadd.f32 %v2697, %v3209
  %v3211 = vpop.f32.mrb[0].mxu0
  %v3212 = vadd.f32 %v2699, %v3211
  %v3213 = vpop.f32.mrb[0].mxu0
  %v3214 = vadd.f32 %v2701, %v3213
  %3215 = vmatprep.mubr.bf16.mxu0 0
  %3216 = vmatmul.mubr.bf16.gmra.mrb[0].mxu0 %v2205
  %v3217 = vpop.f32.mrb[0].mxu0
  %v3218 = vadd.f32 %v2705, %v3217
  %v3219 = vpop.f32.mrb[0].mxu0
  %v3220 = vadd.f32 %v2707, %v3219
  %v3221 = vpop.f32.mrb[0].mxu0
  %v3222 = vadd.f32 %v2709, %v3221
  %v3223 = vpop.f32.mrb[0].mxu0
  %v3224 = vadd.f32 %v2711, %v3223
  %3225 = vmatprep.mubr.bf16.mxu0 0
  %3226 = vmatmul.mubr.bf16.gmra.mrb[0].mxu0 %v2208
  %v3227 = vpop.f32.mrb[0].mxu0
  %v3228 = vadd.f32 %v2715, %v3227
  %v3229 = vpop.f32.mrb[0].mxu0
  %v3230 = vadd.f32 %v2717, %v3229
  %v3231 = vpop.f32.mrb[0].mxu0
  %v3232 = vadd.f32 %v2719, %v3231
  %v3233 = vpop.f32.mrb[0].mxu0
  %v3234 = vadd.f32 %v2721, %v3233
  %3235 = vmatprep.mubr.bf16.mxu0 0
  %3236 = vmatmul.mubr.bf16.gmra.mrb[0].mxu0 %v2211
  %v3237 = vpop.f32.mrb[0].mxu0
  %v3238 = vadd.f32 %v2725, %v3237
  %v3239 = vpop.f32.mrb[0].mxu0
  %v3240 = vadd.f32 %v2727, %v3239
  %v3241 = vpop.f32.mrb[0].mxu0
  %v3242 = vadd.f32 %v2729, %v3241
  %v3243 = vpop.f32.mrb[0].mxu0
  %v3244 = vadd.f32 %v2731, %v3243
  %3245 = vdwg.mxu0
  %v3246 = vmax.f32 %v2768, 0.0
  %v3247 = vmax.f32 %v2770, 0.0
  %v3248 = vmax.f32 %v2772, 0.0
  %v3249 = vmax.f32 %v2774, 0.0
  %v3250 = vmax.f32 %v2778, 0.0
  %v3251 = vmax.f32 %v2780, 0.0
  %v3252 = vmax.f32 %v2782, 0.0
  %v3253 = vmax.f32 %v2784, 0.0
  %v3254 = vmax.f32 %v2788, 0.0
  %v3255 = vmax.f32 %v2790, 0.0
  %v3256 = vmax.f32 %v2792, 0.0
  %v3257 = vmax.f32 %v2794, 0.0
  %v3258 = vmax.f32 %v2798, 0.0
  %v3259 = vmax.f32 %v2800, 0.0
  %v3260 = vmax.f32 %v2802, 0.0
  %v3261 = vmax.f32 %v2804, 0.0
  %v3262 = vmax.f32 %v2808, 0.0
  %v3263 = vmax.f32 %v2810, 0.0
  %v3264 = vmax.f32 %v2812, 0.0
  %v3265 = vmax.f32 %v2814, 0.0
  %v3266 = vmax.f32 %v2818, 0.0
  %v3267 = vmax.f32 %v2820, 0.0
  %v3268 = vmax.f32 %v2822, 0.0
  %v3269 = vmax.f32 %v2824, 0.0
  %v3270 = vmax.f32 %v2828, 0.0
  %v3271 = vmax.f32 %v2830, 0.0
  %v3272 = vmax.f32 %v2832, 0.0
  %v3273 = vmax.f32 %v2834, 0.0
  %v3274 = vmax.f32 %v2838, 0.0
  %v3275 = vmax.f32 %v2840, 0.0
  %v3276 = vmax.f32 %v2842, 0.0
  %v3277 = vmax.f32 %v2844, 0.0
  %v3278 = vmax.f32 %v2848, 0.0
  %v3279 = vmax.f32 %v2850, 0.0
  %v3280 = vmax.f32 %v2852, 0.0
  %v3281 = vmax.f32 %v2854, 0.0
  %v3282 = vmax.f32 %v2858, 0.0
  %v3283 = vmax.f32 %v2860, 0.0
  %v3284 = vmax.f32 %v2862, 0.0
  %v3285 = vmax.f32 %v2864, 0.0
  %v3286 = vmax.f32 %v2868, 0.0
  %v3287 = vmax.f32 %v2870, 0.0
  %v3288 = vmax.f32 %v2872, 0.0
  %v3289 = vmax.f32 %v2874, 0.0
  %v3290 = vmax.f32 %v2878, 0.0
  %v3291 = vmax.f32 %v2880, 0.0
  %v3292 = vmax.f32 %v2882, 0.0
  %v3293 = vmax.f32 %v2884, 0.0
  %v3294 = vmax.f32 %v2888, 0.0
  %v3295 = vmax.f32 %v2890, 0.0
  %v3296 = vmax.f32 %v2892, 0.0
  %v3297 = vmax.f32 %v2894, 0.0
  %v3298 = vmax.f32 %v2898, 0.0
  %v3299 = vmax.f32 %v2900, 0.0
  %v3300 = vmax.f32 %v2902, 0.0
  %v3301 = vmax.f32 %v2904, 0.0
  %v3302 = vmax.f32 %v2908, 0.0
  %v3303 = vmax.f32 %v2910, 0.0
  %v3304 = vmax.f32 %v2912, 0.0
  %v3305 = vmax.f32 %v2914, 0.0
  %v3306 = vmax.f32 %v2918, 0.0
  %v3307 = vmax.f32 %v2920, 0.0
  %v3308 = vmax.f32 %v2922, 0.0
  %v3309 = vmax.f32 %v2924, 0.0
  %v3310 = vmax.f32 %v2928, 0.0
  %v3311 = vmax.f32 %v2930, 0.0
  %v3312 = vmax.f32 %v2932, 0.0
  %v3313 = vmax.f32 %v2934, 0.0
  %v3314 = vmax.f32 %v2938, 0.0
  %v3315 = vmax.f32 %v2940, 0.0
  %v3316 = vmax.f32 %v2942, 0.0
  %v3317 = vmax.f32 %v2944, 0.0
  %v3318 = vmax.f32 %v2948, 0.0
  %v3319 = vmax.f32 %v2950, 0.0
  %v3320 = vmax.f32 %v2952, 0.0
  %v3321 = vmax.f32 %v2954, 0.0
  %v3322 = vmax.f32 %v2958, 0.0
  %v3323 = vmax.f32 %v2960, 0.0
  %v3324 = vmax.f32 %v2962, 0.0
  %v3325 = vmax.f32 %v2964, 0.0
  %v3326 = vmax.f32 %v2968, 0.0
  %v3327 = vmax.f32 %v2970, 0.0
  %v3328 = vmax.f32 %v2972, 0.0
  %v3329 = vmax.f32 %v2974, 0.0
  %v3330 = vmax.f32 %v2978, 0.0
  %v3331 = vmax.f32 %v2980, 0.0
  %v3332 = vmax.f32 %v2982, 0.0
  %v3333 = vmax.f32 %v2984, 0.0
  %v3334 = vmax.f32 %v2988, 0.0
  %v3335 = vmax.f32 %v2990, 0.0
  %v3336 = vmax.f32 %v2992, 0.0
  %v3337 = vmax.f32 %v2994, 0.0
  %v3338 = vmax.f32 %v2998, 0.0
  %v3339 = vmax.f32 %v3000, 0.0
  %v3340 = vmax.f32 %v3002, 0.0
  %v3341 = vmax.f32 %v3004, 0.0
  %v3342 = vmax.f32 %v3008, 0.0
  %v3343 = vmax.f32 %v3010, 0.0
  %v3344 = vmax.f32 %v3012, 0.0
  %v3345 = vmax.f32 %v3014, 0.0
  %v3346 = vmax.f32 %v3018, 0.0
  %v3347 = vmax.f32 %v3020, 0.0
  %v3348 = vmax.f32 %v3022, 0.0
  %v3349 = vmax.f32 %v3024, 0.0
  %v3350 = vmax.f32 %v3028, 0.0
  %v3351 = vmax.f32 %v3030, 0.0
  %v3352 = vmax.f32 %v3032, 0.0
  %v3353 = vmax.f32 %v3034, 0.0
  %v3354 = vmax.f32 %v3038, 0.0
  %v3355 = vmax.f32 %v3040, 0.0
  %v3356 = vmax.f32 %v3042, 0.0
  %v3357 = vmax.f32 %v3044, 0.0
  %v3358 = vmax.f32 %v3048, 0.0
  %v3359 = vmax.f32 %v3050, 0.0
  %v3360 = vmax.f32 %v3052, 0.0
  %v3361 = vmax.f32 %v3054, 0.0
  %v3362 = vmax.f32 %v3058, 0.0
  %v3363 = vmax.f32 %v3060, 0.0
  %v3364 = vmax.f32 %v3062, 0.0
  %v3365 = vmax.f32 %v3064, 0.0
  %v3366 = vmax.f32 %v3068, 0.0
  %v3367 = vmax.f32 %v3070, 0.0
  %v3368 = vmax.f32 %v3072, 0.0
  %v3369 = vmax.f32 %v3074, 0.0
  %v3370 = vmax.f32 %v3078, 0.0
  %v3371 = vmax.f32 %v3080, 0.0
  %v3372 = vmax.f32 %v3082, 0.0
  %v3373 = vmax.f32 %v3084, 0.0
  %v3374 = vmax.f32 %v3088, 0.0
  %v3375 = vmax.f32 %v3090, 0.0
  %v3376 = vmax.f32 %v3092, 0.0
  %v3377 = vmax.f32 %v3094, 0.0
  %v3378 = vmax.f32 %v3098, 0.0
  %v3379 = vmax.f32 %v3100, 0.0
  %v3380 = vmax.f32 %v3102, 0.0
  %v3381 = vmax.f32 %v3104, 0.0
  %v3382 = vmax.f32 %v3108, 0.0
  %v3383 = vmax.f32 %v3110, 0.0
  %v3384 = vmax.f32 %v3112, 0.0
  %v3385 = vmax.f32 %v3114, 0.0
  %v3386 = vmax.f32 %v3118, 0.0
  %v3387 = vmax.f32 %v3120, 0.0
  %v3388 = vmax.f32 %v3122, 0.0
  %v3389 = vmax.f32 %v3124, 0.0
  %v3390 = vmax.f32 %v3128, 0.0
  %v3391 = vmax.f32 %v3130, 0.0
  %v3392 = vmax.f32 %v3132, 0.0
  %v3393 = vmax.f32 %v3134, 0.0
  %v3394 = vmax.f32 %v3138, 0.0
  %v3395 = vmax.f32 %v3140, 0.0
  %v3396 = vmax.f32 %v3142, 0.0
  %v3397 = vmax.f32 %v3144, 0.0
  %v3398 = vmax.f32 %v3148, 0.0
  %v3399 = vmax.f32 %v3150, 0.0
  %v3400 = vmax.f32 %v3152, 0.0
  %v3401 = vmax.f32 %v3154, 0.0
  %v3402 = vmax.f32 %v3158, 0.0
  %v3403 = vmax.f32 %v3160, 0.0
  %v3404 = vmax.f32 %v3162, 0.0
  %v3405 = vmax.f32 %v3164, 0.0
  %v3406 = vmax.f32 %v3168, 0.0
  %v3407 = vmax.f32 %v3170, 0.0
  %v3408 = vmax.f32 %v3172, 0.0
  %v3409 = vmax.f32 %v3174, 0.0
  %v3410 = vmax.f32 %v3178, 0.0
  %v3411 = vmax.f32 %v3180, 0.0
  %v3412 = vmax.f32 %v3182, 0.0
  %v3413 = vmax.f32 %v3184, 0.0
  %v3414 = vmax.f32 %v3188, 0.0
  %v3415 = vmax.f32 %v3190, 0.0
  %v3416 = vmax.f32 %v3192, 0.0
  %v3417 = vmax.f32 %v3194, 0.0
  %v3418 = vmax.f32 %v3198, 0.0
  %v3419 = vmax.f32 %v3200, 0.0
  %v3420 = vmax.f32 %v3202, 0.0
  %v3421 = vmax.f32 %v3204, 0.0
  %v3422 = vmax.f32 %v3208, 0.0
  %v3423 = vmax.f32 %v3210, 0.0
  %v3424 = vmax.f32 %v3212, 0.0
  %v3425 = vmax.f32 %v3214, 0.0
  %v3426 = vmax.f32 %v3218, 0.0
  %v3427 = vmax.f32 %v3220, 0.0
  %v3428 = vmax.f32 %v3222, 0.0
  %v3429 = vmax.f32 %v3224, 0.0
  %v3430 = vmax.f32 %v3228, 0.0
  %v3431 = vmax.f32 %v3230, 0.0
  %v3432 = vmax.f32 %v3232, 0.0
  %v3433 = vmax.f32 %v3234, 0.0
  %v3434 = vmax.f32 %v3238, 0.0
  %v3435 = vmax.f32 %v3240, 0.0
  %v3436 = vmax.f32 %v3242, 0.0
  %v3437 = vmax.f32 %v3244, 0.0
  %v3438 = vld [vmem:[%s3] sm:$0xff]
  %v3439 = vld [vmem:[%s3 + $0x8] sm:$0xff]
  %v3440 = vld [vmem:[%s3 + $0x10] sm:$0xff]
  %v3441 = vld [vmem:[%s3 + $0x18] sm:$0xff]
  %v3442 = vld [vmem:[%s3 + $0x20] sm:$0xff]
  %v3443 = vld [vmem:[%s3 + $0x28] sm:$0xff]
  %v3444 = vld [vmem:[%s3 + $0x30] sm:$0xff]
  %v3445 = vld [vmem:[%s3 + $0x38] sm:$0xff]
  %v3446 = vld [vmem:[%s3 + $0x40] sm:$0x3f]
  %v3447 = vadd.f32 %v3246, %v3342
  %v3448 = vadd.f32 %v3248, %v3344
  %v3449 = vadd.f32 %v3250, %v3346
  %v3450 = vadd.f32 %v3252, %v3348
  %v3451 = vadd.f32 %v3254, %v3350
  %v3452 = vadd.f32 %v3256, %v3352
  %v3453 = vadd.f32 %v3258, %v3354
  %v3454 = vadd.f32 %v3260, %v3356
  %v3455 = vadd.f32 %v3262, %v3358
  %v3456 = vadd.f32 %v3264, %v3360
  %v3457 = vadd.f32 %v3266, %v3362
  %v3458 = vadd.f32 %v3268, %v3364
  %v3459 = vadd.f32 %v3270, %v3366
  %v3460 = vadd.f32 %v3272, %v3368
  %v3461 = vadd.f32 %v3274, %v3370
  %v3462 = vadd.f32 %v3276, %v3372
  %v3463 = vadd.f32 %v3278, %v3374
  %v3464 = vadd.f32 %v3280, %v3376
  %v3465 = vadd.f32 %v3282, %v3378
  %v3466 = vadd.f32 %v3284, %v3380
  %v3467 = vadd.f32 %v3286, %v3382
  %v3468 = vadd.f32 %v3288, %v3384
  %v3469 = vadd.f32 %v3290, %v3386
  %v3470 = vadd.f32 %v3292, %v3388
  %v3471 = vadd.f32 %v3294, %v3390
  %v3472 = vadd.f32 %v3296, %v3392
  %v3473 = vadd.f32 %v3298, %v3394
  %v3474 = vadd.f32 %v3300, %v3396
  %v3475 = vadd.f32 %v3302, %v3398
  %v3476 = vadd.f32 %v3304, %v3400
  %v3477 = vadd.f32 %v3306, %v3402
  %v3478 = vadd.f32 %v3308, %v3404
  %v3479 = vadd.f32 %v3310, %v3406
  %v3480 = vadd.f32 %v3312, %v3408
  %v3481 = vadd.f32 %v3314, %v3410
  %v3482 = vadd.f32 %v3316, %v3412
  %v3483 = vadd.f32 %v3318, %v3414
  %v3484 = vadd.f32 %v3320, %v3416
  %v3485 = vadd.f32 %v3322, %v3418
  %v3486 = vadd.f32 %v3324, %v3420
  %v3487 = vadd.f32 %v3326, %v3422
  %v3488 = vadd.f32 %v3328, %v3424
  %v3489 = vadd.f32 %v3330, %v3426
  %v3490 = vadd.f32 %v3332, %v3428
  %v3491 = vadd.f32 %v3334, %v3430
  %v3492 = vadd.f32 %v3336, %v3432
  %v3493 = vadd.f32 %v3338, %v3434
  %v3494 = vadd.f32 %v3340, %v3436
  %v3496 = vsel %vm109, %v3447, 0
  %v3499 = vsel %vm109, %v3448, 0
  %v3502 = vsel %vm109, %v3449, 0
  %v3505 = vsel %vm109, %v3450, 0
  %v3508 = vsel %vm109, %v3451, 0
  %v3511 = vsel %vm109, %v3452, 0
  %v3514 = vsel %vm109, %v3453, 0
  %v3517 = vsel %vm109, %v3454, 0
  %v3520 = vsel %vm109, %v3455, 0
  %v3523 = vsel %vm109, %v3456, 0
  %v3526 = vsel %vm109, %v3457, 0
  %v3529 = vsel %vm109, %v3458, 0
  %v3532 = vsel %vm109, %v3459, 0
  %v3535 = vsel %vm109, %v3460, 0
  %v3538 = vsel %vm109, %v3461, 0
  %v3541 = vsel %vm109, %v3462, 0
  %v3544 = vsel %vm109, %v3463, 0
  %v3547 = vsel %vm109, %v3464, 0
  %v3550 = vsel %vm109, %v3465, 0
  %v3553 = vsel %vm109, %v3466, 0
  %v3556 = vsel %vm109, %v3467, 0
  %v3559 = vsel %vm109, %v3468, 0
  %v3562 = vsel %vm109, %v3469, 0
  %v3565 = vsel %vm109, %v3470, 0
  %v3568 = vsel %vm109, %v3471, 0
  %v3571 = vsel %vm109, %v3472, 0
  %v3574 = vsel %vm109, %v3473, 0
  %v3577 = vsel %vm109, %v3474, 0
  %v3580 = vsel %vm109, %v3475, 0
  %v3583 = vsel %vm109, %v3476, 0
  %v3586 = vsel %vm109, %v3477, 0
  %v3589 = vsel %vm109, %v3478, 0
  %v3592 = vsel %vm109, %v3479, 0
  %v3595 = vsel %vm109, %v3480, 0
  %v3598 = vsel %vm109, %v3481, 0
  %v3601 = vsel %vm109, %v3482, 0
  %v3604 = vsel %vm109, %v3483, 0
  %v3607 = vsel %vm109, %v3484, 0
  %v3610 = vsel %vm109, %v3485, 0
  %v3613 = vsel %vm109, %v3486, 0
  %v3616 = vsel %vm109, %v3487, 0
  %v3619 = vsel %vm109, %v3488, 0
  %v3622 = vsel %vm109, %v3489, 0
  %v3625 = vsel %vm109, %v3490, 0
  %v3628 = vsel %vm109, %v3491, 0
  %v3631 = vsel %vm109, %v3492, 0
  %v3634 = vsel %vm109, %v3493, 0
  %v3637 = vsel %vm109, %v3494, 0
  %vm3639 = vcmask 1045504
  %v3641 = vsel %vm3639, %v3446, 0
  %3643 = vmatprep.subr.mxu0 0.0
  %3644 = vmatpush1.msra.mxu0 %v3438
  %3645 = vmatprep.subr.mxu0 0.0
  %3646 = vmatpush1.msra.mxu0 %v3439
  %3647 = vmatprep.subr.mxu0 0.0
  %3648 = vmatpush1.msra.mxu0 %v3440
  %3649 = vmatprep.subr.mxu0 0.0
  %3650 = vmatpush1.msra.mxu0 %v3441
  %3651 = vmatprep.subr.mxu0 0.0
  %3652 = vmatpush1.msra.mxu0 %v3442
  %3653 = vmatprep.subr.mxu0 0.0
  %3654 = vmatpush1.msra.mxu0 %v3443
  %3655 = vmatprep.subr.mxu0 0.0
  %3656 = vmatpush1.msra.mxu0 %v3444
  %3657 = vmatprep.subr.mxu0 0.0
  %3658 = vmatpush1.msra.mxu0 %v3445
  %3659 = vmatprep.subr.mxu0 0.0
  %3660 = vmatpush1.msra.mxu0 %v3641
  %3661 = vmatprep.subr.mxu0 0.0
  %3662 = vmatpush1.msra.mxu0 0.0
  %3663 = vmatprep.subr.mxu0 0.0
  %3664 = vmatpush1.msra.mxu0 0.0
  %3665 = vmatprep.subr.mxu0 0.0
  %3666 = vmatpush1.msra.mxu0 0.0
  %3667 = vmatprep.subr.mxu0 0.0
  %3668 = vmatpush1.msra.mxu0 0.0
  %3669 = vmatprep.subr.mxu0 0.0
  %3670 = vmatpush1.msra.mxu0 0.0
  %3671 = vmatprep.subr.mxu0 0.0
  %3672 = vmatpush1.msra.mxu0 0.0
  %3673 = vmatprep.subr.mxu0 0.0
  %3674 = vmatpush1.msra.mxu0 0.0
  %3675 = vmatprep.subr.mxu0 0.0
  %3676 = vmatpush1.msra.mxu0 0.0
  %3677 = vmatprep.subr.mxu0 0.0
  %3678 = vmatpush1.msra.mxu0 0.0
  %3679 = vmatprep.subr.mxu0 0.0
  %3680 = vmatpush1.msra.mxu0 0.0
  %3681 = vmatprep.subr.mxu0 0.0
  %3682 = vmatpush1.msra.mxu0 0.0
  %3683 = vmatprep.subr.mxu0 0.0
  %3684 = vmatpush1.msra.mxu0 0.0
  %3685 = vmatprep.subr.mxu0 0.0
  %3686 = vmatpush1.msra.mxu0 0.0
  %3687 = vmatprep.subr.mxu0 0.0
  %3688 = vmatpush1.msra.mxu0 0.0
  %3689 = vmatprep.subr.mxu0 0.0
  %3690 = vmatpush1.msra.mxu0 0.0
  %3691 = vmatprep.subr.mxu0 0.0
  %3692 = vmatpush1.msra.mxu0 0.0
  %3693 = vmatprep.subr.mxu0 0.0
  %3694 = vmatpush1.msra.mxu0 0.0
  %3695 = vmatprep.subr.mxu0 0.0
  %3696 = vmatpush1.msra.mxu0 0.0
  %3697 = vmatprep.subr.mxu0 0.0
  %3698 = vmatpush1.msra.mxu0 0.0
  %3699 = vmatprep.subr.mxu0 0.0
  %3700 = vmatpush1.msra.mxu0 0.0
  %3701 = vmatprep.subr.mxu0 0.0
  %3702 = vmatpush1.msra.mxu0 0.0
  %3703 = vmatprep.subr.mxu0 0.0
  %3704 = vmatpush1.msra.mxu0 0.0
  %3705 = vmatprep.subr.mxu0 0.0
  %3706 = vmatpush1.msra.mxu0 0.0
  %3707 = vmatprep.mubr.f32.mxu0 0.0
  %3708 = vmatmul.mubr.f32.gmra.mrb[0].mxu0 %v3496
  %v3709 = vpop.f32.mrb[0].mxu0
  %v3710 = vadd.f32 0.0, %v3709
  %v3711 = vpop.f32.mrb[0].mxu0
  %3712 = vmatprep.mubr.f32.mxu0 0.0
  %3713 = vmatmul.mubr.f32.gmra.mrb[0].mxu0 %v3499
  %v3714 = vpop.f32.mrb[0].mxu0
  %v3715 = vadd.f32 0.0, %v3714
  %v3716 = vpop.f32.mrb[0].mxu0
  %3717 = vmatprep.mubr.f32.mxu0 0.0
  %3718 = vmatmul.mubr.f32.gmra.mrb[0].mxu0 %v3502
  %v3719 = vpop.f32.mrb[0].mxu0
  %v3720 = vadd.f32 0.0, %v3719
  %v3721 = vpop.f32.mrb[0].mxu0
  %3722 = vmatprep.mubr.f32.mxu0 0.0
  %3723 = vmatmul.mubr.f32.gmra.mrb[0].mxu0 %v3505
  %v3724 = vpop.f32.mrb[0].mxu0
  %v3725 = vadd.f32 0.0, %v3724
  %v3726 = vpop.f32.mrb[0].mxu0
  %3727 = vmatprep.mubr.f32.mxu0 0.0
  %3728 = vmatmul.mubr.f32.gmra.mrb[0].mxu0 %v3508
  %v3729 = vpop.f32.mrb[0].mxu0
  %v3730 = vadd.f32 0.0, %v3729
  %v3731 = vpop.f32.mrb[0].mxu0
  %3732 = vmatprep.mubr.f32.mxu0 0.0
  %3733 = vmatmul.mubr.f32.gmra.mrb[0].mxu0 %v3511
  %v3734 = vpop.f32.mrb[0].mxu0
  %v3735 = vadd.f32 0.0, %v3734
  %v3736 = vpop.f32.mrb[0].mxu0
  %3737 = vmatprep.mubr.f32.mxu0 0.0
  %3738 = vmatmul.mubr.f32.gmra.mrb[0].mxu0 %v3514
  %v3739 = vpop.f32.mrb[0].mxu0
  %v3740 = vadd.f32 0.0, %v3739
  %v3741 = vpop.f32.mrb[0].mxu0
  %3742 = vmatprep.mubr.f32.mxu0 0.0
  %3743 = vmatmul.mubr.f32.gmra.mrb[0].mxu0 %v3517
  %v3744 = vpop.f32.mrb[0].mxu0
  %v3745 = vadd.f32 0.0, %v3744
  %v3746 = vpop.f32.mrb[0].mxu0
  %3747 = vmatprep.mubr.f32.mxu0 0.0
  %3748 = vmatmul.mubr.f32.gmra.mrb[0].mxu0 %v3520
  %v3749 = vpop.f32.mrb[0].mxu0
  %v3750 = vadd.f32 0.0, %v3749
  %v3751 = vpop.f32.mrb[0].mxu0
  %3752 = vmatprep.mubr.f32.mxu0 0.0
  %3753 = vmatmul.mubr.f32.gmra.mrb[0].mxu0 %v3523
  %v3754 = vpop.f32.mrb[0].mxu0
  %v3755 = vadd.f32 0.0, %v3754
  %v3756 = vpop.f32.mrb[0].mxu0
  %3757 = vmatprep.mubr.f32.mxu0 0.0
  %3758 = vmatmul.mubr.f32.gmra.mrb[0].mxu0 %v3526
  %v3759 = vpop.f32.mrb[0].mxu0
  %v3760 = vadd.f32 0.0, %v3759
  %v3761 = vpop.f32.mrb[0].mxu0
  %3762 = vmatprep.mubr.f32.mxu0 0.0
  %3763 = vmatmul.mubr.f32.gmra.mrb[0].mxu0 %v3529
  %v3764 = vpop.f32.mrb[0].mxu0
  %v3765 = vadd.f32 0.0, %v3764
  %v3766 = vpop.f32.mrb[0].mxu0
  %3767 = vmatprep.mubr.f32.mxu0 0.0
  %3768 = vmatmul.mubr.f32.gmra.mrb[0].mxu0 %v3532
  %v3769 = vpop.f32.mrb[0].mxu0
  %v3770 = vadd.f32 0.0, %v3769
  %v3771 = vpop.f32.mrb[0].mxu0
  %3772 = vmatprep.mubr.f32.mxu0 0.0
  %3773 = vmatmul.mubr.f32.gmra.mrb[0].mxu0 %v3535
  %v3774 = vpop.f32.mrb[0].mxu0
  %v3775 = vadd.f32 0.0, %v3774
  %v3776 = vpop.f32.mrb[0].mxu0
  %3777 = vmatprep.mubr.f32.mxu0 0.0
  %3778 = vmatmul.mubr.f32.gmra.mrb[0].mxu0 %v3538
  %v3779 = vpop.f32.mrb[0].mxu0
  %v3780 = vadd.f32 0.0, %v3779
  %v3781 = vpop.f32.mrb[0].mxu0
  %3782 = vmatprep.mubr.f32.mxu0 0.0
  %3783 = vmatmul.mubr.f32.gmra.mrb[0].mxu0 %v3541
  %v3784 = vpop.f32.mrb[0].mxu0
  %v3785 = vadd.f32 0.0, %v3784
  %v3786 = vpop.f32.mrb[0].mxu0
  %3787 = vmatprep.mubr.f32.mxu0 0.0
  %3788 = vmatmul.mubr.f32.gmra.mrb[0].mxu0 %v3544
  %v3789 = vpop.f32.mrb[0].mxu0
  %v3790 = vadd.f32 0.0, %v3789
  %v3791 = vpop.f32.mrb[0].mxu0
  %3792 = vmatprep.mubr.f32.mxu0 0.0
  %3793 = vmatmul.mubr.f32.gmra.mrb[0].mxu0 %v3547
  %v3794 = vpop.f32.mrb[0].mxu0
  %v3795 = vadd.f32 0.0, %v3794
  %v3796 = vpop.f32.mrb[0].mxu0
  %3797 = vmatprep.mubr.f32.mxu0 0.0
  %3798 = vmatmul.mubr.f32.gmra.mrb[0].mxu0 %v3550
  %v3799 = vpop.f32.mrb[0].mxu0
  %v3800 = vadd.f32 0.0, %v3799
  %v3801 = vpop.f32.mrb[0].mxu0
  %3802 = vmatprep.mubr.f32.mxu0 0.0
  %3803 = vmatmul.mubr.f32.gmra.mrb[0].mxu0 %v3553
  %v3804 = vpop.f32.mrb[0].mxu0
  %v3805 = vadd.f32 0.0, %v3804
  %v3806 = vpop.f32.mrb[0].mxu0
  %3807 = vmatprep.mubr.f32.mxu0 0.0
  %3808 = vmatmul.mubr.f32.gmra.mrb[0].mxu0 %v3556
  %v3809 = vpop.f32.mrb[0].mxu0
  %v3810 = vadd.f32 0.0, %v3809
  %v3811 = vpop.f32.mrb[0].mxu0
  %3812 = vmatprep.mubr.f32.mxu0 0.0
  %3813 = vmatmul.mubr.f32.gmra.mrb[0].mxu0 %v3559
  %v3814 = vpop.f32.mrb[0].mxu0
  %v3815 = vadd.f32 0.0, %v3814
  %v3816 = vpop.f32.mrb[0].mxu0
  %3817 = vmatprep.mubr.f32.mxu0 0.0
  %3818 = vmatmul.mubr.f32.gmra.mrb[0].mxu0 %v3562
  %v3819 = vpop.f32.mrb[0].mxu0
  %v3820 = vadd.f32 0.0, %v3819
  %v3821 = vpop.f32.mrb[0].mxu0
  %3822 = vmatprep.mubr.f32.mxu0 0.0
  %3823 = vmatmul.mubr.f32.gmra.mrb[0].mxu0 %v3565
  %v3824 = vpop.f32.mrb[0].mxu0
  %v3825 = vadd.f32 0.0, %v3824
  %v3826 = vpop.f32.mrb[0].mxu0
  %3827 = vmatprep.mubr.f32.mxu0 0.0
  %3828 = vmatmul.mubr.f32.gmra.mrb[0].mxu0 %v3568
  %v3829 = vpop.f32.mrb[0].mxu0
  %v3830 = vadd.f32 0.0, %v3829
  %v3831 = vpop.f32.mrb[0].mxu0
  %3832 = vmatprep.mubr.f32.mxu0 0.0
  %3833 = vmatmul.mubr.f32.gmra.mrb[0].mxu0 %v3571
  %v3834 = vpop.f32.mrb[0].mxu0
  %v3835 = vadd.f32 0.0, %v3834
  %v3836 = vpop.f32.mrb[0].mxu0
  %3837 = vmatprep.mubr.f32.mxu0 0.0
  %3838 = vmatmul.mubr.f32.gmra.mrb[0].mxu0 %v3574
  %v3839 = vpop.f32.mrb[0].mxu0
  %v3840 = vadd.f32 0.0, %v3839
  %v3841 = vpop.f32.mrb[0].mxu0
  %3842 = vmatprep.mubr.f32.mxu0 0.0
  %3843 = vmatmul.mubr.f32.gmra.mrb[0].mxu0 %v3577
  %v3844 = vpop.f32.mrb[0].mxu0
  %v3845 = vadd.f32 0.0, %v3844
  %v3846 = vpop.f32.mrb[0].mxu0
  %3847 = vmatprep.mubr.f32.mxu0 0.0
  %3848 = vmatmul.mubr.f32.gmra.mrb[0].mxu0 %v3580
  %v3849 = vpop.f32.mrb[0].mxu0
  %v3850 = vadd.f32 0.0, %v3849
  %v3851 = vpop.f32.mrb[0].mxu0
  %3852 = vmatprep.mubr.f32.mxu0 0.0
  %3853 = vmatmul.mubr.f32.gmra.mrb[0].mxu0 %v3583
  %v3854 = vpop.f32.mrb[0].mxu0
  %v3855 = vadd.f32 0.0, %v3854
  %v3856 = vpop.f32.mrb[0].mxu0
  %3857 = vmatprep.mubr.f32.mxu0 0.0
  %3858 = vmatmul.mubr.f32.gmra.mrb[0].mxu0 %v3586
  %v3859 = vpop.f32.mrb[0].mxu0
  %v3860 = vadd.f32 0.0, %v3859
  %v3861 = vpop.f32.mrb[0].mxu0
  %3862 = vmatprep.mubr.f32.mxu0 0.0
  %3863 = vmatmul.mubr.f32.gmra.mrb[0].mxu0 %v3589
  %v3864 = vpop.f32.mrb[0].mxu0
  %v3865 = vadd.f32 0.0, %v3864
  %v3866 = vpop.f32.mrb[0].mxu0
  %3867 = vmatprep.mubr.f32.mxu0 0.0
  %3868 = vmatmul.mubr.f32.gmra.mrb[0].mxu0 %v3592
  %v3869 = vpop.f32.mrb[0].mxu0
  %v3870 = vadd.f32 0.0, %v3869
  %v3871 = vpop.f32.mrb[0].mxu0
  %3872 = vmatprep.mubr.f32.mxu0 0.0
  %3873 = vmatmul.mubr.f32.gmra.mrb[0].mxu0 %v3595
  %v3874 = vpop.f32.mrb[0].mxu0
  %v3875 = vadd.f32 0.0, %v3874
  %v3876 = vpop.f32.mrb[0].mxu0
  %3877 = vmatprep.mubr.f32.mxu0 0.0
  %3878 = vmatmul.mubr.f32.gmra.mrb[0].mxu0 %v3598
  %v3879 = vpop.f32.mrb[0].mxu0
  %v3880 = vadd.f32 0.0, %v3879
  %v3881 = vpop.f32.mrb[0].mxu0
  %3882 = vmatprep.mubr.f32.mxu0 0.0
  %3883 = vmatmul.mubr.f32.gmra.mrb[0].mxu0 %v3601
  %v3884 = vpop.f32.mrb[0].mxu0
  %v3885 = vadd.f32 0.0, %v3884
  %v3886 = vpop.f32.mrb[0].mxu0
  %3887 = vmatprep.mubr.f32.mxu0 0.0
  %3888 = vmatmul.mubr.f32.gmra.mrb[0].mxu0 %v3604
  %v3889 = vpop.f32.mrb[0].mxu0
  %v3890 = vadd.f32 0.0, %v3889
  %v3891 = vpop.f32.mrb[0].mxu0
  %3892 = vmatprep.mubr.f32.mxu0 0.0
  %3893 = vmatmul.mubr.f32.gmra.mrb[0].mxu0 %v3607
  %v3894 = vpop.f32.mrb[0].mxu0
  %v3895 = vadd.f32 0.0, %v3894
  %v3896 = vpop.f32.mrb[0].mxu0
  %3897 = vmatprep.mubr.f32.mxu0 0.0
  %3898 = vmatmul.mubr.f32.gmra.mrb[0].mxu0 %v3610
  %v3899 = vpop.f32.mrb[0].mxu0
  %v3900 = vadd.f32 0.0, %v3899
  %v3901 = vpop.f32.mrb[0].mxu0
  %3902 = vmatprep.mubr.f32.mxu0 0.0
  %3903 = vmatmul.mubr.f32.gmra.mrb[0].mxu0 %v3613
  %v3904 = vpop.f32.mrb[0].mxu0
  %v3905 = vadd.f32 0.0, %v3904
  %v3906 = vpop.f32.mrb[0].mxu0
  %3907 = vmatprep.mubr.f32.mxu0 0.0
  %3908 = vmatmul.mubr.f32.gmra.mrb[0].mxu0 %v3616
  %v3909 = vpop.f32.mrb[0].mxu0
  %v3910 = vadd.f32 0.0, %v3909
  %v3911 = vpop.f32.mrb[0].mxu0
  %3912 = vmatprep.mubr.f32.mxu0 0.0
  %3913 = vmatmul.mubr.f32.gmra.mrb[0].mxu0 %v3619
  %v3914 = vpop.f32.mrb[0].mxu0
  %v3915 = vadd.f32 0.0, %v3914
  %v3916 = vpop.f32.mrb[0].mxu0
  %3917 = vmatprep.mubr.f32.mxu0 0.0
  %3918 = vmatmul.mubr.f32.gmra.mrb[0].mxu0 %v3622
  %v3919 = vpop.f32.mrb[0].mxu0
  %v3920 = vadd.f32 0.0, %v3919
  %v3921 = vpop.f32.mrb[0].mxu0
  %3922 = vmatprep.mubr.f32.mxu0 0.0
  %3923 = vmatmul.mubr.f32.gmra.mrb[0].mxu0 %v3625
  %v3924 = vpop.f32.mrb[0].mxu0
  %v3925 = vadd.f32 0.0, %v3924
  %v3926 = vpop.f32.mrb[0].mxu0
  %3927 = vmatprep.mubr.f32.mxu0 0.0
  %3928 = vmatmul.mubr.f32.gmra.mrb[0].mxu0 %v3628
  %v3929 = vpop.f32.mrb[0].mxu0
  %v3930 = vadd.f32 0.0, %v3929
  %v3931 = vpop.f32.mrb[0].mxu0
  %3932 = vmatprep.mubr.f32.mxu0 0.0
  %3933 = vmatmul.mubr.f32.gmra.mrb[0].mxu0 %v3631
  %v3934 = vpop.f32.mrb[0].mxu0
  %v3935 = vadd.f32 0.0, %v3934
  %v3936 = vpop.f32.mrb[0].mxu0
  %3937 = vmatprep.mubr.f32.mxu0 0.0
  %3938 = vmatmul.mubr.f32.gmra.mrb[0].mxu0 %v3634
  %v3939 = vpop.f32.mrb[0].mxu0
  %v3940 = vadd.f32 0.0, %v3939
  %v3941 = vpop.f32.mrb[0].mxu0
  %3942 = vmatprep.mubr.f32.mxu0 0.0
  %3943 = vmatmul.mubr.f32.gmra.mrb[0].mxu0 %v3637
  %v3944 = vpop.f32.mrb[0].mxu0
  %v3945 = vadd.f32 0.0, %v3944
  %v3946 = vpop.f32.mrb[0].mxu0
  %3947 = vdwg.mxu0
  %vm3948 = vcmask 285696
  %3949 = vst.msk [vmem:[%s4] sm:$0xff] %vm3948, %v3710
  %3950 = vst.msk [vmem:[%s4 + $0x8] sm:$0xff] %vm3948, %v3715
  %3951 = vst.msk [vmem:[%s4 + $0x10] sm:$0xff] %vm3948, %v3720
  %3952 = vst.msk [vmem:[%s4 + $0x18] sm:$0xff] %vm3948, %v3725
  %3953 = vst.msk [vmem:[%s4 + $0x20] sm:$0xff] %vm3948, %v3730
  %3954 = vst.msk [vmem:[%s4 + $0x28] sm:$0xff] %vm3948, %v3735
  %3955 = vst.msk [vmem:[%s4 + $0x30] sm:$0xff] %vm3948, %v3740
  %3956 = vst.msk [vmem:[%s4 + $0x38] sm:$0xff] %vm3948, %v3745
  %3957 = vst.msk [vmem:[%s4 + $0x40] sm:$0xff] %vm3948, %v3750
  %3958 = vst.msk [vmem:[%s4 + $0x48] sm:$0xff] %vm3948, %v3755
  %3959 = vst.msk [vmem:[%s4 + $0x50] sm:$0xff] %vm3948, %v3760
  %3960 = vst.msk [vmem:[%s4 + $0x58] sm:$0xff] %vm3948, %v3765
  %3961 = vst.msk [vmem:[%s4 + $0x60] sm:$0xff] %vm3948, %v3770
  %3962 = vst.msk [vmem:[%s4 + $0x68] sm:$0xff] %vm3948, %v3775
  %3963 = vst.msk [vmem:[%s4 + $0x70] sm:$0xff] %vm3948, %v3780
  %3964 = vst.msk [vmem:[%s4 + $0x78] sm:$0xff] %vm3948, %v3785
  %3965 = vst.msk [vmem:[%s4 + $0x80] sm:$0xff] %vm3948, %v3790
  %3966 = vst.msk [vmem:[%s4 + $0x88] sm:$0xff] %vm3948, %v3795
  %3967 = vst.msk [vmem:[%s4 + $0x90] sm:$0xff] %vm3948, %v3800
  %3968 = vst.msk [vmem:[%s4 + $0x98] sm:$0xff] %vm3948, %v3805
  %3969 = vst.msk [vmem:[%s4 + $0xa0] sm:$0xff] %vm3948, %v3810
  %3970 = vst.msk [vmem:[%s4 + $0xa8] sm:$0xff] %vm3948, %v3815
  %3971 = vst.msk [vmem:[%s4 + $0xb0] sm:$0xff] %vm3948, %v3820
  %3972 = vst.msk [vmem:[%s4 + $0xb8] sm:$0xff] %vm3948, %v3825
  %3973 = vst.msk [vmem:[%s4 + $0xc0] sm:$0xff] %vm3948, %v3830
  %3974 = vst.msk [vmem:[%s4 + $0xc8] sm:$0xff] %vm3948, %v3835
  %3975 = vst.msk [vmem:[%s4 + $0xd0] sm:$0xff] %vm3948, %v3840
  %3976 = vst.msk [vmem:[%s4 + $0xd8] sm:$0xff] %vm3948, %v3845
  %3977 = vst.msk [vmem:[%s4 + $0xe0] sm:$0xff] %vm3948, %v3850
  %3978 = vst.msk [vmem:[%s4 + $0xe8] sm:$0xff] %vm3948, %v3855
  %3979 = vst.msk [vmem:[%s4 + $0xf0] sm:$0xff] %vm3948, %v3860
  %3980 = vst.msk [vmem:[%s4 + $0xf8] sm:$0xff] %vm3948, %v3865
  %3981 = vst.msk [vmem:[%s4 + $0x100] sm:$0xff] %vm3948, %v3870
  %3982 = vst.msk [vmem:[%s4 + $0x108] sm:$0xff] %vm3948, %v3875
  %3983 = vst.msk [vmem:[%s4 + $0x110] sm:$0xff] %vm3948, %v3880
  %3984 = vst.msk [vmem:[%s4 + $0x118] sm:$0xff] %vm3948, %v3885
  %3985 = vst.msk [vmem:[%s4 + $0x120] sm:$0xff] %vm3948, %v3890
  %3986 = vst.msk [vmem:[%s4 + $0x128] sm:$0xff] %vm3948, %v3895
  %3987 = vst.msk [vmem:[%s4 + $0x130] sm:$0xff] %vm3948, %v3900
  %3988 = vst.msk [vmem:[%s4 + $0x138] sm:$0xff] %vm3948, %v3905
  %3989 = vst.msk [vmem:[%s4 + $0x140] sm:$0xff] %vm3948, %v3910
  %3990 = vst.msk [vmem:[%s4 + $0x148] sm:$0xff] %vm3948, %v3915
  %3991 = vst.msk [vmem:[%s4 + $0x150] sm:$0xff] %vm3948, %v3920
  %3992 = vst.msk [vmem:[%s4 + $0x158] sm:$0xff] %vm3948, %v3925
  %3993 = vst.msk [vmem:[%s4 + $0x160] sm:$0xff] %vm3948, %v3930
  %3994 = vst.msk [vmem:[%s4 + $0x168] sm:$0xff] %vm3948, %v3935
  %3995 = vst.msk [vmem:[%s4 + $0x170] sm:$0xff] %vm3948, %v3940
  %3996 = vst.msk [vmem:[%s4 + $0x178] sm:$0xff] %vm3948, %v3945
  %v3997 = vadd.f32 %v3247, %v3343
  %v3998 = vadd.f32 %v3249, %v3345
  %v3999 = vadd.f32 %v3251, %v3347
  %v4000 = vadd.f32 %v3253, %v3349
  %v4001 = vadd.f32 %v3255, %v3351
  %v4002 = vadd.f32 %v3257, %v3353
  %v4003 = vadd.f32 %v3259, %v3355
  %v4004 = vadd.f32 %v3261, %v3357
  %v4005 = vadd.f32 %v3263, %v3359
  %v4006 = vadd.f32 %v3265, %v3361
  %v4007 = vadd.f32 %v3267, %v3363
  %v4008 = vadd.f32 %v3269, %v3365
  %v4009 = vadd.f32 %v3271, %v3367
  %v4010 = vadd.f32 %v3273, %v3369
  %v4011 = vadd.f32 %v3275, %v3371
  %v4012 = vadd.f32 %v3277, %v3373
  %v4013 = vadd.f32 %v3279, %v3375
  %v4014 = vadd.f32 %v3281, %v3377
  %v4015 = vadd.f32 %v3283, %v3379
  %v4016 = vadd.f32 %v3285, %v3381
  %v4017 = vadd.f32 %v3287, %v3383
  %v4018 = vadd.f32 %v3289, %v3385
  %v4019 = vadd.f32 %v3291, %v3387
  %v4020 = vadd.f32 %v3293, %v3389
  %v4021 = vadd.f32 %v3295, %v3391
  %v4022 = vadd.f32 %v3297, %v3393
  %v4023 = vadd.f32 %v3299, %v3395
  %v4024 = vadd.f32 %v3301, %v3397
  %v4025 = vadd.f32 %v3303, %v3399
  %v4026 = vadd.f32 %v3305, %v3401
  %v4027 = vadd.f32 %v3307, %v3403
  %v4028 = vadd.f32 %v3309, %v3405
  %v4029 = vadd.f32 %v3311, %v3407
  %v4030 = vadd.f32 %v3313, %v3409
  %v4031 = vadd.f32 %v3315, %v3411
  %v4032 = vadd.f32 %v3317, %v3413
  %v4033 = vadd.f32 %v3319, %v3415
  %v4034 = vadd.f32 %v3321, %v3417
  %v4035 = vadd.f32 %v3323, %v3419
  %v4036 = vadd.f32 %v3325, %v3421
  %v4037 = vadd.f32 %v3327, %v3423
  %v4038 = vadd.f32 %v3329, %v3425
  %v4039 = vadd.f32 %v3331, %v3427
  %v4040 = vadd.f32 %v3333, %v3429
  %v4041 = vadd.f32 %v3335, %v3431
  %v4042 = vadd.f32 %v3337, %v3433
  %v4043 = vadd.f32 %v3339, %v3435
  %v4044 = vadd.f32 %v3341, %v3437
  %v4046 = vsel %vm109, %v3997, 0
  %v4049 = vsel %vm109, %v3998, 0
  %v4052 = vsel %vm109, %v3999, 0
  %v4055 = vsel %vm109, %v4000, 0
  %v4058 = vsel %vm109, %v4001, 0
  %v4061 = vsel %vm109, %v4002, 0
  %v4064 = vsel %vm109, %v4003, 0
  %v4067 = vsel %vm109, %v4004, 0
  %v4070 = vsel %vm109, %v4005, 0
  %v4073 = vsel %vm109, %v4006, 0
  %v4076 = vsel %vm109, %v4007, 0
  %v4079 = vsel %vm109, %v4008, 0
  %v4082 = vsel %vm109, %v4009, 0
  %v4085 = vsel %vm109, %v4010, 0
  %v4088 = vsel %vm109, %v4011, 0
  %v4091 = vsel %vm109, %v4012, 0
  %v4094 = vsel %vm109, %v4013, 0
  %v4097 = vsel %vm109, %v4014, 0
  %v4100 = vsel %vm109, %v4015, 0
  %v4103 = vsel %vm109, %v4016, 0
  %v4106 = vsel %vm109, %v4017, 0
  %v4109 = vsel %vm109, %v4018, 0
  %v4112 = vsel %vm109, %v4019, 0
  %v4115 = vsel %vm109, %v4020, 0
  %v4118 = vsel %vm109, %v4021, 0
  %v4121 = vsel %vm109, %v4022, 0
  %v4124 = vsel %vm109, %v4023, 0
  %v4127 = vsel %vm109, %v4024, 0
  %v4130 = vsel %vm109, %v4025, 0
  %v4133 = vsel %vm109, %v4026, 0
  %v4136 = vsel %vm109, %v4027, 0
  %v4139 = vsel %vm109, %v4028, 0
  %v4142 = vsel %vm109, %v4029, 0
  %v4145 = vsel %vm109, %v4030, 0
  %v4148 = vsel %vm109, %v4031, 0
  %v4151 = vsel %vm109, %v4032, 0
  %v4154 = vsel %vm109, %v4033, 0
  %v4157 = vsel %vm109, %v4034, 0
  %v4160 = vsel %vm109, %v4035, 0
  %v4163 = vsel %vm109, %v4036, 0
  %v4166 = vsel %vm109, %v4037, 0
  %v4169 = vsel %vm109, %v4038, 0
  %v4172 = vsel %vm109, %v4039, 0
  %v4175 = vsel %vm109, %v4040, 0
  %v4178 = vsel %vm109, %v4041, 0
  %v4181 = vsel %vm109, %v4042, 0
  %v4184 = vsel %vm109, %v4043, 0
  %v4187 = vsel %vm109, %v4044, 0
  %4189 = vmatprep.subr.mxu0 0.0
  %4190 = vmatpush1.msra.mxu0 %v3438
  %4191 = vmatprep.subr.mxu0 0.0
  %4192 = vmatpush1.msra.mxu0 %v3439
  %4193 = vmatprep.subr.mxu0 0.0
  %4194 = vmatpush1.msra.mxu0 %v3440
  %4195 = vmatprep.subr.mxu0 0.0
  %4196 = vmatpush1.msra.mxu0 %v3441
  %4197 = vmatprep.subr.mxu0 0.0
  %4198 = vmatpush1.msra.mxu0 %v3442
  %4199 = vmatprep.subr.mxu0 0.0
  %4200 = vmatpush1.msra.mxu0 %v3443
  %4201 = vmatprep.subr.mxu0 0.0
  %4202 = vmatpush1.msra.mxu0 %v3444
  %4203 = vmatprep.subr.mxu0 0.0
  %4204 = vmatpush1.msra.mxu0 %v3445
  %4205 = vmatprep.subr.mxu0 0.0
  %4206 = vmatpush1.msra.mxu0 %v3641
  %4207 = vmatprep.subr.mxu0 0.0
  %4208 = vmatpush1.msra.mxu0 0.0
  %4209 = vmatprep.subr.mxu0 0.0
  %4210 = vmatpush1.msra.mxu0 0.0
  %4211 = vmatprep.subr.mxu0 0.0
  %4212 = vmatpush1.msra.mxu0 0.0
  %4213 = vmatprep.subr.mxu0 0.0
  %4214 = vmatpush1.msra.mxu0 0.0
  %4215 = vmatprep.subr.mxu0 0.0
  %4216 = vmatpush1.msra.mxu0 0.0
  %4217 = vmatprep.subr.mxu0 0.0
  %4218 = vmatpush1.msra.mxu0 0.0
  %4219 = vmatprep.subr.mxu0 0.0
  %4220 = vmatpush1.msra.mxu0 0.0
  %4221 = vmatprep.subr.mxu0 0.0
  %4222 = vmatpush1.msra.mxu0 0.0
  %4223 = vmatprep.subr.mxu0 0.0
  %4224 = vmatpush1.msra.mxu0 0.0
  %4225 = vmatprep.subr.mxu0 0.0
  %4226 = vmatpush1.msra.mxu0 0.0
  %4227 = vmatprep.subr.mxu0 0.0
  %4228 = vmatpush1.msra.mxu0 0.0
  %4229 = vmatprep.subr.mxu0 0.0
  %4230 = vmatpush1.msra.mxu0 0.0
  %4231 = vmatprep.subr.mxu0 0.0
  %4232 = vmatpush1.msra.mxu0 0.0
  %4233 = vmatprep.subr.mxu0 0.0
  %4234 = vmatpush1.msra.mxu0 0.0
  %4235 = vmatprep.subr.mxu0 0.0
  %4236 = vmatpush1.msra.mxu0 0.0
  %4237 = vmatprep.subr.mxu0 0.0
  %4238 = vmatpush1.msra.mxu0 0.0
  %4239 = vmatprep.subr.mxu0 0.0
  %4240 = vmatpush1.msra.mxu0 0.0
  %4241 = vmatprep.subr.mxu0 0.0
  %4242 = vmatpush1.msra.mxu0 0.0
  %4243 = vmatprep.subr.mxu0 0.0
  %4244 = vmatpush1.msra.mxu0 0.0
  %4245 = vmatprep.subr.mxu0 0.0
  %4246 = vmatpush1.msra.mxu0 0.0
  %4247 = vmatprep.subr.mxu0 0.0
  %4248 = vmatpush1.msra.mxu0 0.0
  %4249 = vmatprep.subr.mxu0 0.0
  %4250 = vmatpush1.msra.mxu0 0.0
  %4251 = vmatprep.subr.mxu0 0.0
  %4252 = vmatpush1.msra.mxu0 0.0
  %4253 = vmatprep.mubr.f32.mxu0 0.0
  %4254 = vmatmul.mubr.f32.gmra.mrb[0].mxu0 %v4046
  %v4255 = vpop.f32.mrb[0].mxu0
  %v4256 = vadd.f32 0.0, %v4255
  %v4257 = vpop.f32.mrb[0].mxu0
  %4258 = vmatprep.mubr.f32.mxu0 0.0
  %4259 = vmatmul.mubr.f32.gmra.mrb[0].mxu0 %v4049
  %v4260 = vpop.f32.mrb[0].mxu0
  %v4261 = vadd.f32 0.0, %v4260
  %v4262 = vpop.f32.mrb[0].mxu0
  %4263 = vmatprep.mubr.f32.mxu0 0.0
  %4264 = vmatmul.mubr.f32.gmra.mrb[0].mxu0 %v4052
  %v4265 = vpop.f32.mrb[0].mxu0
  %v4266 = vadd.f32 0.0, %v4265
  %v4267 = vpop.f32.mrb[0].mxu0
  %4268 = vmatprep.mubr.f32.mxu0 0.0
  %4269 = vmatmul.mubr.f32.gmra.mrb[0].mxu0 %v4055
  %v4270 = vpop.f32.mrb[0].mxu0
  %v4271 = vadd.f32 0.0, %v4270
  %v4272 = vpop.f32.mrb[0].mxu0
  %4273 = vmatprep.mubr.f32.mxu0 0.0
  %4274 = vmatmul.mubr.f32.gmra.mrb[0].mxu0 %v4058
  %v4275 = vpop.f32.mrb[0].mxu0
  %v4276 = vadd.f32 0.0, %v4275
  %v4277 = vpop.f32.mrb[0].mxu0
  %4278 = vmatprep.mubr.f32.mxu0 0.0
  %4279 = vmatmul.mubr.f32.gmra.mrb[0].mxu0 %v4061
  %v4280 = vpop.f32.mrb[0].mxu0
  %v4281 = vadd.f32 0.0, %v4280
  %v4282 = vpop.f32.mrb[0].mxu0
  %4283 = vmatprep.mubr.f32.mxu0 0.0
  %4284 = vmatmul.mubr.f32.gmra.mrb[0].mxu0 %v4064
  %v4285 = vpop.f32.mrb[0].mxu0
  %v4286 = vadd.f32 0.0, %v4285
  %v4287 = vpop.f32.mrb[0].mxu0
  %4288 = vmatprep.mubr.f32.mxu0 0.0
  %4289 = vmatmul.mubr.f32.gmra.mrb[0].mxu0 %v4067
  %v4290 = vpop.f32.mrb[0].mxu0
  %v4291 = vadd.f32 0.0, %v4290
  %v4292 = vpop.f32.mrb[0].mxu0
  %4293 = vmatprep.mubr.f32.mxu0 0.0
  %4294 = vmatmul.mubr.f32.gmra.mrb[0].mxu0 %v4070
  %v4295 = vpop.f32.mrb[0].mxu0
  %v4296 = vadd.f32 0.0, %v4295
  %v4297 = vpop.f32.mrb[0].mxu0
  %4298 = vmatprep.mubr.f32.mxu0 0.0
  %4299 = vmatmul.mubr.f32.gmra.mrb[0].mxu0 %v4073
  %v4300 = vpop.f32.mrb[0].mxu0
  %v4301 = vadd.f32 0.0, %v4300
  %v4302 = vpop.f32.mrb[0].mxu0
  %4303 = vmatprep.mubr.f32.mxu0 0.0
  %4304 = vmatmul.mubr.f32.gmra.mrb[0].mxu0 %v4076
  %v4305 = vpop.f32.mrb[0].mxu0
  %v4306 = vadd.f32 0.0, %v4305
  %v4307 = vpop.f32.mrb[0].mxu0
  %4308 = vmatprep.mubr.f32.mxu0 0.0
  %4309 = vmatmul.mubr.f32.gmra.mrb[0].mxu0 %v4079
  %v4310 = vpop.f32.mrb[0].mxu0
  %v4311 = vadd.f32 0.0, %v4310
  %v4312 = vpop.f32.mrb[0].mxu0
  %4313 = vmatprep.mubr.f32.mxu0 0.0
  %4314 = vmatmul.mubr.f32.gmra.mrb[0].mxu0 %v4082
  %v4315 = vpop.f32.mrb[0].mxu0
  %v4316 = vadd.f32 0.0, %v4315
  %v4317 = vpop.f32.mrb[0].mxu0
  %4318 = vmatprep.mubr.f32.mxu0 0.0
  %4319 = vmatmul.mubr.f32.gmra.mrb[0].mxu0 %v4085
  %v4320 = vpop.f32.mrb[0].mxu0
  %v4321 = vadd.f32 0.0, %v4320
  %v4322 = vpop.f32.mrb[0].mxu0
  %4323 = vmatprep.mubr.f32.mxu0 0.0
  %4324 = vmatmul.mubr.f32.gmra.mrb[0].mxu0 %v4088
  %v4325 = vpop.f32.mrb[0].mxu0
  %v4326 = vadd.f32 0.0, %v4325
  %v4327 = vpop.f32.mrb[0].mxu0
  %4328 = vmatprep.mubr.f32.mxu0 0.0
  %4329 = vmatmul.mubr.f32.gmra.mrb[0].mxu0 %v4091
  %v4330 = vpop.f32.mrb[0].mxu0
  %v4331 = vadd.f32 0.0, %v4330
  %v4332 = vpop.f32.mrb[0].mxu0
  %4333 = vmatprep.mubr.f32.mxu0 0.0
  %4334 = vmatmul.mubr.f32.gmra.mrb[0].mxu0 %v4094
  %v4335 = vpop.f32.mrb[0].mxu0
  %v4336 = vadd.f32 0.0, %v4335
  %v4337 = vpop.f32.mrb[0].mxu0
  %4338 = vmatprep.mubr.f32.mxu0 0.0
  %4339 = vmatmul.mubr.f32.gmra.mrb[0].mxu0 %v4097
  %v4340 = vpop.f32.mrb[0].mxu0
  %v4341 = vadd.f32 0.0, %v4340
  %v4342 = vpop.f32.mrb[0].mxu0
  %4343 = vmatprep.mubr.f32.mxu0 0.0
  %4344 = vmatmul.mubr.f32.gmra.mrb[0].mxu0 %v4100
  %v4345 = vpop.f32.mrb[0].mxu0
  %v4346 = vadd.f32 0.0, %v4345
  %v4347 = vpop.f32.mrb[0].mxu0
  %4348 = vmatprep.mubr.f32.mxu0 0.0
  %4349 = vmatmul.mubr.f32.gmra.mrb[0].mxu0 %v4103
  %v4350 = vpop.f32.mrb[0].mxu0
  %v4351 = vadd.f32 0.0, %v4350
  %v4352 = vpop.f32.mrb[0].mxu0
  %4353 = vmatprep.mubr.f32.mxu0 0.0
  %4354 = vmatmul.mubr.f32.gmra.mrb[0].mxu0 %v4106
  %v4355 = vpop.f32.mrb[0].mxu0
  %v4356 = vadd.f32 0.0, %v4355
  %v4357 = vpop.f32.mrb[0].mxu0
  %4358 = vmatprep.mubr.f32.mxu0 0.0
  %4359 = vmatmul.mubr.f32.gmra.mrb[0].mxu0 %v4109
  %v4360 = vpop.f32.mrb[0].mxu0
  %v4361 = vadd.f32 0.0, %v4360
  %v4362 = vpop.f32.mrb[0].mxu0
  %4363 = vmatprep.mubr.f32.mxu0 0.0
  %4364 = vmatmul.mubr.f32.gmra.mrb[0].mxu0 %v4112
  %v4365 = vpop.f32.mrb[0].mxu0
  %v4366 = vadd.f32 0.0, %v4365
  %v4367 = vpop.f32.mrb[0].mxu0
  %4368 = vmatprep.mubr.f32.mxu0 0.0
  %4369 = vmatmul.mubr.f32.gmra.mrb[0].mxu0 %v4115
  %v4370 = vpop.f32.mrb[0].mxu0
  %v4371 = vadd.f32 0.0, %v4370
  %v4372 = vpop.f32.mrb[0].mxu0
  %4373 = vmatprep.mubr.f32.mxu0 0.0
  %4374 = vmatmul.mubr.f32.gmra.mrb[0].mxu0 %v4118
  %v4375 = vpop.f32.mrb[0].mxu0
  %v4376 = vadd.f32 0.0, %v4375
  %v4377 = vpop.f32.mrb[0].mxu0
  %4378 = vmatprep.mubr.f32.mxu0 0.0
  %4379 = vmatmul.mubr.f32.gmra.mrb[0].mxu0 %v4121
  %v4380 = vpop.f32.mrb[0].mxu0
  %v4381 = vadd.f32 0.0, %v4380
  %v4382 = vpop.f32.mrb[0].mxu0
  %4383 = vmatprep.mubr.f32.mxu0 0.0
  %4384 = vmatmul.mubr.f32.gmra.mrb[0].mxu0 %v4124
  %v4385 = vpop.f32.mrb[0].mxu0
  %v4386 = vadd.f32 0.0, %v4385
  %v4387 = vpop.f32.mrb[0].mxu0
  %4388 = vmatprep.mubr.f32.mxu0 0.0
  %4389 = vmatmul.mubr.f32.gmra.mrb[0].mxu0 %v4127
  %v4390 = vpop.f32.mrb[0].mxu0
  %v4391 = vadd.f32 0.0, %v4390
  %v4392 = vpop.f32.mrb[0].mxu0
  %4393 = vmatprep.mubr.f32.mxu0 0.0
  %4394 = vmatmul.mubr.f32.gmra.mrb[0].mxu0 %v4130
  %v4395 = vpop.f32.mrb[0].mxu0
  %v4396 = vadd.f32 0.0, %v4395
  %v4397 = vpop.f32.mrb[0].mxu0
  %4398 = vmatprep.mubr.f32.mxu0 0.0
  %4399 = vmatmul.mubr.f32.gmra.mrb[0].mxu0 %v4133
  %v4400 = vpop.f32.mrb[0].mxu0
  %v4401 = vadd.f32 0.0, %v4400
  %v4402 = vpop.f32.mrb[0].mxu0
  %4403 = vmatprep.mubr.f32.mxu0 0.0
  %4404 = vmatmul.mubr.f32.gmra.mrb[0].mxu0 %v4136
  %v4405 = vpop.f32.mrb[0].mxu0
  %v4406 = vadd.f32 0.0, %v4405
  %v4407 = vpop.f32.mrb[0].mxu0
  %4408 = vmatprep.mubr.f32.mxu0 0.0
  %4409 = vmatmul.mubr.f32.gmra.mrb[0].mxu0 %v4139
  %v4410 = vpop.f32.mrb[0].mxu0
  %v4411 = vadd.f32 0.0, %v4410
  %v4412 = vpop.f32.mrb[0].mxu0
  %4413 = vmatprep.mubr.f32.mxu0 0.0
  %4414 = vmatmul.mubr.f32.gmra.mrb[0].mxu0 %v4142
  %v4415 = vpop.f32.mrb[0].mxu0
  %v4416 = vadd.f32 0.0, %v4415
  %v4417 = vpop.f32.mrb[0].mxu0
  %4418 = vmatprep.mubr.f32.mxu0 0.0
  %4419 = vmatmul.mubr.f32.gmra.mrb[0].mxu0 %v4145
  %v4420 = vpop.f32.mrb[0].mxu0
  %v4421 = vadd.f32 0.0, %v4420
  %v4422 = vpop.f32.mrb[0].mxu0
  %4423 = vmatprep.mubr.f32.mxu0 0.0
  %4424 = vmatmul.mubr.f32.gmra.mrb[0].mxu0 %v4148
  %v4425 = vpop.f32.mrb[0].mxu0
  %v4426 = vadd.f32 0.0, %v4425
  %v4427 = vpop.f32.mrb[0].mxu0
  %4428 = vmatprep.mubr.f32.mxu0 0.0
  %4429 = vmatmul.mubr.f32.gmra.mrb[0].mxu0 %v4151
  %v4430 = vpop.f32.mrb[0].mxu0
  %v4431 = vadd.f32 0.0, %v4430
  %v4432 = vpop.f32.mrb[0].mxu0
  %4433 = vmatprep.mubr.f32.mxu0 0.0
  %4434 = vmatmul.mubr.f32.gmra.mrb[0].mxu0 %v4154
  %v4435 = vpop.f32.mrb[0].mxu0
  %v4436 = vadd.f32 0.0, %v4435
  %v4437 = vpop.f32.mrb[0].mxu0
  %4438 = vmatprep.mubr.f32.mxu0 0.0
  %4439 = vmatmul.mubr.f32.gmra.mrb[0].mxu0 %v4157
  %v4440 = vpop.f32.mrb[0].mxu0
  %v4441 = vadd.f32 0.0, %v4440
  %v4442 = vpop.f32.mrb[0].mxu0
  %4443 = vmatprep.mubr.f32.mxu0 0.0
  %4444 = vmatmul.mubr.f32.gmra.mrb[0].mxu0 %v4160
  %v4445 = vpop.f32.mrb[0].mxu0
  %v4446 = vadd.f32 0.0, %v4445
  %v4447 = vpop.f32.mrb[0].mxu0
  %4448 = vmatprep.mubr.f32.mxu0 0.0
  %4449 = vmatmul.mubr.f32.gmra.mrb[0].mxu0 %v4163
  %v4450 = vpop.f32.mrb[0].mxu0
  %v4451 = vadd.f32 0.0, %v4450
  %v4452 = vpop.f32.mrb[0].mxu0
  %4453 = vmatprep.mubr.f32.mxu0 0.0
  %4454 = vmatmul.mubr.f32.gmra.mrb[0].mxu0 %v4166
  %v4455 = vpop.f32.mrb[0].mxu0
  %v4456 = vadd.f32 0.0, %v4455
  %v4457 = vpop.f32.mrb[0].mxu0
  %4458 = vmatprep.mubr.f32.mxu0 0.0
  %4459 = vmatmul.mubr.f32.gmra.mrb[0].mxu0 %v4169
  %v4460 = vpop.f32.mrb[0].mxu0
  %v4461 = vadd.f32 0.0, %v4460
  %v4462 = vpop.f32.mrb[0].mxu0
  %4463 = vmatprep.mubr.f32.mxu0 0.0
  %4464 = vmatmul.mubr.f32.gmra.mrb[0].mxu0 %v4172
  %v4465 = vpop.f32.mrb[0].mxu0
  %v4466 = vadd.f32 0.0, %v4465
  %v4467 = vpop.f32.mrb[0].mxu0
  %4468 = vmatprep.mubr.f32.mxu0 0.0
  %4469 = vmatmul.mubr.f32.gmra.mrb[0].mxu0 %v4175
  %v4470 = vpop.f32.mrb[0].mxu0
  %v4471 = vadd.f32 0.0, %v4470
  %v4472 = vpop.f32.mrb[0].mxu0
  %4473 = vmatprep.mubr.f32.mxu0 0.0
  %4474 = vmatmul.mubr.f32.gmra.mrb[0].mxu0 %v4178
  %v4475 = vpop.f32.mrb[0].mxu0
  %v4476 = vadd.f32 0.0, %v4475
  %v4477 = vpop.f32.mrb[0].mxu0
  %4478 = vmatprep.mubr.f32.mxu0 0.0
  %4479 = vmatmul.mubr.f32.gmra.mrb[0].mxu0 %v4181
  %v4480 = vpop.f32.mrb[0].mxu0
  %v4481 = vadd.f32 0.0, %v4480
  %v4482 = vpop.f32.mrb[0].mxu0
  %4483 = vmatprep.mubr.f32.mxu0 0.0
  %4484 = vmatmul.mubr.f32.gmra.mrb[0].mxu0 %v4184
  %v4485 = vpop.f32.mrb[0].mxu0
  %v4486 = vadd.f32 0.0, %v4485
  %v4487 = vpop.f32.mrb[0].mxu0
  %4488 = vmatprep.mubr.f32.mxu0 0.0
  %4489 = vmatmul.mubr.f32.gmra.mrb[0].mxu0 %v4187
  %v4490 = vpop.f32.mrb[0].mxu0
  %v4491 = vadd.f32 0.0, %v4490
  %v4492 = vpop.f32.mrb[0].mxu0
  %4493 = vdwg.mxu0
  %s4494 = scalar_lea.vmem %s4, 384
  %4495 = vst.msk [vmem:[%s4494] sm:$0xff] %vm3948, %v4256
  %4496 = vst.msk [vmem:[%s4494 + $0x8] sm:$0xff] %vm3948, %v4261
  %4497 = vst.msk [vmem:[%s4494 + $0x10] sm:$0xff] %vm3948, %v4266
  %4498 = vst.msk [vmem:[%s4494 + $0x18] sm:$0xff] %vm3948, %v4271
  %4499 = vst.msk [vmem:[%s4494 + $0x20] sm:$0xff] %vm3948, %v4276
  %4500 = vst.msk [vmem:[%s4494 + $0x28] sm:$0xff] %vm3948, %v4281
  %4501 = vst.msk [vmem:[%s4494 + $0x30] sm:$0xff] %vm3948, %v4286
  %4502 = vst.msk [vmem:[%s4494 + $0x38] sm:$0xff] %vm3948, %v4291
  %4503 = vst.msk [vmem:[%s4494 + $0x40] sm:$0xff] %vm3948, %v4296
  %4504 = vst.msk [vmem:[%s4494 + $0x48] sm:$0xff] %vm3948, %v4301
  %4505 = vst.msk [vmem:[%s4494 + $0x50] sm:$0xff] %vm3948, %v4306
  %4506 = vst.msk [vmem:[%s4494 + $0x58] sm:$0xff] %vm3948, %v4311
  %4507 = vst.msk [vmem:[%s4494 + $0x60] sm:$0xff] %vm3948, %v4316
  %4508 = vst.msk [vmem:[%s4494 + $0x68] sm:$0xff] %vm3948, %v4321
  %4509 = vst.msk [vmem:[%s4494 + $0x70] sm:$0xff] %vm3948, %v4326
  %4510 = vst.msk [vmem:[%s4494 + $0x78] sm:$0xff] %vm3948, %v4331
  %4511 = vst.msk [vmem:[%s4494 + $0x80] sm:$0xff] %vm3948, %v4336
  %4512 = vst.msk [vmem:[%s4494 + $0x88] sm:$0xff] %vm3948, %v4341
  %4513 = vst.msk [vmem:[%s4494 + $0x90] sm:$0xff] %vm3948, %v4346
  %4514 = vst.msk [vmem:[%s4494 + $0x98] sm:$0xff] %vm3948, %v4351
  %4515 = vst.msk [vmem:[%s4494 + $0xa0] sm:$0xff] %vm3948, %v4356
  %4516 = vst.msk [vmem:[%s4494 + $0xa8] sm:$0xff] %vm3948, %v4361
  %4517 = vst.msk [vmem:[%s4494 + $0xb0] sm:$0xff] %vm3948, %v4366
  %4518 = vst.msk [vmem:[%s4494 + $0xb8] sm:$0xff] %vm3948, %v4371
  %4519 = vst.msk [vmem:[%s4494 + $0xc0] sm:$0xff] %vm3948, %v4376
  %4520 = vst.msk [vmem:[%s4494 + $0xc8] sm:$0xff] %vm3948, %v4381
  %4521 = vst.msk [vmem:[%s4494 + $0xd0] sm:$0xff] %vm3948, %v4386
  %4522 = vst.msk [vmem:[%s4494 + $0xd8] sm:$0xff] %vm3948, %v4391
  %4523 = vst.msk [vmem:[%s4494 + $0xe0] sm:$0xff] %vm3948, %v4396
  %4524 = vst.msk [vmem:[%s4494 + $0xe8] sm:$0xff] %vm3948, %v4401
  %4525 = vst.msk [vmem:[%s4494 + $0xf0] sm:$0xff] %vm3948, %v4406
  %4526 = vst.msk [vmem:[%s4494 + $0xf8] sm:$0xff] %vm3948, %v4411
  %4527 = vst.msk [vmem:[%s4494 + $0x100] sm:$0xff] %vm3948, %v4416
  %4528 = vst.msk [vmem:[%s4494 + $0x108] sm:$0xff] %vm3948, %v4421
  %4529 = vst.msk [vmem:[%s4494 + $0x110] sm:$0xff] %vm3948, %v4426
  %4530 = vst.msk [vmem:[%s4494 + $0x118] sm:$0xff] %vm3948, %v4431
  %4531 = vst.msk [vmem:[%s4494 + $0x120] sm:$0xff] %vm3948, %v4436
  %4532 = vst.msk [vmem:[%s4494 + $0x128] sm:$0xff] %vm3948, %v4441
  %4533 = vst.msk [vmem:[%s4494 + $0x130] sm:$0xff] %vm3948, %v4446
  %4534 = vst.msk [vmem:[%s4494 + $0x138] sm:$0xff] %vm3948, %v4451
  %4535 = vst.msk [vmem:[%s4494 + $0x140] sm:$0xff] %vm3948, %v4456
  %4536 = vst.msk [vmem:[%s4494 + $0x148] sm:$0xff] %vm3948, %v4461
  %4537 = vst.msk [vmem:[%s4494 + $0x150] sm:$0xff] %vm3948, %v4466
  %4538 = vst.msk [vmem:[%s4494 + $0x158] sm:$0xff] %vm3948, %v4471
  %4539 = vst.msk [vmem:[%s4494 + $0x160] sm:$0xff] %vm3948, %v4476
  %4540 = vst.msk [vmem:[%s4494 + $0x168] sm:$0xff] %vm3948, %v4481
  %4541 = vst.msk [vmem:[%s4494 + $0x170] sm:$0xff] %vm3948, %v4486
  %4542 = vst.msk [vmem:[%s4494 + $0x178] sm:$0xff] %vm3948, %v4491
  // Predicated region
  $region18: #{ercnn_forward.2} parent=0 // pred_check
    _
  $region19: #{ercnn_forward.2} parent=0 // pred_check_branch
    %4544 = sbr.rel (0) target = $region21
  $region20: #{ercnn_forward.2} parent=0 // pred_region
    _
  $region21: #{ercnn_forward.2} parent=0 // pred_fallthru
    _
  // Predicated region
  $region22: #{ercnn_forward.2} parent=0 // pred_check
    _
  $region23: #{ercnn_forward.2} parent=0 // pred_check_branch
    %4546 = sbr.rel (0) target = $region25
  $region24: #{ercnn_forward.2} parent=0 // pred_region
    _
  $region25: #{ercnn_forward.2} parent=0 // pred_fallthru
    _

// kernel: ercnn_forward.3
$region0: #{ercnn_forward.3}
  #allocation0 [shape = 'u32[]', space=smem, size = 0x4, offset = 0x4, fixed_abs, tag = 'smem constant byte address 0x4 - core index']
  #allocation1 [shape = 'u32[144,128]{1,0:T(1,128)}', space=vmem, size = 0x12000, scoped, tag = 'internal scratch']
  %s0 = inlined_call_operand.vmem [shape: f32[2,13440], index: 0, kind: input, shape index: {}]
  %s1 = inlined_call_operand.vmem [shape: s8[13440,256], index: 1, kind: input, shape index: {}]
  %s2 = inlined_call_operand.vmem [shape: f32[1,256], index: 2, kind: input, shape index: {}]
  %s3 = inlined_call_operand.vmem [shape: f32[1,256], index: 3, kind: input, shape index: {}]
  %s4 = inlined_call_operand.vmem [shape: f32[2,12], index: 4, kind: input, shape index: {}]
  %s5 = inlined_call_operand.vmem [shape: f32[12,32], index: 5, kind: input, shape index: {}]
  %s6 = inlined_call_operand.vmem [shape: f32[1,32], index: 6, kind: input, shape index: {}]
  %s7 = inlined_call_operand.vmem [shape: f32[256,2], index: 7, kind: input, shape index: {}]
  %s8 = inlined_call_operand.vmem [shape: f32[32,2], index: 8, kind: input, shape index: {}]
  %s9 = inlined_call_operand.vmem [shape: f32[1,2], index: 9, kind: input, shape index: {}]
  %s10 = inlined_call_operand.hbm [shape: f32[2,2], index: 10, kind: output, shape index: {}]
  %s11 = sld [smem:[#allocation0]]
  $region50: #{ercnn_forward.3} parent=0
    _
  %s13 = ssub.s32 1, %s11
  %s14 = scalar_select 0, %s13, %s11
  $region1: #{ercnn_forward.3} parent=0
    #allocation2 [shape = 'u8[1024]{0}', space=vmem, size = 0x400, scoped, tag = 'output window, operand 0, single buffered']
    #allocation3 [shape = 's32[1]{0}', space=sflag, size = 0x4, scoped, tag = 'scoped memory for ercnn_forward.3']
    %15 = vsyncpa [#allocation3], 0
    // Predicated region
    $region2: #{ercnn_forward.3} parent=1 // pred_check
      _
    $region3: #{ercnn_forward.3} parent=1 // pred_check_branch
      %17 = sbr.rel (0) target = $region5
    $region4: #{ercnn_forward.3} parent=1 // pred_region
      _
    $region5: #{ercnn_forward.3} parent=1 // pred_fallthru
      _
    // Predicated region
    $region6: #{ercnn_forward.3} parent=1 // pred_check
      _
    $region7: #{ercnn_forward.3} parent=1 // pred_check_branch
      %19 = sbr.rel (0) target = $region9
    $region8: #{ercnn_forward.3} parent=1 // pred_region
      _
    $region9: #{ercnn_forward.3} parent=1 // pred_fallthru
      _
    // Predicated region
    $region10: #{ercnn_forward.3} parent=1 // pred_check
      _
    $region11: #{ercnn_forward.3} parent=1 // pred_check_branch
      %21 = sbr.rel (0) target = $region13
    $region12: #{ercnn_forward.3} parent=1 // pred_region
      _
    $region13: #{ercnn_forward.3} parent=1 // pred_fallthru
      _
    // Predicated region
    $region14: #{ercnn_forward.3} parent=1 // pred_check
      _
    $region15: #{ercnn_forward.3} parent=1 // pred_check_branch
      %23 = sbr.rel (0) target = $region17
    $region16: #{ercnn_forward.3} parent=1 // pred_region
      _
    $region17: #{ercnn_forward.3} parent=1 // pred_fallthru
      _
    // Predicated region
    $region18: #{ercnn_forward.3} parent=1 // pred_check
      _
    $region19: #{ercnn_forward.3} parent=1 // pred_check_branch
      %25 = sbr.rel (0) target = $region21
    $region20: #{ercnn_forward.3} parent=1 // pred_region
      _
    $region21: #{ercnn_forward.3} parent=1 // pred_fallthru
      _
    // Predicated region
    $region22: #{ercnn_forward.3} parent=1 // pred_check
      _
    $region23: #{ercnn_forward.3} parent=1 // pred_check_branch
      %27 = sbr.rel (0) target = $region25
    $region24: #{ercnn_forward.3} parent=1 // pred_region
      _
    $region25: #{ercnn_forward.3} parent=1 // pred_fallthru
      _
    // Predicated region
    $region26: #{ercnn_forward.3} parent=1 // pred_check
      _
    $region27: #{ercnn_forward.3} parent=1 // pred_check_branch
      %29 = sbr.rel (0) target = $region29
    $region28: #{ercnn_forward.3} parent=1 // pred_region
      _
    $region29: #{ercnn_forward.3} parent=1 // pred_fallthru
      _
    // Predicated region
    $region30: #{ercnn_forward.3} parent=1 // pred_check
      _
    $region31: #{ercnn_forward.3} parent=1 // pred_check_branch
      %31 = sbr.rel (0) target = $region33
    $region32: #{ercnn_forward.3} parent=1 // pred_region
      _
    $region33: #{ercnn_forward.3} parent=1 // pred_fallthru
      _
    // Predicated region
    $region34: #{ercnn_forward.3} parent=1 // pred_check
      _
    $region35: #{ercnn_forward.3} parent=1 // pred_check_branch
      %33 = sbr.rel (0) target = $region37
    $region36: #{ercnn_forward.3} parent=1 // pred_region
      _
    $region37: #{ercnn_forward.3} parent=1 // pred_fallthru
      _
    // Predicated region
    $region38: #{ercnn_forward.3} parent=1 // pred_check
      _
    $region39: #{ercnn_forward.3} parent=1 // pred_check_branch
      %35 = sbr.rel (0) target = $region41
    $region40: #{ercnn_forward.3} parent=1 // pred_region
      _
    $region41: #{ercnn_forward.3} parent=1 // pred_fallthru
      _
    %v37 = vld [vmem:[%s0] sm:$0xff]
    %v38 = vld [vmem:[%s0 + $0x8] sm:$0xff]
    %v39 = vld [vmem:[%s0 + $0x10] sm:$0xff]
    %v40 = vld [vmem:[%s0 + $0x18] sm:$0xff]
    %v41 = vld [vmem:[%s0 + $0x20] sm:$0xff]
    %v42 = vld [vmem:[%s0 + $0x28] sm:$0xff]
    %v43 = vld [vmem:[%s0 + $0x30] sm:$0xff]
    %v44 = vld [vmem:[%s0 + $0x38] sm:$0xff]
    %v45 = vld [vmem:[%s0 + $0x40] sm:$0xff]
    %v46 = vld [vmem:[%s0 + $0x48] sm:$0xff]
    %v47 = vld [vmem:[%s0 + $0x50] sm:$0xff]
    %v48 = vld [vmem:[%s0 + $0x58] sm:$0xff]
    %v49 = vld [vmem:[%s0 + $0x60] sm:$0xff]
    %v50 = vld [vmem:[%s0 + $0x68] sm:$0xff]
    %v51 = vld [vmem:[%s0 + $0x70] sm:$0xff]
    %v52 = vld [vmem:[%s0 + $0x78] sm:$0xff]
    %v53 = vld [vmem:[%s0 + $0x80] sm:$0xff]
    %v54 = vld [vmem:[%s0 + $0x88] sm:$0xff]
    %v55 = vld [vmem:[%s0 + $0x90] sm:$0xff]
    %v56 = vld [vmem:[%s0 + $0x98] sm:$0xff]
    %v57 = vld [vmem:[%s0 + $0xa0] sm:$0xff]
    %v58 = vld [vmem:[%s0 + $0xa8] sm:$0xff]
    %v59 = vld [vmem:[%s0 + $0xb0] sm:$0xff]
    %v60 = vld [vmem:[%s0 + $0xb8] sm:$0xff]
    %v61 = vld [vmem:[%s0 + $0xc0] sm:$0xff]
    %v62 = vld [vmem:[%s0 + $0xc8] sm:$0xff]
    %v63 = vld [vmem:[%s0 + $0xd0] sm:$0x3]
    %v91 = vcombine.high %v37, %v37
    %v93 = vunpack.c.l.s4 1983009808
    %v94 = vunpack.c.0.s8 %v93
    %v95 = vlaneseq
    %v96 = vshrl.u32 %v95, 7
    %v97 = vsub.s32 %v94, %v96
    %v98 = vrot.slane %v37, %v97
    %v100 = vunpack.c.l.s4 1983009808
    %v101 = vunpack.c.0.s8 %v100
    %v102 = vlaneseq
    %v103 = vshrl.u32 %v102, 7
    %v104 = vsub.s32 %v101, %v103
    %v105 = vrot.slane %v91, %v104
    %v106 = vcombine.high %v98, %v98
    %v107 = vcombine.high %v105, %v105
    %v108 = vcombine.high %v38, %v38
    %v110 = vunpack.c.l.s4 1983009808
    %v111 = vunpack.c.0.s8 %v110
    %v112 = vlaneseq
    %v113 = vshrl.u32 %v112, 7
    %v114 = vsub.s32 %v111, %v113
    %v115 = vrot.slane %v38, %v114
    %v117 = vunpack.c.l.s4 1983009808
    %v118 = vunpack.c.0.s8 %v117
    %v119 = vlaneseq
    %v120 = vshrl.u32 %v119, 7
    %v121 = vsub.s32 %v118, %v120
    %v122 = vrot.slane %v108, %v121
    %v123 = vcombine.high %v115, %v115
    %v124 = vcombine.high %v122, %v122
    %v125 = vcombine.high %v39, %v39
    %v127 = vunpack.c.l.s4 1983009808
    %v128 = vunpack.c.0.s8 %v127
    %v129 = vlaneseq
    %v130 = vshrl.u32 %v129, 7
    %v131 = vsub.s32 %v128, %v130
    %v132 = vrot.slane %v39, %v131
    %v134 = vunpack.c.l.s4 1983009808
    %v135 = vunpack.c.0.s8 %v134
    %v136 = vlaneseq
    %v137 = vshrl.u32 %v136, 7
    %v138 = vsub.s32 %v135, %v137
    %v139 = vrot.slane %v125, %v138
    %v140 = vcombine.high %v132, %v132
    %v141 = vcombine.high %v139, %v139
    %v142 = vcombine.high %v40, %v40
    %v144 = vunpack.c.l.s4 1983009808
    %v145 = vunpack.c.0.s8 %v144
    %v146 = vlaneseq
    %v147 = vshrl.u32 %v146, 7
    %v148 = vsub.s32 %v145, %v147
    %v149 = vrot.slane %v40, %v148
    %v151 = vunpack.c.l.s4 1983009808
    %v152 = vunpack.c.0.s8 %v151
    %v153 = vlaneseq
    %v154 = vshrl.u32 %v153, 7
    %v155 = vsub.s32 %v152, %v154
    %v156 = vrot.slane %v142, %v155
    %v157 = vcombine.high %v149, %v149
    %v158 = vcombine.high %v156, %v156
    %v159 = vcombine.high %v41, %v41
    %v161 = vunpack.c.l.s4 1983009808
    %v162 = vunpack.c.0.s8 %v161
    %v163 = vlaneseq
    %v164 = vshrl.u32 %v163, 7
    %v165 = vsub.s32 %v162, %v164
    %v166 = vrot.slane %v41, %v165
    %v168 = vunpack.c.l.s4 1983009808
    %v169 = vunpack.c.0.s8 %v168
    %v170 = vlaneseq
    %v171 = vshrl.u32 %v170, 7
    %v172 = vsub.s32 %v169, %v171
    %v173 = vrot.slane %v159, %v172
    %v174 = vcombine.high %v166, %v166
    %v175 = vcombine.high %v173, %v173
    %v176 = vcombine.high %v42, %v42
    %v178 = vunpack.c.l.s4 1983009808
    %v179 = vunpack.c.0.s8 %v178
    %v180 = vlaneseq
    %v181 = vshrl.u32 %v180, 7
    %v182 = vsub.s32 %v179, %v181
    %v183 = vrot.slane %v42, %v182
    %v185 = vunpack.c.l.s4 1983009808
    %v186 = vunpack.c.0.s8 %v185
    %v187 = vlaneseq
    %v188 = vshrl.u32 %v187, 7
    %v189 = vsub.s32 %v186, %v188
    %v190 = vrot.slane %v176, %v189
    %v191 = vcombine.high %v183, %v183
    %v192 = vcombine.high %v190, %v190
    %v193 = vcombine.high %v43, %v43
    %v195 = vunpack.c.l.s4 1983009808
    %v196 = vunpack.c.0.s8 %v195
    %v197 = vlaneseq
    %v198 = vshrl.u32 %v197, 7
    %v199 = vsub.s32 %v196, %v198
    %v200 = vrot.slane %v43, %v199
    %v202 = vunpack.c.l.s4 1983009808
    %v203 = vunpack.c.0.s8 %v202
    %v204 = vlaneseq
    %v205 = vshrl.u32 %v204, 7
    %v206 = vsub.s32 %v203, %v205
    %v207 = vrot.slane %v193, %v206
    %v208 = vcombine.high %v200, %v200
    %v209 = vcombine.high %v207, %v207
    %v210 = vcombine.high %v44, %v44
    %v212 = vunpack.c.l.s4 1983009808
    %v213 = vunpack.c.0.s8 %v212
    %v214 = vlaneseq
    %v215 = vshrl.u32 %v214, 7
    %v216 = vsub.s32 %v213, %v215
    %v217 = vrot.slane %v44, %v216
    %v219 = vunpack.c.l.s4 1983009808
    %v220 = vunpack.c.0.s8 %v219
    %v221 = vlaneseq
    %v222 = vshrl.u32 %v221, 7
    %v223 = vsub.s32 %v220, %v222
    %v224 = vrot.slane %v210, %v223
    %v225 = vcombine.high %v217, %v217
    %v226 = vcombine.high %v224, %v224
    %v227 = vcombine.high %v45, %v45
    %v229 = vunpack.c.l.s4 1983009808
    %v230 = vunpack.c.0.s8 %v229
    %v231 = vlaneseq
    %v232 = vshrl.u32 %v231, 7
    %v233 = vsub.s32 %v230, %v232
    %v234 = vrot.slane %v45, %v233
    %v236 = vunpack.c.l.s4 1983009808
    %v237 = vunpack.c.0.s8 %v236
    %v238 = vlaneseq
    %v239 = vshrl.u32 %v238, 7
    %v240 = vsub.s32 %v237, %v239
    %v241 = vrot.slane %v227, %v240
    %v242 = vcombine.high %v234, %v234
    %v243 = vcombine.high %v241, %v241
    %v244 = vcombine.high %v46, %v46
    %v246 = vunpack.c.l.s4 1983009808
    %v247 = vunpack.c.0.s8 %v246
    %v248 = vlaneseq
    %v249 = vshrl.u32 %v248, 7
    %v250 = vsub.s32 %v247, %v249
    %v251 = vrot.slane %v46, %v250
    %v253 = vunpack.c.l.s4 1983009808
    %v254 = vunpack.c.0.s8 %v253
    %v255 = vlaneseq
    %v256 = vshrl.u32 %v255, 7
    %v257 = vsub.s32 %v254, %v256
    %v258 = vrot.slane %v244, %v257
    %v259 = vcombine.high %v251, %v251
    %v260 = vcombine.high %v258, %v258
    %v261 = vcombine.high %v47, %v47
    %v263 = vunpack.c.l.s4 1983009808
    %v264 = vunpack.c.0.s8 %v263
    %v265 = vlaneseq
    %v266 = vshrl.u32 %v265, 7
    %v267 = vsub.s32 %v264, %v266
    %v268 = vrot.slane %v47, %v267
    %v270 = vunpack.c.l.s4 1983009808
    %v271 = vunpack.c.0.s8 %v270
    %v272 = vlaneseq
    %v273 = vshrl.u32 %v272, 7
    %v274 = vsub.s32 %v271, %v273
    %v275 = vrot.slane %v261, %v274
    %v276 = vcombine.high %v268, %v268
    %v277 = vcombine.high %v275, %v275
    %v278 = vcombine.high %v48, %v48
    %v280 = vunpack.c.l.s4 1983009808
    %v281 = vunpack.c.0.s8 %v280
    %v282 = vlaneseq
    %v283 = vshrl.u32 %v282, 7
    %v284 = vsub.s32 %v281, %v283
    %v285 = vrot.slane %v48, %v284
    %v287 = vunpack.c.l.s4 1983009808
    %v288 = vunpack.c.0.s8 %v287
    %v289 = vlaneseq
    %v290 = vshrl.u32 %v289, 7
    %v291 = vsub.s32 %v288, %v290
    %v292 = vrot.slane %v278, %v291
    %v293 = vcombine.high %v285, %v285
    %v294 = vcombine.high %v292, %v292
    %v295 = vcombine.high %v49, %v49
    %v297 = vunpack.c.l.s4 1983009808
    %v298 = vunpack.c.0.s8 %v297
    %v299 = vlaneseq
    %v300 = vshrl.u32 %v299, 7
    %v301 = vsub.s32 %v298, %v300
    %v302 = vrot.slane %v49, %v301
    %v304 = vunpack.c.l.s4 1983009808
    %v305 = vunpack.c.0.s8 %v304
    %v306 = vlaneseq
    %v307 = vshrl.u32 %v306, 7
    %v308 = vsub.s32 %v305, %v307
    %v309 = vrot.slane %v295, %v308
    %v310 = vcombine.high %v302, %v302
    %v311 = vcombine.high %v309, %v309
    %v312 = vcombine.high %v50, %v50
    %v314 = vunpack.c.l.s4 1983009808
    %v315 = vunpack.c.0.s8 %v314
    %v316 = vlaneseq
    %v317 = vshrl.u32 %v316, 7
    %v318 = vsub.s32 %v315, %v317
    %v319 = vrot.slane %v50, %v318
    %v321 = vunpack.c.l.s4 1983009808
    %v322 = vunpack.c.0.s8 %v321
    %v323 = vlaneseq
    %v324 = vshrl.u32 %v323, 7
    %v325 = vsub.s32 %v322, %v324
    %v326 = vrot.slane %v312, %v325
    %v327 = vcombine.high %v319, %v319
    %v328 = vcombine.high %v326, %v326
    %v329 = vcombine.high %v51, %v51
    %v331 = vunpack.c.l.s4 1983009808
    %v332 = vunpack.c.0.s8 %v331
    %v333 = vlaneseq
    %v334 = vshrl.u32 %v333, 7
    %v335 = vsub.s32 %v332, %v334
    %v336 = vrot.slane %v51, %v335
    %v338 = vunpack.c.l.s4 1983009808
    %v339 = vunpack.c.0.s8 %v338
    %v340 = vlaneseq
    %v341 = vshrl.u32 %v340, 7
    %v342 = vsub.s32 %v339, %v341
    %v343 = vrot.slane %v329, %v342
    %v344 = vcombine.high %v336, %v336
    %v345 = vcombine.high %v343, %v343
    %v346 = vcombine.high %v52, %v52
    %v348 = vunpack.c.l.s4 1983009808
    %v349 = vunpack.c.0.s8 %v348
    %v350 = vlaneseq
    %v351 = vshrl.u32 %v350, 7
    %v352 = vsub.s32 %v349, %v351
    %v353 = vrot.slane %v52, %v352
    %v355 = vunpack.c.l.s4 1983009808
    %v356 = vunpack.c.0.s8 %v355
    %v357 = vlaneseq
    %v358 = vshrl.u32 %v357, 7
    %v359 = vsub.s32 %v356, %v358
    %v360 = vrot.slane %v346, %v359
    %v361 = vcombine.high %v353, %v353
    %v362 = vcombine.high %v360, %v360
    %v363 = vcombine.high %v53, %v53
    %v365 = vunpack.c.l.s4 1983009808
    %v366 = vunpack.c.0.s8 %v365
    %v367 = vlaneseq
    %v368 = vshrl.u32 %v367, 7
    %v369 = vsub.s32 %v366, %v368
    %v370 = vrot.slane %v53, %v369
    %v372 = vunpack.c.l.s4 1983009808
    %v373 = vunpack.c.0.s8 %v372
    %v374 = vlaneseq
    %v375 = vshrl.u32 %v374, 7
    %v376 = vsub.s32 %v373, %v375
    %v377 = vrot.slane %v363, %v376
    %v378 = vcombine.high %v370, %v370
    %v379 = vcombine.high %v377, %v377
    %v380 = vcombine.high %v54, %v54
    %v382 = vunpack.c.l.s4 1983009808
    %v383 = vunpack.c.0.s8 %v382
    %v384 = vlaneseq
    %v385 = vshrl.u32 %v384, 7
    %v386 = vsub.s32 %v383, %v385
    %v387 = vrot.slane %v54, %v386
    %v389 = vunpack.c.l.s4 1983009808
    %v390 = vunpack.c.0.s8 %v389
    %v391 = vlaneseq
    %v392 = vshrl.u32 %v391, 7
    %v393 = vsub.s32 %v390, %v392
    %v394 = vrot.slane %v380, %v393
    %v395 = vcombine.high %v387, %v387
    %v396 = vcombine.high %v394, %v394
    %v397 = vcombine.high %v55, %v55
    %v399 = vunpack.c.l.s4 1983009808
    %v400 = vunpack.c.0.s8 %v399
    %v401 = vlaneseq
    %v402 = vshrl.u32 %v401, 7
    %v403 = vsub.s32 %v400, %v402
    %v404 = vrot.slane %v55, %v403
    %v406 = vunpack.c.l.s4 1983009808
    %v407 = vunpack.c.0.s8 %v406
    %v408 = vlaneseq
    %v409 = vshrl.u32 %v408, 7
    %v410 = vsub.s32 %v407, %v409
    %v411 = vrot.slane %v397, %v410
    %v412 = vcombine.high %v404, %v404
    %v413 = vcombine.high %v411, %v411
    %v414 = vcombine.high %v56, %v56
    %v416 = vunpack.c.l.s4 1983009808
    %v417 = vunpack.c.0.s8 %v416
    %v418 = vlaneseq
    %v419 = vshrl.u32 %v418, 7
    %v420 = vsub.s32 %v417, %v419
    %v421 = vrot.slane %v56, %v420
    %v423 = vunpack.c.l.s4 1983009808
    %v424 = vunpack.c.0.s8 %v423
    %v425 = vlaneseq
    %v426 = vshrl.u32 %v425, 7
    %v427 = vsub.s32 %v424, %v426
    %v428 = vrot.slane %v414, %v427
    %v429 = vcombine.high %v421, %v421
    %v430 = vcombine.high %v428, %v428
    %v431 = vcombine.high %v57, %v57
    %v433 = vunpack.c.l.s4 1983009808
    %v434 = vunpack.c.0.s8 %v433
    %v435 = vlaneseq
    %v436 = vshrl.u32 %v435, 7
    %v437 = vsub.s32 %v434, %v436
    %v438 = vrot.slane %v57, %v437
    %v440 = vunpack.c.l.s4 1983009808
    %v441 = vunpack.c.0.s8 %v440
    %v442 = vlaneseq
    %v443 = vshrl.u32 %v442, 7
    %v444 = vsub.s32 %v441, %v443
    %v445 = vrot.slane %v431, %v444
    %v446 = vcombine.high %v438, %v438
    %v447 = vcombine.high %v445, %v445
    %v448 = vcombine.high %v58, %v58
    %v450 = vunpack.c.l.s4 1983009808
    %v451 = vunpack.c.0.s8 %v450
    %v452 = vlaneseq
    %v453 = vshrl.u32 %v452, 7
    %v454 = vsub.s32 %v451, %v453
    %v455 = vrot.slane %v58, %v454
    %v457 = vunpack.c.l.s4 1983009808
    %v458 = vunpack.c.0.s8 %v457
    %v459 = vlaneseq
    %v460 = vshrl.u32 %v459, 7
    %v461 = vsub.s32 %v458, %v460
    %v462 = vrot.slane %v448, %v461
    %v463 = vcombine.high %v455, %v455
    %v464 = vcombine.high %v462, %v462
    %v465 = vcombine.high %v59, %v59
    %v467 = vunpack.c.l.s4 1983009808
    %v468 = vunpack.c.0.s8 %v467
    %v469 = vlaneseq
    %v470 = vshrl.u32 %v469, 7
    %v471 = vsub.s32 %v468, %v470
    %v472 = vrot.slane %v59, %v471
    %v474 = vunpack.c.l.s4 1983009808
    %v475 = vunpack.c.0.s8 %v474
    %v476 = vlaneseq
    %v477 = vshrl.u32 %v476, 7
    %v478 = vsub.s32 %v475, %v477
    %v479 = vrot.slane %v465, %v478
    %v480 = vcombine.high %v472, %v472
    %v481 = vcombine.high %v479, %v479
    %v482 = vcombine.high %v60, %v60
    %v484 = vunpack.c.l.s4 1983009808
    %v485 = vunpack.c.0.s8 %v484
    %v486 = vlaneseq
    %v487 = vshrl.u32 %v486, 7
    %v488 = vsub.s32 %v485, %v487
    %v489 = vrot.slane %v60, %v488
    %v491 = vunpack.c.l.s4 1983009808
    %v492 = vunpack.c.0.s8 %v491
    %v493 = vlaneseq
    %v494 = vshrl.u32 %v493, 7
    %v495 = vsub.s32 %v492, %v494
    %v496 = vrot.slane %v482, %v495
    %v497 = vcombine.high %v489, %v489
    %v498 = vcombine.high %v496, %v496
    %v499 = vcombine.high %v61, %v61
    %v501 = vunpack.c.l.s4 1983009808
    %v502 = vunpack.c.0.s8 %v501
    %v503 = vlaneseq
    %v504 = vshrl.u32 %v503, 7
    %v505 = vsub.s32 %v502, %v504
    %v506 = vrot.slane %v61, %v505
    %v508 = vunpack.c.l.s4 1983009808
    %v509 = vunpack.c.0.s8 %v508
    %v510 = vlaneseq
    %v511 = vshrl.u32 %v510, 7
    %v512 = vsub.s32 %v509, %v511
    %v513 = vrot.slane %v499, %v512
    %v514 = vcombine.high %v506, %v506
    %v515 = vcombine.high %v513, %v513
    %v516 = vcombine.high %v62, %v62
    %v518 = vunpack.c.l.s4 1983009808
    %v519 = vunpack.c.0.s8 %v518
    %v520 = vlaneseq
    %v521 = vshrl.u32 %v520, 7
    %v522 = vsub.s32 %v519, %v521
    %v523 = vrot.slane %v62, %v522
    %v525 = vunpack.c.l.s4 1983009808
    %v526 = vunpack.c.0.s8 %v525
    %v527 = vlaneseq
    %v528 = vshrl.u32 %v527, 7
    %v529 = vsub.s32 %v526, %v528
    %v530 = vrot.slane %v516, %v529
    %v531 = vcombine.high %v523, %v523
    %v532 = vcombine.high %v530, %v530
    %v534 = vunpack.c.l.s4 1983009808
    %v535 = vunpack.c.0.s8 %v534
    %v536 = vlaneseq
    %v537 = vshrl.u32 %v536, 7
    %v538 = vsub.s32 %v535, %v537
    %v539 = vrot.slane %v63, %v538
    %v645 = vpack.c.bf16 %v98, %v98
    %v646 = vpack.c.bf16 %v106, %v106
    %v647 = vpack.c.bf16 %v105, %v105
    %v648 = vpack.c.bf16 %v107, %v107
    %v649 = vpack.c.bf16 %v115, %v115
    %v650 = vpack.c.bf16 %v123, %v123
    %v651 = vpack.c.bf16 %v122, %v122
    %v652 = vpack.c.bf16 %v124, %v124
    %v653 = vpack.c.bf16 %v132, %v132
    %v654 = vpack.c.bf16 %v140, %v140
    %v655 = vpack.c.bf16 %v139, %v139
    %v656 = vpack.c.bf16 %v141, %v141
    %v657 = vpack.c.bf16 %v149, %v149
    %v658 = vpack.c.bf16 %v157, %v157
    %v659 = vpack.c.bf16 %v156, %v156
    %v660 = vpack.c.bf16 %v158, %v158
    %v661 = vpack.c.bf16 %v166, %v166
    %v662 = vpack.c.bf16 %v174, %v174
    %v663 = vpack.c.bf16 %v173, %v173
    %v664 = vpack.c.bf16 %v175, %v175
    %v665 = vpack.c.bf16 %v183, %v183
    %v666 = vpack.c.bf16 %v191, %v191
    %v667 = vpack.c.bf16 %v190, %v190
    %v668 = vpack.c.bf16 %v192, %v192
    %v669 = vpack.c.bf16 %v200, %v200
    %v670 = vpack.c.bf16 %v208, %v208
    %v671 = vpack.c.bf16 %v207, %v207
    %v672 = vpack.c.bf16 %v209, %v209
    %v673 = vpack.c.bf16 %v217, %v217
    %v674 = vpack.c.bf16 %v225, %v225
    %v675 = vpack.c.bf16 %v224, %v224
    %v676 = vpack.c.bf16 %v226, %v226
    %v677 = vpack.c.bf16 %v234, %v234
    %v678 = vpack.c.bf16 %v242, %v242
    %v679 = vpack.c.bf16 %v241, %v241
    %v680 = vpack.c.bf16 %v243, %v243
    %v681 = vpack.c.bf16 %v251, %v251
    %v682 = vpack.c.bf16 %v259, %v259
    %v683 = vpack.c.bf16 %v258, %v258
    %v684 = vpack.c.bf16 %v260, %v260
    %v685 = vpack.c.bf16 %v268, %v268
    %v686 = vpack.c.bf16 %v276, %v276
    %v687 = vpack.c.bf16 %v275, %v275
    %v688 = vpack.c.bf16 %v277, %v277
    %v689 = vpack.c.bf16 %v285, %v285
    %v690 = vpack.c.bf16 %v293, %v293
    %v691 = vpack.c.bf16 %v292, %v292
    %v692 = vpack.c.bf16 %v294, %v294
    %v693 = vpack.c.bf16 %v302, %v302
    %v694 = vpack.c.bf16 %v310, %v310
    %v695 = vpack.c.bf16 %v309, %v309
    %v696 = vpack.c.bf16 %v311, %v311
    %v697 = vpack.c.bf16 %v319, %v319
    %v698 = vpack.c.bf16 %v327, %v327
    %v699 = vpack.c.bf16 %v326, %v326
    %v700 = vpack.c.bf16 %v328, %v328
    %v701 = vpack.c.bf16 %v336, %v336
    %v702 = vpack.c.bf16 %v344, %v344
    %v703 = vpack.c.bf16 %v343, %v343
    %v704 = vpack.c.bf16 %v345, %v345
    %v705 = vpack.c.bf16 %v353, %v353
    %v706 = vpack.c.bf16 %v361, %v361
    %v707 = vpack.c.bf16 %v360, %v360
    %v708 = vpack.c.bf16 %v362, %v362
    %v709 = vpack.c.bf16 %v370, %v370
    %v710 = vpack.c.bf16 %v378, %v378
    %v711 = vpack.c.bf16 %v377, %v377
    %v712 = vpack.c.bf16 %v379, %v379
    %v713 = vpack.c.bf16 %v387, %v387
    %v714 = vpack.c.bf16 %v395, %v395
    %v715 = vpack.c.bf16 %v394, %v394
    %v716 = vpack.c.bf16 %v396, %v396
    %v717 = vpack.c.bf16 %v404, %v404
    %v718 = vpack.c.bf16 %v412, %v412
    %v719 = vpack.c.bf16 %v411, %v411
    %v720 = vpack.c.bf16 %v413, %v413
    %v721 = vpack.c.bf16 %v421, %v421
    %v722 = vpack.c.bf16 %v429, %v429
    %v723 = vpack.c.bf16 %v428, %v428
    %v724 = vpack.c.bf16 %v430, %v430
    %v725 = vpack.c.bf16 %v438, %v438
    %v726 = vpack.c.bf16 %v446, %v446
    %v727 = vpack.c.bf16 %v445, %v445
    %v728 = vpack.c.bf16 %v447, %v447
    %v729 = vpack.c.bf16 %v455, %v455
    %v730 = vpack.c.bf16 %v463, %v463
    %v731 = vpack.c.bf16 %v462, %v462
    %v732 = vpack.c.bf16 %v464, %v464
    %v733 = vpack.c.bf16 %v472, %v472
    %v734 = vpack.c.bf16 %v480, %v480
    %v735 = vpack.c.bf16 %v479, %v479
    %v736 = vpack.c.bf16 %v481, %v481
    %v737 = vpack.c.bf16 %v489, %v489
    %v738 = vpack.c.bf16 %v497, %v497
    %v739 = vpack.c.bf16 %v496, %v496
    %v740 = vpack.c.bf16 %v498, %v498
    %v741 = vpack.c.bf16 %v506, %v506
    %v742 = vpack.c.bf16 %v514, %v514
    %v743 = vpack.c.bf16 %v513, %v513
    %v744 = vpack.c.bf16 %v515, %v515
    %v745 = vpack.c.bf16 %v523, %v523
    %v746 = vpack.c.bf16 %v531, %v531
    %v747 = vpack.c.bf16 %v530, %v530
    %v748 = vpack.c.bf16 %v532, %v532
    %v749 = vpack.c.bf16 %v539, %v539
    %v750 = vld [vmem:[%s1] sm:$0xff]
    %v751 = vld [vmem:[%s1 + $0x8] sm:$0xff]
    %v752 = vld [vmem:[%s1 + $0x10] sm:$0xff]
    %v753 = vld [vmem:[%s1 + $0x18] sm:$0xff]
    %v754 = vld [vmem:[%s1 + $0x20] sm:$0xff]
    %v755 = vld [vmem:[%s1 + $0x28] sm:$0xff]
    %v756 = vld [vmem:[%s1 + $0x30] sm:$0xff]
    %v757 = vld [vmem:[%s1 + $0x38] sm:$0xff]
    %v758 = vld [vmem:[%s1 + $0x40] sm:$0xff]
    %v759 = vld [vmem:[%s1 + $0x48] sm:$0xff]
    %v760 = vld [vmem:[%s1 + $0x50] sm:$0xff]
    %v761 = vld [vmem:[%s1 + $0x58] sm:$0xff]
    %v762 = vld [vmem:[%s1 + $0x60] sm:$0xff]
    %v763 = vld [vmem:[%s1 + $0x68] sm:$0xff]
    %v764 = vld [vmem:[%s1 + $0x70] sm:$0xff]
    %v765 = vld [vmem:[%s1 + $0x78] sm:$0xff]
    %v766 = vld [vmem:[%s1 + $0x80] sm:$0xff]
    %v767 = vld [vmem:[%s1 + $0x88] sm:$0xff]
    %v768 = vld [vmem:[%s1 + $0x90] sm:$0xff]
    %v769 = vld [vmem:[%s1 + $0x98] sm:$0xff]
    %v770 = vld [vmem:[%s1 + $0xa0] sm:$0xff]
    %v771 = vld [vmem:[%s1 + $0xa8] sm:$0xff]
    %v772 = vld [vmem:[%s1 + $0xb0] sm:$0xff]
    %v773 = vld [vmem:[%s1 + $0xb8] sm:$0xff]
    %v774 = vld [vmem:[%s1 + $0xc0] sm:$0xff]
    %v775 = vld [vmem:[%s1 + $0xc8] sm:$0xff]
    %v776 = vld [vmem:[%s1 + $0xd0] sm:$0xff]
    %v777 = vld [vmem:[%s1 + $0xd8] sm:$0xff]
    %v778 = vld [vmem:[%s1 + $0xe0] sm:$0xff]
    %v779 = vld [vmem:[%s1 + $0xe8] sm:$0xff]
    %v780 = vld [vmem:[%s1 + $0xf0] sm:$0xff]
    %v781 = vld [vmem:[%s1 + $0xf8] sm:$0xff]
    %v782 = vld [vmem:[%s1 + $0x100] sm:$0xff]
    %v783 = vld [vmem:[%s1 + $0x108] sm:$0xff]
    %v784 = vld [vmem:[%s1 + $0x110] sm:$0xff]
    %v785 = vld [vmem:[%s1 + $0x118] sm:$0xff]
    %v786 = vld [vmem:[%s1 + $0x120] sm:$0xff]
    %v787 = vld [vmem:[%s1 + $0x128] sm:$0xff]
    %v788 = vld [vmem:[%s1 + $0x130] sm:$0xff]
    %v789 = vld [vmem:[%s1 + $0x138] sm:$0xff]
    %v790 = vld [vmem:[%s1 + $0x140] sm:$0xff]
    %v791 = vld [vmem:[%s1 + $0x148] sm:$0xff]
    %v792 = vld [vmem:[%s1 + $0x150] sm:$0xff]
    %v793 = vld [vmem:[%s1 + $0x158] sm:$0xff]
    %v794 = vld [vmem:[%s1 + $0x160] sm:$0xff]
    %v795 = vld [vmem:[%s1 + $0x168] sm:$0xff]
    %v796 = vld [vmem:[%s1 + $0x170] sm:$0xff]
    %v797 = vld [vmem:[%s1 + $0x178] sm:$0xff]
    %v798 = vld [vmem:[%s1 + $0x180] sm:$0xff]
    %v799 = vld [vmem:[%s1 + $0x188] sm:$0xff]
    %v800 = vld [vmem:[%s1 + $0x190] sm:$0xff]
    %v801 = vld [vmem:[%s1 + $0x198] sm:$0xff]
    %v802 = vld [vmem:[%s1 + $0x1a0] sm:$0xff]
    %v803 = vld [vmem:[%s1 + $0x1a8] sm:$0xff]
    %v804 = vld [vmem:[%s1 + $0x1b0] sm:$0xff]
    %v805 = vld [vmem:[%s1 + $0x1b8] sm:$0xff]
    %v806 = vld [vmem:[%s1 + $0x1c0] sm:$0xff]
    %v807 = vld [vmem:[%s1 + $0x1c8] sm:$0xff]
    %v808 = vld [vmem:[%s1 + $0x1d0] sm:$0xff]
    %v809 = vld [vmem:[%s1 + $0x1d8] sm:$0xff]
    %v810 = vld [vmem:[%s1 + $0x1e0] sm:$0xff]
    %v811 = vld [vmem:[%s1 + $0x1e8] sm:$0xff]
    %v812 = vld [vmem:[%s1 + $0x1f0] sm:$0xff]
    %v813 = vld [vmem:[%s1 + $0x1f8] sm:$0xff]
    %v814 = vld [vmem:[%s1 + $0x200] sm:$0xff]
    %v815 = vld [vmem:[%s1 + $0x208] sm:$0xff]
    %v816 = vld [vmem:[%s1 + $0x210] sm:$0xff]
    %v817 = vld [vmem:[%s1 + $0x218] sm:$0xff]
    %v818 = vld [vmem:[%s1 + $0x220] sm:$0xff]
    %v819 = vld [vmem:[%s1 + $0x228] sm:$0xff]
    %v820 = vld [vmem:[%s1 + $0x230] sm:$0xff]
    %v821 = vld [vmem:[%s1 + $0x238] sm:$0xff]
    %v822 = vld [vmem:[%s1 + $0x240] sm:$0xff]
    %v823 = vld [vmem:[%s1 + $0x248] sm:$0xff]
    %v824 = vld [vmem:[%s1 + $0x250] sm:$0xff]
    %v825 = vld [vmem:[%s1 + $0x258] sm:$0xff]
    %v826 = vld [vmem:[%s1 + $0x260] sm:$0xff]
    %v827 = vld [vmem:[%s1 + $0x268] sm:$0xff]
    %v828 = vld [vmem:[%s1 + $0x270] sm:$0xff]
    %v829 = vld [vmem:[%s1 + $0x278] sm:$0xff]
    %v830 = vld [vmem:[%s1 + $0x280] sm:$0xff]
    %v831 = vld [vmem:[%s1 + $0x288] sm:$0xff]
    %v832 = vld [vmem:[%s1 + $0x290] sm:$0xff]
    %v833 = vld [vmem:[%s1 + $0x298] sm:$0xff]
    %v834 = vld [vmem:[%s1 + $0x2a0] sm:$0xff]
    %v835 = vld [vmem:[%s1 + $0x2a8] sm:$0xff]
    %v836 = vld [vmem:[%s1 + $0x2b0] sm:$0xff]
    %v837 = vld [vmem:[%s1 + $0x2b8] sm:$0xff]
    %v838 = vld [vmem:[%s1 + $0x2c0] sm:$0xff]
    %v839 = vld [vmem:[%s1 + $0x2c8] sm:$0xff]
    %v840 = vld [vmem:[%s1 + $0x2d0] sm:$0xff]
    %v841 = vld [vmem:[%s1 + $0x2d8] sm:$0xff]
    %v842 = vld [vmem:[%s1 + $0x2e0] sm:$0xff]
    %v843 = vld [vmem:[%s1 + $0x2e8] sm:$0xff]
    %v844 = vld [vmem:[%s1 + $0x2f0] sm:$0xff]
    %v845 = vld [vmem:[%s1 + $0x2f8] sm:$0xff]
    %v846 = vld [vmem:[%s1 + $0x300] sm:$0xff]
    %v847 = vld [vmem:[%s1 + $0x308] sm:$0xff]
    %v848 = vld [vmem:[%s1 + $0x310] sm:$0xff]
    %v849 = vld [vmem:[%s1 + $0x318] sm:$0xff]
    %v850 = vld [vmem:[%s1 + $0x320] sm:$0xff]
    %v851 = vld [vmem:[%s1 + $0x328] sm:$0xff]
    %v852 = vld [vmem:[%s1 + $0x330] sm:$0xff]
    %v853 = vld [vmem:[%s1 + $0x338] sm:$0xff]
    %v854 = vld [vmem:[%s1 + $0x340] sm:$0xff]
    %v855 = vld [vmem:[%s1 + $0x348] sm:$0xff]
    %v856 = vld [vmem:[%s1 + $0x350] sm:$0xff]
    %v857 = vld [vmem:[%s1 + $0x358] sm:$0xff]
    %v858 = vld [vmem:[%s1 + $0x360] sm:$0xff]
    %v859 = vld [vmem:[%s1 + $0x368] sm:$0xff]
    %v860 = vld [vmem:[%s1 + $0x370] sm:$0xff]
    %v861 = vld [vmem:[%s1 + $0x378] sm:$0xff]
    %v862 = vld [vmem:[%s1 + $0x380] sm:$0xff]
    %v863 = vld [vmem:[%s1 + $0x388] sm:$0xff]
    %v864 = vld [vmem:[%s1 + $0x390] sm:$0xff]
    %v865 = vld [vmem:[%s1 + $0x398] sm:$0xff]
    %v866 = vld [vmem:[%s1 + $0x3a0] sm:$0xff]
    %v867 = vld [vmem:[%s1 + $0x3a8] sm:$0xff]
    %v868 = vld [vmem:[%s1 + $0x3b0] sm:$0xff]
    %v869 = vld [vmem:[%s1 + $0x3b8] sm:$0xff]
    %v870 = vld [vmem:[%s1 + $0x3c0] sm:$0xff]
    %v871 = vld [vmem:[%s1 + $0x3c8] sm:$0xff]
    %v872 = vld [vmem:[%s1 + $0x3d0] sm:$0xff]
    %v873 = vld [vmem:[%s1 + $0x3d8] sm:$0xff]
    %v874 = vld [vmem:[%s1 + $0x3e0] sm:$0xff]
    %v875 = vld [vmem:[%s1 + $0x3e8] sm:$0xff]
    %v876 = vld [vmem:[%s1 + $0x3f0] sm:$0xff]
    %v877 = vld [vmem:[%s1 + $0x3f8] sm:$0xff]
    %v878 = vld [vmem:[%s1 + $0x400] sm:$0xff]
    %v879 = vld [vmem:[%s1 + $0x408] sm:$0xff]
    %v880 = vld [vmem:[%s1 + $0x410] sm:$0xff]
    %v881 = vld [vmem:[%s1 + $0x418] sm:$0xff]
    %v882 = vld [vmem:[%s1 + $0x420] sm:$0xff]
    %v883 = vld [vmem:[%s1 + $0x428] sm:$0xff]
    %v884 = vld [vmem:[%s1 + $0x430] sm:$0xff]
    %v885 = vld [vmem:[%s1 + $0x438] sm:$0xff]
    %v886 = vld [vmem:[%s1 + $0x440] sm:$0xff]
    %v887 = vld [vmem:[%s1 + $0x448] sm:$0xff]
    %v888 = vld [vmem:[%s1 + $0x450] sm:$0xff]
    %v889 = vld [vmem:[%s1 + $0x458] sm:$0xff]
    %v890 = vld [vmem:[%s1 + $0x460] sm:$0xff]
    %v891 = vld [vmem:[%s1 + $0x468] sm:$0xff]
    %v892 = vld [vmem:[%s1 + $0x470] sm:$0xff]
    %v893 = vld [vmem:[%s1 + $0x478] sm:$0xff]
    %v894 = vld [vmem:[%s1 + $0x480] sm:$0xff]
    %v895 = vld [vmem:[%s1 + $0x488] sm:$0xff]
    %v896 = vld [vmem:[%s1 + $0x490] sm:$0xff]
    %v897 = vld [vmem:[%s1 + $0x498] sm:$0xff]
    %v898 = vld [vmem:[%s1 + $0x4a0] sm:$0xff]
    %v899 = vld [vmem:[%s1 + $0x4a8] sm:$0xff]
    %v900 = vld [vmem:[%s1 + $0x4b0] sm:$0xff]
    %v901 = vld [vmem:[%s1 + $0x4b8] sm:$0xff]
    %v902 = vld [vmem:[%s1 + $0x4c0] sm:$0xff]
    %v903 = vld [vmem:[%s1 + $0x4c8] sm:$0xff]
    %v904 = vld [vmem:[%s1 + $0x4d0] sm:$0xff]
    %v905 = vld [vmem:[%s1 + $0x4d8] sm:$0xff]
    %v906 = vld [vmem:[%s1 + $0x4e0] sm:$0xff]
    %v907 = vld [vmem:[%s1 + $0x4e8] sm:$0xff]
    %v908 = vld [vmem:[%s1 + $0x4f0] sm:$0xff]
    %v909 = vld [vmem:[%s1 + $0x4f8] sm:$0xff]
    %v910 = vld [vmem:[%s1 + $0x500] sm:$0xff]
    %v911 = vld [vmem:[%s1 + $0x508] sm:$0xff]
    %v912 = vld [vmem:[%s1 + $0x510] sm:$0xff]
    %v913 = vld [vmem:[%s1 + $0x518] sm:$0xff]
    %v914 = vld [vmem:[%s1 + $0x520] sm:$0xff]
    %v915 = vld [vmem:[%s1 + $0x528] sm:$0xff]
    %v916 = vld [vmem:[%s1 + $0x530] sm:$0xff]
    %v917 = vld [vmem:[%s1 + $0x538] sm:$0xff]
    %v918 = vld [vmem:[%s1 + $0x540] sm:$0xff]
    %v919 = vld [vmem:[%s1 + $0x548] sm:$0xff]
    %v920 = vld [vmem:[%s1 + $0x550] sm:$0xff]
    %v921 = vld [vmem:[%s1 + $0x558] sm:$0xff]
    %v922 = vld [vmem:[%s1 + $0x560] sm:$0xff]
    %v923 = vld [vmem:[%s1 + $0x568] sm:$0xff]
    %v924 = vld [vmem:[%s1 + $0x570] sm:$0xff]
    %v925 = vld [vmem:[%s1 + $0x578] sm:$0xff]
    %v926 = vld [vmem:[%s1 + $0x580] sm:$0xff]
    %v927 = vld [vmem:[%s1 + $0x588] sm:$0xff]
    %v928 = vld [vmem:[%s1 + $0x590] sm:$0xff]
    %v929 = vld [vmem:[%s1 + $0x598] sm:$0xff]
    %v930 = vld [vmem:[%s1 + $0x5a0] sm:$0xff]
    %v931 = vld [vmem:[%s1 + $0x5a8] sm:$0xff]
    %v932 = vld [vmem:[%s1 + $0x5b0] sm:$0xff]
    %v933 = vld [vmem:[%s1 + $0x5b8] sm:$0xff]
    %v934 = vld [vmem:[%s1 + $0x5c0] sm:$0xff]
    %v935 = vld [vmem:[%s1 + $0x5c8] sm:$0xff]
    %v936 = vld [vmem:[%s1 + $0x5d0] sm:$0xff]
    %v937 = vld [vmem:[%s1 + $0x5d8] sm:$0xff]
    %v938 = vld [vmem:[%s1 + $0x5e0] sm:$0xff]
    %v939 = vld [vmem:[%s1 + $0x5e8] sm:$0xff]
    %v940 = vld [vmem:[%s1 + $0x5f0] sm:$0xff]
    %v941 = vld [vmem:[%s1 + $0x5f8] sm:$0xff]
    %v942 = vld [vmem:[%s1 + $0x600] sm:$0xff]
    %v943 = vld [vmem:[%s1 + $0x608] sm:$0xff]
    %v944 = vld [vmem:[%s1 + $0x610] sm:$0xff]
    %v945 = vld [vmem:[%s1 + $0x618] sm:$0xff]
    %v946 = vld [vmem:[%s1 + $0x620] sm:$0xff]
    %v947 = vld [vmem:[%s1 + $0x628] sm:$0xff]
    %v948 = vld [vmem:[%s1 + $0x630] sm:$0xff]
    %v949 = vld [vmem:[%s1 + $0x638] sm:$0xff]
    %v950 = vld [vmem:[%s1 + $0x640] sm:$0xff]
    %v951 = vld [vmem:[%s1 + $0x648] sm:$0xff]
    %v952 = vld [vmem:[%s1 + $0x650] sm:$0xff]
    %v953 = vld [vmem:[%s1 + $0x658] sm:$0xff]
    %v954 = vld [vmem:[%s1 + $0x660] sm:$0xff]
    %v955 = vld [vmem:[%s1 + $0x668] sm:$0xff]
    %v956 = vld [vmem:[%s1 + $0x670] sm:$0xff]
    %v957 = vld [vmem:[%s1 + $0x678] sm:$0xff]
    %v958 = vld [vmem:[%s1 + $0x680] sm:$0xff]
    %v959 = vld [vmem:[%s1 + $0x688] sm:$0xff]
    %v960 = vld [vmem:[%s1 + $0x690] sm:$0xff]
    %v961 = vld [vmem:[%s1 + $0x698] sm:$0xff]
    %v962 = vld [vmem:[%s1 + $0x6a0] sm:$0xff]
    %v963 = vld [vmem:[%s1 + $0x6a8] sm:$0xff]
    %v964 = vld [vmem:[%s1 + $0x6b0] sm:$0xff]
    %v965 = vld [vmem:[%s1 + $0x6b8] sm:$0xff]
    %v966 = vld [vmem:[%s1 + $0x6c0] sm:$0xff]
    %v967 = vld [vmem:[%s1 + $0x6c8] sm:$0xff]
    %v968 = vld [vmem:[%s1 + $0x6d0] sm:$0xff]
    %v969 = vld [vmem:[%s1 + $0x6d8] sm:$0xff]
    %v970 = vld [vmem:[%s1 + $0x6e0] sm:$0xff]
    %v971 = vld [vmem:[%s1 + $0x6e8] sm:$0xff]
    %v972 = vld [vmem:[%s1 + $0x6f0] sm:$0xff]
    %v973 = vld [vmem:[%s1 + $0x6f8] sm:$0xff]
    %v974 = vld [vmem:[%s1 + $0x700] sm:$0xff]
    %v975 = vld [vmem:[%s1 + $0x708] sm:$0xff]
    %v976 = vld [vmem:[%s1 + $0x710] sm:$0xff]
    %v977 = vld [vmem:[%s1 + $0x718] sm:$0xff]
    %v978 = vld [vmem:[%s1 + $0x720] sm:$0xff]
    %v979 = vld [vmem:[%s1 + $0x728] sm:$0xff]
    %v980 = vld [vmem:[%s1 + $0x730] sm:$0xff]
    %v981 = vld [vmem:[%s1 + $0x738] sm:$0xff]
    %v982 = vld [vmem:[%s1 + $0x740] sm:$0xff]
    %v983 = vld [vmem:[%s1 + $0x748] sm:$0xff]
    %v984 = vld [vmem:[%s1 + $0x750] sm:$0xff]
    %v985 = vld [vmem:[%s1 + $0x758] sm:$0xff]
    %v986 = vld [vmem:[%s1 + $0x760] sm:$0xff]
    %v987 = vld [vmem:[%s1 + $0x768] sm:$0xff]
    %v988 = vld [vmem:[%s1 + $0x770] sm:$0xff]
    %v989 = vld [vmem:[%s1 + $0x778] sm:$0xff]
    %v990 = vld [vmem:[%s1 + $0x780] sm:$0xff]
    %v991 = vld [vmem:[%s1 + $0x788] sm:$0xff]
    %v992 = vld [vmem:[%s1 + $0x790] sm:$0xff]
    %v993 = vld [vmem:[%s1 + $0x798] sm:$0xff]
    %v994 = vld [vmem:[%s1 + $0x7a0] sm:$0xff]
    %v995 = vld [vmem:[%s1 + $0x7a8] sm:$0xff]
    %v996 = vld [vmem:[%s1 + $0x7b0] sm:$0xff]
    %v997 = vld [vmem:[%s1 + $0x7b8] sm:$0xff]
    %v998 = vld [vmem:[%s1 + $0x7c0] sm:$0xff]
    %v999 = vld [vmem:[%s1 + $0x7c8] sm:$0xff]
    %v1000 = vld [vmem:[%s1 + $0x7d0] sm:$0xff]
    %v1001 = vld [vmem:[%s1 + $0x7d8] sm:$0xff]
    %v1002 = vld [vmem:[%s1 + $0x7e0] sm:$0xff]
    %v1003 = vld [vmem:[%s1 + $0x7e8] sm:$0xff]
    %v1004 = vld [vmem:[%s1 + $0x7f0] sm:$0xff]
    %v1005 = vld [vmem:[%s1 + $0x7f8] sm:$0xff]
    %v1006 = vld [vmem:[%s1 + $0x800] sm:$0xff]
    %v1007 = vld [vmem:[%s1 + $0x808] sm:$0xff]
    %v1008 = vld [vmem:[%s1 + $0x810] sm:$0xff]
    %v1009 = vld [vmem:[%s1 + $0x818] sm:$0xff]
    %v1010 = vld [vmem:[%s1 + $0x820] sm:$0xff]
    %v1011 = vld [vmem:[%s1 + $0x828] sm:$0xff]
    %v1012 = vld [vmem:[%s1 + $0x830] sm:$0xff]
    %v1013 = vld [vmem:[%s1 + $0x838] sm:$0xff]
    %v1014 = vld [vmem:[%s1 + $0x840] sm:$0xff]
    %v1015 = vld [vmem:[%s1 + $0x848] sm:$0xff]
    %v1016 = vld [vmem:[%s1 + $0x850] sm:$0xff]
    %v1017 = vld [vmem:[%s1 + $0x858] sm:$0xff]
    %v1018 = vld [vmem:[%s1 + $0x860] sm:$0xff]
    %v1019 = vld [vmem:[%s1 + $0x868] sm:$0xff]
    %v1020 = vld [vmem:[%s1 + $0x870] sm:$0xff]
    %v1021 = vld [vmem:[%s1 + $0x878] sm:$0xff]
    %v1022 = vld [vmem:[%s1 + $0x880] sm:$0xff]
    %v1023 = vld [vmem:[%s1 + $0x888] sm:$0xff]
    %v1024 = vld [vmem:[%s1 + $0x890] sm:$0xff]
    %v1025 = vld [vmem:[%s1 + $0x898] sm:$0xff]
    %v1026 = vld [vmem:[%s1 + $0x8a0] sm:$0xff]
    %v1027 = vld [vmem:[%s1 + $0x8a8] sm:$0xff]
    %v1028 = vld [vmem:[%s1 + $0x8b0] sm:$0xff]
    %v1029 = vld [vmem:[%s1 + $0x8b8] sm:$0xff]
    %v1030 = vld [vmem:[%s1 + $0x8c0] sm:$0xff]
    %v1031 = vld [vmem:[%s1 + $0x8c8] sm:$0xff]
    %v1032 = vld [vmem:[%s1 + $0x8d0] sm:$0xff]
    %v1033 = vld [vmem:[%s1 + $0x8d8] sm:$0xff]
    %v1034 = vld [vmem:[%s1 + $0x8e0] sm:$0xff]
    %v1035 = vld [vmem:[%s1 + $0x8e8] sm:$0xff]
    %v1036 = vld [vmem:[%s1 + $0x8f0] sm:$0xff]
    %v1037 = vld [vmem:[%s1 + $0x8f8] sm:$0xff]
    %v1038 = vld [vmem:[%s1 + $0x900] sm:$0xff]
    %v1039 = vld [vmem:[%s1 + $0x908] sm:$0xff]
    %v1040 = vld [vmem:[%s1 + $0x910] sm:$0xff]
    %v1041 = vld [vmem:[%s1 + $0x918] sm:$0xff]
    %v1042 = vld [vmem:[%s1 + $0x920] sm:$0xff]
    %v1043 = vld [vmem:[%s1 + $0x928] sm:$0xff]
    %v1044 = vld [vmem:[%s1 + $0x930] sm:$0xff]
    %v1045 = vld [vmem:[%s1 + $0x938] sm:$0xff]
    %v1046 = vld [vmem:[%s1 + $0x940] sm:$0xff]
    %v1047 = vld [vmem:[%s1 + $0x948] sm:$0xff]
    %v1048 = vld [vmem:[%s1 + $0x950] sm:$0xff]
    %v1049 = vld [vmem:[%s1 + $0x958] sm:$0xff]
    %v1050 = vld [vmem:[%s1 + $0x960] sm:$0xff]
    %v1051 = vld [vmem:[%s1 + $0x968] sm:$0xff]
    %v1052 = vld [vmem:[%s1 + $0x970] sm:$0xff]
    %v1053 = vld [vmem:[%s1 + $0x978] sm:$0xff]
    %v1054 = vld [vmem:[%s1 + $0x980] sm:$0xff]
    %v1055 = vld [vmem:[%s1 + $0x988] sm:$0xff]
    %v1056 = vld [vmem:[%s1 + $0x990] sm:$0xff]
    %v1057 = vld [vmem:[%s1 + $0x998] sm:$0xff]
    %v1058 = vld [vmem:[%s1 + $0x9a0] sm:$0xff]
    %v1059 = vld [vmem:[%s1 + $0x9a8] sm:$0xff]
    %v1060 = vld [vmem:[%s1 + $0x9b0] sm:$0xff]
    %v1061 = vld [vmem:[%s1 + $0x9b8] sm:$0xff]
    %v1062 = vld [vmem:[%s1 + $0x9c0] sm:$0xff]
    %v1063 = vld [vmem:[%s1 + $0x9c8] sm:$0xff]
    %v1064 = vld [vmem:[%s1 + $0x9d0] sm:$0xff]
    %v1065 = vld [vmem:[%s1 + $0x9d8] sm:$0xff]
    %v1066 = vld [vmem:[%s1 + $0x9e0] sm:$0xff]
    %v1067 = vld [vmem:[%s1 + $0x9e8] sm:$0xff]
    %v1068 = vld [vmem:[%s1 + $0x9f0] sm:$0xff]
    %v1069 = vld [vmem:[%s1 + $0x9f8] sm:$0xff]
    %v1070 = vld [vmem:[%s1 + $0xa00] sm:$0xff]
    %v1071 = vld [vmem:[%s1 + $0xa08] sm:$0xff]
    %v1072 = vld [vmem:[%s1 + $0xa10] sm:$0xff]
    %v1073 = vld [vmem:[%s1 + $0xa18] sm:$0xff]
    %v1074 = vld [vmem:[%s1 + $0xa20] sm:$0xff]
    %v1075 = vld [vmem:[%s1 + $0xa28] sm:$0xff]
    %v1076 = vld [vmem:[%s1 + $0xa30] sm:$0xff]
    %v1077 = vld [vmem:[%s1 + $0xa38] sm:$0xff]
    %v1078 = vld [vmem:[%s1 + $0xa40] sm:$0xff]
    %v1079 = vld [vmem:[%s1 + $0xa48] sm:$0xff]
    %v1080 = vld [vmem:[%s1 + $0xa50] sm:$0xff]
    %v1081 = vld [vmem:[%s1 + $0xa58] sm:$0xff]
    %v1082 = vld [vmem:[%s1 + $0xa60] sm:$0xff]
    %v1083 = vld [vmem:[%s1 + $0xa68] sm:$0xff]
    %v1084 = vld [vmem:[%s1 + $0xa70] sm:$0xff]
    %v1085 = vld [vmem:[%s1 + $0xa78] sm:$0xff]
    %v1086 = vld [vmem:[%s1 + $0xa80] sm:$0xff]
    %v1087 = vld [vmem:[%s1 + $0xa88] sm:$0xff]
    %v1088 = vld [vmem:[%s1 + $0xa90] sm:$0xff]
    %v1089 = vld [vmem:[%s1 + $0xa98] sm:$0xff]
    %v1090 = vld [vmem:[%s1 + $0xaa0] sm:$0xff]
    %v1091 = vld [vmem:[%s1 + $0xaa8] sm:$0xff]
    %v1092 = vld [vmem:[%s1 + $0xab0] sm:$0xff]
    %v1093 = vld [vmem:[%s1 + $0xab8] sm:$0xff]
    %v1094 = vld [vmem:[%s1 + $0xac0] sm:$0xff]
    %v1095 = vld [vmem:[%s1 + $0xac8] sm:$0xff]
    %v1096 = vld [vmem:[%s1 + $0xad0] sm:$0xff]
    %v1097 = vld [vmem:[%s1 + $0xad8] sm:$0xff]
    %v1098 = vld [vmem:[%s1 + $0xae0] sm:$0xff]
    %v1099 = vld [vmem:[%s1 + $0xae8] sm:$0xff]
    %v1100 = vld [vmem:[%s1 + $0xaf0] sm:$0xff]
    %v1101 = vld [vmem:[%s1 + $0xaf8] sm:$0xff]
    %v1102 = vld [vmem:[%s1 + $0xb00] sm:$0xff]
    %v1103 = vld [vmem:[%s1 + $0xb08] sm:$0xff]
    %v1104 = vld [vmem:[%s1 + $0xb10] sm:$0xff]
    %v1105 = vld [vmem:[%s1 + $0xb18] sm:$0xff]
    %v1106 = vld [vmem:[%s1 + $0xb20] sm:$0xff]
    %v1107 = vld [vmem:[%s1 + $0xb28] sm:$0xff]
    %v1108 = vld [vmem:[%s1 + $0xb30] sm:$0xff]
    %v1109 = vld [vmem:[%s1 + $0xb38] sm:$0xff]
    %v1110 = vld [vmem:[%s1 + $0xb40] sm:$0xff]
    %v1111 = vld [vmem:[%s1 + $0xb48] sm:$0xff]
    %v1112 = vld [vmem:[%s1 + $0xb50] sm:$0xff]
    %v1113 = vld [vmem:[%s1 + $0xb58] sm:$0xff]
    %v1114 = vld [vmem:[%s1 + $0xb60] sm:$0xff]
    %v1115 = vld [vmem:[%s1 + $0xb68] sm:$0xff]
    %v1116 = vld [vmem:[%s1 + $0xb70] sm:$0xff]
    %v1117 = vld [vmem:[%s1 + $0xb78] sm:$0xff]
    %v1118 = vld [vmem:[%s1 + $0xb80] sm:$0xff]
    %v1119 = vld [vmem:[%s1 + $0xb88] sm:$0xff]
    %v1120 = vld [vmem:[%s1 + $0xb90] sm:$0xff]
    %v1121 = vld [vmem:[%s1 + $0xb98] sm:$0xff]
    %v1122 = vld [vmem:[%s1 + $0xba0] sm:$0xff]
    %v1123 = vld [vmem:[%s1 + $0xba8] sm:$0xff]
    %v1124 = vld [vmem:[%s1 + $0xbb0] sm:$0xff]
    %v1125 = vld [vmem:[%s1 + $0xbb8] sm:$0xff]
    %v1126 = vld [vmem:[%s1 + $0xbc0] sm:$0xff]
    %v1127 = vld [vmem:[%s1 + $0xbc8] sm:$0xff]
    %v1128 = vld [vmem:[%s1 + $0xbd0] sm:$0xff]
    %v1129 = vld [vmem:[%s1 + $0xbd8] sm:$0xff]
    %v1130 = vld [vmem:[%s1 + $0xbe0] sm:$0xff]
    %v1131 = vld [vmem:[%s1 + $0xbe8] sm:$0xff]
    %v1132 = vld [vmem:[%s1 + $0xbf0] sm:$0xff]
    %v1133 = vld [vmem:[%s1 + $0xbf8] sm:$0xff]
    %v1134 = vld [vmem:[%s1 + $0xc00] sm:$0xff]
    %v1135 = vld [vmem:[%s1 + $0xc08] sm:$0xff]
    %v1136 = vld [vmem:[%s1 + $0xc10] sm:$0xff]
    %v1137 = vld [vmem:[%s1 + $0xc18] sm:$0xff]
    %v1138 = vld [vmem:[%s1 + $0xc20] sm:$0xff]
    %v1139 = vld [vmem:[%s1 + $0xc28] sm:$0xff]
    %v1140 = vld [vmem:[%s1 + $0xc30] sm:$0xff]
    %v1141 = vld [vmem:[%s1 + $0xc38] sm:$0xff]
    %v1142 = vld [vmem:[%s1 + $0xc40] sm:$0xff]
    %v1143 = vld [vmem:[%s1 + $0xc48] sm:$0xff]
    %v1144 = vld [vmem:[%s1 + $0xc50] sm:$0xff]
    %v1145 = vld [vmem:[%s1 + $0xc58] sm:$0xff]
    %v1146 = vld [vmem:[%s1 + $0xc60] sm:$0xff]
    %v1147 = vld [vmem:[%s1 + $0xc68] sm:$0xff]
    %v1148 = vld [vmem:[%s1 + $0xc70] sm:$0xff]
    %v1149 = vld [vmem:[%s1 + $0xc78] sm:$0xff]
    %v1150 = vld [vmem:[%s1 + $0xc80] sm:$0xff]
    %v1151 = vld [vmem:[%s1 + $0xc88] sm:$0xff]
    %v1152 = vld [vmem:[%s1 + $0xc90] sm:$0xff]
    %v1153 = vld [vmem:[%s1 + $0xc98] sm:$0xff]
    %v1154 = vld [vmem:[%s1 + $0xca0] sm:$0xff]
    %v1155 = vld [vmem:[%s1 + $0xca8] sm:$0xff]
    %v1156 = vld [vmem:[%s1 + $0xcb0] sm:$0xff]
    %v1157 = vld [vmem:[%s1 + $0xcb8] sm:$0xff]
    %v1158 = vld [vmem:[%s1 + $0xcc0] sm:$0xff]
    %v1159 = vld [vmem:[%s1 + $0xcc8] sm:$0xff]
    %v1160 = vld [vmem:[%s1 + $0xcd0] sm:$0xff]
    %v1161 = vld [vmem:[%s1 + $0xcd8] sm:$0xff]
    %v1162 = vld [vmem:[%s1 + $0xce0] sm:$0xff]
    %v1163 = vld [vmem:[%s1 + $0xce8] sm:$0xff]
    %v1164 = vld [vmem:[%s1 + $0xcf0] sm:$0xff]
    %v1165 = vld [vmem:[%s1 + $0xcf8] sm:$0xff]
    %v1166 = vld [vmem:[%s1 + $0xd00] sm:$0xff]
    %v1167 = vld [vmem:[%s1 + $0xd08] sm:$0xff]
    %v1168 = vld [vmem:[%s1 + $0xd10] sm:$0xff]
    %v1169 = vld [vmem:[%s1 + $0xd18] sm:$0xff]
    %v1170 = vld [vmem:[%s1 + $0xd20] sm:$0xff]
    %v1171 = vld [vmem:[%s1 + $0xd28] sm:$0xff]
    %v1172 = vld [vmem:[%s1 + $0xd30] sm:$0xff]
    %v1173 = vld [vmem:[%s1 + $0xd38] sm:$0xff]
    %v1174 = vld [vmem:[%s1 + $0xd40] sm:$0xff]
    %v1175 = vld [vmem:[%s1 + $0xd48] sm:$0xff]
    %v1176 = vld [vmem:[%s1 + $0xd50] sm:$0xff]
    %v1177 = vld [vmem:[%s1 + $0xd58] sm:$0xff]
    %v1178 = vld [vmem:[%s1 + $0xd60] sm:$0xff]
    %v1179 = vld [vmem:[%s1 + $0xd68] sm:$0xff]
    %v1180 = vld [vmem:[%s1 + $0xd70] sm:$0xff]
    %v1181 = vld [vmem:[%s1 + $0xd78] sm:$0xff]
    %v1182 = vld [vmem:[%s1 + $0xd80] sm:$0xff]
    %v1183 = vld [vmem:[%s1 + $0xd88] sm:$0xff]
    %v1184 = vld [vmem:[%s1 + $0xd90] sm:$0xff]
    %v1185 = vld [vmem:[%s1 + $0xd98] sm:$0xff]
    %v1186 = vld [vmem:[%s1 + $0xda0] sm:$0xff]
    %v1187 = vld [vmem:[%s1 + $0xda8] sm:$0xff]
    %v1188 = vld [vmem:[%s1 + $0xdb0] sm:$0xff]
    %v1189 = vld [vmem:[%s1 + $0xdb8] sm:$0xff]
    %v1190 = vld [vmem:[%s1 + $0xdc0] sm:$0xff]
    %v1191 = vld [vmem:[%s1 + $0xdc8] sm:$0xff]
    %v1192 = vld [vmem:[%s1 + $0xdd0] sm:$0xff]
    %v1193 = vld [vmem:[%s1 + $0xdd8] sm:$0xff]
    %v1194 = vld [vmem:[%s1 + $0xde0] sm:$0xff]
    %v1195 = vld [vmem:[%s1 + $0xde8] sm:$0xff]
    %v1196 = vld [vmem:[%s1 + $0xdf0] sm:$0xff]
    %v1197 = vld [vmem:[%s1 + $0xdf8] sm:$0xff]
    %v1198 = vld [vmem:[%s1 + $0xe00] sm:$0xff]
    %v1199 = vld [vmem:[%s1 + $0xe08] sm:$0xff]
    %v1200 = vld [vmem:[%s1 + $0xe10] sm:$0xff]
    %v1201 = vld [vmem:[%s1 + $0xe18] sm:$0xff]
    %v1202 = vld [vmem:[%s1 + $0xe20] sm:$0xff]
    %v1203 = vld [vmem:[%s1 + $0xe28] sm:$0xff]
    %v1204 = vld [vmem:[%s1 + $0xe30] sm:$0xff]
    %v1205 = vld [vmem:[%s1 + $0xe38] sm:$0xff]
    %v1206 = vld [vmem:[%s1 + $0xe40] sm:$0xff]
    %v1207 = vld [vmem:[%s1 + $0xe48] sm:$0xff]
    %v1208 = vld [vmem:[%s1 + $0xe50] sm:$0xff]
    %v1209 = vld [vmem:[%s1 + $0xe58] sm:$0xff]
    %v1210 = vld [vmem:[%s1 + $0xe60] sm:$0xff]
    %v1211 = vld [vmem:[%s1 + $0xe68] sm:$0xff]
    %v1212 = vld [vmem:[%s1 + $0xe70] sm:$0xff]
    %v1213 = vld [vmem:[%s1 + $0xe78] sm:$0xff]
    %v1214 = vld [vmem:[%s1 + $0xe80] sm:$0xff]
    %v1215 = vld [vmem:[%s1 + $0xe88] sm:$0xff]
    %v1216 = vld [vmem:[%s1 + $0xe90] sm:$0xff]
    %v1217 = vld [vmem:[%s1 + $0xe98] sm:$0xff]
    %v1218 = vld [vmem:[%s1 + $0xea0] sm:$0xff]
    %v1219 = vld [vmem:[%s1 + $0xea8] sm:$0xff]
    %v1220 = vld [vmem:[%s1 + $0xeb0] sm:$0xff]
    %v1221 = vld [vmem:[%s1 + $0xeb8] sm:$0xff]
    %v1222 = vld [vmem:[%s1 + $0xec0] sm:$0xff]
    %v1223 = vld [vmem:[%s1 + $0xec8] sm:$0xff]
    %v1224 = vld [vmem:[%s1 + $0xed0] sm:$0xff]
    %v1225 = vld [vmem:[%s1 + $0xed8] sm:$0xff]
    %v1226 = vld [vmem:[%s1 + $0xee0] sm:$0xff]
    %v1227 = vld [vmem:[%s1 + $0xee8] sm:$0xff]
    %v1228 = vld [vmem:[%s1 + $0xef0] sm:$0xff]
    %v1229 = vld [vmem:[%s1 + $0xef8] sm:$0xff]
    %v1230 = vld [vmem:[%s1 + $0xf00] sm:$0xff]
    %v1231 = vld [vmem:[%s1 + $0xf08] sm:$0xff]
    %v1232 = vld [vmem:[%s1 + $0xf10] sm:$0xff]
    %v1233 = vld [vmem:[%s1 + $0xf18] sm:$0xff]
    %v1234 = vld [vmem:[%s1 + $0xf20] sm:$0xff]
    %v1235 = vld [vmem:[%s1 + $0xf28] sm:$0xff]
    %v1236 = vld [vmem:[%s1 + $0xf30] sm:$0xff]
    %v1237 = vld [vmem:[%s1 + $0xf38] sm:$0xff]
    %v1238 = vld [vmem:[%s1 + $0xf40] sm:$0xff]
    %v1239 = vld [vmem:[%s1 + $0xf48] sm:$0xff]
    %v1240 = vld [vmem:[%s1 + $0xf50] sm:$0xff]
    %v1241 = vld [vmem:[%s1 + $0xf58] sm:$0xff]
    %v1242 = vld [vmem:[%s1 + $0xf60] sm:$0xff]
    %v1243 = vld [vmem:[%s1 + $0xf68] sm:$0xff]
    %v1244 = vld [vmem:[%s1 + $0xf70] sm:$0xff]
    %v1245 = vld [vmem:[%s1 + $0xf78] sm:$0xff]
    %v1246 = vld [vmem:[%s1 + $0xf80] sm:$0xff]
    %v1247 = vld [vmem:[%s1 + $0xf88] sm:$0xff]
    %v1248 = vld [vmem:[%s1 + $0xf90] sm:$0xff]
    %v1249 = vld [vmem:[%s1 + $0xf98] sm:$0xff]
    %v1250 = vld [vmem:[%s1 + $0xfa0] sm:$0xff]
    %v1251 = vld [vmem:[%s1 + $0xfa8] sm:$0xff]
    %v1252 = vld [vmem:[%s1 + $0xfb0] sm:$0xff]
    %v1253 = vld [vmem:[%s1 + $0xfb8] sm:$0xff]
    %v1254 = vld [vmem:[%s1 + $0xfc0] sm:$0xff]
    %v1255 = vld [vmem:[%s1 + $0xfc8] sm:$0xff]
    %v1256 = vld [vmem:[%s1 + $0xfd0] sm:$0xff]
    %v1257 = vld [vmem:[%s1 + $0xfd8] sm:$0xff]
    %v1258 = vld [vmem:[%s1 + $0xfe0] sm:$0xff]
    %v1259 = vld [vmem:[%s1 + $0xfe8] sm:$0xff]
    %v1260 = vld [vmem:[%s1 + $0xff0] sm:$0xff]
    %v1261 = vld [vmem:[%s1 + $0xff8] sm:$0xff]
    %v1262 = vld [vmem:[%s1 + $0x1000] sm:$0xff]
    %v1263 = vld [vmem:[%s1 + $0x1008] sm:$0xff]
    %v1264 = vld [vmem:[%s1 + $0x1010] sm:$0xff]
    %v1265 = vld [vmem:[%s1 + $0x1018] sm:$0xff]
    %v1266 = vld [vmem:[%s1 + $0x1020] sm:$0xff]
    %v1267 = vld [vmem:[%s1 + $0x1028] sm:$0xff]
    %v1268 = vld [vmem:[%s1 + $0x1030] sm:$0xff]
    %v1269 = vld [vmem:[%s1 + $0x1038] sm:$0xff]
    %v1270 = vld [vmem:[%s1 + $0x1040] sm:$0xff]
    %v1271 = vld [vmem:[%s1 + $0x1048] sm:$0xff]
    %v1272 = vld [vmem:[%s1 + $0x1050] sm:$0xff]
    %v1273 = vld [vmem:[%s1 + $0x1058] sm:$0xff]
    %v1274 = vld [vmem:[%s1 + $0x1060] sm:$0xff]
    %v1275 = vld [vmem:[%s1 + $0x1068] sm:$0xff]
    %v1276 = vld [vmem:[%s1 + $0x1070] sm:$0xff]
    %v1277 = vld [vmem:[%s1 + $0x1078] sm:$0xff]
    %v1278 = vld [vmem:[%s1 + $0x1080] sm:$0xff]
    %v1279 = vld [vmem:[%s1 + $0x1088] sm:$0xff]
    %v1280 = vld [vmem:[%s1 + $0x1090] sm:$0xff]
    %v1281 = vld [vmem:[%s1 + $0x1098] sm:$0xff]
    %v1282 = vld [vmem:[%s1 + $0x10a0] sm:$0xff]
    %v1283 = vld [vmem:[%s1 + $0x10a8] sm:$0xff]
    %v1284 = vld [vmem:[%s1 + $0x10b0] sm:$0xff]
    %v1285 = vld [vmem:[%s1 + $0x10b8] sm:$0xff]
    %v1286 = vld [vmem:[%s1 + $0x10c0] sm:$0xff]
    %v1287 = vld [vmem:[%s1 + $0x10c8] sm:$0xff]
    %v1288 = vld [vmem:[%s1 + $0x10d0] sm:$0xff]
    %v1289 = vld [vmem:[%s1 + $0x10d8] sm:$0xff]
    %v1290 = vld [vmem:[%s1 + $0x10e0] sm:$0xff]
    %v1291 = vld [vmem:[%s1 + $0x10e8] sm:$0xff]
    %v1292 = vld [vmem:[%s1 + $0x10f0] sm:$0xff]
    %v1293 = vld [vmem:[%s1 + $0x10f8] sm:$0xff]
    %v1294 = vld [vmem:[%s1 + $0x1100] sm:$0xff]
    %v1295 = vld [vmem:[%s1 + $0x1108] sm:$0xff]
    %v1296 = vld [vmem:[%s1 + $0x1110] sm:$0xff]
    %v1297 = vld [vmem:[%s1 + $0x1118] sm:$0xff]
    %v1298 = vld [vmem:[%s1 + $0x1120] sm:$0xff]
    %v1299 = vld [vmem:[%s1 + $0x1128] sm:$0xff]
    %v1300 = vld [vmem:[%s1 + $0x1130] sm:$0xff]
    %v1301 = vld [vmem:[%s1 + $0x1138] sm:$0xff]
    %v1302 = vld [vmem:[%s1 + $0x1140] sm:$0xff]
    %v1303 = vld [vmem:[%s1 + $0x1148] sm:$0xff]
    %v1304 = vld [vmem:[%s1 + $0x1150] sm:$0xff]
    %v1305 = vld [vmem:[%s1 + $0x1158] sm:$0xff]
    %v1306 = vld [vmem:[%s1 + $0x1160] sm:$0xff]
    %v1307 = vld [vmem:[%s1 + $0x1168] sm:$0xff]
    %v1308 = vld [vmem:[%s1 + $0x1170] sm:$0xff]
    %v1309 = vld [vmem:[%s1 + $0x1178] sm:$0xff]
    %v1310 = vld [vmem:[%s1 + $0x1180] sm:$0xff]
    %v1311 = vld [vmem:[%s1 + $0x1188] sm:$0xff]
    %v1312 = vld [vmem:[%s1 + $0x1190] sm:$0xff]
    %v1313 = vld [vmem:[%s1 + $0x1198] sm:$0xff]
    %v1314 = vld [vmem:[%s1 + $0x11a0] sm:$0xff]
    %v1315 = vld [vmem:[%s1 + $0x11a8] sm:$0xff]
    %v1316 = vld [vmem:[%s1 + $0x11b0] sm:$0xff]
    %v1317 = vld [vmem:[%s1 + $0x11b8] sm:$0xff]
    %v1318 = vld [vmem:[%s1 + $0x11c0] sm:$0xff]
    %v1319 = vld [vmem:[%s1 + $0x11c8] sm:$0xff]
    %v1320 = vld [vmem:[%s1 + $0x11d0] sm:$0xff]
    %v1321 = vld [vmem:[%s1 + $0x11d8] sm:$0xff]
    %v1322 = vld [vmem:[%s1 + $0x11e0] sm:$0xff]
    %v1323 = vld [vmem:[%s1 + $0x11e8] sm:$0xff]
    %v1324 = vld [vmem:[%s1 + $0x11f0] sm:$0xff]
    %v1325 = vld [vmem:[%s1 + $0x11f8] sm:$0xff]
    %v1326 = vld [vmem:[%s1 + $0x1200] sm:$0xff]
    %v1327 = vld [vmem:[%s1 + $0x1208] sm:$0xff]
    %v1328 = vld [vmem:[%s1 + $0x1210] sm:$0xff]
    %v1329 = vld [vmem:[%s1 + $0x1218] sm:$0xff]
    %v1330 = vld [vmem:[%s1 + $0x1220] sm:$0xff]
    %v1331 = vld [vmem:[%s1 + $0x1228] sm:$0xff]
    %v1332 = vld [vmem:[%s1 + $0x1230] sm:$0xff]
    %v1333 = vld [vmem:[%s1 + $0x1238] sm:$0xff]
    %v1334 = vld [vmem:[%s1 + $0x1240] sm:$0xff]
    %v1335 = vld [vmem:[%s1 + $0x1248] sm:$0xff]
    %v1336 = vld [vmem:[%s1 + $0x1250] sm:$0xff]
    %v1337 = vld [vmem:[%s1 + $0x1258] sm:$0xff]
    %v1338 = vld [vmem:[%s1 + $0x1260] sm:$0xff]
    %v1339 = vld [vmem:[%s1 + $0x1268] sm:$0xff]
    %v1340 = vld [vmem:[%s1 + $0x1270] sm:$0xff]
    %v1341 = vld [vmem:[%s1 + $0x1278] sm:$0xff]
    %v1342 = vld [vmem:[%s1 + $0x1280] sm:$0xff]
    %v1343 = vld [vmem:[%s1 + $0x1288] sm:$0xff]
    %v1344 = vld [vmem:[%s1 + $0x1290] sm:$0xff]
    %v1345 = vld [vmem:[%s1 + $0x1298] sm:$0xff]
    %v1346 = vld [vmem:[%s1 + $0x12a0] sm:$0xff]
    %v1347 = vld [vmem:[%s1 + $0x12a8] sm:$0xff]
    %v1348 = vld [vmem:[%s1 + $0x12b0] sm:$0xff]
    %v1349 = vld [vmem:[%s1 + $0x12b8] sm:$0xff]
    %v1350 = vld [vmem:[%s1 + $0x12c0] sm:$0xff]
    %v1351 = vld [vmem:[%s1 + $0x12c8] sm:$0xff]
    %v1352 = vld [vmem:[%s1 + $0x12d0] sm:$0xff]
    %v1353 = vld [vmem:[%s1 + $0x12d8] sm:$0xff]
    %v1354 = vld [vmem:[%s1 + $0x12e0] sm:$0xff]
    %v1355 = vld [vmem:[%s1 + $0x12e8] sm:$0xff]
    %v1356 = vld [vmem:[%s1 + $0x12f0] sm:$0xff]
    %v1357 = vld [vmem:[%s1 + $0x12f8] sm:$0xff]
    %v1358 = vld [vmem:[%s1 + $0x1300] sm:$0xff]
    %v1359 = vld [vmem:[%s1 + $0x1308] sm:$0xff]
    %v1360 = vld [vmem:[%s1 + $0x1310] sm:$0xff]
    %v1361 = vld [vmem:[%s1 + $0x1318] sm:$0xff]
    %v1362 = vld [vmem:[%s1 + $0x1320] sm:$0xff]
    %v1363 = vld [vmem:[%s1 + $0x1328] sm:$0xff]
    %v1364 = vld [vmem:[%s1 + $0x1330] sm:$0xff]
    %v1365 = vld [vmem:[%s1 + $0x1338] sm:$0xff]
    %v1366 = vld [vmem:[%s1 + $0x1340] sm:$0xff]
    %v1367 = vld [vmem:[%s1 + $0x1348] sm:$0xff]
    %v1368 = vld [vmem:[%s1 + $0x1350] sm:$0xff]
    %v1369 = vld [vmem:[%s1 + $0x1358] sm:$0xff]
    %v1370 = vld [vmem:[%s1 + $0x1360] sm:$0xff]
    %v1371 = vld [vmem:[%s1 + $0x1368] sm:$0xff]
    %v1372 = vld [vmem:[%s1 + $0x1370] sm:$0xff]
    %v1373 = vld [vmem:[%s1 + $0x1378] sm:$0xff]
    %v1374 = vld [vmem:[%s1 + $0x1380] sm:$0xff]
    %v1375 = vld [vmem:[%s1 + $0x1388] sm:$0xff]
    %v1376 = vld [vmem:[%s1 + $0x1390] sm:$0xff]
    %v1377 = vld [vmem:[%s1 + $0x1398] sm:$0xff]
    %v1378 = vld [vmem:[%s1 + $0x13a0] sm:$0xff]
    %v1379 = vld [vmem:[%s1 + $0x13a8] sm:$0xff]
    %v1380 = vld [vmem:[%s1 + $0x13b0] sm:$0xff]
    %v1381 = vld [vmem:[%s1 + $0x13b8] sm:$0xff]
    %v1382 = vld [vmem:[%s1 + $0x13c0] sm:$0xff]
    %v1383 = vld [vmem:[%s1 + $0x13c8] sm:$0xff]
    %v1384 = vld [vmem:[%s1 + $0x13d0] sm:$0xff]
    %v1385 = vld [vmem:[%s1 + $0x13d8] sm:$0xff]
    %v1386 = vld [vmem:[%s1 + $0x13e0] sm:$0xff]
    %v1387 = vld [vmem:[%s1 + $0x13e8] sm:$0xff]
    %v1388 = vld [vmem:[%s1 + $0x13f0] sm:$0xff]
    %v1389 = vld [vmem:[%s1 + $0x13f8] sm:$0xff]
    %v1390 = vld [vmem:[%s1 + $0x1400] sm:$0xff]
    %v1391 = vld [vmem:[%s1 + $0x1408] sm:$0xff]
    %v1392 = vld [vmem:[%s1 + $0x1410] sm:$0xff]
    %v1393 = vld [vmem:[%s1 + $0x1418] sm:$0xff]
    %v1394 = vld [vmem:[%s1 + $0x1420] sm:$0xff]
    %v1395 = vld [vmem:[%s1 + $0x1428] sm:$0xff]
    %v1396 = vld [vmem:[%s1 + $0x1430] sm:$0xff]
    %v1397 = vld [vmem:[%s1 + $0x1438] sm:$0xff]
    %v1398 = vld [vmem:[%s1 + $0x1440] sm:$0xff]
    %v1399 = vld [vmem:[%s1 + $0x1448] sm:$0xff]
    %v1400 = vld [vmem:[%s1 + $0x1450] sm:$0xff]
    %v1401 = vld [vmem:[%s1 + $0x1458] sm:$0xff]
    %v1402 = vld [vmem:[%s1 + $0x1460] sm:$0xff]
    %v1403 = vld [vmem:[%s1 + $0x1468] sm:$0xff]
    %v1404 = vld [vmem:[%s1 + $0x1470] sm:$0xff]
    %v1405 = vld [vmem:[%s1 + $0x1478] sm:$0xff]
    %v1406 = vld [vmem:[%s1 + $0x1480] sm:$0xff]
    %v1407 = vld [vmem:[%s1 + $0x1488] sm:$0xff]
    %v1408 = vld [vmem:[%s1 + $0x1490] sm:$0xff]
    %v1409 = vld [vmem:[%s1 + $0x1498] sm:$0xff]
    %v1410 = vld [vmem:[%s1 + $0x14a0] sm:$0xff]
    %v1411 = vld [vmem:[%s1 + $0x14a8] sm:$0xff]
    %v1412 = vld [vmem:[%s1 + $0x14b0] sm:$0xff]
    %v1413 = vld [vmem:[%s1 + $0x14b8] sm:$0xff]
    %v1414 = vld [vmem:[%s1 + $0x14c0] sm:$0xff]
    %v1415 = vld [vmem:[%s1 + $0x14c8] sm:$0xff]
    %v1416 = vld [vmem:[%s1 + $0x14d0] sm:$0xff]
    %v1417 = vld [vmem:[%s1 + $0x14d8] sm:$0xff]
    %v1418 = vld [vmem:[%s1 + $0x14e0] sm:$0xff]
    %v1419 = vld [vmem:[%s1 + $0x14e8] sm:$0xff]
    %v1420 = vld [vmem:[%s1 + $0x14f0] sm:$0xff]
    %v1421 = vld [vmem:[%s1 + $0x14f8] sm:$0xff]
    %v1422 = vld [vmem:[%s1 + $0x1500] sm:$0xff]
    %v1423 = vld [vmem:[%s1 + $0x1508] sm:$0xff]
    %v1424 = vld [vmem:[%s1 + $0x1510] sm:$0xff]
    %v1425 = vld [vmem:[%s1 + $0x1518] sm:$0xff]
    %v1426 = vld [vmem:[%s1 + $0x1520] sm:$0xff]
    %v1427 = vld [vmem:[%s1 + $0x1528] sm:$0xff]
    %v1428 = vld [vmem:[%s1 + $0x1530] sm:$0xff]
    %v1429 = vld [vmem:[%s1 + $0x1538] sm:$0xff]
    %v1430 = vld [vmem:[%s1 + $0x1540] sm:$0xff]
    %v1431 = vld [vmem:[%s1 + $0x1548] sm:$0xff]
    %v1432 = vld [vmem:[%s1 + $0x1550] sm:$0xff]
    %v1433 = vld [vmem:[%s1 + $0x1558] sm:$0xff]
    %v1434 = vld [vmem:[%s1 + $0x1560] sm:$0xff]
    %v1435 = vld [vmem:[%s1 + $0x1568] sm:$0xff]
    %v1436 = vld [vmem:[%s1 + $0x1570] sm:$0xff]
    %v1437 = vld [vmem:[%s1 + $0x1578] sm:$0xff]
    %v1438 = vld [vmem:[%s1 + $0x1580] sm:$0xff]
    %v1439 = vld [vmem:[%s1 + $0x1588] sm:$0xff]
    %v1440 = vld [vmem:[%s1 + $0x1590] sm:$0xff]
    %v1441 = vld [vmem:[%s1 + $0x1598] sm:$0xff]
    %v1442 = vld [vmem:[%s1 + $0x15a0] sm:$0xff]
    %v1443 = vld [vmem:[%s1 + $0x15a8] sm:$0xff]
    %v1444 = vld [vmem:[%s1 + $0x15b0] sm:$0xff]
    %v1445 = vld [vmem:[%s1 + $0x15b8] sm:$0xff]
    %v1446 = vld [vmem:[%s1 + $0x15c0] sm:$0xff]
    %v1447 = vld [vmem:[%s1 + $0x15c8] sm:$0xff]
    %v1448 = vld [vmem:[%s1 + $0x15d0] sm:$0xff]
    %v1449 = vld [vmem:[%s1 + $0x15d8] sm:$0xff]
    %v1450 = vld [vmem:[%s1 + $0x15e0] sm:$0xff]
    %v1451 = vld [vmem:[%s1 + $0x15e8] sm:$0xff]
    %v1452 = vld [vmem:[%s1 + $0x15f0] sm:$0xff]
    %v1453 = vld [vmem:[%s1 + $0x15f8] sm:$0xff]
    %v1454 = vld [vmem:[%s1 + $0x1600] sm:$0xff]
    %v1455 = vld [vmem:[%s1 + $0x1608] sm:$0xff]
    %v1456 = vld [vmem:[%s1 + $0x1610] sm:$0xff]
    %v1457 = vld [vmem:[%s1 + $0x1618] sm:$0xff]
    %v1458 = vld [vmem:[%s1 + $0x1620] sm:$0xff]
    %v1459 = vld [vmem:[%s1 + $0x1628] sm:$0xff]
    %v1460 = vld [vmem:[%s1 + $0x1630] sm:$0xff]
    %v1461 = vld [vmem:[%s1 + $0x1638] sm:$0xff]
    %v1462 = vld [vmem:[%s1 + $0x1640] sm:$0xff]
    %v1463 = vld [vmem:[%s1 + $0x1648] sm:$0xff]
    %v1464 = vld [vmem:[%s1 + $0x1650] sm:$0xff]
    %v1465 = vld [vmem:[%s1 + $0x1658] sm:$0xff]
    %v1466 = vld [vmem:[%s1 + $0x1660] sm:$0xff]
    %v1467 = vld [vmem:[%s1 + $0x1668] sm:$0xff]
    %v1468 = vld [vmem:[%s1 + $0x1670] sm:$0xff]
    %v1469 = vld [vmem:[%s1 + $0x1678] sm:$0xff]
    %v1470 = vld [vmem:[%s1 + $0x1680] sm:$0xff]
    %v1471 = vld [vmem:[%s1 + $0x1688] sm:$0xff]
    %v1472 = vld [vmem:[%s1 + $0x1690] sm:$0xff]
    %v1473 = vld [vmem:[%s1 + $0x1698] sm:$0xff]
    %v1474 = vld [vmem:[%s1 + $0x16a0] sm:$0xff]
    %v1475 = vld [vmem:[%s1 + $0x16a8] sm:$0xff]
    %v1476 = vld [vmem:[%s1 + $0x16b0] sm:$0xff]
    %v1477 = vld [vmem:[%s1 + $0x16b8] sm:$0xff]
    %v1478 = vld [vmem:[%s1 + $0x16c0] sm:$0xff]
    %v1479 = vld [vmem:[%s1 + $0x16c8] sm:$0xff]
    %v1480 = vld [vmem:[%s1 + $0x16d0] sm:$0xff]
    %v1481 = vld [vmem:[%s1 + $0x16d8] sm:$0xff]
    %v1482 = vld [vmem:[%s1 + $0x16e0] sm:$0xff]
    %v1483 = vld [vmem:[%s1 + $0x16e8] sm:$0xff]
    %v1484 = vld [vmem:[%s1 + $0x16f0] sm:$0xff]
    %v1485 = vld [vmem:[%s1 + $0x16f8] sm:$0xff]
    %v1486 = vld [vmem:[%s1 + $0x1700] sm:$0xff]
    %v1487 = vld [vmem:[%s1 + $0x1708] sm:$0xff]
    %v1488 = vld [vmem:[%s1 + $0x1710] sm:$0xff]
    %v1489 = vld [vmem:[%s1 + $0x1718] sm:$0xff]
    %v1490 = vld [vmem:[%s1 + $0x1720] sm:$0xff]
    %v1491 = vld [vmem:[%s1 + $0x1728] sm:$0xff]
    %v1492 = vld [vmem:[%s1 + $0x1730] sm:$0xff]
    %v1493 = vld [vmem:[%s1 + $0x1738] sm:$0xff]
    %v1494 = vld [vmem:[%s1 + $0x1740] sm:$0xff]
    %v1495 = vld [vmem:[%s1 + $0x1748] sm:$0xff]
    %v1496 = vld [vmem:[%s1 + $0x1750] sm:$0xff]
    %v1497 = vld [vmem:[%s1 + $0x1758] sm:$0xff]
    %v1498 = vld [vmem:[%s1 + $0x1760] sm:$0xff]
    %v1499 = vld [vmem:[%s1 + $0x1768] sm:$0xff]
    %v1500 = vld [vmem:[%s1 + $0x1770] sm:$0xff]
    %v1501 = vld [vmem:[%s1 + $0x1778] sm:$0xff]
    %v1502 = vld [vmem:[%s1 + $0x1780] sm:$0xff]
    %v1503 = vld [vmem:[%s1 + $0x1788] sm:$0xff]
    %v1504 = vld [vmem:[%s1 + $0x1790] sm:$0xff]
    %v1505 = vld [vmem:[%s1 + $0x1798] sm:$0xff]
    %v1506 = vld [vmem:[%s1 + $0x17a0] sm:$0xff]
    %v1507 = vld [vmem:[%s1 + $0x17a8] sm:$0xff]
    %v1508 = vld [vmem:[%s1 + $0x17b0] sm:$0xff]
    %v1509 = vld [vmem:[%s1 + $0x17b8] sm:$0xff]
    %v1510 = vld [vmem:[%s1 + $0x17c0] sm:$0xff]
    %v1511 = vld [vmem:[%s1 + $0x17c8] sm:$0xff]
    %v1512 = vld [vmem:[%s1 + $0x17d0] sm:$0xff]
    %v1513 = vld [vmem:[%s1 + $0x17d8] sm:$0xff]
    %v1514 = vld [vmem:[%s1 + $0x17e0] sm:$0xff]
    %v1515 = vld [vmem:[%s1 + $0x17e8] sm:$0xff]
    %v1516 = vld [vmem:[%s1 + $0x17f0] sm:$0xff]
    %v1517 = vld [vmem:[%s1 + $0x17f8] sm:$0xff]
    %v1518 = vld [vmem:[%s1 + $0x1800] sm:$0xff]
    %v1519 = vld [vmem:[%s1 + $0x1808] sm:$0xff]
    %v1520 = vld [vmem:[%s1 + $0x1810] sm:$0xff]
    %v1521 = vld [vmem:[%s1 + $0x1818] sm:$0xff]
    %v1522 = vld [vmem:[%s1 + $0x1820] sm:$0xff]
    %v1523 = vld [vmem:[%s1 + $0x1828] sm:$0xff]
    %v1524 = vld [vmem:[%s1 + $0x1830] sm:$0xff]
    %v1525 = vld [vmem:[%s1 + $0x1838] sm:$0xff]
    %v1526 = vld [vmem:[%s1 + $0x1840] sm:$0xff]
    %v1527 = vld [vmem:[%s1 + $0x1848] sm:$0xff]
    %v1528 = vld [vmem:[%s1 + $0x1850] sm:$0xff]
    %v1529 = vld [vmem:[%s1 + $0x1858] sm:$0xff]
    %v1530 = vld [vmem:[%s1 + $0x1860] sm:$0xff]
    %v1531 = vld [vmem:[%s1 + $0x1868] sm:$0xff]
    %v1532 = vld [vmem:[%s1 + $0x1870] sm:$0xff]
    %v1533 = vld [vmem:[%s1 + $0x1878] sm:$0xff]
    %v1534 = vld [vmem:[%s1 + $0x1880] sm:$0xff]
    %v1535 = vld [vmem:[%s1 + $0x1888] sm:$0xff]
    %v1536 = vld [vmem:[%s1 + $0x1890] sm:$0xff]
    %v1537 = vld [vmem:[%s1 + $0x1898] sm:$0xff]
    %v1538 = vld [vmem:[%s1 + $0x18a0] sm:$0xff]
    %v1539 = vld [vmem:[%s1 + $0x18a8] sm:$0xff]
    %v1540 = vld [vmem:[%s1 + $0x18b0] sm:$0xff]
    %v1541 = vld [vmem:[%s1 + $0x18b8] sm:$0xff]
    %v1542 = vld [vmem:[%s1 + $0x18c0] sm:$0xff]
    %v1543 = vld [vmem:[%s1 + $0x18c8] sm:$0xff]
    %v1544 = vld [vmem:[%s1 + $0x18d0] sm:$0xff]
    %v1545 = vld [vmem:[%s1 + $0x18d8] sm:$0xff]
    %v1546 = vld [vmem:[%s1 + $0x18e0] sm:$0xff]
    %v1547 = vld [vmem:[%s1 + $0x18e8] sm:$0xff]
    %v1548 = vld [vmem:[%s1 + $0x18f0] sm:$0xff]
    %v1549 = vld [vmem:[%s1 + $0x18f8] sm:$0xff]
    %v1550 = vld [vmem:[%s1 + $0x1900] sm:$0xff]
    %v1551 = vld [vmem:[%s1 + $0x1908] sm:$0xff]
    %v1552 = vld [vmem:[%s1 + $0x1910] sm:$0xff]
    %v1553 = vld [vmem:[%s1 + $0x1918] sm:$0xff]
    %v1554 = vld [vmem:[%s1 + $0x1920] sm:$0xff]
    %v1555 = vld [vmem:[%s1 + $0x1928] sm:$0xff]
    %v1556 = vld [vmem:[%s1 + $0x1930] sm:$0xff]
    %v1557 = vld [vmem:[%s1 + $0x1938] sm:$0xff]
    %v1558 = vld [vmem:[%s1 + $0x1940] sm:$0xff]
    %v1559 = vld [vmem:[%s1 + $0x1948] sm:$0xff]
    %v1560 = vld [vmem:[%s1 + $0x1950] sm:$0xff]
    %v1561 = vld [vmem:[%s1 + $0x1958] sm:$0xff]
    %v1562 = vld [vmem:[%s1 + $0x1960] sm:$0xff]
    %v1563 = vld [vmem:[%s1 + $0x1968] sm:$0xff]
    %v1564 = vld [vmem:[%s1 + $0x1970] sm:$0xff]
    %v1565 = vld [vmem:[%s1 + $0x1978] sm:$0xff]
    %v1566 = vld [vmem:[%s1 + $0x1980] sm:$0xff]
    %v1567 = vld [vmem:[%s1 + $0x1988] sm:$0xff]
    %v1568 = vld [vmem:[%s1 + $0x1990] sm:$0xff]
    %v1569 = vld [vmem:[%s1 + $0x1998] sm:$0xff]
    %v1570 = vld [vmem:[%s1 + $0x19a0] sm:$0xff]
    %v1571 = vld [vmem:[%s1 + $0x19a8] sm:$0xff]
    %v1572 = vld [vmem:[%s1 + $0x19b0] sm:$0xff]
    %v1573 = vld [vmem:[%s1 + $0x19b8] sm:$0xff]
    %v1574 = vld [vmem:[%s1 + $0x19c0] sm:$0xff]
    %v1575 = vld [vmem:[%s1 + $0x19c8] sm:$0xff]
    %v1576 = vld [vmem:[%s1 + $0x19d0] sm:$0xff]
    %v1577 = vld [vmem:[%s1 + $0x19d8] sm:$0xff]
    %v1578 = vld [vmem:[%s1 + $0x19e0] sm:$0xff]
    %v1579 = vld [vmem:[%s1 + $0x19e8] sm:$0xff]
    %v1580 = vld [vmem:[%s1 + $0x19f0] sm:$0xff]
    %v1581 = vld [vmem:[%s1 + $0x19f8] sm:$0xff]
    %v1582 = vld [vmem:[%s1 + $0x1a00] sm:$0xff]
    %v1583 = vld [vmem:[%s1 + $0x1a08] sm:$0xff]
    %v1584 = vld [vmem:[%s1 + $0x1a10] sm:$0xff]
    %v1585 = vld [vmem:[%s1 + $0x1a18] sm:$0xff]
    %v1586 = vld [vmem:[%s1 + $0x1a20] sm:$0xff]
    %v1587 = vld [vmem:[%s1 + $0x1a28] sm:$0xff]
    %v1588 = vld [vmem:[%s1 + $0x1a30] sm:$0xff]
    %v1589 = vld [vmem:[%s1 + $0x1a38] sm:$0xff]
    %v1590 = vunpack.c.l.s8.bf16 %v750
    %v1591 = vunpack.c.l.s8.bf16 %v751
    %v1592 = vunpack.c.h.s8.bf16 %v750
    %v1593 = vunpack.c.h.s8.bf16 %v751
    %v1594 = vunpack.c.l.s8.bf16 %v752
    %v1595 = vunpack.c.l.s8.bf16 %v753
    %v1596 = vunpack.c.h.s8.bf16 %v752
    %v1597 = vunpack.c.h.s8.bf16 %v753
    %v1598 = vunpack.c.l.s8.bf16 %v754
    %v1599 = vunpack.c.l.s8.bf16 %v755
    %v1600 = vunpack.c.h.s8.bf16 %v754
    %v1601 = vunpack.c.h.s8.bf16 %v755
    %v1602 = vunpack.c.l.s8.bf16 %v756
    %v1603 = vunpack.c.l.s8.bf16 %v757
    %v1604 = vunpack.c.h.s8.bf16 %v756
    %v1605 = vunpack.c.h.s8.bf16 %v757
    %v1606 = vunpack.c.l.s8.bf16 %v758
    %v1607 = vunpack.c.l.s8.bf16 %v759
    %v1608 = vunpack.c.h.s8.bf16 %v758
    %v1609 = vunpack.c.h.s8.bf16 %v759
    %v1610 = vunpack.c.l.s8.bf16 %v760
    %v1611 = vunpack.c.l.s8.bf16 %v761
    %v1612 = vunpack.c.h.s8.bf16 %v760
    %v1613 = vunpack.c.h.s8.bf16 %v761
    %v1614 = vunpack.c.l.s8.bf16 %v762
    %v1615 = vunpack.c.l.s8.bf16 %v763
    %v1616 = vunpack.c.h.s8.bf16 %v762
    %v1617 = vunpack.c.h.s8.bf16 %v763
    %v1618 = vunpack.c.l.s8.bf16 %v764
    %v1619 = vunpack.c.l.s8.bf16 %v765
    %v1620 = vunpack.c.h.s8.bf16 %v764
    %v1621 = vunpack.c.h.s8.bf16 %v765
    %v1622 = vunpack.c.l.s8.bf16 %v766
    %v1623 = vunpack.c.l.s8.bf16 %v767
    %v1624 = vunpack.c.h.s8.bf16 %v766
    %v1625 = vunpack.c.h.s8.bf16 %v767
    %v1626 = vunpack.c.l.s8.bf16 %v768
    %v1627 = vunpack.c.l.s8.bf16 %v769
    %v1628 = vunpack.c.h.s8.bf16 %v768
    %v1629 = vunpack.c.h.s8.bf16 %v769
    %v1630 = vunpack.c.l.s8.bf16 %v770
    %v1631 = vunpack.c.l.s8.bf16 %v771
    %v1632 = vunpack.c.h.s8.bf16 %v770
    %v1633 = vunpack.c.h.s8.bf16 %v771
    %v1634 = vunpack.c.l.s8.bf16 %v772
    %v1635 = vunpack.c.l.s8.bf16 %v773
    %v1636 = vunpack.c.h.s8.bf16 %v772
    %v1637 = vunpack.c.h.s8.bf16 %v773
    %v1638 = vunpack.c.l.s8.bf16 %v774
    %v1639 = vunpack.c.l.s8.bf16 %v775
    %v1640 = vunpack.c.h.s8.bf16 %v774
    %v1641 = vunpack.c.h.s8.bf16 %v775
    %v1642 = vunpack.c.l.s8.bf16 %v776
    %v1643 = vunpack.c.l.s8.bf16 %v777
    %v1644 = vunpack.c.h.s8.bf16 %v776
    %v1645 = vunpack.c.h.s8.bf16 %v777
    %v1646 = vunpack.c.l.s8.bf16 %v778
    %v1647 = vunpack.c.l.s8.bf16 %v779
    %v1648 = vunpack.c.h.s8.bf16 %v778
    %v1649 = vunpack.c.h.s8.bf16 %v779
    %v1650 = vunpack.c.l.s8.bf16 %v780
    %v1651 = vunpack.c.l.s8.bf16 %v781
    %v1652 = vunpack.c.h.s8.bf16 %v780
    %v1653 = vunpack.c.h.s8.bf16 %v781
    %v1654 = vunpack.c.l.s8.bf16 %v782
    %v1655 = vunpack.c.l.s8.bf16 %v783
    %v1656 = vunpack.c.h.s8.bf16 %v782
    %v1657 = vunpack.c.h.s8.bf16 %v783
    %v1658 = vunpack.c.l.s8.bf16 %v784
    %v1659 = vunpack.c.l.s8.bf16 %v785
    %v1660 = vunpack.c.h.s8.bf16 %v784
    %v1661 = vunpack.c.h.s8.bf16 %v785
    %v1662 = vunpack.c.l.s8.bf16 %v786
    %v1663 = vunpack.c.l.s8.bf16 %v787
    %v1664 = vunpack.c.h.s8.bf16 %v786
    %v1665 = vunpack.c.h.s8.bf16 %v787
    %v1666 = vunpack.c.l.s8.bf16 %v788
    %v1667 = vunpack.c.l.s8.bf16 %v789
    %v1668 = vunpack.c.h.s8.bf16 %v788
    %v1669 = vunpack.c.h.s8.bf16 %v789
    %v1670 = vunpack.c.l.s8.bf16 %v790
    %v1671 = vunpack.c.l.s8.bf16 %v791
    %v1672 = vunpack.c.h.s8.bf16 %v790
    %v1673 = vunpack.c.h.s8.bf16 %v791
    %v1674 = vunpack.c.l.s8.bf16 %v792
    %v1675 = vunpack.c.l.s8.bf16 %v793
    %v1676 = vunpack.c.h.s8.bf16 %v792
    %v1677 = vunpack.c.h.s8.bf16 %v793
    %v1678 = vunpack.c.l.s8.bf16 %v794
    %v1679 = vunpack.c.l.s8.bf16 %v795
    %v1680 = vunpack.c.h.s8.bf16 %v794
    %v1681 = vunpack.c.h.s8.bf16 %v795
    %v1682 = vunpack.c.l.s8.bf16 %v796
    %v1683 = vunpack.c.l.s8.bf16 %v797
    %v1684 = vunpack.c.h.s8.bf16 %v796
    %v1685 = vunpack.c.h.s8.bf16 %v797
    %v1686 = vunpack.c.l.s8.bf16 %v798
    %v1687 = vunpack.c.l.s8.bf16 %v799
    %v1688 = vunpack.c.h.s8.bf16 %v798
    %v1689 = vunpack.c.h.s8.bf16 %v799
    %v1690 = vunpack.c.l.s8.bf16 %v800
    %v1691 = vunpack.c.l.s8.bf16 %v801
    %v1692 = vunpack.c.h.s8.bf16 %v800
    %v1693 = vunpack.c.h.s8.bf16 %v801
    %v1694 = vunpack.c.l.s8.bf16 %v802
    %v1695 = vunpack.c.l.s8.bf16 %v803
    %v1696 = vunpack.c.h.s8.bf16 %v802
    %v1697 = vunpack.c.h.s8.bf16 %v803
    %v1698 = vunpack.c.l.s8.bf16 %v804
    %v1699 = vunpack.c.l.s8.bf16 %v805
    %v1700 = vunpack.c.h.s8.bf16 %v804
    %v1701 = vunpack.c.h.s8.bf16 %v805
    %v1702 = vunpack.c.l.s8.bf16 %v806
    %v1703 = vunpack.c.l.s8.bf16 %v807
    %v1704 = vunpack.c.h.s8.bf16 %v806
    %v1705 = vunpack.c.h.s8.bf16 %v807
    %v1706 = vunpack.c.l.s8.bf16 %v808
    %v1707 = vunpack.c.l.s8.bf16 %v809
    %v1708 = vunpack.c.h.s8.bf16 %v808
    %v1709 = vunpack.c.h.s8.bf16 %v809
    %v1710 = vunpack.c.l.s8.bf16 %v810
    %v1711 = vunpack.c.l.s8.bf16 %v811
    %v1712 = vunpack.c.h.s8.bf16 %v810
    %v1713 = vunpack.c.h.s8.bf16 %v811
    %v1714 = vunpack.c.l.s8.bf16 %v812
    %v1715 = vunpack.c.l.s8.bf16 %v813
    %v1716 = vunpack.c.h.s8.bf16 %v812
    %v1717 = vunpack.c.h.s8.bf16 %v813
    %v1718 = vunpack.c.l.s8.bf16 %v814
    %v1719 = vunpack.c.l.s8.bf16 %v815
    %v1720 = vunpack.c.h.s8.bf16 %v814
    %v1721 = vunpack.c.h.s8.bf16 %v815
    %v1722 = vunpack.c.l.s8.bf16 %v816
    %v1723 = vunpack.c.l.s8.bf16 %v817
    %v1724 = vunpack.c.h.s8.bf16 %v816
    %v1725 = vunpack.c.h.s8.bf16 %v817
    %v1726 = vunpack.c.l.s8.bf16 %v818
    %v1727 = vunpack.c.l.s8.bf16 %v819
    %v1728 = vunpack.c.h.s8.bf16 %v818
    %v1729 = vunpack.c.h.s8.bf16 %v819
    %v1730 = vunpack.c.l.s8.bf16 %v820
    %v1731 = vunpack.c.l.s8.bf16 %v821
    %v1732 = vunpack.c.h.s8.bf16 %v820
    %v1733 = vunpack.c.h.s8.bf16 %v821
    %v1734 = vunpack.c.l.s8.bf16 %v822
    %v1735 = vunpack.c.l.s8.bf16 %v823
    %v1736 = vunpack.c.h.s8.bf16 %v822
    %v1737 = vunpack.c.h.s8.bf16 %v823
    %v1738 = vunpack.c.l.s8.bf16 %v824
    %v1739 = vunpack.c.l.s8.bf16 %v825
    %v1740 = vunpack.c.h.s8.bf16 %v824
    %v1741 = vunpack.c.h.s8.bf16 %v825
    %v1742 = vunpack.c.l.s8.bf16 %v826
    %v1743 = vunpack.c.l.s8.bf16 %v827
    %v1744 = vunpack.c.h.s8.bf16 %v826
    %v1745 = vunpack.c.h.s8.bf16 %v827
    %v1746 = vunpack.c.l.s8.bf16 %v828
    %v1747 = vunpack.c.l.s8.bf16 %v829
    %v1748 = vunpack.c.h.s8.bf16 %v828
    %v1749 = vunpack.c.h.s8.bf16 %v829
    %v1750 = vunpack.c.l.s8.bf16 %v830
    %v1751 = vunpack.c.l.s8.bf16 %v831
    %v1752 = vunpack.c.h.s8.bf16 %v830
    %v1753 = vunpack.c.h.s8.bf16 %v831
    %v1754 = vunpack.c.l.s8.bf16 %v832
    %v1755 = vunpack.c.l.s8.bf16 %v833
    %v1756 = vunpack.c.h.s8.bf16 %v832
    %v1757 = vunpack.c.h.s8.bf16 %v833
    %v1758 = vunpack.c.l.s8.bf16 %v834
    %v1759 = vunpack.c.l.s8.bf16 %v835
    %v1760 = vunpack.c.h.s8.bf16 %v834
    %v1761 = vunpack.c.h.s8.bf16 %v835
    %v1762 = vunpack.c.l.s8.bf16 %v836
    %v1763 = vunpack.c.l.s8.bf16 %v837
    %v1764 = vunpack.c.h.s8.bf16 %v836
    %v1765 = vunpack.c.h.s8.bf16 %v837
    %v1766 = vunpack.c.l.s8.bf16 %v838
    %v1767 = vunpack.c.l.s8.bf16 %v839
    %v1768 = vunpack.c.h.s8.bf16 %v838
    %v1769 = vunpack.c.h.s8.bf16 %v839
    %v1770 = vunpack.c.l.s8.bf16 %v840
    %v1771 = vunpack.c.l.s8.bf16 %v841
    %v1772 = vunpack.c.h.s8.bf16 %v840
    %v1773 = vunpack.c.h.s8.bf16 %v841
    %v1774 = vunpack.c.l.s8.bf16 %v842
    %v1775 = vunpack.c.l.s8.bf16 %v843
    %v1776 = vunpack.c.h.s8.bf16 %v842
    %v1777 = vunpack.c.h.s8.bf16 %v843
    %v1778 = vunpack.c.l.s8.bf16 %v844
    %v1779 = vunpack.c.l.s8.bf16 %v845
    %v1780 = vunpack.c.h.s8.bf16 %v844
    %v1781 = vunpack.c.h.s8.bf16 %v845
    %v1782 = vunpack.c.l.s8.bf16 %v846
    %v1783 = vunpack.c.l.s8.bf16 %v847
    %v1784 = vunpack.c.h.s8.bf16 %v846
    %v1785 = vunpack.c.h.s8.bf16 %v847
    %v1786 = vunpack.c.l.s8.bf16 %v848
    %v1787 = vunpack.c.l.s8.bf16 %v849
    %v1788 = vunpack.c.h.s8.bf16 %v848
    %v1789 = vunpack.c.h.s8.bf16 %v849
    %v1790 = vunpack.c.l.s8.bf16 %v850
    %v1791 = vunpack.c.l.s8.bf16 %v851
    %v1792 = vunpack.c.h.s8.bf16 %v850
    %v1793 = vunpack.c.h.s8.bf16 %v851
    %v1794 = vunpack.c.l.s8.bf16 %v852
    %v1795 = vunpack.c.l.s8.bf16 %v853
    %v1796 = vunpack.c.h.s8.bf16 %v852
    %v1797 = vunpack.c.h.s8.bf16 %v853
    %v1798 = vunpack.c.l.s8.bf16 %v854
    %v1799 = vunpack.c.l.s8.bf16 %v855
    %v1800 = vunpack.c.h.s8.bf16 %v854
    %v1801 = vunpack.c.h.s8.bf16 %v855
    %v1802 = vunpack.c.l.s8.bf16 %v856
    %v1803 = vunpack.c.l.s8.bf16 %v857
    %v1804 = vunpack.c.h.s8.bf16 %v856
    %v1805 = vunpack.c.h.s8.bf16 %v857
    %v1806 = vunpack.c.l.s8.bf16 %v858
    %v1807 = vunpack.c.l.s8.bf16 %v859
    %v1808 = vunpack.c.h.s8.bf16 %v858
    %v1809 = vunpack.c.h.s8.bf16 %v859
    %v1810 = vunpack.c.l.s8.bf16 %v860
    %v1811 = vunpack.c.l.s8.bf16 %v861
    %v1812 = vunpack.c.h.s8.bf16 %v860
    %v1813 = vunpack.c.h.s8.bf16 %v861
    %v1814 = vunpack.c.l.s8.bf16 %v862
    %v1815 = vunpack.c.l.s8.bf16 %v863
    %v1816 = vunpack.c.h.s8.bf16 %v862
    %v1817 = vunpack.c.h.s8.bf16 %v863
    %v1818 = vunpack.c.l.s8.bf16 %v864
    %v1819 = vunpack.c.l.s8.bf16 %v865
    %v1820 = vunpack.c.h.s8.bf16 %v864
    %v1821 = vunpack.c.h.s8.bf16 %v865
    %v1822 = vunpack.c.l.s8.bf16 %v866
    %v1823 = vunpack.c.l.s8.bf16 %v867
    %v1824 = vunpack.c.h.s8.bf16 %v866
    %v1825 = vunpack.c.h.s8.bf16 %v867
    %v1826 = vunpack.c.l.s8.bf16 %v868
    %v1827 = vunpack.c.l.s8.bf16 %v869
    %v1828 = vunpack.c.h.s8.bf16 %v868
    %v1829 = vunpack.c.h.s8.bf16 %v869
    %v1830 = vunpack.c.l.s8.bf16 %v870
    %v1831 = vunpack.c.l.s8.bf16 %v871
    %v1832 = vunpack.c.h.s8.bf16 %v870
    %v1833 = vunpack.c.h.s8.bf16 %v871
    %v1834 = vunpack.c.l.s8.bf16 %v872
    %v1835 = vunpack.c.l.s8.bf16 %v873
    %v1836 = vunpack.c.h.s8.bf16 %v872
    %v1837 = vunpack.c.h.s8.bf16 %v873
    %v1838 = vunpack.c.l.s8.bf16 %v874
    %v1839 = vunpack.c.l.s8.bf16 %v875
    %v1840 = vunpack.c.h.s8.bf16 %v874
    %v1841 = vunpack.c.h.s8.bf16 %v875
    %v1842 = vunpack.c.l.s8.bf16 %v876
    %v1843 = vunpack.c.l.s8.bf16 %v877
    %v1844 = vunpack.c.h.s8.bf16 %v876
    %v1845 = vunpack.c.h.s8.bf16 %v877
    %v1846 = vunpack.c.l.s8.bf16 %v878
    %v1847 = vunpack.c.l.s8.bf16 %v879
    %v1848 = vunpack.c.h.s8.bf16 %v878
    %v1849 = vunpack.c.h.s8.bf16 %v879
    %v1850 = vunpack.c.l.s8.bf16 %v880
    %v1851 = vunpack.c.l.s8.bf16 %v881
    %v1852 = vunpack.c.h.s8.bf16 %v880
    %v1853 = vunpack.c.h.s8.bf16 %v881
    %v1854 = vunpack.c.l.s8.bf16 %v882
    %v1855 = vunpack.c.l.s8.bf16 %v883
    %v1856 = vunpack.c.h.s8.bf16 %v882
    %v1857 = vunpack.c.h.s8.bf16 %v883
    %v1858 = vunpack.c.l.s8.bf16 %v884
    %v1859 = vunpack.c.l.s8.bf16 %v885
    %v1860 = vunpack.c.h.s8.bf16 %v884
    %v1861 = vunpack.c.h.s8.bf16 %v885
    %v1862 = vunpack.c.l.s8.bf16 %v886
    %v1863 = vunpack.c.l.s8.bf16 %v887
    %v1864 = vunpack.c.h.s8.bf16 %v886
    %v1865 = vunpack.c.h.s8.bf16 %v887
    %v1866 = vunpack.c.l.s8.bf16 %v888
    %v1867 = vunpack.c.l.s8.bf16 %v889
    %v1868 = vunpack.c.h.s8.bf16 %v888
    %v1869 = vunpack.c.h.s8.bf16 %v889
    %v1870 = vunpack.c.l.s8.bf16 %v890
    %v1871 = vunpack.c.l.s8.bf16 %v891
    %v1872 = vunpack.c.h.s8.bf16 %v890
    %v1873 = vunpack.c.h.s8.bf16 %v891
    %v1874 = vunpack.c.l.s8.bf16 %v892
    %v1875 = vunpack.c.l.s8.bf16 %v893
    %v1876 = vunpack.c.h.s8.bf16 %v892
    %v1877 = vunpack.c.h.s8.bf16 %v893
    %v1878 = vunpack.c.l.s8.bf16 %v894
    %v1879 = vunpack.c.l.s8.bf16 %v895
    %v1880 = vunpack.c.h.s8.bf16 %v894
    %v1881 = vunpack.c.h.s8.bf16 %v895
    %v1882 = vunpack.c.l.s8.bf16 %v896
    %v1883 = vunpack.c.l.s8.bf16 %v897
    %v1884 = vunpack.c.h.s8.bf16 %v896
    %v1885 = vunpack.c.h.s8.bf16 %v897
    %v1886 = vunpack.c.l.s8.bf16 %v898
    %v1887 = vunpack.c.l.s8.bf16 %v899
    %v1888 = vunpack.c.h.s8.bf16 %v898
    %v1889 = vunpack.c.h.s8.bf16 %v899
    %v1890 = vunpack.c.l.s8.bf16 %v900
    %v1891 = vunpack.c.l.s8.bf16 %v901
    %v1892 = vunpack.c.h.s8.bf16 %v900
    %v1893 = vunpack.c.h.s8.bf16 %v901
    %v1894 = vunpack.c.l.s8.bf16 %v902
    %v1895 = vunpack.c.l.s8.bf16 %v903
    %v1896 = vunpack.c.h.s8.bf16 %v902
    %v1897 = vunpack.c.h.s8.bf16 %v903
    %v1898 = vunpack.c.l.s8.bf16 %v904
    %v1899 = vunpack.c.l.s8.bf16 %v905
    %v1900 = vunpack.c.h.s8.bf16 %v904
    %v1901 = vunpack.c.h.s8.bf16 %v905
    %v1902 = vunpack.c.l.s8.bf16 %v906
    %v1903 = vunpack.c.l.s8.bf16 %v907
    %v1904 = vunpack.c.h.s8.bf16 %v906
    %v1905 = vunpack.c.h.s8.bf16 %v907
    %v1906 = vunpack.c.l.s8.bf16 %v908
    %v1907 = vunpack.c.l.s8.bf16 %v909
    %v1908 = vunpack.c.h.s8.bf16 %v908
    %v1909 = vunpack.c.h.s8.bf16 %v909
    %v1910 = vunpack.c.l.s8.bf16 %v910
    %v1911 = vunpack.c.l.s8.bf16 %v911
    %v1912 = vunpack.c.h.s8.bf16 %v910
    %v1913 = vunpack.c.h.s8.bf16 %v911
    %v1914 = vunpack.c.l.s8.bf16 %v912
    %v1915 = vunpack.c.l.s8.bf16 %v913
    %v1916 = vunpack.c.h.s8.bf16 %v912
    %v1917 = vunpack.c.h.s8.bf16 %v913
    %v1918 = vunpack.c.l.s8.bf16 %v914
    %v1919 = vunpack.c.l.s8.bf16 %v915
    %v1920 = vunpack.c.h.s8.bf16 %v914
    %v1921 = vunpack.c.h.s8.bf16 %v915
    %v1922 = vunpack.c.l.s8.bf16 %v916
    %v1923 = vunpack.c.l.s8.bf16 %v917
    %v1924 = vunpack.c.h.s8.bf16 %v916
    %v1925 = vunpack.c.h.s8.bf16 %v917
    %v1926 = vunpack.c.l.s8.bf16 %v918
    %v1927 = vunpack.c.l.s8.bf16 %v919
    %v1928 = vunpack.c.h.s8.bf16 %v918
    %v1929 = vunpack.c.h.s8.bf16 %v919
    %v1930 = vunpack.c.l.s8.bf16 %v920
    %v1931 = vunpack.c.l.s8.bf16 %v921
    %v1932 = vunpack.c.h.s8.bf16 %v920
    %v1933 = vunpack.c.h.s8.bf16 %v921
    %v1934 = vunpack.c.l.s8.bf16 %v922
    %v1935 = vunpack.c.l.s8.bf16 %v923
    %v1936 = vunpack.c.h.s8.bf16 %v922
    %v1937 = vunpack.c.h.s8.bf16 %v923
    %v1938 = vunpack.c.l.s8.bf16 %v924
    %v1939 = vunpack.c.l.s8.bf16 %v925
    %v1940 = vunpack.c.h.s8.bf16 %v924
    %v1941 = vunpack.c.h.s8.bf16 %v925
    %v1942 = vunpack.c.l.s8.bf16 %v926
    %v1943 = vunpack.c.l.s8.bf16 %v927
    %v1944 = vunpack.c.h.s8.bf16 %v926
    %v1945 = vunpack.c.h.s8.bf16 %v927
    %v1946 = vunpack.c.l.s8.bf16 %v928
    %v1947 = vunpack.c.l.s8.bf16 %v929
    %v1948 = vunpack.c.h.s8.bf16 %v928
    %v1949 = vunpack.c.h.s8.bf16 %v929
    %v1950 = vunpack.c.l.s8.bf16 %v930
    %v1951 = vunpack.c.l.s8.bf16 %v931
    %v1952 = vunpack.c.h.s8.bf16 %v930
    %v1953 = vunpack.c.h.s8.bf16 %v931
    %v1954 = vunpack.c.l.s8.bf16 %v932
    %v1955 = vunpack.c.l.s8.bf16 %v933
    %v1956 = vunpack.c.h.s8.bf16 %v932
    %v1957 = vunpack.c.h.s8.bf16 %v933
    %v1958 = vunpack.c.l.s8.bf16 %v934
    %v1959 = vunpack.c.l.s8.bf16 %v935
    %v1960 = vunpack.c.h.s8.bf16 %v934
    %v1961 = vunpack.c.h.s8.bf16 %v935
    %v1962 = vunpack.c.l.s8.bf16 %v936
    %v1963 = vunpack.c.l.s8.bf16 %v937
    %v1964 = vunpack.c.h.s8.bf16 %v936
    %v1965 = vunpack.c.h.s8.bf16 %v937
    %v1966 = vunpack.c.l.s8.bf16 %v938
    %v1967 = vunpack.c.l.s8.bf16 %v939
    %v1968 = vunpack.c.h.s8.bf16 %v938
    %v1969 = vunpack.c.h.s8.bf16 %v939
    %v1970 = vunpack.c.l.s8.bf16 %v940
    %v1971 = vunpack.c.l.s8.bf16 %v941
    %v1972 = vunpack.c.h.s8.bf16 %v940
    %v1973 = vunpack.c.h.s8.bf16 %v941
    %v1974 = vunpack.c.l.s8.bf16 %v942
    %v1975 = vunpack.c.l.s8.bf16 %v943
    %v1976 = vunpack.c.h.s8.bf16 %v942
    %v1977 = vunpack.c.h.s8.bf16 %v943
    %v1978 = vunpack.c.l.s8.bf16 %v944
    %v1979 = vunpack.c.l.s8.bf16 %v945
    %v1980 = vunpack.c.h.s8.bf16 %v944
    %v1981 = vunpack.c.h.s8.bf16 %v945
    %v1982 = vunpack.c.l.s8.bf16 %v946
    %v1983 = vunpack.c.l.s8.bf16 %v947
    %v1984 = vunpack.c.h.s8.bf16 %v946
    %v1985 = vunpack.c.h.s8.bf16 %v947
    %v1986 = vunpack.c.l.s8.bf16 %v948
    %v1987 = vunpack.c.l.s8.bf16 %v949
    %v1988 = vunpack.c.h.s8.bf16 %v948
    %v1989 = vunpack.c.h.s8.bf16 %v949
    %v1990 = vunpack.c.l.s8.bf16 %v950
    %v1991 = vunpack.c.l.s8.bf16 %v951
    %v1992 = vunpack.c.h.s8.bf16 %v950
    %v1993 = vunpack.c.h.s8.bf16 %v951
    %v1994 = vunpack.c.l.s8.bf16 %v952
    %v1995 = vunpack.c.l.s8.bf16 %v953
    %v1996 = vunpack.c.h.s8.bf16 %v952
    %v1997 = vunpack.c.h.s8.bf16 %v953
    %v1998 = vunpack.c.l.s8.bf16 %v954
    %v1999 = vunpack.c.l.s8.bf16 %v955
    %v2000 = vunpack.c.h.s8.bf16 %v954
    %v2001 = vunpack.c.h.s8.bf16 %v955
    %v2002 = vunpack.c.l.s8.bf16 %v956
    %v2003 = vunpack.c.l.s8.bf16 %v957
    %v2004 = vunpack.c.h.s8.bf16 %v956
    %v2005 = vunpack.c.h.s8.bf16 %v957
    %v2006 = vunpack.c.l.s8.bf16 %v958
    %v2007 = vunpack.c.l.s8.bf16 %v959
    %v2008 = vunpack.c.h.s8.bf16 %v958
    %v2009 = vunpack.c.h.s8.bf16 %v959
    %v2010 = vunpack.c.l.s8.bf16 %v960
    %v2011 = vunpack.c.l.s8.bf16 %v961
    %v2012 = vunpack.c.h.s8.bf16 %v960
    %v2013 = vunpack.c.h.s8.bf16 %v961
    %v2014 = vunpack.c.l.s8.bf16 %v962
    %v2015 = vunpack.c.l.s8.bf16 %v963
    %v2016 = vunpack.c.h.s8.bf16 %v962
    %v2017 = vunpack.c.h.s8.bf16 %v963
    %v2018 = vunpack.c.l.s8.bf16 %v964
    %v2019 = vunpack.c.l.s8.bf16 %v965
    %v2020 = vunpack.c.h.s8.bf16 %v964
    %v2021 = vunpack.c.h.s8.bf16 %v965
    %v2022 = vunpack.c.l.s8.bf16 %v966
    %v2023 = vunpack.c.l.s8.bf16 %v967
    %v2024 = vunpack.c.h.s8.bf16 %v966
    %v2025 = vunpack.c.h.s8.bf16 %v967
    %v2026 = vunpack.c.l.s8.bf16 %v968
    %v2027 = vunpack.c.l.s8.bf16 %v969
    %v2028 = vunpack.c.h.s8.bf16 %v968
    %v2029 = vunpack.c.h.s8.bf16 %v969
    %v2030 = vunpack.c.l.s8.bf16 %v970
    %v2031 = vunpack.c.l.s8.bf16 %v971
    %v2032 = vunpack.c.h.s8.bf16 %v970
    %v2033 = vunpack.c.h.s8.bf16 %v971
    %v2034 = vunpack.c.l.s8.bf16 %v972
    %v2035 = vunpack.c.l.s8.bf16 %v973
    %v2036 = vunpack.c.h.s8.bf16 %v972
    %v2037 = vunpack.c.h.s8.bf16 %v973
    %v2038 = vunpack.c.l.s8.bf16 %v974
    %v2039 = vunpack.c.l.s8.bf16 %v975
    %v2040 = vunpack.c.h.s8.bf16 %v974
    %v2041 = vunpack.c.h.s8.bf16 %v975
    %v2042 = vunpack.c.l.s8.bf16 %v976
    %v2043 = vunpack.c.l.s8.bf16 %v977
    %v2044 = vunpack.c.h.s8.bf16 %v976
    %v2045 = vunpack.c.h.s8.bf16 %v977
    %v2046 = vunpack.c.l.s8.bf16 %v978
    %v2047 = vunpack.c.l.s8.bf16 %v979
    %v2048 = vunpack.c.h.s8.bf16 %v978
    %v2049 = vunpack.c.h.s8.bf16 %v979
    %v2050 = vunpack.c.l.s8.bf16 %v980
    %v2051 = vunpack.c.l.s8.bf16 %v981
    %v2052 = vunpack.c.h.s8.bf16 %v980
    %v2053 = vunpack.c.h.s8.bf16 %v981
    %v2054 = vunpack.c.l.s8.bf16 %v982
    %v2055 = vunpack.c.l.s8.bf16 %v983
    %v2056 = vunpack.c.h.s8.bf16 %v982
    %v2057 = vunpack.c.h.s8.bf16 %v983
    %v2058 = vunpack.c.l.s8.bf16 %v984
    %v2059 = vunpack.c.l.s8.bf16 %v985
    %v2060 = vunpack.c.h.s8.bf16 %v984
    %v2061 = vunpack.c.h.s8.bf16 %v985
    %v2062 = vunpack.c.l.s8.bf16 %v986
    %v2063 = vunpack.c.l.s8.bf16 %v987
    %v2064 = vunpack.c.h.s8.bf16 %v986
    %v2065 = vunpack.c.h.s8.bf16 %v987
    %v2066 = vunpack.c.l.s8.bf16 %v988
    %v2067 = vunpack.c.l.s8.bf16 %v989
    %v2068 = vunpack.c.h.s8.bf16 %v988
    %v2069 = vunpack.c.h.s8.bf16 %v989
    %v2070 = vunpack.c.l.s8.bf16 %v990
    %v2071 = vunpack.c.l.s8.bf16 %v991
    %v2072 = vunpack.c.h.s8.bf16 %v990
    %v2073 = vunpack.c.h.s8.bf16 %v991
    %v2074 = vunpack.c.l.s8.bf16 %v992
    %v2075 = vunpack.c.l.s8.bf16 %v993
    %v2076 = vunpack.c.h.s8.bf16 %v992
    %v2077 = vunpack.c.h.s8.bf16 %v993
    %v2078 = vunpack.c.l.s8.bf16 %v994
    %v2079 = vunpack.c.l.s8.bf16 %v995
    %v2080 = vunpack.c.h.s8.bf16 %v994
    %v2081 = vunpack.c.h.s8.bf16 %v995
    %v2082 = vunpack.c.l.s8.bf16 %v996
    %v2083 = vunpack.c.l.s8.bf16 %v997
    %v2084 = vunpack.c.h.s8.bf16 %v996
    %v2085 = vunpack.c.h.s8.bf16 %v997
    %v2086 = vunpack.c.l.s8.bf16 %v998
    %v2087 = vunpack.c.l.s8.bf16 %v999
    %v2088 = vunpack.c.h.s8.bf16 %v998
    %v2089 = vunpack.c.h.s8.bf16 %v999
    %v2090 = vunpack.c.l.s8.bf16 %v1000
    %v2091 = vunpack.c.l.s8.bf16 %v1001
    %v2092 = vunpack.c.h.s8.bf16 %v1000
    %v2093 = vunpack.c.h.s8.bf16 %v1001
    %v2094 = vunpack.c.l.s8.bf16 %v1002
    %v2095 = vunpack.c.l.s8.bf16 %v1003
    %v2096 = vunpack.c.h.s8.bf16 %v1002
    %v2097 = vunpack.c.h.s8.bf16 %v1003
    %v2098 = vunpack.c.l.s8.bf16 %v1004
    %v2099 = vunpack.c.l.s8.bf16 %v1005
    %v2100 = vunpack.c.h.s8.bf16 %v1004
    %v2101 = vunpack.c.h.s8.bf16 %v1005
    %v2102 = vunpack.c.l.s8.bf16 %v1006
    %v2103 = vunpack.c.l.s8.bf16 %v1007
    %v2104 = vunpack.c.h.s8.bf16 %v1006
    %v2105 = vunpack.c.h.s8.bf16 %v1007
    %v2106 = vunpack.c.l.s8.bf16 %v1008
    %v2107 = vunpack.c.l.s8.bf16 %v1009
    %v2108 = vunpack.c.h.s8.bf16 %v1008
    %v2109 = vunpack.c.h.s8.bf16 %v1009
    %v2110 = vunpack.c.l.s8.bf16 %v1010
    %v2111 = vunpack.c.l.s8.bf16 %v1011
    %v2112 = vunpack.c.h.s8.bf16 %v1010
    %v2113 = vunpack.c.h.s8.bf16 %v1011
    %v2114 = vunpack.c.l.s8.bf16 %v1012
    %v2115 = vunpack.c.l.s8.bf16 %v1013
    %v2116 = vunpack.c.h.s8.bf16 %v1012
    %v2117 = vunpack.c.h.s8.bf16 %v1013
    %v2118 = vunpack.c.l.s8.bf16 %v1014
    %v2119 = vunpack.c.l.s8.bf16 %v1015
    %v2120 = vunpack.c.h.s8.bf16 %v1014
    %v2121 = vunpack.c.h.s8.bf16 %v1015
    %v2122 = vunpack.c.l.s8.bf16 %v1016
    %v2123 = vunpack.c.l.s8.bf16 %v1017
    %v2124 = vunpack.c.h.s8.bf16 %v1016
    %v2125 = vunpack.c.h.s8.bf16 %v1017
    %v2126 = vunpack.c.l.s8.bf16 %v1018
    %v2127 = vunpack.c.l.s8.bf16 %v1019
    %v2128 = vunpack.c.h.s8.bf16 %v1018
    %v2129 = vunpack.c.h.s8.bf16 %v1019
    %v2130 = vunpack.c.l.s8.bf16 %v1020
    %v2131 = vunpack.c.l.s8.bf16 %v1021
    %v2132 = vunpack.c.h.s8.bf16 %v1020
    %v2133 = vunpack.c.h.s8.bf16 %v1021
    %v2134 = vunpack.c.l.s8.bf16 %v1022
    %v2135 = vunpack.c.l.s8.bf16 %v1023
    %v2136 = vunpack.c.h.s8.bf16 %v1022
    %v2137 = vunpack.c.h.s8.bf16 %v1023
    %v2138 = vunpack.c.l.s8.bf16 %v1024
    %v2139 = vunpack.c.l.s8.bf16 %v1025
    %v2140 = vunpack.c.h.s8.bf16 %v1024
    %v2141 = vunpack.c.h.s8.bf16 %v1025
    %v2142 = vunpack.c.l.s8.bf16 %v1026
    %v2143 = vunpack.c.l.s8.bf16 %v1027
    %v2144 = vunpack.c.h.s8.bf16 %v1026
    %v2145 = vunpack.c.h.s8.bf16 %v1027
    %v2146 = vunpack.c.l.s8.bf16 %v1028
    %v2147 = vunpack.c.l.s8.bf16 %v1029
    %v2148 = vunpack.c.h.s8.bf16 %v1028
    %v2149 = vunpack.c.h.s8.bf16 %v1029
    %v2150 = vunpack.c.l.s8.bf16 %v1030
    %v2151 = vunpack.c.l.s8.bf16 %v1031
    %v2152 = vunpack.c.h.s8.bf16 %v1030
    %v2153 = vunpack.c.h.s8.bf16 %v1031
    %v2154 = vunpack.c.l.s8.bf16 %v1032
    %v2155 = vunpack.c.l.s8.bf16 %v1033
    %v2156 = vunpack.c.h.s8.bf16 %v1032
    %v2157 = vunpack.c.h.s8.bf16 %v1033
    %v2158 = vunpack.c.l.s8.bf16 %v1034
    %v2159 = vunpack.c.l.s8.bf16 %v1035
    %v2160 = vunpack.c.h.s8.bf16 %v1034
    %v2161 = vunpack.c.h.s8.bf16 %v1035
    %v2162 = vunpack.c.l.s8.bf16 %v1036
    %v2163 = vunpack.c.l.s8.bf16 %v1037
    %v2164 = vunpack.c.h.s8.bf16 %v1036
    %v2165 = vunpack.c.h.s8.bf16 %v1037
    %v2166 = vunpack.c.l.s8.bf16 %v1038
    %v2167 = vunpack.c.l.s8.bf16 %v1039
    %v2168 = vunpack.c.h.s8.bf16 %v1038
    %v2169 = vunpack.c.h.s8.bf16 %v1039
    %v2170 = vunpack.c.l.s8.bf16 %v1040
    %v2171 = vunpack.c.l.s8.bf16 %v1041
    %v2172 = vunpack.c.h.s8.bf16 %v1040
    %v2173 = vunpack.c.h.s8.bf16 %v1041
    %v2174 = vunpack.c.l.s8.bf16 %v1042
    %v2175 = vunpack.c.l.s8.bf16 %v1043
    %v2176 = vunpack.c.h.s8.bf16 %v1042
    %v2177 = vunpack.c.h.s8.bf16 %v1043
    %v2178 = vunpack.c.l.s8.bf16 %v1044
    %v2179 = vunpack.c.l.s8.bf16 %v1045
    %v2180 = vunpack.c.h.s8.bf16 %v1044
    %v2181 = vunpack.c.h.s8.bf16 %v1045
    %v2182 = vunpack.c.l.s8.bf16 %v1046
    %v2183 = vunpack.c.l.s8.bf16 %v1047
    %v2184 = vunpack.c.h.s8.bf16 %v1046
    %v2185 = vunpack.c.h.s8.bf16 %v1047
    %v2186 = vunpack.c.l.s8.bf16 %v1048
    %v2187 = vunpack.c.l.s8.bf16 %v1049
    %v2188 = vunpack.c.h.s8.bf16 %v1048
    %v2189 = vunpack.c.h.s8.bf16 %v1049
    %v2190 = vunpack.c.l.s8.bf16 %v1050
    %v2191 = vunpack.c.l.s8.bf16 %v1051
    %v2192 = vunpack.c.h.s8.bf16 %v1050
    %v2193 = vunpack.c.h.s8.bf16 %v1051
    %v2194 = vunpack.c.l.s8.bf16 %v1052
    %v2195 = vunpack.c.l.s8.bf16 %v1053
    %v2196 = vunpack.c.h.s8.bf16 %v1052
    %v2197 = vunpack.c.h.s8.bf16 %v1053
    %v2198 = vunpack.c.l.s8.bf16 %v1054
    %v2199 = vunpack.c.l.s8.bf16 %v1055
    %v2200 = vunpack.c.h.s8.bf16 %v1054
    %v2201 = vunpack.c.h.s8.bf16 %v1055
    %v2202 = vunpack.c.l.s8.bf16 %v1056
    %v2203 = vunpack.c.l.s8.bf16 %v1057
    %v2204 = vunpack.c.h.s8.bf16 %v1056
    %v2205 = vunpack.c.h.s8.bf16 %v1057
    %v2206 = vunpack.c.l.s8.bf16 %v1058
    %v2207 = vunpack.c.l.s8.bf16 %v1059
    %v2208 = vunpack.c.h.s8.bf16 %v1058
    %v2209 = vunpack.c.h.s8.bf16 %v1059
    %v2210 = vunpack.c.l.s8.bf16 %v1060
    %v2211 = vunpack.c.l.s8.bf16 %v1061
    %v2212 = vunpack.c.h.s8.bf16 %v1060
    %v2213 = vunpack.c.h.s8.bf16 %v1061
    %v2214 = vunpack.c.l.s8.bf16 %v1062
    %v2215 = vunpack.c.l.s8.bf16 %v1063
    %v2216 = vunpack.c.h.s8.bf16 %v1062
    %v2217 = vunpack.c.h.s8.bf16 %v1063
    %v2218 = vunpack.c.l.s8.bf16 %v1064
    %v2219 = vunpack.c.l.s8.bf16 %v1065
    %v2220 = vunpack.c.h.s8.bf16 %v1064
    %v2221 = vunpack.c.h.s8.bf16 %v1065
    %v2222 = vunpack.c.l.s8.bf16 %v1066
    %v2223 = vunpack.c.l.s8.bf16 %v1067
    %v2224 = vunpack.c.h.s8.bf16 %v1066
    %v2225 = vunpack.c.h.s8.bf16 %v1067
    %v2226 = vunpack.c.l.s8.bf16 %v1068
    %v2227 = vunpack.c.l.s8.bf16 %v1069
    %v2228 = vunpack.c.h.s8.bf16 %v1068
    %v2229 = vunpack.c.h.s8.bf16 %v1069
    %v2230 = vunpack.c.l.s8.bf16 %v1070
    %v2231 = vunpack.c.l.s8.bf16 %v1071
    %v2232 = vunpack.c.h.s8.bf16 %v1070
    %v2233 = vunpack.c.h.s8.bf16 %v1071
    %v2234 = vunpack.c.l.s8.bf16 %v1072
    %v2235 = vunpack.c.l.s8.bf16 %v1073
    %v2236 = vunpack.c.h.s8.bf16 %v1072
    %v2237 = vunpack.c.h.s8.bf16 %v1073
    %v2238 = vunpack.c.l.s8.bf16 %v1074
    %v2239 = vunpack.c.l.s8.bf16 %v1075
    %v2240 = vunpack.c.h.s8.bf16 %v1074
    %v2241 = vunpack.c.h.s8.bf16 %v1075
    %v2242 = vunpack.c.l.s8.bf16 %v1076
    %v2243 = vunpack.c.l.s8.bf16 %v1077
    %v2244 = vunpack.c.h.s8.bf16 %v1076
    %v2245 = vunpack.c.h.s8.bf16 %v1077
    %v2246 = vunpack.c.l.s8.bf16 %v1078
    %v2247 = vunpack.c.l.s8.bf16 %v1079
    %v2248 = vunpack.c.h.s8.bf16 %v1078
    %v2249 = vunpack.c.h.s8.bf16 %v1079
    %v2250 = vunpack.c.l.s8.bf16 %v1080
    %v2251 = vunpack.c.l.s8.bf16 %v1081
    %v2252 = vunpack.c.h.s8.bf16 %v1080
    %v2253 = vunpack.c.h.s8.bf16 %v1081
    %v2254 = vunpack.c.l.s8.bf16 %v1082
    %v2255 = vunpack.c.l.s8.bf16 %v1083
    %v2256 = vunpack.c.h.s8.bf16 %v1082
    %v2257 = vunpack.c.h.s8.bf16 %v1083
    %v2258 = vunpack.c.l.s8.bf16 %v1084
    %v2259 = vunpack.c.l.s8.bf16 %v1085
    %v2260 = vunpack.c.h.s8.bf16 %v1084
    %v2261 = vunpack.c.h.s8.bf16 %v1085
    %v2262 = vunpack.c.l.s8.bf16 %v1086
    %v2263 = vunpack.c.l.s8.bf16 %v1087
    %v2264 = vunpack.c.h.s8.bf16 %v1086
    %v2265 = vunpack.c.h.s8.bf16 %v1087
    %v2266 = vunpack.c.l.s8.bf16 %v1088
    %v2267 = vunpack.c.l.s8.bf16 %v1089
    %v2268 = vunpack.c.h.s8.bf16 %v1088
    %v2269 = vunpack.c.h.s8.bf16 %v1089
    %v2270 = vunpack.c.l.s8.bf16 %v1090
    %v2271 = vunpack.c.l.s8.bf16 %v1091
    %v2272 = vunpack.c.h.s8.bf16 %v1090
    %v2273 = vunpack.c.h.s8.bf16 %v1091
    %v2274 = vunpack.c.l.s8.bf16 %v1092
    %v2275 = vunpack.c.l.s8.bf16 %v1093
    %v2276 = vunpack.c.h.s8.bf16 %v1092
    %v2277 = vunpack.c.h.s8.bf16 %v1093
    %v2278 = vunpack.c.l.s8.bf16 %v1094
    %v2279 = vunpack.c.l.s8.bf16 %v1095
    %v2280 = vunpack.c.h.s8.bf16 %v1094
    %v2281 = vunpack.c.h.s8.bf16 %v1095
    %v2282 = vunpack.c.l.s8.bf16 %v1096
    %v2283 = vunpack.c.l.s8.bf16 %v1097
    %v2284 = vunpack.c.h.s8.bf16 %v1096
    %v2285 = vunpack.c.h.s8.bf16 %v1097
    %v2286 = vunpack.c.l.s8.bf16 %v1098
    %v2287 = vunpack.c.l.s8.bf16 %v1099
    %v2288 = vunpack.c.h.s8.bf16 %v1098
    %v2289 = vunpack.c.h.s8.bf16 %v1099
    %v2290 = vunpack.c.l.s8.bf16 %v1100
    %v2291 = vunpack.c.l.s8.bf16 %v1101
    %v2292 = vunpack.c.h.s8.bf16 %v1100
    %v2293 = vunpack.c.h.s8.bf16 %v1101
    %v2294 = vunpack.c.l.s8.bf16 %v1102
    %v2295 = vunpack.c.l.s8.bf16 %v1103
    %v2296 = vunpack.c.h.s8.bf16 %v1102
    %v2297 = vunpack.c.h.s8.bf16 %v1103
    %v2298 = vunpack.c.l.s8.bf16 %v1104
    %v2299 = vunpack.c.l.s8.bf16 %v1105
    %v2300 = vunpack.c.h.s8.bf16 %v1104
    %v2301 = vunpack.c.h.s8.bf16 %v1105
    %v2302 = vunpack.c.l.s8.bf16 %v1106
    %v2303 = vunpack.c.l.s8.bf16 %v1107
    %v2304 = vunpack.c.h.s8.bf16 %v1106
    %v2305 = vunpack.c.h.s8.bf16 %v1107
    %v2306 = vunpack.c.l.s8.bf16 %v1108
    %v2307 = vunpack.c.l.s8.bf16 %v1109
    %v2308 = vunpack.c.h.s8.bf16 %v1108
    %v2309 = vunpack.c.h.s8.bf16 %v1109
    %v2310 = vunpack.c.l.s8.bf16 %v1110
    %v2311 = vunpack.c.l.s8.bf16 %v1111
    %v2312 = vunpack.c.h.s8.bf16 %v1110
    %v2313 = vunpack.c.h.s8.bf16 %v1111
    %v2314 = vunpack.c.l.s8.bf16 %v1112
    %v2315 = vunpack.c.l.s8.bf16 %v1113
    %v2316 = vunpack.c.h.s8.bf16 %v1112
    %v2317 = vunpack.c.h.s8.bf16 %v1113
    %v2318 = vunpack.c.l.s8.bf16 %v1114
    %v2319 = vunpack.c.l.s8.bf16 %v1115
    %v2320 = vunpack.c.h.s8.bf16 %v1114
    %v2321 = vunpack.c.h.s8.bf16 %v1115
    %v2322 = vunpack.c.l.s8.bf16 %v1116
    %v2323 = vunpack.c.l.s8.bf16 %v1117
    %v2324 = vunpack.c.h.s8.bf16 %v1116
    %v2325 = vunpack.c.h.s8.bf16 %v1117
    %v2326 = vunpack.c.l.s8.bf16 %v1118
    %v2327 = vunpack.c.l.s8.bf16 %v1119
    %v2328 = vunpack.c.h.s8.bf16 %v1118
    %v2329 = vunpack.c.h.s8.bf16 %v1119
    %v2330 = vunpack.c.l.s8.bf16 %v1120
    %v2331 = vunpack.c.l.s8.bf16 %v1121
    %v2332 = vunpack.c.h.s8.bf16 %v1120
    %v2333 = vunpack.c.h.s8.bf16 %v1121
    %v2334 = vunpack.c.l.s8.bf16 %v1122
    %v2335 = vunpack.c.l.s8.bf16 %v1123
    %v2336 = vunpack.c.h.s8.bf16 %v1122
    %v2337 = vunpack.c.h.s8.bf16 %v1123
    %v2338 = vunpack.c.l.s8.bf16 %v1124
    %v2339 = vunpack.c.l.s8.bf16 %v1125
    %v2340 = vunpack.c.h.s8.bf16 %v1124
    %v2341 = vunpack.c.h.s8.bf16 %v1125
    %v2342 = vunpack.c.l.s8.bf16 %v1126
    %v2343 = vunpack.c.l.s8.bf16 %v1127
    %v2344 = vunpack.c.h.s8.bf16 %v1126
    %v2345 = vunpack.c.h.s8.bf16 %v1127
    %v2346 = vunpack.c.l.s8.bf16 %v1128
    %v2347 = vunpack.c.l.s8.bf16 %v1129
    %v2348 = vunpack.c.h.s8.bf16 %v1128
    %v2349 = vunpack.c.h.s8.bf16 %v1129
    %v2350 = vunpack.c.l.s8.bf16 %v1130
    %v2351 = vunpack.c.l.s8.bf16 %v1131
    %v2352 = vunpack.c.h.s8.bf16 %v1130
    %v2353 = vunpack.c.h.s8.bf16 %v1131
    %v2354 = vunpack.c.l.s8.bf16 %v1132
    %v2355 = vunpack.c.l.s8.bf16 %v1133
    %v2356 = vunpack.c.h.s8.bf16 %v1132
    %v2357 = vunpack.c.h.s8.bf16 %v1133
    %v2358 = vunpack.c.l.s8.bf16 %v1134
    %v2359 = vunpack.c.l.s8.bf16 %v1135
    %v2360 = vunpack.c.h.s8.bf16 %v1134
    %v2361 = vunpack.c.h.s8.bf16 %v1135
    %v2362 = vunpack.c.l.s8.bf16 %v1136
    %v2363 = vunpack.c.l.s8.bf16 %v1137
    %v2364 = vunpack.c.h.s8.bf16 %v1136
    %v2365 = vunpack.c.h.s8.bf16 %v1137
    %v2366 = vunpack.c.l.s8.bf16 %v1138
    %v2367 = vunpack.c.l.s8.bf16 %v1139
    %v2368 = vunpack.c.h.s8.bf16 %v1138
    %v2369 = vunpack.c.h.s8.bf16 %v1139
    %v2370 = vunpack.c.l.s8.bf16 %v1140
    %v2371 = vunpack.c.l.s8.bf16 %v1141
    %v2372 = vunpack.c.h.s8.bf16 %v1140
    %v2373 = vunpack.c.h.s8.bf16 %v1141
    %v2374 = vunpack.c.l.s8.bf16 %v1142
    %v2375 = vunpack.c.l.s8.bf16 %v1143
    %v2376 = vunpack.c.h.s8.bf16 %v1142
    %v2377 = vunpack.c.h.s8.bf16 %v1143
    %v2378 = vunpack.c.l.s8.bf16 %v1144
    %v2379 = vunpack.c.l.s8.bf16 %v1145
    %v2380 = vunpack.c.h.s8.bf16 %v1144
    %v2381 = vunpack.c.h.s8.bf16 %v1145
    %v2382 = vunpack.c.l.s8.bf16 %v1146
    %v2383 = vunpack.c.l.s8.bf16 %v1147
    %v2384 = vunpack.c.h.s8.bf16 %v1146
    %v2385 = vunpack.c.h.s8.bf16 %v1147
    %v2386 = vunpack.c.l.s8.bf16 %v1148
    %v2387 = vunpack.c.l.s8.bf16 %v1149
    %v2388 = vunpack.c.h.s8.bf16 %v1148
    %v2389 = vunpack.c.h.s8.bf16 %v1149
    %v2390 = vunpack.c.l.s8.bf16 %v1150
    %v2391 = vunpack.c.l.s8.bf16 %v1151
    %v2392 = vunpack.c.h.s8.bf16 %v1150
    %v2393 = vunpack.c.h.s8.bf16 %v1151
    %v2394 = vunpack.c.l.s8.bf16 %v1152
    %v2395 = vunpack.c.l.s8.bf16 %v1153
    %v2396 = vunpack.c.h.s8.bf16 %v1152
    %v2397 = vunpack.c.h.s8.bf16 %v1153
    %v2398 = vunpack.c.l.s8.bf16 %v1154
    %v2399 = vunpack.c.l.s8.bf16 %v1155
    %v2400 = vunpack.c.h.s8.bf16 %v1154
    %v2401 = vunpack.c.h.s8.bf16 %v1155
    %v2402 = vunpack.c.l.s8.bf16 %v1156
    %v2403 = vunpack.c.l.s8.bf16 %v1157
    %v2404 = vunpack.c.h.s8.bf16 %v1156
    %v2405 = vunpack.c.h.s8.bf16 %v1157
    %v2406 = vunpack.c.l.s8.bf16 %v1158
    %v2407 = vunpack.c.l.s8.bf16 %v1159
    %v2408 = vunpack.c.h.s8.bf16 %v1158
    %v2409 = vunpack.c.h.s8.bf16 %v1159
    %v2410 = vunpack.c.l.s8.bf16 %v1160
    %v2411 = vunpack.c.l.s8.bf16 %v1161
    %v2412 = vunpack.c.h.s8.bf16 %v1160
    %v2413 = vunpack.c.h.s8.bf16 %v1161
    %v2414 = vunpack.c.l.s8.bf16 %v1162
    %v2415 = vunpack.c.l.s8.bf16 %v1163
    %v2416 = vunpack.c.h.s8.bf16 %v1162
    %v2417 = vunpack.c.h.s8.bf16 %v1163
    %v2418 = vunpack.c.l.s8.bf16 %v1164
    %v2419 = vunpack.c.l.s8.bf16 %v1165
    %v2420 = vunpack.c.h.s8.bf16 %v1164
    %v2421 = vunpack.c.h.s8.bf16 %v1165
    %v2422 = vunpack.c.l.s8.bf16 %v1166
    %v2423 = vunpack.c.l.s8.bf16 %v1167
    %v2424 = vunpack.c.h.s8.bf16 %v1166
    %v2425 = vunpack.c.h.s8.bf16 %v1167
    %v2426 = vunpack.c.l.s8.bf16 %v1168
    %v2427 = vunpack.c.l.s8.bf16 %v1169
    %v2428 = vunpack.c.h.s8.bf16 %v1168
    %v2429 = vunpack.c.h.s8.bf16 %v1169
    %v2430 = vunpack.c.l.s8.bf16 %v1170
    %v2431 = vunpack.c.l.s8.bf16 %v1171
    %v2432 = vunpack.c.h.s8.bf16 %v1170
    %v2433 = vunpack.c.h.s8.bf16 %v1171
    %v2434 = vunpack.c.l.s8.bf16 %v1172
    %v2435 = vunpack.c.l.s8.bf16 %v1173
    %v2436 = vunpack.c.h.s8.bf16 %v1172
    %v2437 = vunpack.c.h.s8.bf16 %v1173
    %v2438 = vunpack.c.l.s8.bf16 %v1174
    %v2439 = vunpack.c.l.s8.bf16 %v1175
    %v2440 = vunpack.c.h.s8.bf16 %v1174
    %v2441 = vunpack.c.h.s8.bf16 %v1175
    %v2442 = vunpack.c.l.s8.bf16 %v1176
    %v2443 = vunpack.c.l.s8.bf16 %v1177
    %v2444 = vunpack.c.h.s8.bf16 %v1176
    %v2445 = vunpack.c.h.s8.bf16 %v1177
    %v2446 = vunpack.c.l.s8.bf16 %v1178
    %v2447 = vunpack.c.l.s8.bf16 %v1179
    %v2448 = vunpack.c.h.s8.bf16 %v1178
    %v2449 = vunpack.c.h.s8.bf16 %v1179
    %v2450 = vunpack.c.l.s8.bf16 %v1180
    %v2451 = vunpack.c.l.s8.bf16 %v1181
    %v2452 = vunpack.c.h.s8.bf16 %v1180
    %v2453 = vunpack.c.h.s8.bf16 %v1181
    %v2454 = vunpack.c.l.s8.bf16 %v1182
    %v2455 = vunpack.c.l.s8.bf16 %v1183
    %v2456 = vunpack.c.h.s8.bf16 %v1182
    %v2457 = vunpack.c.h.s8.bf16 %v1183
    %v2458 = vunpack.c.l.s8.bf16 %v1184
    %v2459 = vunpack.c.l.s8.bf16 %v1185
    %v2460 = vunpack.c.h.s8.bf16 %v1184
    %v2461 = vunpack.c.h.s8.bf16 %v1185
    %v2462 = vunpack.c.l.s8.bf16 %v1186
    %v2463 = vunpack.c.l.s8.bf16 %v1187
    %v2464 = vunpack.c.h.s8.bf16 %v1186
    %v2465 = vunpack.c.h.s8.bf16 %v1187
    %v2466 = vunpack.c.l.s8.bf16 %v1188
    %v2467 = vunpack.c.l.s8.bf16 %v1189
    %v2468 = vunpack.c.h.s8.bf16 %v1188
    %v2469 = vunpack.c.h.s8.bf16 %v1189
    %v2470 = vunpack.c.l.s8.bf16 %v1190
    %v2471 = vunpack.c.l.s8.bf16 %v1191
    %v2472 = vunpack.c.h.s8.bf16 %v1190
    %v2473 = vunpack.c.h.s8.bf16 %v1191
    %v2474 = vunpack.c.l.s8.bf16 %v1192
    %v2475 = vunpack.c.l.s8.bf16 %v1193
    %v2476 = vunpack.c.h.s8.bf16 %v1192
    %v2477 = vunpack.c.h.s8.bf16 %v1193
    %v2478 = vunpack.c.l.s8.bf16 %v1194
    %v2479 = vunpack.c.l.s8.bf16 %v1195
    %v2480 = vunpack.c.h.s8.bf16 %v1194
    %v2481 = vunpack.c.h.s8.bf16 %v1195
    %v2482 = vunpack.c.l.s8.bf16 %v1196
    %v2483 = vunpack.c.l.s8.bf16 %v1197
    %v2484 = vunpack.c.h.s8.bf16 %v1196
    %v2485 = vunpack.c.h.s8.bf16 %v1197
    %v2486 = vunpack.c.l.s8.bf16 %v1198
    %v2487 = vunpack.c.l.s8.bf16 %v1199
    %v2488 = vunpack.c.h.s8.bf16 %v1198
    %v2489 = vunpack.c.h.s8.bf16 %v1199
    %v2490 = vunpack.c.l.s8.bf16 %v1200
    %v2491 = vunpack.c.l.s8.bf16 %v1201
    %v2492 = vunpack.c.h.s8.bf16 %v1200
    %v2493 = vunpack.c.h.s8.bf16 %v1201
    %v2494 = vunpack.c.l.s8.bf16 %v1202
    %v2495 = vunpack.c.l.s8.bf16 %v1203
    %v2496 = vunpack.c.h.s8.bf16 %v1202
    %v2497 = vunpack.c.h.s8.bf16 %v1203
    %v2498 = vunpack.c.l.s8.bf16 %v1204
    %v2499 = vunpack.c.l.s8.bf16 %v1205
    %v2500 = vunpack.c.h.s8.bf16 %v1204
    %v2501 = vunpack.c.h.s8.bf16 %v1205
    %v2502 = vunpack.c.l.s8.bf16 %v1206
    %v2503 = vunpack.c.l.s8.bf16 %v1207
    %v2504 = vunpack.c.h.s8.bf16 %v1206
    %v2505 = vunpack.c.h.s8.bf16 %v1207
    %v2506 = vunpack.c.l.s8.bf16 %v1208
    %v2507 = vunpack.c.l.s8.bf16 %v1209
    %v2508 = vunpack.c.h.s8.bf16 %v1208
    %v2509 = vunpack.c.h.s8.bf16 %v1209
    %v2510 = vunpack.c.l.s8.bf16 %v1210
    %v2511 = vunpack.c.l.s8.bf16 %v1211
    %v2512 = vunpack.c.h.s8.bf16 %v1210
    %v2513 = vunpack.c.h.s8.bf16 %v1211
    %v2514 = vunpack.c.l.s8.bf16 %v1212
    %v2515 = vunpack.c.l.s8.bf16 %v1213
    %v2516 = vunpack.c.h.s8.bf16 %v1212
    %v2517 = vunpack.c.h.s8.bf16 %v1213
    %v2518 = vunpack.c.l.s8.bf16 %v1214
    %v2519 = vunpack.c.l.s8.bf16 %v1215
    %v2520 = vunpack.c.h.s8.bf16 %v1214
    %v2521 = vunpack.c.h.s8.bf16 %v1215
    %v2522 = vunpack.c.l.s8.bf16 %v1216
    %v2523 = vunpack.c.l.s8.bf16 %v1217
    %v2524 = vunpack.c.h.s8.bf16 %v1216
    %v2525 = vunpack.c.h.s8.bf16 %v1217
    %v2526 = vunpack.c.l.s8.bf16 %v1218
    %v2527 = vunpack.c.l.s8.bf16 %v1219
    %v2528 = vunpack.c.h.s8.bf16 %v1218
    %v2529 = vunpack.c.h.s8.bf16 %v1219
    %v2530 = vunpack.c.l.s8.bf16 %v1220
    %v2531 = vunpack.c.l.s8.bf16 %v1221
    %v2532 = vunpack.c.h.s8.bf16 %v1220
    %v2533 = vunpack.c.h.s8.bf16 %v1221
    %v2534 = vunpack.c.l.s8.bf16 %v1222
    %v2535 = vunpack.c.l.s8.bf16 %v1223
    %v2536 = vunpack.c.h.s8.bf16 %v1222
    %v2537 = vunpack.c.h.s8.bf16 %v1223
    %v2538 = vunpack.c.l.s8.bf16 %v1224
    %v2539 = vunpack.c.l.s8.bf16 %v1225
    %v2540 = vunpack.c.h.s8.bf16 %v1224
    %v2541 = vunpack.c.h.s8.bf16 %v1225
    %v2542 = vunpack.c.l.s8.bf16 %v1226
    %v2543 = vunpack.c.l.s8.bf16 %v1227
    %v2544 = vunpack.c.h.s8.bf16 %v1226
    %v2545 = vunpack.c.h.s8.bf16 %v1227
    %v2546 = vunpack.c.l.s8.bf16 %v1228
    %v2547 = vunpack.c.l.s8.bf16 %v1229
    %v2548 = vunpack.c.h.s8.bf16 %v1228
    %v2549 = vunpack.c.h.s8.bf16 %v1229
    %v2550 = vunpack.c.l.s8.bf16 %v1230
    %v2551 = vunpack.c.l.s8.bf16 %v1231
    %v2552 = vunpack.c.h.s8.bf16 %v1230
    %v2553 = vunpack.c.h.s8.bf16 %v1231
    %v2554 = vunpack.c.l.s8.bf16 %v1232
    %v2555 = vunpack.c.l.s8.bf16 %v1233
    %v2556 = vunpack.c.h.s8.bf16 %v1232
    %v2557 = vunpack.c.h.s8.bf16 %v1233
    %v2558 = vunpack.c.l.s8.bf16 %v1234
    %v2559 = vunpack.c.l.s8.bf16 %v1235
    %v2560 = vunpack.c.h.s8.bf16 %v1234
    %v2561 = vunpack.c.h.s8.bf16 %v1235
    %v2562 = vunpack.c.l.s8.bf16 %v1236
    %v2563 = vunpack.c.l.s8.bf16 %v1237
    %v2564 = vunpack.c.h.s8.bf16 %v1236
    %v2565 = vunpack.c.h.s8.bf16 %v1237
    %v2566 = vunpack.c.l.s8.bf16 %v1238
    %v2567 = vunpack.c.l.s8.bf16 %v1239
    %v2568 = vunpack.c.h.s8.bf16 %v1238
    %v2569 = vunpack.c.h.s8.bf16 %v1239
    %v2570 = vunpack.c.l.s8.bf16 %v1240
    %v2571 = vunpack.c.l.s8.bf16 %v1241
    %v2572 = vunpack.c.h.s8.bf16 %v1240
    %v2573 = vunpack.c.h.s8.bf16 %v1241
    %v2574 = vunpack.c.l.s8.bf16 %v1242
    %v2575 = vunpack.c.l.s8.bf16 %v1243
    %v2576 = vunpack.c.h.s8.bf16 %v1242
    %v2577 = vunpack.c.h.s8.bf16 %v1243
    %v2578 = vunpack.c.l.s8.bf16 %v1244
    %v2579 = vunpack.c.l.s8.bf16 %v1245
    %v2580 = vunpack.c.h.s8.bf16 %v1244
    %v2581 = vunpack.c.h.s8.bf16 %v1245
    %v2582 = vunpack.c.l.s8.bf16 %v1246
    %v2583 = vunpack.c.l.s8.bf16 %v1247
    %v2584 = vunpack.c.h.s8.bf16 %v1246
    %v2585 = vunpack.c.h.s8.bf16 %v1247
    %v2586 = vunpack.c.l.s8.bf16 %v1248
    %v2587 = vunpack.c.l.s8.bf16 %v1249
    %v2588 = vunpack.c.h.s8.bf16 %v1248
    %v2589 = vunpack.c.h.s8.bf16 %v1249
    %v2590 = vunpack.c.l.s8.bf16 %v1250
    %v2591 = vunpack.c.l.s8.bf16 %v1251
    %v2592 = vunpack.c.h.s8.bf16 %v1250
    %v2593 = vunpack.c.h.s8.bf16 %v1251
    %v2594 = vunpack.c.l.s8.bf16 %v1252
    %v2595 = vunpack.c.l.s8.bf16 %v1253
    %v2596 = vunpack.c.h.s8.bf16 %v1252
    %v2597 = vunpack.c.h.s8.bf16 %v1253
    %v2598 = vunpack.c.l.s8.bf16 %v1254
    %v2599 = vunpack.c.l.s8.bf16 %v1255
    %v2600 = vunpack.c.h.s8.bf16 %v1254
    %v2601 = vunpack.c.h.s8.bf16 %v1255
    %v2602 = vunpack.c.l.s8.bf16 %v1256
    %v2603 = vunpack.c.l.s8.bf16 %v1257
    %v2604 = vunpack.c.h.s8.bf16 %v1256
    %v2605 = vunpack.c.h.s8.bf16 %v1257
    %v2606 = vunpack.c.l.s8.bf16 %v1258
    %v2607 = vunpack.c.l.s8.bf16 %v1259
    %v2608 = vunpack.c.h.s8.bf16 %v1258
    %v2609 = vunpack.c.h.s8.bf16 %v1259
    %v2610 = vunpack.c.l.s8.bf16 %v1260
    %v2611 = vunpack.c.l.s8.bf16 %v1261
    %v2612 = vunpack.c.h.s8.bf16 %v1260
    %v2613 = vunpack.c.h.s8.bf16 %v1261
    %v2614 = vunpack.c.l.s8.bf16 %v1262
    %v2615 = vunpack.c.l.s8.bf16 %v1263
    %v2616 = vunpack.c.h.s8.bf16 %v1262
    %v2617 = vunpack.c.h.s8.bf16 %v1263
    %v2618 = vunpack.c.l.s8.bf16 %v1264
    %v2619 = vunpack.c.l.s8.bf16 %v1265
    %v2620 = vunpack.c.h.s8.bf16 %v1264
    %v2621 = vunpack.c.h.s8.bf16 %v1265
    %v2622 = vunpack.c.l.s8.bf16 %v1266
    %v2623 = vunpack.c.l.s8.bf16 %v1267
    %v2624 = vunpack.c.h.s8.bf16 %v1266
    %v2625 = vunpack.c.h.s8.bf16 %v1267
    %v2626 = vunpack.c.l.s8.bf16 %v1268
    %v2627 = vunpack.c.l.s8.bf16 %v1269
    %v2628 = vunpack.c.h.s8.bf16 %v1268
    %v2629 = vunpack.c.h.s8.bf16 %v1269
    %v2630 = vunpack.c.l.s8.bf16 %v1270
    %v2631 = vunpack.c.l.s8.bf16 %v1271
    %v2632 = vunpack.c.h.s8.bf16 %v1270
    %v2633 = vunpack.c.h.s8.bf16 %v1271
    %v2634 = vunpack.c.l.s8.bf16 %v1272
    %v2635 = vunpack.c.l.s8.bf16 %v1273
    %v2636 = vunpack.c.h.s8.bf16 %v1272
    %v2637 = vunpack.c.h.s8.bf16 %v1273
    %v2638 = vunpack.c.l.s8.bf16 %v1274
    %v2639 = vunpack.c.l.s8.bf16 %v1275
    %v2640 = vunpack.c.h.s8.bf16 %v1274
    %v2641 = vunpack.c.h.s8.bf16 %v1275
    %v2642 = vunpack.c.l.s8.bf16 %v1276
    %v2643 = vunpack.c.l.s8.bf16 %v1277
    %v2644 = vunpack.c.h.s8.bf16 %v1276
    %v2645 = vunpack.c.h.s8.bf16 %v1277
    %v2646 = vunpack.c.l.s8.bf16 %v1278
    %v2647 = vunpack.c.l.s8.bf16 %v1279
    %v2648 = vunpack.c.h.s8.bf16 %v1278
    %v2649 = vunpack.c.h.s8.bf16 %v1279
    %v2650 = vunpack.c.l.s8.bf16 %v1280
    %v2651 = vunpack.c.l.s8.bf16 %v1281
    %v2652 = vunpack.c.h.s8.bf16 %v1280
    %v2653 = vunpack.c.h.s8.bf16 %v1281
    %v2654 = vunpack.c.l.s8.bf16 %v1282
    %v2655 = vunpack.c.l.s8.bf16 %v1283
    %v2656 = vunpack.c.h.s8.bf16 %v1282
    %v2657 = vunpack.c.h.s8.bf16 %v1283
    %v2658 = vunpack.c.l.s8.bf16 %v1284
    %v2659 = vunpack.c.l.s8.bf16 %v1285
    %v2660 = vunpack.c.h.s8.bf16 %v1284
    %v2661 = vunpack.c.h.s8.bf16 %v1285
    %v2662 = vunpack.c.l.s8.bf16 %v1286
    %v2663 = vunpack.c.l.s8.bf16 %v1287
    %v2664 = vunpack.c.h.s8.bf16 %v1286
    %v2665 = vunpack.c.h.s8.bf16 %v1287
    %v2666 = vunpack.c.l.s8.bf16 %v1288
    %v2667 = vunpack.c.l.s8.bf16 %v1289
    %v2668 = vunpack.c.h.s8.bf16 %v1288
    %v2669 = vunpack.c.h.s8.bf16 %v1289
    %v2670 = vunpack.c.l.s8.bf16 %v1290
    %v2671 = vunpack.c.l.s8.bf16 %v1291
    %v2672 = vunpack.c.h.s8.bf16 %v1290
    %v2673 = vunpack.c.h.s8.bf16 %v1291
    %v2674 = vunpack.c.l.s8.bf16 %v1292
    %v2675 = vunpack.c.l.s8.bf16 %v1293
    %v2676 = vunpack.c.h.s8.bf16 %v1292
    %v2677 = vunpack.c.h.s8.bf16 %v1293
    %v2678 = vunpack.c.l.s8.bf16 %v1294
    %v2679 = vunpack.c.l.s8.bf16 %v1295
    %v2680 = vunpack.c.h.s8.bf16 %v1294
    %v2681 = vunpack.c.h.s8.bf16 %v1295
    %v2682 = vunpack.c.l.s8.bf16 %v1296
    %v2683 = vunpack.c.l.s8.bf16 %v1297
    %v2684 = vunpack.c.h.s8.bf16 %v1296
    %v2685 = vunpack.c.h.s8.bf16 %v1297
    %v2686 = vunpack.c.l.s8.bf16 %v1298
    %v2687 = vunpack.c.l.s8.bf16 %v1299
    %v2688 = vunpack.c.h.s8.bf16 %v1298
    %v2689 = vunpack.c.h.s8.bf16 %v1299
    %v2690 = vunpack.c.l.s8.bf16 %v1300
    %v2691 = vunpack.c.l.s8.bf16 %v1301
    %v2692 = vunpack.c.h.s8.bf16 %v1300
    %v2693 = vunpack.c.h.s8.bf16 %v1301
    %v2694 = vunpack.c.l.s8.bf16 %v1302
    %v2695 = vunpack.c.l.s8.bf16 %v1303
    %v2696 = vunpack.c.h.s8.bf16 %v1302
    %v2697 = vunpack.c.h.s8.bf16 %v1303
    %v2698 = vunpack.c.l.s8.bf16 %v1304
    %v2699 = vunpack.c.l.s8.bf16 %v1305
    %v2700 = vunpack.c.h.s8.bf16 %v1304
    %v2701 = vunpack.c.h.s8.bf16 %v1305
    %v2702 = vunpack.c.l.s8.bf16 %v1306
    %v2703 = vunpack.c.l.s8.bf16 %v1307
    %v2704 = vunpack.c.h.s8.bf16 %v1306
    %v2705 = vunpack.c.h.s8.bf16 %v1307
    %v2706 = vunpack.c.l.s8.bf16 %v1308
    %v2707 = vunpack.c.l.s8.bf16 %v1309
    %v2708 = vunpack.c.h.s8.bf16 %v1308
    %v2709 = vunpack.c.h.s8.bf16 %v1309
    %v2710 = vunpack.c.l.s8.bf16 %v1310
    %v2711 = vunpack.c.l.s8.bf16 %v1311
    %v2712 = vunpack.c.h.s8.bf16 %v1310
    %v2713 = vunpack.c.h.s8.bf16 %v1311
    %v2714 = vunpack.c.l.s8.bf16 %v1312
    %v2715 = vunpack.c.l.s8.bf16 %v1313
    %v2716 = vunpack.c.h.s8.bf16 %v1312
    %v2717 = vunpack.c.h.s8.bf16 %v1313
    %v2718 = vunpack.c.l.s8.bf16 %v1314
    %v2719 = vunpack.c.l.s8.bf16 %v1315
    %v2720 = vunpack.c.h.s8.bf16 %v1314
    %v2721 = vunpack.c.h.s8.bf16 %v1315
    %v2722 = vunpack.c.l.s8.bf16 %v1316
    %v2723 = vunpack.c.l.s8.bf16 %v1317
    %v2724 = vunpack.c.h.s8.bf16 %v1316
    %v2725 = vunpack.c.h.s8.bf16 %v1317
    %v2726 = vunpack.c.l.s8.bf16 %v1318
    %v2727 = vunpack.c.l.s8.bf16 %v1319
    %v2728 = vunpack.c.h.s8.bf16 %v1318
    %v2729 = vunpack.c.h.s8.bf16 %v1319
    %v2730 = vunpack.c.l.s8.bf16 %v1320
    %v2731 = vunpack.c.l.s8.bf16 %v1321
    %v2732 = vunpack.c.h.s8.bf16 %v1320
    %v2733 = vunpack.c.h.s8.bf16 %v1321
    %v2734 = vunpack.c.l.s8.bf16 %v1322
    %v2735 = vunpack.c.l.s8.bf16 %v1323
    %v2736 = vunpack.c.h.s8.bf16 %v1322
    %v2737 = vunpack.c.h.s8.bf16 %v1323
    %v2738 = vunpack.c.l.s8.bf16 %v1324
    %v2739 = vunpack.c.l.s8.bf16 %v1325
    %v2740 = vunpack.c.h.s8.bf16 %v1324
    %v2741 = vunpack.c.h.s8.bf16 %v1325
    %v2742 = vunpack.c.l.s8.bf16 %v1326
    %v2743 = vunpack.c.l.s8.bf16 %v1327
    %v2744 = vunpack.c.h.s8.bf16 %v1326
    %v2745 = vunpack.c.h.s8.bf16 %v1327
    %v2746 = vunpack.c.l.s8.bf16 %v1328
    %v2747 = vunpack.c.l.s8.bf16 %v1329
    %v2748 = vunpack.c.h.s8.bf16 %v1328
    %v2749 = vunpack.c.h.s8.bf16 %v1329
    %v2750 = vunpack.c.l.s8.bf16 %v1330
    %v2751 = vunpack.c.l.s8.bf16 %v1331
    %v2752 = vunpack.c.h.s8.bf16 %v1330
    %v2753 = vunpack.c.h.s8.bf16 %v1331
    %v2754 = vunpack.c.l.s8.bf16 %v1332
    %v2755 = vunpack.c.l.s8.bf16 %v1333
    %v2756 = vunpack.c.h.s8.bf16 %v1332
    %v2757 = vunpack.c.h.s8.bf16 %v1333
    %v2758 = vunpack.c.l.s8.bf16 %v1334
    %v2759 = vunpack.c.l.s8.bf16 %v1335
    %v2760 = vunpack.c.h.s8.bf16 %v1334
    %v2761 = vunpack.c.h.s8.bf16 %v1335
    %v2762 = vunpack.c.l.s8.bf16 %v1336
    %v2763 = vunpack.c.l.s8.bf16 %v1337
    %v2764 = vunpack.c.h.s8.bf16 %v1336
    %v2765 = vunpack.c.h.s8.bf16 %v1337
    %v2766 = vunpack.c.l.s8.bf16 %v1338
    %v2767 = vunpack.c.l.s8.bf16 %v1339
    %v2768 = vunpack.c.h.s8.bf16 %v1338
    %v2769 = vunpack.c.h.s8.bf16 %v1339
    %v2770 = vunpack.c.l.s8.bf16 %v1340
    %v2771 = vunpack.c.l.s8.bf16 %v1341
    %v2772 = vunpack.c.h.s8.bf16 %v1340
    %v2773 = vunpack.c.h.s8.bf16 %v1341
    %v2774 = vunpack.c.l.s8.bf16 %v1342
    %v2775 = vunpack.c.l.s8.bf16 %v1343
    %v2776 = vunpack.c.h.s8.bf16 %v1342
    %v2777 = vunpack.c.h.s8.bf16 %v1343
    %v2778 = vunpack.c.l.s8.bf16 %v1344
    %v2779 = vunpack.c.l.s8.bf16 %v1345
    %v2780 = vunpack.c.h.s8.bf16 %v1344
    %v2781 = vunpack.c.h.s8.bf16 %v1345
    %v2782 = vunpack.c.l.s8.bf16 %v1346
    %v2783 = vunpack.c.l.s8.bf16 %v1347
    %v2784 = vunpack.c.h.s8.bf16 %v1346
    %v2785 = vunpack.c.h.s8.bf16 %v1347
    %v2786 = vunpack.c.l.s8.bf16 %v1348
    %v2787 = vunpack.c.l.s8.bf16 %v1349
    %v2788 = vunpack.c.h.s8.bf16 %v1348
    %v2789 = vunpack.c.h.s8.bf16 %v1349
    %v2790 = vunpack.c.l.s8.bf16 %v1350
    %v2791 = vunpack.c.l.s8.bf16 %v1351
    %v2792 = vunpack.c.h.s8.bf16 %v1350
    %v2793 = vunpack.c.h.s8.bf16 %v1351
    %v2794 = vunpack.c.l.s8.bf16 %v1352
    %v2795 = vunpack.c.l.s8.bf16 %v1353
    %v2796 = vunpack.c.h.s8.bf16 %v1352
    %v2797 = vunpack.c.h.s8.bf16 %v1353
    %v2798 = vunpack.c.l.s8.bf16 %v1354
    %v2799 = vunpack.c.l.s8.bf16 %v1355
    %v2800 = vunpack.c.h.s8.bf16 %v1354
    %v2801 = vunpack.c.h.s8.bf16 %v1355
    %v2802 = vunpack.c.l.s8.bf16 %v1356
    %v2803 = vunpack.c.l.s8.bf16 %v1357
    %v2804 = vunpack.c.h.s8.bf16 %v1356
    %v2805 = vunpack.c.h.s8.bf16 %v1357
    %v2806 = vunpack.c.l.s8.bf16 %v1358
    %v2807 = vunpack.c.l.s8.bf16 %v1359
    %v2808 = vunpack.c.h.s8.bf16 %v1358
    %v2809 = vunpack.c.h.s8.bf16 %v1359
    %v2810 = vunpack.c.l.s8.bf16 %v1360
    %v2811 = vunpack.c.l.s8.bf16 %v1361
    %v2812 = vunpack.c.h.s8.bf16 %v1360
    %v2813 = vunpack.c.h.s8.bf16 %v1361
    %v2814 = vunpack.c.l.s8.bf16 %v1362
    %v2815 = vunpack.c.l.s8.bf16 %v1363
    %v2816 = vunpack.c.h.s8.bf16 %v1362
    %v2817 = vunpack.c.h.s8.bf16 %v1363
    %v2818 = vunpack.c.l.s8.bf16 %v1364
    %v2819 = vunpack.c.l.s8.bf16 %v1365
    %v2820 = vunpack.c.h.s8.bf16 %v1364
    %v2821 = vunpack.c.h.s8.bf16 %v1365
    %v2822 = vunpack.c.l.s8.bf16 %v1366
    %v2823 = vunpack.c.l.s8.bf16 %v1367
    %v2824 = vunpack.c.h.s8.bf16 %v1366
    %v2825 = vunpack.c.h.s8.bf16 %v1367
    %v2826 = vunpack.c.l.s8.bf16 %v1368
    %v2827 = vunpack.c.l.s8.bf16 %v1369
    %v2828 = vunpack.c.h.s8.bf16 %v1368
    %v2829 = vunpack.c.h.s8.bf16 %v1369
    %v2830 = vunpack.c.l.s8.bf16 %v1370
    %v2831 = vunpack.c.l.s8.bf16 %v1371
    %v2832 = vunpack.c.h.s8.bf16 %v1370
    %v2833 = vunpack.c.h.s8.bf16 %v1371
    %v2834 = vunpack.c.l.s8.bf16 %v1372
    %v2835 = vunpack.c.l.s8.bf16 %v1373
    %v2836 = vunpack.c.h.s8.bf16 %v1372
    %v2837 = vunpack.c.h.s8.bf16 %v1373
    %v2838 = vunpack.c.l.s8.bf16 %v1374
    %v2839 = vunpack.c.l.s8.bf16 %v1375
    %v2840 = vunpack.c.h.s8.bf16 %v1374
    %v2841 = vunpack.c.h.s8.bf16 %v1375
    %v2842 = vunpack.c.l.s8.bf16 %v1376
    %v2843 = vunpack.c.l.s8.bf16 %v1377
    %v2844 = vunpack.c.h.s8.bf16 %v1376
    %v2845 = vunpack.c.h.s8.bf16 %v1377
    %v2846 = vunpack.c.l.s8.bf16 %v1378
    %v2847 = vunpack.c.l.s8.bf16 %v1379
    %v2848 = vunpack.c.h.s8.bf16 %v1378
    %v2849 = vunpack.c.h.s8.bf16 %v1379
    %v2850 = vunpack.c.l.s8.bf16 %v1380
    %v2851 = vunpack.c.l.s8.bf16 %v1381
    %v2852 = vunpack.c.h.s8.bf16 %v1380
    %v2853 = vunpack.c.h.s8.bf16 %v1381
    %v2854 = vunpack.c.l.s8.bf16 %v1382
    %v2855 = vunpack.c.l.s8.bf16 %v1383
    %v2856 = vunpack.c.h.s8.bf16 %v1382
    %v2857 = vunpack.c.h.s8.bf16 %v1383
    %v2858 = vunpack.c.l.s8.bf16 %v1384
    %v2859 = vunpack.c.l.s8.bf16 %v1385
    %v2860 = vunpack.c.h.s8.bf16 %v1384
    %v2861 = vunpack.c.h.s8.bf16 %v1385
    %v2862 = vunpack.c.l.s8.bf16 %v1386
    %v2863 = vunpack.c.l.s8.bf16 %v1387
    %v2864 = vunpack.c.h.s8.bf16 %v1386
    %v2865 = vunpack.c.h.s8.bf16 %v1387
    %v2866 = vunpack.c.l.s8.bf16 %v1388
    %v2867 = vunpack.c.l.s8.bf16 %v1389
    %v2868 = vunpack.c.h.s8.bf16 %v1388
    %v2869 = vunpack.c.h.s8.bf16 %v1389
    %v2870 = vunpack.c.l.s8.bf16 %v1390
    %v2871 = vunpack.c.l.s8.bf16 %v1391
    %v2872 = vunpack.c.h.s8.bf16 %v1390
    %v2873 = vunpack.c.h.s8.bf16 %v1391
    %v2874 = vunpack.c.l.s8.bf16 %v1392
    %v2875 = vunpack.c.l.s8.bf16 %v1393
    %v2876 = vunpack.c.h.s8.bf16 %v1392
    %v2877 = vunpack.c.h.s8.bf16 %v1393
    %v2878 = vunpack.c.l.s8.bf16 %v1394
    %v2879 = vunpack.c.l.s8.bf16 %v1395
    %v2880 = vunpack.c.h.s8.bf16 %v1394
    %v2881 = vunpack.c.h.s8.bf16 %v1395
    %v2882 = vunpack.c.l.s8.bf16 %v1396
    %v2883 = vunpack.c.l.s8.bf16 %v1397
    %v2884 = vunpack.c.h.s8.bf16 %v1396
    %v2885 = vunpack.c.h.s8.bf16 %v1397
    %v2886 = vunpack.c.l.s8.bf16 %v1398
    %v2887 = vunpack.c.l.s8.bf16 %v1399
    %v2888 = vunpack.c.h.s8.bf16 %v1398
    %v2889 = vunpack.c.h.s8.bf16 %v1399
    %v2890 = vunpack.c.l.s8.bf16 %v1400
    %v2891 = vunpack.c.l.s8.bf16 %v1401
    %v2892 = vunpack.c.h.s8.bf16 %v1400
    %v2893 = vunpack.c.h.s8.bf16 %v1401
    %v2894 = vunpack.c.l.s8.bf16 %v1402
    %v2895 = vunpack.c.l.s8.bf16 %v1403
    %v2896 = vunpack.c.h.s8.bf16 %v1402
    %v2897 = vunpack.c.h.s8.bf16 %v1403
    %v2898 = vunpack.c.l.s8.bf16 %v1404
    %v2899 = vunpack.c.l.s8.bf16 %v1405
    %v2900 = vunpack.c.h.s8.bf16 %v1404
    %v2901 = vunpack.c.h.s8.bf16 %v1405
    %v2902 = vunpack.c.l.s8.bf16 %v1406
    %v2903 = vunpack.c.l.s8.bf16 %v1407
    %v2904 = vunpack.c.h.s8.bf16 %v1406
    %v2905 = vunpack.c.h.s8.bf16 %v1407
    %v2906 = vunpack.c.l.s8.bf16 %v1408
    %v2907 = vunpack.c.l.s8.bf16 %v1409
    %v2908 = vunpack.c.h.s8.bf16 %v1408
    %v2909 = vunpack.c.h.s8.bf16 %v1409
    %v2910 = vunpack.c.l.s8.bf16 %v1410
    %v2911 = vunpack.c.l.s8.bf16 %v1411
    %v2912 = vunpack.c.h.s8.bf16 %v1410
    %v2913 = vunpack.c.h.s8.bf16 %v1411
    %v2914 = vunpack.c.l.s8.bf16 %v1412
    %v2915 = vunpack.c.l.s8.bf16 %v1413
    %v2916 = vunpack.c.h.s8.bf16 %v1412
    %v2917 = vunpack.c.h.s8.bf16 %v1413
    %v2918 = vunpack.c.l.s8.bf16 %v1414
    %v2919 = vunpack.c.l.s8.bf16 %v1415
    %v2920 = vunpack.c.h.s8.bf16 %v1414
    %v2921 = vunpack.c.h.s8.bf16 %v1415
    %v2922 = vunpack.c.l.s8.bf16 %v1416
    %v2923 = vunpack.c.l.s8.bf16 %v1417
    %v2924 = vunpack.c.h.s8.bf16 %v1416
    %v2925 = vunpack.c.h.s8.bf16 %v1417
    %v2926 = vunpack.c.l.s8.bf16 %v1418
    %v2927 = vunpack.c.l.s8.bf16 %v1419
    %v2928 = vunpack.c.h.s8.bf16 %v1418
    %v2929 = vunpack.c.h.s8.bf16 %v1419
    %v2930 = vunpack.c.l.s8.bf16 %v1420
    %v2931 = vunpack.c.l.s8.bf16 %v1421
    %v2932 = vunpack.c.h.s8.bf16 %v1420
    %v2933 = vunpack.c.h.s8.bf16 %v1421
    %v2934 = vunpack.c.l.s8.bf16 %v1422
    %v2935 = vunpack.c.l.s8.bf16 %v1423
    %v2936 = vunpack.c.h.s8.bf16 %v1422
    %v2937 = vunpack.c.h.s8.bf16 %v1423
    %v2938 = vunpack.c.l.s8.bf16 %v1424
    %v2939 = vunpack.c.l.s8.bf16 %v1425
    %v2940 = vunpack.c.h.s8.bf16 %v1424
    %v2941 = vunpack.c.h.s8.bf16 %v1425
    %v2942 = vunpack.c.l.s8.bf16 %v1426
    %v2943 = vunpack.c.l.s8.bf16 %v1427
    %v2944 = vunpack.c.h.s8.bf16 %v1426
    %v2945 = vunpack.c.h.s8.bf16 %v1427
    %v2946 = vunpack.c.l.s8.bf16 %v1428
    %v2947 = vunpack.c.l.s8.bf16 %v1429
    %v2948 = vunpack.c.h.s8.bf16 %v1428
    %v2949 = vunpack.c.h.s8.bf16 %v1429
    %v2950 = vunpack.c.l.s8.bf16 %v1430
    %v2951 = vunpack.c.l.s8.bf16 %v1431
    %v2952 = vunpack.c.h.s8.bf16 %v1430
    %v2953 = vunpack.c.h.s8.bf16 %v1431
    %v2954 = vunpack.c.l.s8.bf16 %v1432
    %v2955 = vunpack.c.l.s8.bf16 %v1433
    %v2956 = vunpack.c.h.s8.bf16 %v1432
    %v2957 = vunpack.c.h.s8.bf16 %v1433
    %v2958 = vunpack.c.l.s8.bf16 %v1434
    %v2959 = vunpack.c.l.s8.bf16 %v1435
    %v2960 = vunpack.c.h.s8.bf16 %v1434
    %v2961 = vunpack.c.h.s8.bf16 %v1435
    %v2962 = vunpack.c.l.s8.bf16 %v1436
    %v2963 = vunpack.c.l.s8.bf16 %v1437
    %v2964 = vunpack.c.h.s8.bf16 %v1436
    %v2965 = vunpack.c.h.s8.bf16 %v1437
    %v2966 = vunpack.c.l.s8.bf16 %v1438
    %v2967 = vunpack.c.l.s8.bf16 %v1439
    %v2968 = vunpack.c.h.s8.bf16 %v1438
    %v2969 = vunpack.c.h.s8.bf16 %v1439
    %v2970 = vunpack.c.l.s8.bf16 %v1440
    %v2971 = vunpack.c.l.s8.bf16 %v1441
    %v2972 = vunpack.c.h.s8.bf16 %v1440
    %v2973 = vunpack.c.h.s8.bf16 %v1441
    %v2974 = vunpack.c.l.s8.bf16 %v1442
    %v2975 = vunpack.c.l.s8.bf16 %v1443
    %v2976 = vunpack.c.h.s8.bf16 %v1442
    %v2977 = vunpack.c.h.s8.bf16 %v1443
    %v2978 = vunpack.c.l.s8.bf16 %v1444
    %v2979 = vunpack.c.l.s8.bf16 %v1445
    %v2980 = vunpack.c.h.s8.bf16 %v1444
    %v2981 = vunpack.c.h.s8.bf16 %v1445
    %v2982 = vunpack.c.l.s8.bf16 %v1446
    %v2983 = vunpack.c.l.s8.bf16 %v1447
    %v2984 = vunpack.c.h.s8.bf16 %v1446
    %v2985 = vunpack.c.h.s8.bf16 %v1447
    %v2986 = vunpack.c.l.s8.bf16 %v1448
    %v2987 = vunpack.c.l.s8.bf16 %v1449
    %v2988 = vunpack.c.h.s8.bf16 %v1448
    %v2989 = vunpack.c.h.s8.bf16 %v1449
    %v2990 = vunpack.c.l.s8.bf16 %v1450
    %v2991 = vunpack.c.l.s8.bf16 %v1451
    %v2992 = vunpack.c.h.s8.bf16 %v1450
    %v2993 = vunpack.c.h.s8.bf16 %v1451
    %v2994 = vunpack.c.l.s8.bf16 %v1452
    %v2995 = vunpack.c.l.s8.bf16 %v1453
    %v2996 = vunpack.c.h.s8.bf16 %v1452
    %v2997 = vunpack.c.h.s8.bf16 %v1453
    %v2998 = vunpack.c.l.s8.bf16 %v1454
    %v2999 = vunpack.c.l.s8.bf16 %v1455
    %v3000 = vunpack.c.h.s8.bf16 %v1454
    %v3001 = vunpack.c.h.s8.bf16 %v1455
    %v3002 = vunpack.c.l.s8.bf16 %v1456
    %v3003 = vunpack.c.l.s8.bf16 %v1457
    %v3004 = vunpack.c.h.s8.bf16 %v1456
    %v3005 = vunpack.c.h.s8.bf16 %v1457
    %v3006 = vunpack.c.l.s8.bf16 %v1458
    %v3007 = vunpack.c.l.s8.bf16 %v1459
    %v3008 = vunpack.c.h.s8.bf16 %v1458
    %v3009 = vunpack.c.h.s8.bf16 %v1459
    %v3010 = vunpack.c.l.s8.bf16 %v1460
    %v3011 = vunpack.c.l.s8.bf16 %v1461
    %v3012 = vunpack.c.h.s8.bf16 %v1460
    %v3013 = vunpack.c.h.s8.bf16 %v1461
    %v3014 = vunpack.c.l.s8.bf16 %v1462
    %v3015 = vunpack.c.l.s8.bf16 %v1463
    %v3016 = vunpack.c.h.s8.bf16 %v1462
    %v3017 = vunpack.c.h.s8.bf16 %v1463
    %v3018 = vunpack.c.l.s8.bf16 %v1464
    %v3019 = vunpack.c.l.s8.bf16 %v1465
    %v3020 = vunpack.c.h.s8.bf16 %v1464
    %v3021 = vunpack.c.h.s8.bf16 %v1465
    %v3022 = vunpack.c.l.s8.bf16 %v1466
    %v3023 = vunpack.c.l.s8.bf16 %v1467
    %v3024 = vunpack.c.h.s8.bf16 %v1466
    %v3025 = vunpack.c.h.s8.bf16 %v1467
    %v3026 = vunpack.c.l.s8.bf16 %v1468
    %v3027 = vunpack.c.l.s8.bf16 %v1469
    %v3028 = vunpack.c.h.s8.bf16 %v1468
    %v3029 = vunpack.c.h.s8.bf16 %v1469
    %v3030 = vunpack.c.l.s8.bf16 %v1470
    %v3031 = vunpack.c.l.s8.bf16 %v1471
    %v3032 = vunpack.c.h.s8.bf16 %v1470
    %v3033 = vunpack.c.h.s8.bf16 %v1471
    %v3034 = vunpack.c.l.s8.bf16 %v1472
    %v3035 = vunpack.c.l.s8.bf16 %v1473
    %v3036 = vunpack.c.h.s8.bf16 %v1472
    %v3037 = vunpack.c.h.s8.bf16 %v1473
    %v3038 = vunpack.c.l.s8.bf16 %v1474
    %v3039 = vunpack.c.l.s8.bf16 %v1475
    %v3040 = vunpack.c.h.s8.bf16 %v1474
    %v3041 = vunpack.c.h.s8.bf16 %v1475
    %v3042 = vunpack.c.l.s8.bf16 %v1476
    %v3043 = vunpack.c.l.s8.bf16 %v1477
    %v3044 = vunpack.c.h.s8.bf16 %v1476
    %v3045 = vunpack.c.h.s8.bf16 %v1477
    %v3046 = vunpack.c.l.s8.bf16 %v1478
    %v3047 = vunpack.c.l.s8.bf16 %v1479
    %v3048 = vunpack.c.h.s8.bf16 %v1478
    %v3049 = vunpack.c.h.s8.bf16 %v1479
    %v3050 = vunpack.c.l.s8.bf16 %v1480
    %v3051 = vunpack.c.l.s8.bf16 %v1481
    %v3052 = vunpack.c.h.s8.bf16 %v1480
    %v3053 = vunpack.c.h.s8.bf16 %v1481
    %v3054 = vunpack.c.l.s8.bf16 %v1482
    %v3055 = vunpack.c.l.s8.bf16 %v1483
    %v3056 = vunpack.c.h.s8.bf16 %v1482
    %v3057 = vunpack.c.h.s8.bf16 %v1483
    %v3058 = vunpack.c.l.s8.bf16 %v1484
    %v3059 = vunpack.c.l.s8.bf16 %v1485
    %v3060 = vunpack.c.h.s8.bf16 %v1484
    %v3061 = vunpack.c.h.s8.bf16 %v1485
    %v3062 = vunpack.c.l.s8.bf16 %v1486
    %v3063 = vunpack.c.l.s8.bf16 %v1487
    %v3064 = vunpack.c.h.s8.bf16 %v1486
    %v3065 = vunpack.c.h.s8.bf16 %v1487
    %v3066 = vunpack.c.l.s8.bf16 %v1488
    %v3067 = vunpack.c.l.s8.bf16 %v1489
    %v3068 = vunpack.c.h.s8.bf16 %v1488
    %v3069 = vunpack.c.h.s8.bf16 %v1489
    %v3070 = vunpack.c.l.s8.bf16 %v1490
    %v3071 = vunpack.c.l.s8.bf16 %v1491
    %v3072 = vunpack.c.h.s8.bf16 %v1490
    %v3073 = vunpack.c.h.s8.bf16 %v1491
    %v3074 = vunpack.c.l.s8.bf16 %v1492
    %v3075 = vunpack.c.l.s8.bf16 %v1493
    %v3076 = vunpack.c.h.s8.bf16 %v1492
    %v3077 = vunpack.c.h.s8.bf16 %v1493
    %v3078 = vunpack.c.l.s8.bf16 %v1494
    %v3079 = vunpack.c.l.s8.bf16 %v1495
    %v3080 = vunpack.c.h.s8.bf16 %v1494
    %v3081 = vunpack.c.h.s8.bf16 %v1495
    %v3082 = vunpack.c.l.s8.bf16 %v1496
    %v3083 = vunpack.c.l.s8.bf16 %v1497
    %v3084 = vunpack.c.h.s8.bf16 %v1496
    %v3085 = vunpack.c.h.s8.bf16 %v1497
    %v3086 = vunpack.c.l.s8.bf16 %v1498
    %v3087 = vunpack.c.l.s8.bf16 %v1499
    %v3088 = vunpack.c.h.s8.bf16 %v1498
    %v3089 = vunpack.c.h.s8.bf16 %v1499
    %v3090 = vunpack.c.l.s8.bf16 %v1500
    %v3091 = vunpack.c.l.s8.bf16 %v1501
    %v3092 = vunpack.c.h.s8.bf16 %v1500
    %v3093 = vunpack.c.h.s8.bf16 %v1501
    %v3094 = vunpack.c.l.s8.bf16 %v1502
    %v3095 = vunpack.c.l.s8.bf16 %v1503
    %v3096 = vunpack.c.h.s8.bf16 %v1502
    %v3097 = vunpack.c.h.s8.bf16 %v1503
    %v3098 = vunpack.c.l.s8.bf16 %v1504
    %v3099 = vunpack.c.l.s8.bf16 %v1505
    %v3100 = vunpack.c.h.s8.bf16 %v1504
    %v3101 = vunpack.c.h.s8.bf16 %v1505
    %v3102 = vunpack.c.l.s8.bf16 %v1506
    %v3103 = vunpack.c.l.s8.bf16 %v1507
    %v3104 = vunpack.c.h.s8.bf16 %v1506
    %v3105 = vunpack.c.h.s8.bf16 %v1507
    %v3106 = vunpack.c.l.s8.bf16 %v1508
    %v3107 = vunpack.c.l.s8.bf16 %v1509
    %v3108 = vunpack.c.h.s8.bf16 %v1508
    %v3109 = vunpack.c.h.s8.bf16 %v1509
    %v3110 = vunpack.c.l.s8.bf16 %v1510
    %v3111 = vunpack.c.l.s8.bf16 %v1511
    %v3112 = vunpack.c.h.s8.bf16 %v1510
    %v3113 = vunpack.c.h.s8.bf16 %v1511
    %v3114 = vunpack.c.l.s8.bf16 %v1512
    %v3115 = vunpack.c.l.s8.bf16 %v1513
    %v3116 = vunpack.c.h.s8.bf16 %v1512
    %v3117 = vunpack.c.h.s8.bf16 %v1513
    %v3118 = vunpack.c.l.s8.bf16 %v1514
    %v3119 = vunpack.c.l.s8.bf16 %v1515
    %v3120 = vunpack.c.h.s8.bf16 %v1514
    %v3121 = vunpack.c.h.s8.bf16 %v1515
    %v3122 = vunpack.c.l.s8.bf16 %v1516
    %v3123 = vunpack.c.l.s8.bf16 %v1517
    %v3124 = vunpack.c.h.s8.bf16 %v1516
    %v3125 = vunpack.c.h.s8.bf16 %v1517
    %v3126 = vunpack.c.l.s8.bf16 %v1518
    %v3127 = vunpack.c.l.s8.bf16 %v1519
    %v3128 = vunpack.c.h.s8.bf16 %v1518
    %v3129 = vunpack.c.h.s8.bf16 %v1519
    %v3130 = vunpack.c.l.s8.bf16 %v1520
    %v3131 = vunpack.c.l.s8.bf16 %v1521
    %v3132 = vunpack.c.h.s8.bf16 %v1520
    %v3133 = vunpack.c.h.s8.bf16 %v1521
    %v3134 = vunpack.c.l.s8.bf16 %v1522
    %v3135 = vunpack.c.l.s8.bf16 %v1523
    %v3136 = vunpack.c.h.s8.bf16 %v1522
    %v3137 = vunpack.c.h.s8.bf16 %v1523
    %v3138 = vunpack.c.l.s8.bf16 %v1524
    %v3139 = vunpack.c.l.s8.bf16 %v1525
    %v3140 = vunpack.c.h.s8.bf16 %v1524
    %v3141 = vunpack.c.h.s8.bf16 %v1525
    %v3142 = vunpack.c.l.s8.bf16 %v1526
    %v3143 = vunpack.c.l.s8.bf16 %v1527
    %v3144 = vunpack.c.h.s8.bf16 %v1526
    %v3145 = vunpack.c.h.s8.bf16 %v1527
    %v3146 = vunpack.c.l.s8.bf16 %v1528
    %v3147 = vunpack.c.l.s8.bf16 %v1529
    %v3148 = vunpack.c.h.s8.bf16 %v1528
    %v3149 = vunpack.c.h.s8.bf16 %v1529
    %v3150 = vunpack.c.l.s8.bf16 %v1530
    %v3151 = vunpack.c.l.s8.bf16 %v1531
    %v3152 = vunpack.c.h.s8.bf16 %v1530
    %v3153 = vunpack.c.h.s8.bf16 %v1531
    %v3154 = vunpack.c.l.s8.bf16 %v1532
    %v3155 = vunpack.c.l.s8.bf16 %v1533
    %v3156 = vunpack.c.h.s8.bf16 %v1532
    %v3157 = vunpack.c.h.s8.bf16 %v1533
    %v3158 = vunpack.c.l.s8.bf16 %v1534
    %v3159 = vunpack.c.l.s8.bf16 %v1535
    %v3160 = vunpack.c.h.s8.bf16 %v1534
    %v3161 = vunpack.c.h.s8.bf16 %v1535
    %v3162 = vunpack.c.l.s8.bf16 %v1536
    %v3163 = vunpack.c.l.s8.bf16 %v1537
    %v3164 = vunpack.c.h.s8.bf16 %v1536
    %v3165 = vunpack.c.h.s8.bf16 %v1537
    %v3166 = vunpack.c.l.s8.bf16 %v1538
    %v3167 = vunpack.c.l.s8.bf16 %v1539
    %v3168 = vunpack.c.h.s8.bf16 %v1538
    %v3169 = vunpack.c.h.s8.bf16 %v1539
    %v3170 = vunpack.c.l.s8.bf16 %v1540
    %v3171 = vunpack.c.l.s8.bf16 %v1541
    %v3172 = vunpack.c.h.s8.bf16 %v1540
    %v3173 = vunpack.c.h.s8.bf16 %v1541
    %v3174 = vunpack.c.l.s8.bf16 %v1542
    %v3175 = vunpack.c.l.s8.bf16 %v1543
    %v3176 = vunpack.c.h.s8.bf16 %v1542
    %v3177 = vunpack.c.h.s8.bf16 %v1543
    %v3178 = vunpack.c.l.s8.bf16 %v1544
    %v3179 = vunpack.c.l.s8.bf16 %v1545
    %v3180 = vunpack.c.h.s8.bf16 %v1544
    %v3181 = vunpack.c.h.s8.bf16 %v1545
    %v3182 = vunpack.c.l.s8.bf16 %v1546
    %v3183 = vunpack.c.l.s8.bf16 %v1547
    %v3184 = vunpack.c.h.s8.bf16 %v1546
    %v3185 = vunpack.c.h.s8.bf16 %v1547
    %v3186 = vunpack.c.l.s8.bf16 %v1548
    %v3187 = vunpack.c.l.s8.bf16 %v1549
    %v3188 = vunpack.c.h.s8.bf16 %v1548
    %v3189 = vunpack.c.h.s8.bf16 %v1549
    %v3190 = vunpack.c.l.s8.bf16 %v1550
    %v3191 = vunpack.c.l.s8.bf16 %v1551
    %v3192 = vunpack.c.h.s8.bf16 %v1550
    %v3193 = vunpack.c.h.s8.bf16 %v1551
    %v3194 = vunpack.c.l.s8.bf16 %v1552
    %v3195 = vunpack.c.l.s8.bf16 %v1553
    %v3196 = vunpack.c.h.s8.bf16 %v1552
    %v3197 = vunpack.c.h.s8.bf16 %v1553
    %v3198 = vunpack.c.l.s8.bf16 %v1554
    %v3199 = vunpack.c.l.s8.bf16 %v1555
    %v3200 = vunpack.c.h.s8.bf16 %v1554
    %v3201 = vunpack.c.h.s8.bf16 %v1555
    %v3202 = vunpack.c.l.s8.bf16 %v1556
    %v3203 = vunpack.c.l.s8.bf16 %v1557
    %v3204 = vunpack.c.h.s8.bf16 %v1556
    %v3205 = vunpack.c.h.s8.bf16 %v1557
    %v3206 = vunpack.c.l.s8.bf16 %v1558
    %v3207 = vunpack.c.l.s8.bf16 %v1559
    %v3208 = vunpack.c.h.s8.bf16 %v1558
    %v3209 = vunpack.c.h.s8.bf16 %v1559
    %v3210 = vunpack.c.l.s8.bf16 %v1560
    %v3211 = vunpack.c.l.s8.bf16 %v1561
    %v3212 = vunpack.c.h.s8.bf16 %v1560
    %v3213 = vunpack.c.h.s8.bf16 %v1561
    %v3214 = vunpack.c.l.s8.bf16 %v1562
    %v3215 = vunpack.c.l.s8.bf16 %v1563
    %v3216 = vunpack.c.h.s8.bf16 %v1562
    %v3217 = vunpack.c.h.s8.bf16 %v1563
    %v3218 = vunpack.c.l.s8.bf16 %v1564
    %v3219 = vunpack.c.l.s8.bf16 %v1565
    %v3220 = vunpack.c.h.s8.bf16 %v1564
    %v3221 = vunpack.c.h.s8.bf16 %v1565
    %v3222 = vunpack.c.l.s8.bf16 %v1566
    %v3223 = vunpack.c.l.s8.bf16 %v1567
    %v3224 = vunpack.c.h.s8.bf16 %v1566
    %v3225 = vunpack.c.h.s8.bf16 %v1567
    %v3226 = vunpack.c.l.s8.bf16 %v1568
    %v3227 = vunpack.c.l.s8.bf16 %v1569
    %v3228 = vunpack.c.h.s8.bf16 %v1568
    %v3229 = vunpack.c.h.s8.bf16 %v1569
    %v3230 = vunpack.c.l.s8.bf16 %v1570
    %v3231 = vunpack.c.l.s8.bf16 %v1571
    %v3232 = vunpack.c.h.s8.bf16 %v1570
    %v3233 = vunpack.c.h.s8.bf16 %v1571
    %v3234 = vunpack.c.l.s8.bf16 %v1572
    %v3235 = vunpack.c.l.s8.bf16 %v1573
    %v3236 = vunpack.c.h.s8.bf16 %v1572
    %v3237 = vunpack.c.h.s8.bf16 %v1573
    %v3238 = vunpack.c.l.s8.bf16 %v1574
    %v3239 = vunpack.c.l.s8.bf16 %v1575
    %v3240 = vunpack.c.h.s8.bf16 %v1574
    %v3241 = vunpack.c.h.s8.bf16 %v1575
    %v3242 = vunpack.c.l.s8.bf16 %v1576
    %v3243 = vunpack.c.l.s8.bf16 %v1577
    %v3244 = vunpack.c.h.s8.bf16 %v1576
    %v3245 = vunpack.c.h.s8.bf16 %v1577
    %v3246 = vunpack.c.l.s8.bf16 %v1578
    %v3247 = vunpack.c.l.s8.bf16 %v1579
    %v3248 = vunpack.c.h.s8.bf16 %v1578
    %v3249 = vunpack.c.h.s8.bf16 %v1579
    %v3250 = vunpack.c.l.s8.bf16 %v1580
    %v3251 = vunpack.c.l.s8.bf16 %v1581
    %v3252 = vunpack.c.h.s8.bf16 %v1580
    %v3253 = vunpack.c.h.s8.bf16 %v1581
    %v3254 = vunpack.c.l.s8.bf16 %v1582
    %v3255 = vunpack.c.l.s8.bf16 %v1583
    %v3256 = vunpack.c.h.s8.bf16 %v1582
    %v3257 = vunpack.c.h.s8.bf16 %v1583
    %v3258 = vunpack.c.l.s8.bf16 %v1584
    %v3259 = vunpack.c.l.s8.bf16 %v1585
    %v3260 = vunpack.c.h.s8.bf16 %v1584
    %v3261 = vunpack.c.h.s8.bf16 %v1585
    %v3262 = vunpack.c.l.s8.bf16 %v1586
    %v3263 = vunpack.c.l.s8.bf16 %v1587
    %v3264 = vunpack.c.h.s8.bf16 %v1586
    %v3265 = vunpack.c.h.s8.bf16 %v1587
    %v3266 = vunpack.c.l.s8.bf16 %v1588
    %v3267 = vunpack.c.l.s8.bf16 %v1589
    %v3268 = vunpack.c.h.s8.bf16 %v1588
    %v3269 = vunpack.c.h.s8.bf16 %v1589
    %3270 = vmatprep.subr.bf16.mxu0 %v1591
    %3271 = vmatpush1.bf16.msra.mxu0 %v1590
    %3272 = vmatprep.subr.bf16.mxu0 %v1593
    %3273 = vmatpush1.bf16.msra.mxu0 %v1592
    %3274 = vmatprep.subr.bf16.mxu0 %v1595
    %3275 = vmatpush1.bf16.msra.mxu0 %v1594
    %3276 = vmatprep.subr.bf16.mxu0 %v1597
    %3277 = vmatpush1.bf16.msra.mxu0 %v1596
    %3278 = vmatprep.subr.bf16.mxu0 %v1599
    %3279 = vmatpush1.bf16.msra.mxu0 %v1598
    %3280 = vmatprep.subr.bf16.mxu0 %v1601
    %3281 = vmatpush1.bf16.msra.mxu0 %v1600
    %3282 = vmatprep.subr.bf16.mxu0 %v1603
    %3283 = vmatpush1.bf16.msra.mxu0 %v1602
    %3284 = vmatprep.subr.bf16.mxu0 %v1605
    %3285 = vmatpush1.bf16.msra.mxu0 %v1604
    %3286 = vmatprep.subr.bf16.mxu0 %v1607
    %3287 = vmatpush1.bf16.msra.mxu0 %v1606
    %3288 = vmatprep.subr.bf16.mxu0 %v1609
    %3289 = vmatpush1.bf16.msra.mxu0 %v1608
    %3290 = vmatprep.subr.bf16.mxu0 %v1611
    %3291 = vmatpush1.bf16.msra.mxu0 %v1610
    %3292 = vmatprep.subr.bf16.mxu0 %v1613
    %3293 = vmatpush1.bf16.msra.mxu0 %v1612
    %3294 = vmatprep.subr.bf16.mxu0 %v1615
    %3295 = vmatpush1.bf16.msra.mxu0 %v1614
    %3296 = vmatprep.subr.bf16.mxu0 %v1617
    %3297 = vmatpush1.bf16.msra.mxu0 %v1616
    %3298 = vmatprep.subr.bf16.mxu0 %v1619
    %3299 = vmatpush1.bf16.msra.mxu0 %v1618
    %3300 = vmatprep.subr.bf16.mxu0 %v1621
    %3301 = vmatpush1.bf16.msra.mxu0 %v1620
    %3302 = vmatprep.mubr.bf16.mxu0 %v646
    %3303 = vmatmul.mubr.bf16.gmra.mrb[0].mxu0 %v645
    %v3304 = vpop.f32.mrb[0].mxu0
    %v3305 = vadd.f32 0.0, %v3304
    %v3306 = vpop.f32.mrb[0].mxu0
    %v3307 = vadd.f32 0.0, %v3306
    %v3308 = vpop.f32.mrb[0].mxu0
    %v3309 = vpop.f32.mrb[0].mxu0
    %3310 = vdwg.mxu0
    %3311 = vmatprep.subr.bf16.mxu0 %v1623
    %3312 = vmatpush1.bf16.msra.mxu0 %v1622
    %3313 = vmatprep.subr.bf16.mxu0 %v1625
    %3314 = vmatpush1.bf16.msra.mxu0 %v1624
    %3315 = vmatprep.subr.bf16.mxu0 %v1627
    %3316 = vmatpush1.bf16.msra.mxu0 %v1626
    %3317 = vmatprep.subr.bf16.mxu0 %v1629
    %3318 = vmatpush1.bf16.msra.mxu0 %v1628
    %3319 = vmatprep.subr.bf16.mxu0 %v1631
    %3320 = vmatpush1.bf16.msra.mxu0 %v1630
    %3321 = vmatprep.subr.bf16.mxu0 %v1633
    %3322 = vmatpush1.bf16.msra.mxu0 %v1632
    %3323 = vmatprep.subr.bf16.mxu0 %v1635
    %3324 = vmatpush1.bf16.msra.mxu0 %v1634
    %3325 = vmatprep.subr.bf16.mxu0 %v1637
    %3326 = vmatpush1.bf16.msra.mxu0 %v1636
    %3327 = vmatprep.subr.bf16.mxu0 %v1639
    %3328 = vmatpush1.bf16.msra.mxu0 %v1638
    %3329 = vmatprep.subr.bf16.mxu0 %v1641
    %3330 = vmatpush1.bf16.msra.mxu0 %v1640
    %3331 = vmatprep.subr.bf16.mxu0 %v1643
    %3332 = vmatpush1.bf16.msra.mxu0 %v1642
    %3333 = vmatprep.subr.bf16.mxu0 %v1645
    %3334 = vmatpush1.bf16.msra.mxu0 %v1644
    %3335 = vmatprep.subr.bf16.mxu0 %v1647
    %3336 = vmatpush1.bf16.msra.mxu0 %v1646
    %3337 = vmatprep.subr.bf16.mxu0 %v1649
    %3338 = vmatpush1.bf16.msra.mxu0 %v1648
    %3339 = vmatprep.subr.bf16.mxu0 %v1651
    %3340 = vmatpush1.bf16.msra.mxu0 %v1650
    %3341 = vmatprep.subr.bf16.mxu0 %v1653
    %3342 = vmatpush1.bf16.msra.mxu0 %v1652
    %3343 = vmatprep.mubr.bf16.mxu0 %v648
    %3344 = vmatmul.mubr.bf16.gmra.mrb[0].mxu0 %v647
    %v3345 = vpop.f32.mrb[0].mxu0
    %v3346 = vadd.f32 %v3305, %v3345
    %v3347 = vpop.f32.mrb[0].mxu0
    %v3348 = vadd.f32 %v3307, %v3347
    %v3349 = vpop.f32.mrb[0].mxu0
    %v3350 = vpop.f32.mrb[0].mxu0
    %3351 = vdwg.mxu0
    %3352 = vmatprep.subr.bf16.mxu0 %v1655
    %3353 = vmatpush1.bf16.msra.mxu0 %v1654
    %3354 = vmatprep.subr.bf16.mxu0 %v1657
    %3355 = vmatpush1.bf16.msra.mxu0 %v1656
    %3356 = vmatprep.subr.bf16.mxu0 %v1659
    %3357 = vmatpush1.bf16.msra.mxu0 %v1658
    %3358 = vmatprep.subr.bf16.mxu0 %v1661
    %3359 = vmatpush1.bf16.msra.mxu0 %v1660
    %3360 = vmatprep.subr.bf16.mxu0 %v1663
    %3361 = vmatpush1.bf16.msra.mxu0 %v1662
    %3362 = vmatprep.subr.bf16.mxu0 %v1665
    %3363 = vmatpush1.bf16.msra.mxu0 %v1664
    %3364 = vmatprep.subr.bf16.mxu0 %v1667
    %3365 = vmatpush1.bf16.msra.mxu0 %v1666
    %3366 = vmatprep.subr.bf16.mxu0 %v1669
    %3367 = vmatpush1.bf16.msra.mxu0 %v1668
    %3368 = vmatprep.subr.bf16.mxu0 %v1671
    %3369 = vmatpush1.bf16.msra.mxu0 %v1670
    %3370 = vmatprep.subr.bf16.mxu0 %v1673
    %3371 = vmatpush1.bf16.msra.mxu0 %v1672
    %3372 = vmatprep.subr.bf16.mxu0 %v1675
    %3373 = vmatpush1.bf16.msra.mxu0 %v1674
    %3374 = vmatprep.subr.bf16.mxu0 %v1677
    %3375 = vmatpush1.bf16.msra.mxu0 %v1676
    %3376 = vmatprep.subr.bf16.mxu0 %v1679
    %3377 = vmatpush1.bf16.msra.mxu0 %v1678
    %3378 = vmatprep.subr.bf16.mxu0 %v1681
    %3379 = vmatpush1.bf16.msra.mxu0 %v1680
    %3380 = vmatprep.subr.bf16.mxu0 %v1683
    %3381 = vmatpush1.bf16.msra.mxu0 %v1682
    %3382 = vmatprep.subr.bf16.mxu0 %v1685
    %3383 = vmatpush1.bf16.msra.mxu0 %v1684
    %3384 = vmatprep.mubr.bf16.mxu0 %v650
    %3385 = vmatmul.mubr.bf16.gmra.mrb[0].mxu0 %v649
    %v3386 = vpop.f32.mrb[0].mxu0
    %v3387 = vadd.f32 %v3346, %v3386
    %v3388 = vpop.f32.mrb[0].mxu0
    %v3389 = vadd.f32 %v3348, %v3388
    %v3390 = vpop.f32.mrb[0].mxu0
    %v3391 = vpop.f32.mrb[0].mxu0
    %3392 = vdwg.mxu0
    %3393 = vmatprep.subr.bf16.mxu0 %v1687
    %3394 = vmatpush1.bf16.msra.mxu0 %v1686
    %3395 = vmatprep.subr.bf16.mxu0 %v1689
    %3396 = vmatpush1.bf16.msra.mxu0 %v1688
    %3397 = vmatprep.subr.bf16.mxu0 %v1691
    %3398 = vmatpush1.bf16.msra.mxu0 %v1690
    %3399 = vmatprep.subr.bf16.mxu0 %v1693
    %3400 = vmatpush1.bf16.msra.mxu0 %v1692
    %3401 = vmatprep.subr.bf16.mxu0 %v1695
    %3402 = vmatpush1.bf16.msra.mxu0 %v1694
    %3403 = vmatprep.subr.bf16.mxu0 %v1697
    %3404 = vmatpush1.bf16.msra.mxu0 %v1696
    %3405 = vmatprep.subr.bf16.mxu0 %v1699
    %3406 = vmatpush1.bf16.msra.mxu0 %v1698
    %3407 = vmatprep.subr.bf16.mxu0 %v1701
    %3408 = vmatpush1.bf16.msra.mxu0 %v1700
    %3409 = vmatprep.subr.bf16.mxu0 %v1703
    %3410 = vmatpush1.bf16.msra.mxu0 %v1702
    %3411 = vmatprep.subr.bf16.mxu0 %v1705
    %3412 = vmatpush1.bf16.msra.mxu0 %v1704
    %3413 = vmatprep.subr.bf16.mxu0 %v1707
    %3414 = vmatpush1.bf16.msra.mxu0 %v1706
    %3415 = vmatprep.subr.bf16.mxu0 %v1709
    %3416 = vmatpush1.bf16.msra.mxu0 %v1708
    %3417 = vmatprep.subr.bf16.mxu0 %v1711
    %3418 = vmatpush1.bf16.msra.mxu0 %v1710
    %3419 = vmatprep.subr.bf16.mxu0 %v1713
    %3420 = vmatpush1.bf16.msra.mxu0 %v1712
    %3421 = vmatprep.subr.bf16.mxu0 %v1715
    %3422 = vmatpush1.bf16.msra.mxu0 %v1714
    %3423 = vmatprep.subr.bf16.mxu0 %v1717
    %3424 = vmatpush1.bf16.msra.mxu0 %v1716
    %3425 = vmatprep.mubr.bf16.mxu0 %v652
    %3426 = vmatmul.mubr.bf16.gmra.mrb[0].mxu0 %v651
    %v3427 = vpop.f32.mrb[0].mxu0
    %v3428 = vadd.f32 %v3387, %v3427
    %v3429 = vpop.f32.mrb[0].mxu0
    %v3430 = vadd.f32 %v3389, %v3429
    %v3431 = vpop.f32.mrb[0].mxu0
    %v3432 = vpop.f32.mrb[0].mxu0
    %3433 = vdwg.mxu0
    %3434 = vmatprep.subr.bf16.mxu0 %v1719
    %3435 = vmatpush1.bf16.msra.mxu0 %v1718
    %3436 = vmatprep.subr.bf16.mxu0 %v1721
    %3437 = vmatpush1.bf16.msra.mxu0 %v1720
    %3438 = vmatprep.subr.bf16.mxu0 %v1723
    %3439 = vmatpush1.bf16.msra.mxu0 %v1722
    %3440 = vmatprep.subr.bf16.mxu0 %v1725
    %3441 = vmatpush1.bf16.msra.mxu0 %v1724
    %3442 = vmatprep.subr.bf16.mxu0 %v1727
    %3443 = vmatpush1.bf16.msra.mxu0 %v1726
    %3444 = vmatprep.subr.bf16.mxu0 %v1729
    %3445 = vmatpush1.bf16.msra.mxu0 %v1728
    %3446 = vmatprep.subr.bf16.mxu0 %v1731
    %3447 = vmatpush1.bf16.msra.mxu0 %v1730
    %3448 = vmatprep.subr.bf16.mxu0 %v1733
    %3449 = vmatpush1.bf16.msra.mxu0 %v1732
    %3450 = vmatprep.subr.bf16.mxu0 %v1735
    %3451 = vmatpush1.bf16.msra.mxu0 %v1734
    %3452 = vmatprep.subr.bf16.mxu0 %v1737
    %3453 = vmatpush1.bf16.msra.mxu0 %v1736
    %3454 = vmatprep.subr.bf16.mxu0 %v1739
    %3455 = vmatpush1.bf16.msra.mxu0 %v1738
    %3456 = vmatprep.subr.bf16.mxu0 %v1741
    %3457 = vmatpush1.bf16.msra.mxu0 %v1740
    %3458 = vmatprep.subr.bf16.mxu0 %v1743
    %3459 = vmatpush1.bf16.msra.mxu0 %v1742
    %3460 = vmatprep.subr.bf16.mxu0 %v1745
    %3461 = vmatpush1.bf16.msra.mxu0 %v1744
    %3462 = vmatprep.subr.bf16.mxu0 %v1747
    %3463 = vmatpush1.bf16.msra.mxu0 %v1746
    %3464 = vmatprep.subr.bf16.mxu0 %v1749
    %3465 = vmatpush1.bf16.msra.mxu0 %v1748
    %3466 = vmatprep.mubr.bf16.mxu0 %v654
    %3467 = vmatmul.mubr.bf16.gmra.mrb[0].mxu0 %v653
    %v3468 = vpop.f32.mrb[0].mxu0
    %v3469 = vadd.f32 %v3428, %v3468
    %v3470 = vpop.f32.mrb[0].mxu0
    %v3471 = vadd.f32 %v3430, %v3470
    %v3472 = vpop.f32.mrb[0].mxu0
    %v3473 = vpop.f32.mrb[0].mxu0
    %3474 = vdwg.mxu0
    %3475 = vmatprep.subr.bf16.mxu0 %v1751
    %3476 = vmatpush1.bf16.msra.mxu0 %v1750
    %3477 = vmatprep.subr.bf16.mxu0 %v1753
    %3478 = vmatpush1.bf16.msra.mxu0 %v1752
    %3479 = vmatprep.subr.bf16.mxu0 %v1755
    %3480 = vmatpush1.bf16.msra.mxu0 %v1754
    %3481 = vmatprep.subr.bf16.mxu0 %v1757
    %3482 = vmatpush1.bf16.msra.mxu0 %v1756
    %3483 = vmatprep.subr.bf16.mxu0 %v1759
    %3484 = vmatpush1.bf16.msra.mxu0 %v1758
    %3485 = vmatprep.subr.bf16.mxu0 %v1761
    %3486 = vmatpush1.bf16.msra.mxu0 %v1760
    %3487 = vmatprep.subr.bf16.mxu0 %v1763
    %3488 = vmatpush1.bf16.msra.mxu0 %v1762
    %3489 = vmatprep.subr.bf16.mxu0 %v1765
    %3490 = vmatpush1.bf16.msra.mxu0 %v1764
    %3491 = vmatprep.subr.bf16.mxu0 %v1767
    %3492 = vmatpush1.bf16.msra.mxu0 %v1766
    %3493 = vmatprep.subr.bf16.mxu0 %v1769
    %3494 = vmatpush1.bf16.msra.mxu0 %v1768
    %3495 = vmatprep.subr.bf16.mxu0 %v1771
    %3496 = vmatpush1.bf16.msra.mxu0 %v1770
    %3497 = vmatprep.subr.bf16.mxu0 %v1773
    %3498 = vmatpush1.bf16.msra.mxu0 %v1772
    %3499 = vmatprep.subr.bf16.mxu0 %v1775
    %3500 = vmatpush1.bf16.msra.mxu0 %v1774
    %3501 = vmatprep.subr.bf16.mxu0 %v1777
    %3502 = vmatpush1.bf16.msra.mxu0 %v1776
    %3503 = vmatprep.subr.bf16.mxu0 %v1779
    %3504 = vmatpush1.bf16.msra.mxu0 %v1778
    %3505 = vmatprep.subr.bf16.mxu0 %v1781
    %3506 = vmatpush1.bf16.msra.mxu0 %v1780
    %3507 = vmatprep.mubr.bf16.mxu0 %v656
    %3508 = vmatmul.mubr.bf16.gmra.mrb[0].mxu0 %v655
    %v3509 = vpop.f32.mrb[0].mxu0
    %v3510 = vadd.f32 %v3469, %v3509
    %v3511 = vpop.f32.mrb[0].mxu0
    %v3512 = vadd.f32 %v3471, %v3511
    %v3513 = vpop.f32.mrb[0].mxu0
    %v3514 = vpop.f32.mrb[0].mxu0
    %3515 = vdwg.mxu0
    %3516 = vmatprep.subr.bf16.mxu0 %v1783
    %3517 = vmatpush1.bf16.msra.mxu0 %v1782
    %3518 = vmatprep.subr.bf16.mxu0 %v1785
    %3519 = vmatpush1.bf16.msra.mxu0 %v1784
    %3520 = vmatprep.subr.bf16.mxu0 %v1787
    %3521 = vmatpush1.bf16.msra.mxu0 %v1786
    %3522 = vmatprep.subr.bf16.mxu0 %v1789
    %3523 = vmatpush1.bf16.msra.mxu0 %v1788
    %3524 = vmatprep.subr.bf16.mxu0 %v1791
    %3525 = vmatpush1.bf16.msra.mxu0 %v1790
    %3526 = vmatprep.subr.bf16.mxu0 %v1793
    %3527 = vmatpush1.bf16.msra.mxu0 %v1792
    %3528 = vmatprep.subr.bf16.mxu0 %v1795
    %3529 = vmatpush1.bf16.msra.mxu0 %v1794
    %3530 = vmatprep.subr.bf16.mxu0 %v1797
    %3531 = vmatpush1.bf16.msra.mxu0 %v1796
    %3532 = vmatprep.subr.bf16.mxu0 %v1799
    %3533 = vmatpush1.bf16.msra.mxu0 %v1798
    %3534 = vmatprep.subr.bf16.mxu0 %v1801
    %3535 = vmatpush1.bf16.msra.mxu0 %v1800
    %3536 = vmatprep.subr.bf16.mxu0 %v1803
    %3537 = vmatpush1.bf16.msra.mxu0 %v1802
    %3538 = vmatprep.subr.bf16.mxu0 %v1805
    %3539 = vmatpush1.bf16.msra.mxu0 %v1804
    %3540 = vmatprep.subr.bf16.mxu0 %v1807
    %3541 = vmatpush1.bf16.msra.mxu0 %v1806
    %3542 = vmatprep.subr.bf16.mxu0 %v1809
    %3543 = vmatpush1.bf16.msra.mxu0 %v1808
    %3544 = vmatprep.subr.bf16.mxu0 %v1811
    %3545 = vmatpush1.bf16.msra.mxu0 %v1810
    %3546 = vmatprep.subr.bf16.mxu0 %v1813
    %3547 = vmatpush1.bf16.msra.mxu0 %v1812
    %3548 = vmatprep.mubr.bf16.mxu0 %v658
    %3549 = vmatmul.mubr.bf16.gmra.mrb[0].mxu0 %v657
    %v3550 = vpop.f32.mrb[0].mxu0
    %v3551 = vadd.f32 %v3510, %v3550
    %v3552 = vpop.f32.mrb[0].mxu0
    %v3553 = vadd.f32 %v3512, %v3552
    %v3554 = vpop.f32.mrb[0].mxu0
    %v3555 = vpop.f32.mrb[0].mxu0
    %3556 = vdwg.mxu0
    %3557 = vmatprep.subr.bf16.mxu0 %v1815
    %3558 = vmatpush1.bf16.msra.mxu0 %v1814
    %3559 = vmatprep.subr.bf16.mxu0 %v1817
    %3560 = vmatpush1.bf16.msra.mxu0 %v1816
    %3561 = vmatprep.subr.bf16.mxu0 %v1819
    %3562 = vmatpush1.bf16.msra.mxu0 %v1818
    %3563 = vmatprep.subr.bf16.mxu0 %v1821
    %3564 = vmatpush1.bf16.msra.mxu0 %v1820
    %3565 = vmatprep.subr.bf16.mxu0 %v1823
    %3566 = vmatpush1.bf16.msra.mxu0 %v1822
    %3567 = vmatprep.subr.bf16.mxu0 %v1825
    %3568 = vmatpush1.bf16.msra.mxu0 %v1824
    %3569 = vmatprep.subr.bf16.mxu0 %v1827
    %3570 = vmatpush1.bf16.msra.mxu0 %v1826
    %3571 = vmatprep.subr.bf16.mxu0 %v1829
    %3572 = vmatpush1.bf16.msra.mxu0 %v1828
    %3573 = vmatprep.subr.bf16.mxu0 %v1831
    %3574 = vmatpush1.bf16.msra.mxu0 %v1830
    %3575 = vmatprep.subr.bf16.mxu0 %v1833
    %3576 = vmatpush1.bf16.msra.mxu0 %v1832
    %3577 = vmatprep.subr.bf16.mxu0 %v1835
    %3578 = vmatpush1.bf16.msra.mxu0 %v1834
    %3579 = vmatprep.subr.bf16.mxu0 %v1837
    %3580 = vmatpush1.bf16.msra.mxu0 %v1836
    %3581 = vmatprep.subr.bf16.mxu0 %v1839
    %3582 = vmatpush1.bf16.msra.mxu0 %v1838
    %3583 = vmatprep.subr.bf16.mxu0 %v1841
    %3584 = vmatpush1.bf16.msra.mxu0 %v1840
    %3585 = vmatprep.subr.bf16.mxu0 %v1843
    %3586 = vmatpush1.bf16.msra.mxu0 %v1842
    %3587 = vmatprep.subr.bf16.mxu0 %v1845
    %3588 = vmatpush1.bf16.msra.mxu0 %v1844
    %3589 = vmatprep.mubr.bf16.mxu0 %v660
    %3590 = vmatmul.mubr.bf16.gmra.mrb[0].mxu0 %v659
    %v3591 = vpop.f32.mrb[0].mxu0
    %v3592 = vadd.f32 %v3551, %v3591
    %v3593 = vpop.f32.mrb[0].mxu0
    %v3594 = vadd.f32 %v3553, %v3593
    %v3595 = vpop.f32.mrb[0].mxu0
    %v3596 = vpop.f32.mrb[0].mxu0
    %3597 = vdwg.mxu0
    %3598 = vmatprep.subr.bf16.mxu0 %v1847
    %3599 = vmatpush1.bf16.msra.mxu0 %v1846
    %3600 = vmatprep.subr.bf16.mxu0 %v1849
    %3601 = vmatpush1.bf16.msra.mxu0 %v1848
    %3602 = vmatprep.subr.bf16.mxu0 %v1851
    %3603 = vmatpush1.bf16.msra.mxu0 %v1850
    %3604 = vmatprep.subr.bf16.mxu0 %v1853
    %3605 = vmatpush1.bf16.msra.mxu0 %v1852
    %3606 = vmatprep.subr.bf16.mxu0 %v1855
    %3607 = vmatpush1.bf16.msra.mxu0 %v1854
    %3608 = vmatprep.subr.bf16.mxu0 %v1857
    %3609 = vmatpush1.bf16.msra.mxu0 %v1856
    %3610 = vmatprep.subr.bf16.mxu0 %v1859
    %3611 = vmatpush1.bf16.msra.mxu0 %v1858
    %3612 = vmatprep.subr.bf16.mxu0 %v1861
    %3613 = vmatpush1.bf16.msra.mxu0 %v1860
    %3614 = vmatprep.subr.bf16.mxu0 %v1863
    %3615 = vmatpush1.bf16.msra.mxu0 %v1862
    %3616 = vmatprep.subr.bf16.mxu0 %v1865
    %3617 = vmatpush1.bf16.msra.mxu0 %v1864
    %3618 = vmatprep.subr.bf16.mxu0 %v1867
    %3619 = vmatpush1.bf16.msra.mxu0 %v1866
    %3620 = vmatprep.subr.bf16.mxu0 %v1869
    %3621 = vmatpush1.bf16.msra.mxu0 %v1868
    %3622 = vmatprep.subr.bf16.mxu0 %v1871
    %3623 = vmatpush1.bf16.msra.mxu0 %v1870
    %3624 = vmatprep.subr.bf16.mxu0 %v1873
    %3625 = vmatpush1.bf16.msra.mxu0 %v1872
    %3626 = vmatprep.subr.bf16.mxu0 %v1875
    %3627 = vmatpush1.bf16.msra.mxu0 %v1874
    %3628 = vmatprep.subr.bf16.mxu0 %v1877
    %3629 = vmatpush1.bf16.msra.mxu0 %v1876
    %3630 = vmatprep.mubr.bf16.mxu0 %v662
    %3631 = vmatmul.mubr.bf16.gmra.mrb[0].mxu0 %v661
    %v3632 = vpop.f32.mrb[0].mxu0
    %v3633 = vadd.f32 %v3592, %v3632
    %v3634 = vpop.f32.mrb[0].mxu0
    %v3635 = vadd.f32 %v3594, %v3634
    %v3636 = vpop.f32.mrb[0].mxu0
    %v3637 = vpop.f32.mrb[0].mxu0
    %3638 = vdwg.mxu0
    %3639 = vmatprep.subr.bf16.mxu0 %v1879
    %3640 = vmatpush1.bf16.msra.mxu0 %v1878
    %3641 = vmatprep.subr.bf16.mxu0 %v1881
    %3642 = vmatpush1.bf16.msra.mxu0 %v1880
    %3643 = vmatprep.subr.bf16.mxu0 %v1883
    %3644 = vmatpush1.bf16.msra.mxu0 %v1882
    %3645 = vmatprep.subr.bf16.mxu0 %v1885
    %3646 = vmatpush1.bf16.msra.mxu0 %v1884
    %3647 = vmatprep.subr.bf16.mxu0 %v1887
    %3648 = vmatpush1.bf16.msra.mxu0 %v1886
    %3649 = vmatprep.subr.bf16.mxu0 %v1889
    %3650 = vmatpush1.bf16.msra.mxu0 %v1888
    %3651 = vmatprep.subr.bf16.mxu0 %v1891
    %3652 = vmatpush1.bf16.msra.mxu0 %v1890
    %3653 = vmatprep.subr.bf16.mxu0 %v1893
    %3654 = vmatpush1.bf16.msra.mxu0 %v1892
    %3655 = vmatprep.subr.bf16.mxu0 %v1895
    %3656 = vmatpush1.bf16.msra.mxu0 %v1894
    %3657 = vmatprep.subr.bf16.mxu0 %v1897
    %3658 = vmatpush1.bf16.msra.mxu0 %v1896
    %3659 = vmatprep.subr.bf16.mxu0 %v1899
    %3660 = vmatpush1.bf16.msra.mxu0 %v1898
    %3661 = vmatprep.subr.bf16.mxu0 %v1901
    %3662 = vmatpush1.bf16.msra.mxu0 %v1900
    %3663 = vmatprep.subr.bf16.mxu0 %v1903
    %3664 = vmatpush1.bf16.msra.mxu0 %v1902
    %3665 = vmatprep.subr.bf16.mxu0 %v1905
    %3666 = vmatpush1.bf16.msra.mxu0 %v1904
    %3667 = vmatprep.subr.bf16.mxu0 %v1907
    %3668 = vmatpush1.bf16.msra.mxu0 %v1906
    %3669 = vmatprep.subr.bf16.mxu0 %v1909
    %3670 = vmatpush1.bf16.msra.mxu0 %v1908
    %3671 = vmatprep.mubr.bf16.mxu0 %v664
    %3672 = vmatmul.mubr.bf16.gmra.mrb[0].mxu0 %v663
    %v3673 = vpop.f32.mrb[0].mxu0
    %v3674 = vadd.f32 %v3633, %v3673
    %v3675 = vpop.f32.mrb[0].mxu0
    %v3676 = vadd.f32 %v3635, %v3675
    %v3677 = vpop.f32.mrb[0].mxu0
    %v3678 = vpop.f32.mrb[0].mxu0
    %3679 = vdwg.mxu0
    %3680 = vmatprep.subr.bf16.mxu0 %v1911
    %3681 = vmatpush1.bf16.msra.mxu0 %v1910
    %3682 = vmatprep.subr.bf16.mxu0 %v1913
    %3683 = vmatpush1.bf16.msra.mxu0 %v1912
    %3684 = vmatprep.subr.bf16.mxu0 %v1915
    %3685 = vmatpush1.bf16.msra.mxu0 %v1914
    %3686 = vmatprep.subr.bf16.mxu0 %v1917
    %3687 = vmatpush1.bf16.msra.mxu0 %v1916
    %3688 = vmatprep.subr.bf16.mxu0 %v1919
    %3689 = vmatpush1.bf16.msra.mxu0 %v1918
    %3690 = vmatprep.subr.bf16.mxu0 %v1921
    %3691 = vmatpush1.bf16.msra.mxu0 %v1920
    %3692 = vmatprep.subr.bf16.mxu0 %v1923
    %3693 = vmatpush1.bf16.msra.mxu0 %v1922
    %3694 = vmatprep.subr.bf16.mxu0 %v1925
    %3695 = vmatpush1.bf16.msra.mxu0 %v1924
    %3696 = vmatprep.subr.bf16.mxu0 %v1927
    %3697 = vmatpush1.bf16.msra.mxu0 %v1926
    %3698 = vmatprep.subr.bf16.mxu0 %v1929
    %3699 = vmatpush1.bf16.msra.mxu0 %v1928
    %3700 = vmatprep.subr.bf16.mxu0 %v1931
    %3701 = vmatpush1.bf16.msra.mxu0 %v1930
    %3702 = vmatprep.subr.bf16.mxu0 %v1933
    %3703 = vmatpush1.bf16.msra.mxu0 %v1932
    %3704 = vmatprep.subr.bf16.mxu0 %v1935
    %3705 = vmatpush1.bf16.msra.mxu0 %v1934
    %3706 = vmatprep.subr.bf16.mxu0 %v1937
    %3707 = vmatpush1.bf16.msra.mxu0 %v1936
    %3708 = vmatprep.subr.bf16.mxu0 %v1939
    %3709 = vmatpush1.bf16.msra.mxu0 %v1938
    %3710 = vmatprep.subr.bf16.mxu0 %v1941
    %3711 = vmatpush1.bf16.msra.mxu0 %v1940
    %3712 = vmatprep.mubr.bf16.mxu0 %v666
    %3713 = vmatmul.mubr.bf16.gmra.mrb[0].mxu0 %v665
    %v3714 = vpop.f32.mrb[0].mxu0
    %v3715 = vadd.f32 %v3674, %v3714
    %v3716 = vpop.f32.mrb[0].mxu0
    %v3717 = vadd.f32 %v3676, %v3716
    %v3718 = vpop.f32.mrb[0].mxu0
    %v3719 = vpop.f32.mrb[0].mxu0
    %3720 = vdwg.mxu0
    %3721 = vmatprep.subr.bf16.mxu0 %v1943
    %3722 = vmatpush1.bf16.msra.mxu0 %v1942
    %3723 = vmatprep.subr.bf16.mxu0 %v1945
    %3724 = vmatpush1.bf16.msra.mxu0 %v1944
    %3725 = vmatprep.subr.bf16.mxu0 %v1947
    %3726 = vmatpush1.bf16.msra.mxu0 %v1946
    %3727 = vmatprep.subr.bf16.mxu0 %v1949
    %3728 = vmatpush1.bf16.msra.mxu0 %v1948
    %3729 = vmatprep.subr.bf16.mxu0 %v1951
    %3730 = vmatpush1.bf16.msra.mxu0 %v1950
    %3731 = vmatprep.subr.bf16.mxu0 %v1953
    %3732 = vmatpush1.bf16.msra.mxu0 %v1952
    %3733 = vmatprep.subr.bf16.mxu0 %v1955
    %3734 = vmatpush1.bf16.msra.mxu0 %v1954
    %3735 = vmatprep.subr.bf16.mxu0 %v1957
    %3736 = vmatpush1.bf16.msra.mxu0 %v1956
    %3737 = vmatprep.subr.bf16.mxu0 %v1959
    %3738 = vmatpush1.bf16.msra.mxu0 %v1958
    %3739 = vmatprep.subr.bf16.mxu0 %v1961
    %3740 = vmatpush1.bf16.msra.mxu0 %v1960
    %3741 = vmatprep.subr.bf16.mxu0 %v1963
    %3742 = vmatpush1.bf16.msra.mxu0 %v1962
    %3743 = vmatprep.subr.bf16.mxu0 %v1965
    %3744 = vmatpush1.bf16.msra.mxu0 %v1964
    %3745 = vmatprep.subr.bf16.mxu0 %v1967
    %3746 = vmatpush1.bf16.msra.mxu0 %v1966
    %3747 = vmatprep.subr.bf16.mxu0 %v1969
    %3748 = vmatpush1.bf16.msra.mxu0 %v1968
    %3749 = vmatprep.subr.bf16.mxu0 %v1971
    %3750 = vmatpush1.bf16.msra.mxu0 %v1970
    %3751 = vmatprep.subr.bf16.mxu0 %v1973
    %3752 = vmatpush1.bf16.msra.mxu0 %v1972
    %3753 = vmatprep.mubr.bf16.mxu0 %v668
    %3754 = vmatmul.mubr.bf16.gmra.mrb[0].mxu0 %v667
    %v3755 = vpop.f32.mrb[0].mxu0
    %v3756 = vadd.f32 %v3715, %v3755
    %v3757 = vpop.f32.mrb[0].mxu0
    %v3758 = vadd.f32 %v3717, %v3757
    %v3759 = vpop.f32.mrb[0].mxu0
    %v3760 = vpop.f32.mrb[0].mxu0
    %3761 = vdwg.mxu0
    %3762 = vmatprep.subr.bf16.mxu0 %v1975
    %3763 = vmatpush1.bf16.msra.mxu0 %v1974
    %3764 = vmatprep.subr.bf16.mxu0 %v1977
    %3765 = vmatpush1.bf16.msra.mxu0 %v1976
    %3766 = vmatprep.subr.bf16.mxu0 %v1979
    %3767 = vmatpush1.bf16.msra.mxu0 %v1978
    %3768 = vmatprep.subr.bf16.mxu0 %v1981
    %3769 = vmatpush1.bf16.msra.mxu0 %v1980
    %3770 = vmatprep.subr.bf16.mxu0 %v1983
    %3771 = vmatpush1.bf16.msra.mxu0 %v1982
    %3772 = vmatprep.subr.bf16.mxu0 %v1985
    %3773 = vmatpush1.bf16.msra.mxu0 %v1984
    %3774 = vmatprep.subr.bf16.mxu0 %v1987
    %3775 = vmatpush1.bf16.msra.mxu0 %v1986
    %3776 = vmatprep.subr.bf16.mxu0 %v1989
    %3777 = vmatpush1.bf16.msra.mxu0 %v1988
    %3778 = vmatprep.subr.bf16.mxu0 %v1991
    %3779 = vmatpush1.bf16.msra.mxu0 %v1990
    %3780 = vmatprep.subr.bf16.mxu0 %v1993
    %3781 = vmatpush1.bf16.msra.mxu0 %v1992
    %3782 = vmatprep.subr.bf16.mxu0 %v1995
    %3783 = vmatpush1.bf16.msra.mxu0 %v1994
    %3784 = vmatprep.subr.bf16.mxu0 %v1997
    %3785 = vmatpush1.bf16.msra.mxu0 %v1996
    %3786 = vmatprep.subr.bf16.mxu0 %v1999
    %3787 = vmatpush1.bf16.msra.mxu0 %v1998
    %3788 = vmatprep.subr.bf16.mxu0 %v2001
    %3789 = vmatpush1.bf16.msra.mxu0 %v2000
    %3790 = vmatprep.subr.bf16.mxu0 %v2003
    %3791 = vmatpush1.bf16.msra.mxu0 %v2002
    %3792 = vmatprep.subr.bf16.mxu0 %v2005
    %3793 = vmatpush1.bf16.msra.mxu0 %v2004
    %3794 = vmatprep.mubr.bf16.mxu0 %v670
    %3795 = vmatmul.mubr.bf16.gmra.mrb[0].mxu0 %v669
    %v3796 = vpop.f32.mrb[0].mxu0
    %v3797 = vadd.f32 %v3756, %v3796
    %v3798 = vpop.f32.mrb[0].mxu0
    %v3799 = vadd.f32 %v3758, %v3798
    %v3800 = vpop.f32.mrb[0].mxu0
    %v3801 = vpop.f32.mrb[0].mxu0
    %3802 = vdwg.mxu0
    %3803 = vmatprep.subr.bf16.mxu0 %v2007
    %3804 = vmatpush1.bf16.msra.mxu0 %v2006
    %3805 = vmatprep.subr.bf16.mxu0 %v2009
    %3806 = vmatpush1.bf16.msra.mxu0 %v2008
    %3807 = vmatprep.subr.bf16.mxu0 %v2011
    %3808 = vmatpush1.bf16.msra.mxu0 %v2010
    %3809 = vmatprep.subr.bf16.mxu0 %v2013
    %3810 = vmatpush1.bf16.msra.mxu0 %v2012
    %3811 = vmatprep.subr.bf16.mxu0 %v2015
    %3812 = vmatpush1.bf16.msra.mxu0 %v2014
    %3813 = vmatprep.subr.bf16.mxu0 %v2017
    %3814 = vmatpush1.bf16.msra.mxu0 %v2016
    %3815 = vmatprep.subr.bf16.mxu0 %v2019
    %3816 = vmatpush1.bf16.msra.mxu0 %v2018
    %3817 = vmatprep.subr.bf16.mxu0 %v2021
    %3818 = vmatpush1.bf16.msra.mxu0 %v2020
    %3819 = vmatprep.subr.bf16.mxu0 %v2023
    %3820 = vmatpush1.bf16.msra.mxu0 %v2022
    %3821 = vmatprep.subr.bf16.mxu0 %v2025
    %3822 = vmatpush1.bf16.msra.mxu0 %v2024
    %3823 = vmatprep.subr.bf16.mxu0 %v2027
    %3824 = vmatpush1.bf16.msra.mxu0 %v2026
    %3825 = vmatprep.subr.bf16.mxu0 %v2029
    %3826 = vmatpush1.bf16.msra.mxu0 %v2028
    %3827 = vmatprep.subr.bf16.mxu0 %v2031
    %3828 = vmatpush1.bf16.msra.mxu0 %v2030
    %3829 = vmatprep.subr.bf16.mxu0 %v2033
    %3830 = vmatpush1.bf16.msra.mxu0 %v2032
    %3831 = vmatprep.subr.bf16.mxu0 %v2035
    %3832 = vmatpush1.bf16.msra.mxu0 %v2034
    %3833 = vmatprep.subr.bf16.mxu0 %v2037
    %3834 = vmatpush1.bf16.msra.mxu0 %v2036
    %3835 = vmatprep.mubr.bf16.mxu0 %v672
    %3836 = vmatmul.mubr.bf16.gmra.mrb[0].mxu0 %v671
    %v3837 = vpop.f32.mrb[0].mxu0
    %v3838 = vadd.f32 %v3797, %v3837
    %v3839 = vpop.f32.mrb[0].mxu0
    %v3840 = vadd.f32 %v3799, %v3839
    %v3841 = vpop.f32.mrb[0].mxu0
    %v3842 = vpop.f32.mrb[0].mxu0
    %3843 = vdwg.mxu0
    %3844 = vmatprep.subr.bf16.mxu0 %v2039
    %3845 = vmatpush1.bf16.msra.mxu0 %v2038
    %3846 = vmatprep.subr.bf16.mxu0 %v2041
    %3847 = vmatpush1.bf16.msra.mxu0 %v2040
    %3848 = vmatprep.subr.bf16.mxu0 %v2043
    %3849 = vmatpush1.bf16.msra.mxu0 %v2042
    %3850 = vmatprep.subr.bf16.mxu0 %v2045
    %3851 = vmatpush1.bf16.msra.mxu0 %v2044
    %3852 = vmatprep.subr.bf16.mxu0 %v2047
    %3853 = vmatpush1.bf16.msra.mxu0 %v2046
    %3854 = vmatprep.subr.bf16.mxu0 %v2049
    %3855 = vmatpush1.bf16.msra.mxu0 %v2048
    %3856 = vmatprep.subr.bf16.mxu0 %v2051
    %3857 = vmatpush1.bf16.msra.mxu0 %v2050
    %3858 = vmatprep.subr.bf16.mxu0 %v2053
    %3859 = vmatpush1.bf16.msra.mxu0 %v2052
    %3860 = vmatprep.subr.bf16.mxu0 %v2055
    %3861 = vmatpush1.bf16.msra.mxu0 %v2054
    %3862 = vmatprep.subr.bf16.mxu0 %v2057
    %3863 = vmatpush1.bf16.msra.mxu0 %v2056
    %3864 = vmatprep.subr.bf16.mxu0 %v2059
    %3865 = vmatpush1.bf16.msra.mxu0 %v2058
    %3866 = vmatprep.subr.bf16.mxu0 %v2061
    %3867 = vmatpush1.bf16.msra.mxu0 %v2060
    %3868 = vmatprep.subr.bf16.mxu0 %v2063
    %3869 = vmatpush1.bf16.msra.mxu0 %v2062
    %3870 = vmatprep.subr.bf16.mxu0 %v2065
    %3871 = vmatpush1.bf16.msra.mxu0 %v2064
    %3872 = vmatprep.subr.bf16.mxu0 %v2067
    %3873 = vmatpush1.bf16.msra.mxu0 %v2066
    %3874 = vmatprep.subr.bf16.mxu0 %v2069
    %3875 = vmatpush1.bf16.msra.mxu0 %v2068
    %3876 = vmatprep.mubr.bf16.mxu0 %v674
    %3877 = vmatmul.mubr.bf16.gmra.mrb[0].mxu0 %v673
    %v3878 = vpop.f32.mrb[0].mxu0
    %v3879 = vadd.f32 %v3838, %v3878
    %v3880 = vpop.f32.mrb[0].mxu0
    %v3881 = vadd.f32 %v3840, %v3880
    %v3882 = vpop.f32.mrb[0].mxu0
    %v3883 = vpop.f32.mrb[0].mxu0
    %3884 = vdwg.mxu0
    %3885 = vmatprep.subr.bf16.mxu0 %v2071
    %3886 = vmatpush1.bf16.msra.mxu0 %v2070
    %3887 = vmatprep.subr.bf16.mxu0 %v2073
    %3888 = vmatpush1.bf16.msra.mxu0 %v2072
    %3889 = vmatprep.subr.bf16.mxu0 %v2075
    %3890 = vmatpush1.bf16.msra.mxu0 %v2074
    %3891 = vmatprep.subr.bf16.mxu0 %v2077
    %3892 = vmatpush1.bf16.msra.mxu0 %v2076
    %3893 = vmatprep.subr.bf16.mxu0 %v2079
    %3894 = vmatpush1.bf16.msra.mxu0 %v2078
    %3895 = vmatprep.subr.bf16.mxu0 %v2081
    %3896 = vmatpush1.bf16.msra.mxu0 %v2080
    %3897 = vmatprep.subr.bf16.mxu0 %v2083
    %3898 = vmatpush1.bf16.msra.mxu0 %v2082
    %3899 = vmatprep.subr.bf16.mxu0 %v2085
    %3900 = vmatpush1.bf16.msra.mxu0 %v2084
    %3901 = vmatprep.subr.bf16.mxu0 %v2087
    %3902 = vmatpush1.bf16.msra.mxu0 %v2086
    %3903 = vmatprep.subr.bf16.mxu0 %v2089
    %3904 = vmatpush1.bf16.msra.mxu0 %v2088
    %3905 = vmatprep.subr.bf16.mxu0 %v2091
    %3906 = vmatpush1.bf16.msra.mxu0 %v2090
    %3907 = vmatprep.subr.bf16.mxu0 %v2093
    %3908 = vmatpush1.bf16.msra.mxu0 %v2092
    %3909 = vmatprep.subr.bf16.mxu0 %v2095
    %3910 = vmatpush1.bf16.msra.mxu0 %v2094
    %3911 = vmatprep.subr.bf16.mxu0 %v2097
    %3912 = vmatpush1.bf16.msra.mxu0 %v2096
    %3913 = vmatprep.subr.bf16.mxu0 %v2099
    %3914 = vmatpush1.bf16.msra.mxu0 %v2098
    %3915 = vmatprep.subr.bf16.mxu0 %v2101
    %3916 = vmatpush1.bf16.msra.mxu0 %v2100
    %3917 = vmatprep.mubr.bf16.mxu0 %v676
    %3918 = vmatmul.mubr.bf16.gmra.mrb[0].mxu0 %v675
    %v3919 = vpop.f32.mrb[0].mxu0
    %v3920 = vadd.f32 %v3879, %v3919
    %v3921 = vpop.f32.mrb[0].mxu0
    %v3922 = vadd.f32 %v3881, %v3921
    %v3923 = vpop.f32.mrb[0].mxu0
    %v3924 = vpop.f32.mrb[0].mxu0
    %3925 = vdwg.mxu0
    %3926 = vmatprep.subr.bf16.mxu0 %v2103
    %3927 = vmatpush1.bf16.msra.mxu0 %v2102
    %3928 = vmatprep.subr.bf16.mxu0 %v2105
    %3929 = vmatpush1.bf16.msra.mxu0 %v2104
    %3930 = vmatprep.subr.bf16.mxu0 %v2107
    %3931 = vmatpush1.bf16.msra.mxu0 %v2106
    %3932 = vmatprep.subr.bf16.mxu0 %v2109
    %3933 = vmatpush1.bf16.msra.mxu0 %v2108
    %3934 = vmatprep.subr.bf16.mxu0 %v2111
    %3935 = vmatpush1.bf16.msra.mxu0 %v2110
    %3936 = vmatprep.subr.bf16.mxu0 %v2113
    %3937 = vmatpush1.bf16.msra.mxu0 %v2112
    %3938 = vmatprep.subr.bf16.mxu0 %v2115
    %3939 = vmatpush1.bf16.msra.mxu0 %v2114
    %3940 = vmatprep.subr.bf16.mxu0 %v2117
    %3941 = vmatpush1.bf16.msra.mxu0 %v2116
    %3942 = vmatprep.subr.bf16.mxu0 %v2119
    %3943 = vmatpush1.bf16.msra.mxu0 %v2118
    %3944 = vmatprep.subr.bf16.mxu0 %v2121
    %3945 = vmatpush1.bf16.msra.mxu0 %v2120
    %3946 = vmatprep.subr.bf16.mxu0 %v2123
    %3947 = vmatpush1.bf16.msra.mxu0 %v2122
    %3948 = vmatprep.subr.bf16.mxu0 %v2125
    %3949 = vmatpush1.bf16.msra.mxu0 %v2124
    %3950 = vmatprep.subr.bf16.mxu0 %v2127
    %3951 = vmatpush1.bf16.msra.mxu0 %v2126
    %3952 = vmatprep.subr.bf16.mxu0 %v2129
    %3953 = vmatpush1.bf16.msra.mxu0 %v2128
    %3954 = vmatprep.subr.bf16.mxu0 %v2131
    %3955 = vmatpush1.bf16.msra.mxu0 %v2130
    %3956 = vmatprep.subr.bf16.mxu0 %v2133
    %3957 = vmatpush1.bf16.msra.mxu0 %v2132
    %3958 = vmatprep.mubr.bf16.mxu0 %v678
    %3959 = vmatmul.mubr.bf16.gmra.mrb[0].mxu0 %v677
    %v3960 = vpop.f32.mrb[0].mxu0
    %v3961 = vadd.f32 %v3920, %v3960
    %v3962 = vpop.f32.mrb[0].mxu0
    %v3963 = vadd.f32 %v3922, %v3962
    %v3964 = vpop.f32.mrb[0].mxu0
    %v3965 = vpop.f32.mrb[0].mxu0
    %3966 = vdwg.mxu0
    %3967 = vmatprep.subr.bf16.mxu0 %v2135
    %3968 = vmatpush1.bf16.msra.mxu0 %v2134
    %3969 = vmatprep.subr.bf16.mxu0 %v2137
    %3970 = vmatpush1.bf16.msra.mxu0 %v2136
    %3971 = vmatprep.subr.bf16.mxu0 %v2139
    %3972 = vmatpush1.bf16.msra.mxu0 %v2138
    %3973 = vmatprep.subr.bf16.mxu0 %v2141
    %3974 = vmatpush1.bf16.msra.mxu0 %v2140
    %3975 = vmatprep.subr.bf16.mxu0 %v2143
    %3976 = vmatpush1.bf16.msra.mxu0 %v2142
    %3977 = vmatprep.subr.bf16.mxu0 %v2145
    %3978 = vmatpush1.bf16.msra.mxu0 %v2144
    %3979 = vmatprep.subr.bf16.mxu0 %v2147
    %3980 = vmatpush1.bf16.msra.mxu0 %v2146
    %3981 = vmatprep.subr.bf16.mxu0 %v2149
    %3982 = vmatpush1.bf16.msra.mxu0 %v2148
    %3983 = vmatprep.subr.bf16.mxu0 %v2151
    %3984 = vmatpush1.bf16.msra.mxu0 %v2150
    %3985 = vmatprep.subr.bf16.mxu0 %v2153
    %3986 = vmatpush1.bf16.msra.mxu0 %v2152
    %3987 = vmatprep.subr.bf16.mxu0 %v2155
    %3988 = vmatpush1.bf16.msra.mxu0 %v2154
    %3989 = vmatprep.subr.bf16.mxu0 %v2157
    %3990 = vmatpush1.bf16.msra.mxu0 %v2156
    %3991 = vmatprep.subr.bf16.mxu0 %v2159
    %3992 = vmatpush1.bf16.msra.mxu0 %v2158
    %3993 = vmatprep.subr.bf16.mxu0 %v2161
    %3994 = vmatpush1.bf16.msra.mxu0 %v2160
    %3995 = vmatprep.subr.bf16.mxu0 %v2163
    %3996 = vmatpush1.bf16.msra.mxu0 %v2162
    %3997 = vmatprep.subr.bf16.mxu0 %v2165
    %3998 = vmatpush1.bf16.msra.mxu0 %v2164
    %3999 = vmatprep.mubr.bf16.mxu0 %v680
    %4000 = vmatmul.mubr.bf16.gmra.mrb[0].mxu0 %v679
    %v4001 = vpop.f32.mrb[0].mxu0
    %v4002 = vadd.f32 %v3961, %v4001
    %v4003 = vpop.f32.mrb[0].mxu0
    %v4004 = vadd.f32 %v3963, %v4003
    %v4005 = vpop.f32.mrb[0].mxu0
    %v4006 = vpop.f32.mrb[0].mxu0
    %4007 = vdwg.mxu0
    %4008 = vmatprep.subr.bf16.mxu0 %v2167
    %4009 = vmatpush1.bf16.msra.mxu0 %v2166
    %4010 = vmatprep.subr.bf16.mxu0 %v2169
    %4011 = vmatpush1.bf16.msra.mxu0 %v2168
    %4012 = vmatprep.subr.bf16.mxu0 %v2171
    %4013 = vmatpush1.bf16.msra.mxu0 %v2170
    %4014 = vmatprep.subr.bf16.mxu0 %v2173
    %4015 = vmatpush1.bf16.msra.mxu0 %v2172
    %4016 = vmatprep.subr.bf16.mxu0 %v2175
    %4017 = vmatpush1.bf16.msra.mxu0 %v2174
    %4018 = vmatprep.subr.bf16.mxu0 %v2177
    %4019 = vmatpush1.bf16.msra.mxu0 %v2176
    %4020 = vmatprep.subr.bf16.mxu0 %v2179
    %4021 = vmatpush1.bf16.msra.mxu0 %v2178
    %4022 = vmatprep.subr.bf16.mxu0 %v2181
    %4023 = vmatpush1.bf16.msra.mxu0 %v2180
    %4024 = vmatprep.subr.bf16.mxu0 %v2183
    %4025 = vmatpush1.bf16.msra.mxu0 %v2182
    %4026 = vmatprep.subr.bf16.mxu0 %v2185
    %4027 = vmatpush1.bf16.msra.mxu0 %v2184
    %4028 = vmatprep.subr.bf16.mxu0 %v2187
    %4029 = vmatpush1.bf16.msra.mxu0 %v2186
    %4030 = vmatprep.subr.bf16.mxu0 %v2189
    %4031 = vmatpush1.bf16.msra.mxu0 %v2188
    %4032 = vmatprep.subr.bf16.mxu0 %v2191
    %4033 = vmatpush1.bf16.msra.mxu0 %v2190
    %4034 = vmatprep.subr.bf16.mxu0 %v2193
    %4035 = vmatpush1.bf16.msra.mxu0 %v2192
    %4036 = vmatprep.subr.bf16.mxu0 %v2195
    %4037 = vmatpush1.bf16.msra.mxu0 %v2194
    %4038 = vmatprep.subr.bf16.mxu0 %v2197
    %4039 = vmatpush1.bf16.msra.mxu0 %v2196
    %4040 = vmatprep.mubr.bf16.mxu0 %v682
    %4041 = vmatmul.mubr.bf16.gmra.mrb[0].mxu0 %v681
    %v4042 = vpop.f32.mrb[0].mxu0
    %v4043 = vadd.f32 %v4002, %v4042
    %v4044 = vpop.f32.mrb[0].mxu0
    %v4045 = vadd.f32 %v4004, %v4044
    %v4046 = vpop.f32.mrb[0].mxu0
    %v4047 = vpop.f32.mrb[0].mxu0
    %4048 = vdwg.mxu0
    %4049 = vmatprep.subr.bf16.mxu0 %v2199
    %4050 = vmatpush1.bf16.msra.mxu0 %v2198
    %4051 = vmatprep.subr.bf16.mxu0 %v2201
    %4052 = vmatpush1.bf16.msra.mxu0 %v2200
    %4053 = vmatprep.subr.bf16.mxu0 %v2203
    %4054 = vmatpush1.bf16.msra.mxu0 %v2202
    %4055 = vmatprep.subr.bf16.mxu0 %v2205
    %4056 = vmatpush1.bf16.msra.mxu0 %v2204
    %4057 = vmatprep.subr.bf16.mxu0 %v2207
    %4058 = vmatpush1.bf16.msra.mxu0 %v2206
    %4059 = vmatprep.subr.bf16.mxu0 %v2209
    %4060 = vmatpush1.bf16.msra.mxu0 %v2208
    %4061 = vmatprep.subr.bf16.mxu0 %v2211
    %4062 = vmatpush1.bf16.msra.mxu0 %v2210
    %4063 = vmatprep.subr.bf16.mxu0 %v2213
    %4064 = vmatpush1.bf16.msra.mxu0 %v2212
    %4065 = vmatprep.subr.bf16.mxu0 %v2215
    %4066 = vmatpush1.bf16.msra.mxu0 %v2214
    %4067 = vmatprep.subr.bf16.mxu0 %v2217
    %4068 = vmatpush1.bf16.msra.mxu0 %v2216
    %4069 = vmatprep.subr.bf16.mxu0 %v2219
    %4070 = vmatpush1.bf16.msra.mxu0 %v2218
    %4071 = vmatprep.subr.bf16.mxu0 %v2221
    %4072 = vmatpush1.bf16.msra.mxu0 %v2220
    %4073 = vmatprep.subr.bf16.mxu0 %v2223
    %4074 = vmatpush1.bf16.msra.mxu0 %v2222
    %4075 = vmatprep.subr.bf16.mxu0 %v2225
    %4076 = vmatpush1.bf16.msra.mxu0 %v2224
    %4077 = vmatprep.subr.bf16.mxu0 %v2227
    %4078 = vmatpush1.bf16.msra.mxu0 %v2226
    %4079 = vmatprep.subr.bf16.mxu0 %v2229
    %4080 = vmatpush1.bf16.msra.mxu0 %v2228
    %4081 = vmatprep.mubr.bf16.mxu0 %v684
    %4082 = vmatmul.mubr.bf16.gmra.mrb[0].mxu0 %v683
    %v4083 = vpop.f32.mrb[0].mxu0
    %v4084 = vadd.f32 %v4043, %v4083
    %v4085 = vpop.f32.mrb[0].mxu0
    %v4086 = vadd.f32 %v4045, %v4085
    %v4087 = vpop.f32.mrb[0].mxu0
    %v4088 = vpop.f32.mrb[0].mxu0
    %4089 = vdwg.mxu0
    %4090 = vmatprep.subr.bf16.mxu0 %v2231
    %4091 = vmatpush1.bf16.msra.mxu0 %v2230
    %4092 = vmatprep.subr.bf16.mxu0 %v2233
    %4093 = vmatpush1.bf16.msra.mxu0 %v2232
    %4094 = vmatprep.subr.bf16.mxu0 %v2235
    %4095 = vmatpush1.bf16.msra.mxu0 %v2234
    %4096 = vmatprep.subr.bf16.mxu0 %v2237
    %4097 = vmatpush1.bf16.msra.mxu0 %v2236
    %4098 = vmatprep.subr.bf16.mxu0 %v2239
    %4099 = vmatpush1.bf16.msra.mxu0 %v2238
    %4100 = vmatprep.subr.bf16.mxu0 %v2241
    %4101 = vmatpush1.bf16.msra.mxu0 %v2240
    %4102 = vmatprep.subr.bf16.mxu0 %v2243
    %4103 = vmatpush1.bf16.msra.mxu0 %v2242
    %4104 = vmatprep.subr.bf16.mxu0 %v2245
    %4105 = vmatpush1.bf16.msra.mxu0 %v2244
    %4106 = vmatprep.subr.bf16.mxu0 %v2247
    %4107 = vmatpush1.bf16.msra.mxu0 %v2246
    %4108 = vmatprep.subr.bf16.mxu0 %v2249
    %4109 = vmatpush1.bf16.msra.mxu0 %v2248
    %4110 = vmatprep.subr.bf16.mxu0 %v2251
    %4111 = vmatpush1.bf16.msra.mxu0 %v2250
    %4112 = vmatprep.subr.bf16.mxu0 %v2253
    %4113 = vmatpush1.bf16.msra.mxu0 %v2252
    %4114 = vmatprep.subr.bf16.mxu0 %v2255
    %4115 = vmatpush1.bf16.msra.mxu0 %v2254
    %4116 = vmatprep.subr.bf16.mxu0 %v2257
    %4117 = vmatpush1.bf16.msra.mxu0 %v2256
    %4118 = vmatprep.subr.bf16.mxu0 %v2259
    %4119 = vmatpush1.bf16.msra.mxu0 %v2258
    %4120 = vmatprep.subr.bf16.mxu0 %v2261
    %4121 = vmatpush1.bf16.msra.mxu0 %v2260
    %4122 = vmatprep.mubr.bf16.mxu0 %v686
    %4123 = vmatmul.mubr.bf16.gmra.mrb[0].mxu0 %v685
    %v4124 = vpop.f32.mrb[0].mxu0
    %v4125 = vadd.f32 %v4084, %v4124
    %v4126 = vpop.f32.mrb[0].mxu0
    %v4127 = vadd.f32 %v4086, %v4126
    %v4128 = vpop.f32.mrb[0].mxu0
    %v4129 = vpop.f32.mrb[0].mxu0
    %4130 = vdwg.mxu0
    %4131 = vmatprep.subr.bf16.mxu0 %v2263
    %4132 = vmatpush1.bf16.msra.mxu0 %v2262
    %4133 = vmatprep.subr.bf16.mxu0 %v2265
    %4134 = vmatpush1.bf16.msra.mxu0 %v2264
    %4135 = vmatprep.subr.bf16.mxu0 %v2267
    %4136 = vmatpush1.bf16.msra.mxu0 %v2266
    %4137 = vmatprep.subr.bf16.mxu0 %v2269
    %4138 = vmatpush1.bf16.msra.mxu0 %v2268
    %4139 = vmatprep.subr.bf16.mxu0 %v2271
    %4140 = vmatpush1.bf16.msra.mxu0 %v2270
    %4141 = vmatprep.subr.bf16.mxu0 %v2273
    %4142 = vmatpush1.bf16.msra.mxu0 %v2272
    %4143 = vmatprep.subr.bf16.mxu0 %v2275
    %4144 = vmatpush1.bf16.msra.mxu0 %v2274
    %4145 = vmatprep.subr.bf16.mxu0 %v2277
    %4146 = vmatpush1.bf16.msra.mxu0 %v2276
    %4147 = vmatprep.subr.bf16.mxu0 %v2279
    %4148 = vmatpush1.bf16.msra.mxu0 %v2278
    %4149 = vmatprep.subr.bf16.mxu0 %v2281
    %4150 = vmatpush1.bf16.msra.mxu0 %v2280
    %4151 = vmatprep.subr.bf16.mxu0 %v2283
    %4152 = vmatpush1.bf16.msra.mxu0 %v2282
    %4153 = vmatprep.subr.bf16.mxu0 %v2285
    %4154 = vmatpush1.bf16.msra.mxu0 %v2284
    %4155 = vmatprep.subr.bf16.mxu0 %v2287
    %4156 = vmatpush1.bf16.msra.mxu0 %v2286
    %4157 = vmatprep.subr.bf16.mxu0 %v2289
    %4158 = vmatpush1.bf16.msra.mxu0 %v2288
    %4159 = vmatprep.subr.bf16.mxu0 %v2291
    %4160 = vmatpush1.bf16.msra.mxu0 %v2290
    %4161 = vmatprep.subr.bf16.mxu0 %v2293
    %4162 = vmatpush1.bf16.msra.mxu0 %v2292
    %4163 = vmatprep.mubr.bf16.mxu0 %v688
    %4164 = vmatmul.mubr.bf16.gmra.mrb[0].mxu0 %v687
    %v4165 = vpop.f32.mrb[0].mxu0
    %v4166 = vadd.f32 %v4125, %v4165
    %v4167 = vpop.f32.mrb[0].mxu0
    %v4168 = vadd.f32 %v4127, %v4167
    %v4169 = vpop.f32.mrb[0].mxu0
    %v4170 = vpop.f32.mrb[0].mxu0
    %4171 = vdwg.mxu0
    %4172 = vmatprep.subr.bf16.mxu0 %v2295
    %4173 = vmatpush1.bf16.msra.mxu0 %v2294
    %4174 = vmatprep.subr.bf16.mxu0 %v2297
    %4175 = vmatpush1.bf16.msra.mxu0 %v2296
    %4176 = vmatprep.subr.bf16.mxu0 %v2299
    %4177 = vmatpush1.bf16.msra.mxu0 %v2298
    %4178 = vmatprep.subr.bf16.mxu0 %v2301
    %4179 = vmatpush1.bf16.msra.mxu0 %v2300
    %4180 = vmatprep.subr.bf16.mxu0 %v2303
    %4181 = vmatpush1.bf16.msra.mxu0 %v2302
    %4182 = vmatprep.subr.bf16.mxu0 %v2305
    %4183 = vmatpush1.bf16.msra.mxu0 %v2304
    %4184 = vmatprep.subr.bf16.mxu0 %v2307
    %4185 = vmatpush1.bf16.msra.mxu0 %v2306
    %4186 = vmatprep.subr.bf16.mxu0 %v2309
    %4187 = vmatpush1.bf16.msra.mxu0 %v2308
    %4188 = vmatprep.subr.bf16.mxu0 %v2311
    %4189 = vmatpush1.bf16.msra.mxu0 %v2310
    %4190 = vmatprep.subr.bf16.mxu0 %v2313
    %4191 = vmatpush1.bf16.msra.mxu0 %v2312
    %4192 = vmatprep.subr.bf16.mxu0 %v2315
    %4193 = vmatpush1.bf16.msra.mxu0 %v2314
    %4194 = vmatprep.subr.bf16.mxu0 %v2317
    %4195 = vmatpush1.bf16.msra.mxu0 %v2316
    %4196 = vmatprep.subr.bf16.mxu0 %v2319
    %4197 = vmatpush1.bf16.msra.mxu0 %v2318
    %4198 = vmatprep.subr.bf16.mxu0 %v2321
    %4199 = vmatpush1.bf16.msra.mxu0 %v2320
    %4200 = vmatprep.subr.bf16.mxu0 %v2323
    %4201 = vmatpush1.bf16.msra.mxu0 %v2322
    %4202 = vmatprep.subr.bf16.mxu0 %v2325
    %4203 = vmatpush1.bf16.msra.mxu0 %v2324
    %4204 = vmatprep.mubr.bf16.mxu0 %v690
    %4205 = vmatmul.mubr.bf16.gmra.mrb[0].mxu0 %v689
    %v4206 = vpop.f32.mrb[0].mxu0
    %v4207 = vadd.f32 %v4166, %v4206
    %v4208 = vpop.f32.mrb[0].mxu0
    %v4209 = vadd.f32 %v4168, %v4208
    %v4210 = vpop.f32.mrb[0].mxu0
    %v4211 = vpop.f32.mrb[0].mxu0
    %4212 = vdwg.mxu0
    %4213 = vmatprep.subr.bf16.mxu0 %v2327
    %4214 = vmatpush1.bf16.msra.mxu0 %v2326
    %4215 = vmatprep.subr.bf16.mxu0 %v2329
    %4216 = vmatpush1.bf16.msra.mxu0 %v2328
    %4217 = vmatprep.subr.bf16.mxu0 %v2331
    %4218 = vmatpush1.bf16.msra.mxu0 %v2330
    %4219 = vmatprep.subr.bf16.mxu0 %v2333
    %4220 = vmatpush1.bf16.msra.mxu0 %v2332
    %4221 = vmatprep.subr.bf16.mxu0 %v2335
    %4222 = vmatpush1.bf16.msra.mxu0 %v2334
    %4223 = vmatprep.subr.bf16.mxu0 %v2337
    %4224 = vmatpush1.bf16.msra.mxu0 %v2336
    %4225 = vmatprep.subr.bf16.mxu0 %v2339
    %4226 = vmatpush1.bf16.msra.mxu0 %v2338
    %4227 = vmatprep.subr.bf16.mxu0 %v2341
    %4228 = vmatpush1.bf16.msra.mxu0 %v2340
    %4229 = vmatprep.subr.bf16.mxu0 %v2343
    %4230 = vmatpush1.bf16.msra.mxu0 %v2342
    %4231 = vmatprep.subr.bf16.mxu0 %v2345
    %4232 = vmatpush1.bf16.msra.mxu0 %v2344
    %4233 = vmatprep.subr.bf16.mxu0 %v2347
    %4234 = vmatpush1.bf16.msra.mxu0 %v2346
    %4235 = vmatprep.subr.bf16.mxu0 %v2349
    %4236 = vmatpush1.bf16.msra.mxu0 %v2348
    %4237 = vmatprep.subr.bf16.mxu0 %v2351
    %4238 = vmatpush1.bf16.msra.mxu0 %v2350
    %4239 = vmatprep.subr.bf16.mxu0 %v2353
    %4240 = vmatpush1.bf16.msra.mxu0 %v2352
    %4241 = vmatprep.subr.bf16.mxu0 %v2355
    %4242 = vmatpush1.bf16.msra.mxu0 %v2354
    %4243 = vmatprep.subr.bf16.mxu0 %v2357
    %4244 = vmatpush1.bf16.msra.mxu0 %v2356
    %4245 = vmatprep.mubr.bf16.mxu0 %v692
    %4246 = vmatmul.mubr.bf16.gmra.mrb[0].mxu0 %v691
    %v4247 = vpop.f32.mrb[0].mxu0
    %v4248 = vadd.f32 %v4207, %v4247
    %v4249 = vpop.f32.mrb[0].mxu0
    %v4250 = vadd.f32 %v4209, %v4249
    %v4251 = vpop.f32.mrb[0].mxu0
    %v4252 = vpop.f32.mrb[0].mxu0
    %4253 = vdwg.mxu0
    %4254 = vmatprep.subr.bf16.mxu0 %v2359
    %4255 = vmatpush1.bf16.msra.mxu0 %v2358
    %4256 = vmatprep.subr.bf16.mxu0 %v2361
    %4257 = vmatpush1.bf16.msra.mxu0 %v2360
    %4258 = vmatprep.subr.bf16.mxu0 %v2363
    %4259 = vmatpush1.bf16.msra.mxu0 %v2362
    %4260 = vmatprep.subr.bf16.mxu0 %v2365
    %4261 = vmatpush1.bf16.msra.mxu0 %v2364
    %4262 = vmatprep.subr.bf16.mxu0 %v2367
    %4263 = vmatpush1.bf16.msra.mxu0 %v2366
    %4264 = vmatprep.subr.bf16.mxu0 %v2369
    %4265 = vmatpush1.bf16.msra.mxu0 %v2368
    %4266 = vmatprep.subr.bf16.mxu0 %v2371
    %4267 = vmatpush1.bf16.msra.mxu0 %v2370
    %4268 = vmatprep.subr.bf16.mxu0 %v2373
    %4269 = vmatpush1.bf16.msra.mxu0 %v2372
    %4270 = vmatprep.subr.bf16.mxu0 %v2375
    %4271 = vmatpush1.bf16.msra.mxu0 %v2374
    %4272 = vmatprep.subr.bf16.mxu0 %v2377
    %4273 = vmatpush1.bf16.msra.mxu0 %v2376
    %4274 = vmatprep.subr.bf16.mxu0 %v2379
    %4275 = vmatpush1.bf16.msra.mxu0 %v2378
    %4276 = vmatprep.subr.bf16.mxu0 %v2381
    %4277 = vmatpush1.bf16.msra.mxu0 %v2380
    %4278 = vmatprep.subr.bf16.mxu0 %v2383
    %4279 = vmatpush1.bf16.msra.mxu0 %v2382
    %4280 = vmatprep.subr.bf16.mxu0 %v2385
    %4281 = vmatpush1.bf16.msra.mxu0 %v2384
    %4282 = vmatprep.subr.bf16.mxu0 %v2387
    %4283 = vmatpush1.bf16.msra.mxu0 %v2386
    %4284 = vmatprep.subr.bf16.mxu0 %v2389
    %4285 = vmatpush1.bf16.msra.mxu0 %v2388
    %4286 = vmatprep.mubr.bf16.mxu0 %v694
    %4287 = vmatmul.mubr.bf16.gmra.mrb[0].mxu0 %v693
    %v4288 = vpop.f32.mrb[0].mxu0
    %v4289 = vadd.f32 %v4248, %v4288
    %v4290 = vpop.f32.mrb[0].mxu0
    %v4291 = vadd.f32 %v4250, %v4290
    %v4292 = vpop.f32.mrb[0].mxu0
    %v4293 = vpop.f32.mrb[0].mxu0
    %4294 = vdwg.mxu0
    %4295 = vmatprep.subr.bf16.mxu0 %v2391
    %4296 = vmatpush1.bf16.msra.mxu0 %v2390
    %4297 = vmatprep.subr.bf16.mxu0 %v2393
    %4298 = vmatpush1.bf16.msra.mxu0 %v2392
    %4299 = vmatprep.subr.bf16.mxu0 %v2395
    %4300 = vmatpush1.bf16.msra.mxu0 %v2394
    %4301 = vmatprep.subr.bf16.mxu0 %v2397
    %4302 = vmatpush1.bf16.msra.mxu0 %v2396
    %4303 = vmatprep.subr.bf16.mxu0 %v2399
    %4304 = vmatpush1.bf16.msra.mxu0 %v2398
    %4305 = vmatprep.subr.bf16.mxu0 %v2401
    %4306 = vmatpush1.bf16.msra.mxu0 %v2400
    %4307 = vmatprep.subr.bf16.mxu0 %v2403
    %4308 = vmatpush1.bf16.msra.mxu0 %v2402
    %4309 = vmatprep.subr.bf16.mxu0 %v2405
    %4310 = vmatpush1.bf16.msra.mxu0 %v2404
    %4311 = vmatprep.subr.bf16.mxu0 %v2407
    %4312 = vmatpush1.bf16.msra.mxu0 %v2406
    %4313 = vmatprep.subr.bf16.mxu0 %v2409
    %4314 = vmatpush1.bf16.msra.mxu0 %v2408
    %4315 = vmatprep.subr.bf16.mxu0 %v2411
    %4316 = vmatpush1.bf16.msra.mxu0 %v2410
    %4317 = vmatprep.subr.bf16.mxu0 %v2413
    %4318 = vmatpush1.bf16.msra.mxu0 %v2412
    %4319 = vmatprep.subr.bf16.mxu0 %v2415
    %4320 = vmatpush1.bf16.msra.mxu0 %v2414
    %4321 = vmatprep.subr.bf16.mxu0 %v2417
    %4322 = vmatpush1.bf16.msra.mxu0 %v2416
    %4323 = vmatprep.subr.bf16.mxu0 %v2419
    %4324 = vmatpush1.bf16.msra.mxu0 %v2418
    %4325 = vmatprep.subr.bf16.mxu0 %v2421
    %4326 = vmatpush1.bf16.msra.mxu0 %v2420
    %4327 = vmatprep.mubr.bf16.mxu0 %v696
    %4328 = vmatmul.mubr.bf16.gmra.mrb[0].mxu0 %v695
    %v4329 = vpop.f32.mrb[0].mxu0
    %v4330 = vadd.f32 %v4289, %v4329
    %v4331 = vpop.f32.mrb[0].mxu0
    %v4332 = vadd.f32 %v4291, %v4331
    %v4333 = vpop.f32.mrb[0].mxu0
    %v4334 = vpop.f32.mrb[0].mxu0
    %4335 = vdwg.mxu0
    %4336 = vmatprep.subr.bf16.mxu0 %v2423
    %4337 = vmatpush1.bf16.msra.mxu0 %v2422
    %4338 = vmatprep.subr.bf16.mxu0 %v2425
    %4339 = vmatpush1.bf16.msra.mxu0 %v2424
    %4340 = vmatprep.subr.bf16.mxu0 %v2427
    %4341 = vmatpush1.bf16.msra.mxu0 %v2426
    %4342 = vmatprep.subr.bf16.mxu0 %v2429
    %4343 = vmatpush1.bf16.msra.mxu0 %v2428
    %4344 = vmatprep.subr.bf16.mxu0 %v2431
    %4345 = vmatpush1.bf16.msra.mxu0 %v2430
    %4346 = vmatprep.subr.bf16.mxu0 %v2433
    %4347 = vmatpush1.bf16.msra.mxu0 %v2432
    %4348 = vmatprep.subr.bf16.mxu0 %v2435
    %4349 = vmatpush1.bf16.msra.mxu0 %v2434
    %4350 = vmatprep.subr.bf16.mxu0 %v2437
    %4351 = vmatpush1.bf16.msra.mxu0 %v2436
    %4352 = vmatprep.subr.bf16.mxu0 %v2439
    %4353 = vmatpush1.bf16.msra.mxu0 %v2438
    %4354 = vmatprep.subr.bf16.mxu0 %v2441
    %4355 = vmatpush1.bf16.msra.mxu0 %v2440
    %4356 = vmatprep.subr.bf16.mxu0 %v2443
    %4357 = vmatpush1.bf16.msra.mxu0 %v2442
    %4358 = vmatprep.subr.bf16.mxu0 %v2445
    %4359 = vmatpush1.bf16.msra.mxu0 %v2444
    %4360 = vmatprep.subr.bf16.mxu0 %v2447
    %4361 = vmatpush1.bf16.msra.mxu0 %v2446
    %4362 = vmatprep.subr.bf16.mxu0 %v2449
    %4363 = vmatpush1.bf16.msra.mxu0 %v2448
    %4364 = vmatprep.subr.bf16.mxu0 %v2451
    %4365 = vmatpush1.bf16.msra.mxu0 %v2450
    %4366 = vmatprep.subr.bf16.mxu0 %v2453
    %4367 = vmatpush1.bf16.msra.mxu0 %v2452
    %4368 = vmatprep.mubr.bf16.mxu0 %v698
    %4369 = vmatmul.mubr.bf16.gmra.mrb[0].mxu0 %v697
    %v4370 = vpop.f32.mrb[0].mxu0
    %v4371 = vadd.f32 %v4330, %v4370
    %v4372 = vpop.f32.mrb[0].mxu0
    %v4373 = vadd.f32 %v4332, %v4372
    %v4374 = vpop.f32.mrb[0].mxu0
    %v4375 = vpop.f32.mrb[0].mxu0
    %4376 = vdwg.mxu0
    %4377 = vmatprep.subr.bf16.mxu0 %v2455
    %4378 = vmatpush1.bf16.msra.mxu0 %v2454
    %4379 = vmatprep.subr.bf16.mxu0 %v2457
    %4380 = vmatpush1.bf16.msra.mxu0 %v2456
    %4381 = vmatprep.subr.bf16.mxu0 %v2459
    %4382 = vmatpush1.bf16.msra.mxu0 %v2458
    %4383 = vmatprep.subr.bf16.mxu0 %v2461
    %4384 = vmatpush1.bf16.msra.mxu0 %v2460
    %4385 = vmatprep.subr.bf16.mxu0 %v2463
    %4386 = vmatpush1.bf16.msra.mxu0 %v2462
    %4387 = vmatprep.subr.bf16.mxu0 %v2465
    %4388 = vmatpush1.bf16.msra.mxu0 %v2464
    %4389 = vmatprep.subr.bf16.mxu0 %v2467
    %4390 = vmatpush1.bf16.msra.mxu0 %v2466
    %4391 = vmatprep.subr.bf16.mxu0 %v2469
    %4392 = vmatpush1.bf16.msra.mxu0 %v2468
    %4393 = vmatprep.subr.bf16.mxu0 %v2471
    %4394 = vmatpush1.bf16.msra.mxu0 %v2470
    %4395 = vmatprep.subr.bf16.mxu0 %v2473
    %4396 = vmatpush1.bf16.msra.mxu0 %v2472
    %4397 = vmatprep.subr.bf16.mxu0 %v2475
    %4398 = vmatpush1.bf16.msra.mxu0 %v2474
    %4399 = vmatprep.subr.bf16.mxu0 %v2477
    %4400 = vmatpush1.bf16.msra.mxu0 %v2476
    %4401 = vmatprep.subr.bf16.mxu0 %v2479
    %4402 = vmatpush1.bf16.msra.mxu0 %v2478
    %4403 = vmatprep.subr.bf16.mxu0 %v2481
    %4404 = vmatpush1.bf16.msra.mxu0 %v2480
    %4405 = vmatprep.subr.bf16.mxu0 %v2483
    %4406 = vmatpush1.bf16.msra.mxu0 %v2482
    %4407 = vmatprep.subr.bf16.mxu0 %v2485
    %4408 = vmatpush1.bf16.msra.mxu0 %v2484
    %4409 = vmatprep.mubr.bf16.mxu0 %v700
    %4410 = vmatmul.mubr.bf16.gmra.mrb[0].mxu0 %v699
    %v4411 = vpop.f32.mrb[0].mxu0
    %v4412 = vadd.f32 %v4371, %v4411
    %v4413 = vpop.f32.mrb[0].mxu0
    %v4414 = vadd.f32 %v4373, %v4413
    %v4415 = vpop.f32.mrb[0].mxu0
    %v4416 = vpop.f32.mrb[0].mxu0
    %4417 = vdwg.mxu0
    %4418 = vmatprep.subr.bf16.mxu0 %v2487
    %4419 = vmatpush1.bf16.msra.mxu0 %v2486
    %4420 = vmatprep.subr.bf16.mxu0 %v2489
    %4421 = vmatpush1.bf16.msra.mxu0 %v2488
    %4422 = vmatprep.subr.bf16.mxu0 %v2491
    %4423 = vmatpush1.bf16.msra.mxu0 %v2490
    %4424 = vmatprep.subr.bf16.mxu0 %v2493
    %4425 = vmatpush1.bf16.msra.mxu0 %v2492
    %4426 = vmatprep.subr.bf16.mxu0 %v2495
    %4427 = vmatpush1.bf16.msra.mxu0 %v2494
    %4428 = vmatprep.subr.bf16.mxu0 %v2497
    %4429 = vmatpush1.bf16.msra.mxu0 %v2496
    %4430 = vmatprep.subr.bf16.mxu0 %v2499
    %4431 = vmatpush1.bf16.msra.mxu0 %v2498
    %4432 = vmatprep.subr.bf16.mxu0 %v2501
    %4433 = vmatpush1.bf16.msra.mxu0 %v2500
    %4434 = vmatprep.subr.bf16.mxu0 %v2503
    %4435 = vmatpush1.bf16.msra.mxu0 %v2502
    %4436 = vmatprep.subr.bf16.mxu0 %v2505
    %4437 = vmatpush1.bf16.msra.mxu0 %v2504
    %4438 = vmatprep.subr.bf16.mxu0 %v2507
    %4439 = vmatpush1.bf16.msra.mxu0 %v2506
    %4440 = vmatprep.subr.bf16.mxu0 %v2509
    %4441 = vmatpush1.bf16.msra.mxu0 %v2508
    %4442 = vmatprep.subr.bf16.mxu0 %v2511
    %4443 = vmatpush1.bf16.msra.mxu0 %v2510
    %4444 = vmatprep.subr.bf16.mxu0 %v2513
    %4445 = vmatpush1.bf16.msra.mxu0 %v2512
    %4446 = vmatprep.subr.bf16.mxu0 %v2515
    %4447 = vmatpush1.bf16.msra.mxu0 %v2514
    %4448 = vmatprep.subr.bf16.mxu0 %v2517
    %4449 = vmatpush1.bf16.msra.mxu0 %v2516
    %4450 = vmatprep.mubr.bf16.mxu0 %v702
    %4451 = vmatmul.mubr.bf16.gmra.mrb[0].mxu0 %v701
    %v4452 = vpop.f32.mrb[0].mxu0
    %v4453 = vadd.f32 %v4412, %v4452
    %v4454 = vpop.f32.mrb[0].mxu0
    %v4455 = vadd.f32 %v4414, %v4454
    %v4456 = vpop.f32.mrb[0].mxu0
    %v4457 = vpop.f32.mrb[0].mxu0
    %4458 = vdwg.mxu0
    %4459 = vmatprep.subr.bf16.mxu0 %v2519
    %4460 = vmatpush1.bf16.msra.mxu0 %v2518
    %4461 = vmatprep.subr.bf16.mxu0 %v2521
    %4462 = vmatpush1.bf16.msra.mxu0 %v2520
    %4463 = vmatprep.subr.bf16.mxu0 %v2523
    %4464 = vmatpush1.bf16.msra.mxu0 %v2522
    %4465 = vmatprep.subr.bf16.mxu0 %v2525
    %4466 = vmatpush1.bf16.msra.mxu0 %v2524
    %4467 = vmatprep.subr.bf16.mxu0 %v2527
    %4468 = vmatpush1.bf16.msra.mxu0 %v2526
    %4469 = vmatprep.subr.bf16.mxu0 %v2529
    %4470 = vmatpush1.bf16.msra.mxu0 %v2528
    %4471 = vmatprep.subr.bf16.mxu0 %v2531
    %4472 = vmatpush1.bf16.msra.mxu0 %v2530
    %4473 = vmatprep.subr.bf16.mxu0 %v2533
    %4474 = vmatpush1.bf16.msra.mxu0 %v2532
    %4475 = vmatprep.subr.bf16.mxu0 %v2535
    %4476 = vmatpush1.bf16.msra.mxu0 %v2534
    %4477 = vmatprep.subr.bf16.mxu0 %v2537
    %4478 = vmatpush1.bf16.msra.mxu0 %v2536
    %4479 = vmatprep.subr.bf16.mxu0 %v2539
    %4480 = vmatpush1.bf16.msra.mxu0 %v2538
    %4481 = vmatprep.subr.bf16.mxu0 %v2541
    %4482 = vmatpush1.bf16.msra.mxu0 %v2540
    %4483 = vmatprep.subr.bf16.mxu0 %v2543
    %4484 = vmatpush1.bf16.msra.mxu0 %v2542
    %4485 = vmatprep.subr.bf16.mxu0 %v2545
    %4486 = vmatpush1.bf16.msra.mxu0 %v2544
    %4487 = vmatprep.subr.bf16.mxu0 %v2547
    %4488 = vmatpush1.bf16.msra.mxu0 %v2546
    %4489 = vmatprep.subr.bf16.mxu0 %v2549
    %4490 = vmatpush1.bf16.msra.mxu0 %v2548
    %4491 = vmatprep.mubr.bf16.mxu0 %v704
    %4492 = vmatmul.mubr.bf16.gmra.mrb[0].mxu0 %v703
    %v4493 = vpop.f32.mrb[0].mxu0
    %v4494 = vadd.f32 %v4453, %v4493
    %v4495 = vpop.f32.mrb[0].mxu0
    %v4496 = vadd.f32 %v4455, %v4495
    %v4497 = vpop.f32.mrb[0].mxu0
    %v4498 = vpop.f32.mrb[0].mxu0
    %4499 = vdwg.mxu0
    %4500 = vmatprep.subr.bf16.mxu0 %v2551
    %4501 = vmatpush1.bf16.msra.mxu0 %v2550
    %4502 = vmatprep.subr.bf16.mxu0 %v2553
    %4503 = vmatpush1.bf16.msra.mxu0 %v2552
    %4504 = vmatprep.subr.bf16.mxu0 %v2555
    %4505 = vmatpush1.bf16.msra.mxu0 %v2554
    %4506 = vmatprep.subr.bf16.mxu0 %v2557
    %4507 = vmatpush1.bf16.msra.mxu0 %v2556
    %4508 = vmatprep.subr.bf16.mxu0 %v2559
    %4509 = vmatpush1.bf16.msra.mxu0 %v2558
    %4510 = vmatprep.subr.bf16.mxu0 %v2561
    %4511 = vmatpush1.bf16.msra.mxu0 %v2560
    %4512 = vmatprep.subr.bf16.mxu0 %v2563
    %4513 = vmatpush1.bf16.msra.mxu0 %v2562
    %4514 = vmatprep.subr.bf16.mxu0 %v2565
    %4515 = vmatpush1.bf16.msra.mxu0 %v2564
    %4516 = vmatprep.subr.bf16.mxu0 %v2567
    %4517 = vmatpush1.bf16.msra.mxu0 %v2566
    %4518 = vmatprep.subr.bf16.mxu0 %v2569
    %4519 = vmatpush1.bf16.msra.mxu0 %v2568
    %4520 = vmatprep.subr.bf16.mxu0 %v2571
    %4521 = vmatpush1.bf16.msra.mxu0 %v2570
    %4522 = vmatprep.subr.bf16.mxu0 %v2573
    %4523 = vmatpush1.bf16.msra.mxu0 %v2572
    %4524 = vmatprep.subr.bf16.mxu0 %v2575
    %4525 = vmatpush1.bf16.msra.mxu0 %v2574
    %4526 = vmatprep.subr.bf16.mxu0 %v2577
    %4527 = vmatpush1.bf16.msra.mxu0 %v2576
    %4528 = vmatprep.subr.bf16.mxu0 %v2579
    %4529 = vmatpush1.bf16.msra.mxu0 %v2578
    %4530 = vmatprep.subr.bf16.mxu0 %v2581
    %4531 = vmatpush1.bf16.msra.mxu0 %v2580
    %4532 = vmatprep.mubr.bf16.mxu0 %v706
    %4533 = vmatmul.mubr.bf16.gmra.mrb[0].mxu0 %v705
    %v4534 = vpop.f32.mrb[0].mxu0
    %v4535 = vadd.f32 %v4494, %v4534
    %v4536 = vpop.f32.mrb[0].mxu0
    %v4537 = vadd.f32 %v4496, %v4536
    %v4538 = vpop.f32.mrb[0].mxu0
    %v4539 = vpop.f32.mrb[0].mxu0
    %4540 = vdwg.mxu0
    %4541 = vmatprep.subr.bf16.mxu0 %v2583
    %4542 = vmatpush1.bf16.msra.mxu0 %v2582
    %4543 = vmatprep.subr.bf16.mxu0 %v2585
    %4544 = vmatpush1.bf16.msra.mxu0 %v2584
    %4545 = vmatprep.subr.bf16.mxu0 %v2587
    %4546 = vmatpush1.bf16.msra.mxu0 %v2586
    %4547 = vmatprep.subr.bf16.mxu0 %v2589
    %4548 = vmatpush1.bf16.msra.mxu0 %v2588
    %4549 = vmatprep.subr.bf16.mxu0 %v2591
    %4550 = vmatpush1.bf16.msra.mxu0 %v2590
    %4551 = vmatprep.subr.bf16.mxu0 %v2593
    %4552 = vmatpush1.bf16.msra.mxu0 %v2592
    %4553 = vmatprep.subr.bf16.mxu0 %v2595
    %4554 = vmatpush1.bf16.msra.mxu0 %v2594
    %4555 = vmatprep.subr.bf16.mxu0 %v2597
    %4556 = vmatpush1.bf16.msra.mxu0 %v2596
    %4557 = vmatprep.subr.bf16.mxu0 %v2599
    %4558 = vmatpush1.bf16.msra.mxu0 %v2598
    %4559 = vmatprep.subr.bf16.mxu0 %v2601
    %4560 = vmatpush1.bf16.msra.mxu0 %v2600
    %4561 = vmatprep.subr.bf16.mxu0 %v2603
    %4562 = vmatpush1.bf16.msra.mxu0 %v2602
    %4563 = vmatprep.subr.bf16.mxu0 %v2605
    %4564 = vmatpush1.bf16.msra.mxu0 %v2604
    %4565 = vmatprep.subr.bf16.mxu0 %v2607
    %4566 = vmatpush1.bf16.msra.mxu0 %v2606
    %4567 = vmatprep.subr.bf16.mxu0 %v2609
    %4568 = vmatpush1.bf16.msra.mxu0 %v2608
    %4569 = vmatprep.subr.bf16.mxu0 %v2611
    %4570 = vmatpush1.bf16.msra.mxu0 %v2610
    %4571 = vmatprep.subr.bf16.mxu0 %v2613
    %4572 = vmatpush1.bf16.msra.mxu0 %v2612
    %4573 = vmatprep.mubr.bf16.mxu0 %v708
    %4574 = vmatmul.mubr.bf16.gmra.mrb[0].mxu0 %v707
    %v4575 = vpop.f32.mrb[0].mxu0
    %v4576 = vadd.f32 %v4535, %v4575
    %v4577 = vpop.f32.mrb[0].mxu0
    %v4578 = vadd.f32 %v4537, %v4577
    %v4579 = vpop.f32.mrb[0].mxu0
    %v4580 = vpop.f32.mrb[0].mxu0
    %4581 = vdwg.mxu0
    %4582 = vmatprep.subr.bf16.mxu0 %v2615
    %4583 = vmatpush1.bf16.msra.mxu0 %v2614
    %4584 = vmatprep.subr.bf16.mxu0 %v2617
    %4585 = vmatpush1.bf16.msra.mxu0 %v2616
    %4586 = vmatprep.subr.bf16.mxu0 %v2619
    %4587 = vmatpush1.bf16.msra.mxu0 %v2618
    %4588 = vmatprep.subr.bf16.mxu0 %v2621
    %4589 = vmatpush1.bf16.msra.mxu0 %v2620
    %4590 = vmatprep.subr.bf16.mxu0 %v2623
    %4591 = vmatpush1.bf16.msra.mxu0 %v2622
    %4592 = vmatprep.subr.bf16.mxu0 %v2625
    %4593 = vmatpush1.bf16.msra.mxu0 %v2624
    %4594 = vmatprep.subr.bf16.mxu0 %v2627
    %4595 = vmatpush1.bf16.msra.mxu0 %v2626
    %4596 = vmatprep.subr.bf16.mxu0 %v2629
    %4597 = vmatpush1.bf16.msra.mxu0 %v2628
    %4598 = vmatprep.subr.bf16.mxu0 %v2631
    %4599 = vmatpush1.bf16.msra.mxu0 %v2630
    %4600 = vmatprep.subr.bf16.mxu0 %v2633
    %4601 = vmatpush1.bf16.msra.mxu0 %v2632
    %4602 = vmatprep.subr.bf16.mxu0 %v2635
    %4603 = vmatpush1.bf16.msra.mxu0 %v2634
    %4604 = vmatprep.subr.bf16.mxu0 %v2637
    %4605 = vmatpush1.bf16.msra.mxu0 %v2636
    %4606 = vmatprep.subr.bf16.mxu0 %v2639
    %4607 = vmatpush1.bf16.msra.mxu0 %v2638
    %4608 = vmatprep.subr.bf16.mxu0 %v2641
    %4609 = vmatpush1.bf16.msra.mxu0 %v2640
    %4610 = vmatprep.subr.bf16.mxu0 %v2643
    %4611 = vmatpush1.bf16.msra.mxu0 %v2642
    %4612 = vmatprep.subr.bf16.mxu0 %v2645
    %4613 = vmatpush1.bf16.msra.mxu0 %v2644
    %4614 = vmatprep.mubr.bf16.mxu0 %v710
    %4615 = vmatmul.mubr.bf16.gmra.mrb[0].mxu0 %v709
    %v4616 = vpop.f32.mrb[0].mxu0
    %v4617 = vadd.f32 %v4576, %v4616
    %v4618 = vpop.f32.mrb[0].mxu0
    %v4619 = vadd.f32 %v4578, %v4618
    %v4620 = vpop.f32.mrb[0].mxu0
    %v4621 = vpop.f32.mrb[0].mxu0
    %4622 = vdwg.mxu0
    %4623 = vmatprep.subr.bf16.mxu0 %v2647
    %4624 = vmatpush1.bf16.msra.mxu0 %v2646
    %4625 = vmatprep.subr.bf16.mxu0 %v2649
    %4626 = vmatpush1.bf16.msra.mxu0 %v2648
    %4627 = vmatprep.subr.bf16.mxu0 %v2651
    %4628 = vmatpush1.bf16.msra.mxu0 %v2650
    %4629 = vmatprep.subr.bf16.mxu0 %v2653
    %4630 = vmatpush1.bf16.msra.mxu0 %v2652
    %4631 = vmatprep.subr.bf16.mxu0 %v2655
    %4632 = vmatpush1.bf16.msra.mxu0 %v2654
    %4633 = vmatprep.subr.bf16.mxu0 %v2657
    %4634 = vmatpush1.bf16.msra.mxu0 %v2656
    %4635 = vmatprep.subr.bf16.mxu0 %v2659
    %4636 = vmatpush1.bf16.msra.mxu0 %v2658
    %4637 = vmatprep.subr.bf16.mxu0 %v2661
    %4638 = vmatpush1.bf16.msra.mxu0 %v2660
    %4639 = vmatprep.subr.bf16.mxu0 %v2663
    %4640 = vmatpush1.bf16.msra.mxu0 %v2662
    %4641 = vmatprep.subr.bf16.mxu0 %v2665
    %4642 = vmatpush1.bf16.msra.mxu0 %v2664
    %4643 = vmatprep.subr.bf16.mxu0 %v2667
    %4644 = vmatpush1.bf16.msra.mxu0 %v2666
    %4645 = vmatprep.subr.bf16.mxu0 %v2669
    %4646 = vmatpush1.bf16.msra.mxu0 %v2668
    %4647 = vmatprep.subr.bf16.mxu0 %v2671
    %4648 = vmatpush1.bf16.msra.mxu0 %v2670
    %4649 = vmatprep.subr.bf16.mxu0 %v2673
    %4650 = vmatpush1.bf16.msra.mxu0 %v2672
    %4651 = vmatprep.subr.bf16.mxu0 %v2675
    %4652 = vmatpush1.bf16.msra.mxu0 %v2674
    %4653 = vmatprep.subr.bf16.mxu0 %v2677
    %4654 = vmatpush1.bf16.msra.mxu0 %v2676
    %4655 = vmatprep.mubr.bf16.mxu0 %v712
    %4656 = vmatmul.mubr.bf16.gmra.mrb[0].mxu0 %v711
    %v4657 = vpop.f32.mrb[0].mxu0
    %v4658 = vadd.f32 %v4617, %v4657
    %v4659 = vpop.f32.mrb[0].mxu0
    %v4660 = vadd.f32 %v4619, %v4659
    %v4661 = vpop.f32.mrb[0].mxu0
    %v4662 = vpop.f32.mrb[0].mxu0
    %4663 = vdwg.mxu0
    %4664 = vmatprep.subr.bf16.mxu0 %v2679
    %4665 = vmatpush1.bf16.msra.mxu0 %v2678
    %4666 = vmatprep.subr.bf16.mxu0 %v2681
    %4667 = vmatpush1.bf16.msra.mxu0 %v2680
    %4668 = vmatprep.subr.bf16.mxu0 %v2683
    %4669 = vmatpush1.bf16.msra.mxu0 %v2682
    %4670 = vmatprep.subr.bf16.mxu0 %v2685
    %4671 = vmatpush1.bf16.msra.mxu0 %v2684
    %4672 = vmatprep.subr.bf16.mxu0 %v2687
    %4673 = vmatpush1.bf16.msra.mxu0 %v2686
    %4674 = vmatprep.subr.bf16.mxu0 %v2689
    %4675 = vmatpush1.bf16.msra.mxu0 %v2688
    %4676 = vmatprep.subr.bf16.mxu0 %v2691
    %4677 = vmatpush1.bf16.msra.mxu0 %v2690
    %4678 = vmatprep.subr.bf16.mxu0 %v2693
    %4679 = vmatpush1.bf16.msra.mxu0 %v2692
    %4680 = vmatprep.subr.bf16.mxu0 %v2695
    %4681 = vmatpush1.bf16.msra.mxu0 %v2694
    %4682 = vmatprep.subr.bf16.mxu0 %v2697
    %4683 = vmatpush1.bf16.msra.mxu0 %v2696
    %4684 = vmatprep.subr.bf16.mxu0 %v2699
    %4685 = vmatpush1.bf16.msra.mxu0 %v2698
    %4686 = vmatprep.subr.bf16.mxu0 %v2701
    %4687 = vmatpush1.bf16.msra.mxu0 %v2700
    %4688 = vmatprep.subr.bf16.mxu0 %v2703
    %4689 = vmatpush1.bf16.msra.mxu0 %v2702
    %4690 = vmatprep.subr.bf16.mxu0 %v2705
    %4691 = vmatpush1.bf16.msra.mxu0 %v2704
    %4692 = vmatprep.subr.bf16.mxu0 %v2707
    %4693 = vmatpush1.bf16.msra.mxu0 %v2706
    %4694 = vmatprep.subr.bf16.mxu0 %v2709
    %4695 = vmatpush1.bf16.msra.mxu0 %v2708
    %4696 = vmatprep.mubr.bf16.mxu0 %v714
    %4697 = vmatmul.mubr.bf16.gmra.mrb[0].mxu0 %v713
    %v4698 = vpop.f32.mrb[0].mxu0
    %v4699 = vadd.f32 %v4658, %v4698
    %v4700 = vpop.f32.mrb[0].mxu0
    %v4701 = vadd.f32 %v4660, %v4700
    %v4702 = vpop.f32.mrb[0].mxu0
    %v4703 = vpop.f32.mrb[0].mxu0
    %4704 = vdwg.mxu0
    %4705 = vmatprep.subr.bf16.mxu0 %v2711
    %4706 = vmatpush1.bf16.msra.mxu0 %v2710
    %4707 = vmatprep.subr.bf16.mxu0 %v2713
    %4708 = vmatpush1.bf16.msra.mxu0 %v2712
    %4709 = vmatprep.subr.bf16.mxu0 %v2715
    %4710 = vmatpush1.bf16.msra.mxu0 %v2714
    %4711 = vmatprep.subr.bf16.mxu0 %v2717
    %4712 = vmatpush1.bf16.msra.mxu0 %v2716
    %4713 = vmatprep.subr.bf16.mxu0 %v2719
    %4714 = vmatpush1.bf16.msra.mxu0 %v2718
    %4715 = vmatprep.subr.bf16.mxu0 %v2721
    %4716 = vmatpush1.bf16.msra.mxu0 %v2720
    %4717 = vmatprep.subr.bf16.mxu0 %v2723
    %4718 = vmatpush1.bf16.msra.mxu0 %v2722
    %4719 = vmatprep.subr.bf16.mxu0 %v2725
    %4720 = vmatpush1.bf16.msra.mxu0 %v2724
    %4721 = vmatprep.subr.bf16.mxu0 %v2727
    %4722 = vmatpush1.bf16.msra.mxu0 %v2726
    %4723 = vmatprep.subr.bf16.mxu0 %v2729
    %4724 = vmatpush1.bf16.msra.mxu0 %v2728
    %4725 = vmatprep.subr.bf16.mxu0 %v2731
    %4726 = vmatpush1.bf16.msra.mxu0 %v2730
    %4727 = vmatprep.subr.bf16.mxu0 %v2733
    %4728 = vmatpush1.bf16.msra.mxu0 %v2732
    %4729 = vmatprep.subr.bf16.mxu0 %v2735
    %4730 = vmatpush1.bf16.msra.mxu0 %v2734
    %4731 = vmatprep.subr.bf16.mxu0 %v2737
    %4732 = vmatpush1.bf16.msra.mxu0 %v2736
    %4733 = vmatprep.subr.bf16.mxu0 %v2739
    %4734 = vmatpush1.bf16.msra.mxu0 %v2738
    %4735 = vmatprep.subr.bf16.mxu0 %v2741
    %4736 = vmatpush1.bf16.msra.mxu0 %v2740
    %4737 = vmatprep.mubr.bf16.mxu0 %v716
    %4738 = vmatmul.mubr.bf16.gmra.mrb[0].mxu0 %v715
    %v4739 = vpop.f32.mrb[0].mxu0
    %v4740 = vadd.f32 %v4699, %v4739
    %v4741 = vpop.f32.mrb[0].mxu0
    %v4742 = vadd.f32 %v4701, %v4741
    %v4743 = vpop.f32.mrb[0].mxu0
    %v4744 = vpop.f32.mrb[0].mxu0
    %4745 = vdwg.mxu0
    %4746 = vmatprep.subr.bf16.mxu0 %v2743
    %4747 = vmatpush1.bf16.msra.mxu0 %v2742
    %4748 = vmatprep.subr.bf16.mxu0 %v2745
    %4749 = vmatpush1.bf16.msra.mxu0 %v2744
    %4750 = vmatprep.subr.bf16.mxu0 %v2747
    %4751 = vmatpush1.bf16.msra.mxu0 %v2746
    %4752 = vmatprep.subr.bf16.mxu0 %v2749
    %4753 = vmatpush1.bf16.msra.mxu0 %v2748
    %4754 = vmatprep.subr.bf16.mxu0 %v2751
    %4755 = vmatpush1.bf16.msra.mxu0 %v2750
    %4756 = vmatprep.subr.bf16.mxu0 %v2753
    %4757 = vmatpush1.bf16.msra.mxu0 %v2752
    %4758 = vmatprep.subr.bf16.mxu0 %v2755
    %4759 = vmatpush1.bf16.msra.mxu0 %v2754
    %4760 = vmatprep.subr.bf16.mxu0 %v2757
    %4761 = vmatpush1.bf16.msra.mxu0 %v2756
    %4762 = vmatprep.subr.bf16.mxu0 %v2759
    %4763 = vmatpush1.bf16.msra.mxu0 %v2758
    %4764 = vmatprep.subr.bf16.mxu0 %v2761
    %4765 = vmatpush1.bf16.msra.mxu0 %v2760
    %4766 = vmatprep.subr.bf16.mxu0 %v2763
    %4767 = vmatpush1.bf16.msra.mxu0 %v2762
    %4768 = vmatprep.subr.bf16.mxu0 %v2765
    %4769 = vmatpush1.bf16.msra.mxu0 %v2764
    %4770 = vmatprep.subr.bf16.mxu0 %v2767
    %4771 = vmatpush1.bf16.msra.mxu0 %v2766
    %4772 = vmatprep.subr.bf16.mxu0 %v2769
    %4773 = vmatpush1.bf16.msra.mxu0 %v2768
    %4774 = vmatprep.subr.bf16.mxu0 %v2771
    %4775 = vmatpush1.bf16.msra.mxu0 %v2770
    %4776 = vmatprep.subr.bf16.mxu0 %v2773
    %4777 = vmatpush1.bf16.msra.mxu0 %v2772
    %4778 = vmatprep.mubr.bf16.mxu0 %v718
    %4779 = vmatmul.mubr.bf16.gmra.mrb[0].mxu0 %v717
    %v4780 = vpop.f32.mrb[0].mxu0
    %v4781 = vadd.f32 %v4740, %v4780
    %v4782 = vpop.f32.mrb[0].mxu0
    %v4783 = vadd.f32 %v4742, %v4782
    %v4784 = vpop.f32.mrb[0].mxu0
    %v4785 = vpop.f32.mrb[0].mxu0
    %4786 = vdwg.mxu0
    %4787 = vmatprep.subr.bf16.mxu0 %v2775
    %4788 = vmatpush1.bf16.msra.mxu0 %v2774
    %4789 = vmatprep.subr.bf16.mxu0 %v2777
    %4790 = vmatpush1.bf16.msra.mxu0 %v2776
    %4791 = vmatprep.subr.bf16.mxu0 %v2779
    %4792 = vmatpush1.bf16.msra.mxu0 %v2778
    %4793 = vmatprep.subr.bf16.mxu0 %v2781
    %4794 = vmatpush1.bf16.msra.mxu0 %v2780
    %4795 = vmatprep.subr.bf16.mxu0 %v2783
    %4796 = vmatpush1.bf16.msra.mxu0 %v2782
    %4797 = vmatprep.subr.bf16.mxu0 %v2785
    %4798 = vmatpush1.bf16.msra.mxu0 %v2784
    %4799 = vmatprep.subr.bf16.mxu0 %v2787
    %4800 = vmatpush1.bf16.msra.mxu0 %v2786
    %4801 = vmatprep.subr.bf16.mxu0 %v2789
    %4802 = vmatpush1.bf16.msra.mxu0 %v2788
    %4803 = vmatprep.subr.bf16.mxu0 %v2791
    %4804 = vmatpush1.bf16.msra.mxu0 %v2790
    %4805 = vmatprep.subr.bf16.mxu0 %v2793
    %4806 = vmatpush1.bf16.msra.mxu0 %v2792
    %4807 = vmatprep.subr.bf16.mxu0 %v2795
    %4808 = vmatpush1.bf16.msra.mxu0 %v2794
    %4809 = vmatprep.subr.bf16.mxu0 %v2797
    %4810 = vmatpush1.bf16.msra.mxu0 %v2796
    %4811 = vmatprep.subr.bf16.mxu0 %v2799
    %4812 = vmatpush1.bf16.msra.mxu0 %v2798
    %4813 = vmatprep.subr.bf16.mxu0 %v2801
    %4814 = vmatpush1.bf16.msra.mxu0 %v2800
    %4815 = vmatprep.subr.bf16.mxu0 %v2803
    %4816 = vmatpush1.bf16.msra.mxu0 %v2802
    %4817 = vmatprep.subr.bf16.mxu0 %v2805
    %4818 = vmatpush1.bf16.msra.mxu0 %v2804
    %4819 = vmatprep.mubr.bf16.mxu0 %v720
    %4820 = vmatmul.mubr.bf16.gmra.mrb[0].mxu0 %v719
    %v4821 = vpop.f32.mrb[0].mxu0
    %v4822 = vadd.f32 %v4781, %v4821
    %v4823 = vpop.f32.mrb[0].mxu0
    %v4824 = vadd.f32 %v4783, %v4823
    %v4825 = vpop.f32.mrb[0].mxu0
    %v4826 = vpop.f32.mrb[0].mxu0
    %4827 = vdwg.mxu0
    %4828 = vmatprep.subr.bf16.mxu0 %v2807
    %4829 = vmatpush1.bf16.msra.mxu0 %v2806
    %4830 = vmatprep.subr.bf16.mxu0 %v2809
    %4831 = vmatpush1.bf16.msra.mxu0 %v2808
    %4832 = vmatprep.subr.bf16.mxu0 %v2811
    %4833 = vmatpush1.bf16.msra.mxu0 %v2810
    %4834 = vmatprep.subr.bf16.mxu0 %v2813
    %4835 = vmatpush1.bf16.msra.mxu0 %v2812
    %4836 = vmatprep.subr.bf16.mxu0 %v2815
    %4837 = vmatpush1.bf16.msra.mxu0 %v2814
    %4838 = vmatprep.subr.bf16.mxu0 %v2817
    %4839 = vmatpush1.bf16.msra.mxu0 %v2816
    %4840 = vmatprep.subr.bf16.mxu0 %v2819
    %4841 = vmatpush1.bf16.msra.mxu0 %v2818
    %4842 = vmatprep.subr.bf16.mxu0 %v2821
    %4843 = vmatpush1.bf16.msra.mxu0 %v2820
    %4844 = vmatprep.subr.bf16.mxu0 %v2823
    %4845 = vmatpush1.bf16.msra.mxu0 %v2822
    %4846 = vmatprep.subr.bf16.mxu0 %v2825
    %4847 = vmatpush1.bf16.msra.mxu0 %v2824
    %4848 = vmatprep.subr.bf16.mxu0 %v2827
    %4849 = vmatpush1.bf16.msra.mxu0 %v2826
    %4850 = vmatprep.subr.bf16.mxu0 %v2829
    %4851 = vmatpush1.bf16.msra.mxu0 %v2828
    %4852 = vmatprep.subr.bf16.mxu0 %v2831
    %4853 = vmatpush1.bf16.msra.mxu0 %v2830
    %4854 = vmatprep.subr.bf16.mxu0 %v2833
    %4855 = vmatpush1.bf16.msra.mxu0 %v2832
    %4856 = vmatprep.subr.bf16.mxu0 %v2835
    %4857 = vmatpush1.bf16.msra.mxu0 %v2834
    %4858 = vmatprep.subr.bf16.mxu0 %v2837
    %4859 = vmatpush1.bf16.msra.mxu0 %v2836
    %4860 = vmatprep.mubr.bf16.mxu0 %v722
    %4861 = vmatmul.mubr.bf16.gmra.mrb[0].mxu0 %v721
    %v4862 = vpop.f32.mrb[0].mxu0
    %v4863 = vadd.f32 %v4822, %v4862
    %v4864 = vpop.f32.mrb[0].mxu0
    %v4865 = vadd.f32 %v4824, %v4864
    %v4866 = vpop.f32.mrb[0].mxu0
    %v4867 = vpop.f32.mrb[0].mxu0
    %4868 = vdwg.mxu0
    %4869 = vmatprep.subr.bf16.mxu0 %v2839
    %4870 = vmatpush1.bf16.msra.mxu0 %v2838
    %4871 = vmatprep.subr.bf16.mxu0 %v2841
    %4872 = vmatpush1.bf16.msra.mxu0 %v2840
    %4873 = vmatprep.subr.bf16.mxu0 %v2843
    %4874 = vmatpush1.bf16.msra.mxu0 %v2842
    %4875 = vmatprep.subr.bf16.mxu0 %v2845
    %4876 = vmatpush1.bf16.msra.mxu0 %v2844
    %4877 = vmatprep.subr.bf16.mxu0 %v2847
    %4878 = vmatpush1.bf16.msra.mxu0 %v2846
    %4879 = vmatprep.subr.bf16.mxu0 %v2849
    %4880 = vmatpush1.bf16.msra.mxu0 %v2848
    %4881 = vmatprep.subr.bf16.mxu0 %v2851
    %4882 = vmatpush1.bf16.msra.mxu0 %v2850
    %4883 = vmatprep.subr.bf16.mxu0 %v2853
    %4884 = vmatpush1.bf16.msra.mxu0 %v2852
    %4885 = vmatprep.subr.bf16.mxu0 %v2855
    %4886 = vmatpush1.bf16.msra.mxu0 %v2854
    %4887 = vmatprep.subr.bf16.mxu0 %v2857
    %4888 = vmatpush1.bf16.msra.mxu0 %v2856
    %4889 = vmatprep.subr.bf16.mxu0 %v2859
    %4890 = vmatpush1.bf16.msra.mxu0 %v2858
    %4891 = vmatprep.subr.bf16.mxu0 %v2861
    %4892 = vmatpush1.bf16.msra.mxu0 %v2860
    %4893 = vmatprep.subr.bf16.mxu0 %v2863
    %4894 = vmatpush1.bf16.msra.mxu0 %v2862
    %4895 = vmatprep.subr.bf16.mxu0 %v2865
    %4896 = vmatpush1.bf16.msra.mxu0 %v2864
    %4897 = vmatprep.subr.bf16.mxu0 %v2867
    %4898 = vmatpush1.bf16.msra.mxu0 %v2866
    %4899 = vmatprep.subr.bf16.mxu0 %v2869
    %4900 = vmatpush1.bf16.msra.mxu0 %v2868
    %4901 = vmatprep.mubr.bf16.mxu0 %v724
    %4902 = vmatmul.mubr.bf16.gmra.mrb[0].mxu0 %v723
    %v4903 = vpop.f32.mrb[0].mxu0
    %v4904 = vadd.f32 %v4863, %v4903
    %v4905 = vpop.f32.mrb[0].mxu0
    %v4906 = vadd.f32 %v4865, %v4905
    %v4907 = vpop.f32.mrb[0].mxu0
    %v4908 = vpop.f32.mrb[0].mxu0
    %4909 = vdwg.mxu0
    %4910 = vmatprep.subr.bf16.mxu0 %v2871
    %4911 = vmatpush1.bf16.msra.mxu0 %v2870
    %4912 = vmatprep.subr.bf16.mxu0 %v2873
    %4913 = vmatpush1.bf16.msra.mxu0 %v2872
    %4914 = vmatprep.subr.bf16.mxu0 %v2875
    %4915 = vmatpush1.bf16.msra.mxu0 %v2874
    %4916 = vmatprep.subr.bf16.mxu0 %v2877
    %4917 = vmatpush1.bf16.msra.mxu0 %v2876
    %4918 = vmatprep.subr.bf16.mxu0 %v2879
    %4919 = vmatpush1.bf16.msra.mxu0 %v2878
    %4920 = vmatprep.subr.bf16.mxu0 %v2881
    %4921 = vmatpush1.bf16.msra.mxu0 %v2880
    %4922 = vmatprep.subr.bf16.mxu0 %v2883
    %4923 = vmatpush1.bf16.msra.mxu0 %v2882
    %4924 = vmatprep.subr.bf16.mxu0 %v2885
    %4925 = vmatpush1.bf16.msra.mxu0 %v2884
    %4926 = vmatprep.subr.bf16.mxu0 %v2887
    %4927 = vmatpush1.bf16.msra.mxu0 %v2886
    %4928 = vmatprep.subr.bf16.mxu0 %v2889
    %4929 = vmatpush1.bf16.msra.mxu0 %v2888
    %4930 = vmatprep.subr.bf16.mxu0 %v2891
    %4931 = vmatpush1.bf16.msra.mxu0 %v2890
    %4932 = vmatprep.subr.bf16.mxu0 %v2893
    %4933 = vmatpush1.bf16.msra.mxu0 %v2892
    %4934 = vmatprep.subr.bf16.mxu0 %v2895
    %4935 = vmatpush1.bf16.msra.mxu0 %v2894
    %4936 = vmatprep.subr.bf16.mxu0 %v2897
    %4937 = vmatpush1.bf16.msra.mxu0 %v2896
    %4938 = vmatprep.subr.bf16.mxu0 %v2899
    %4939 = vmatpush1.bf16.msra.mxu0 %v2898
    %4940 = vmatprep.subr.bf16.mxu0 %v2901
    %4941 = vmatpush1.bf16.msra.mxu0 %v2900
    %4942 = vmatprep.mubr.bf16.mxu0 %v726
    %4943 = vmatmul.mubr.bf16.gmra.mrb[0].mxu0 %v725
    %v4944 = vpop.f32.mrb[0].mxu0
    %v4945 = vadd.f32 %v4904, %v4944
    %v4946 = vpop.f32.mrb[0].mxu0
    %v4947 = vadd.f32 %v4906, %v4946
    %v4948 = vpop.f32.mrb[0].mxu0
    %v4949 = vpop.f32.mrb[0].mxu0
    %4950 = vdwg.mxu0
    %4951 = vmatprep.subr.bf16.mxu0 %v2903
    %4952 = vmatpush1.bf16.msra.mxu0 %v2902
    %4953 = vmatprep.subr.bf16.mxu0 %v2905
    %4954 = vmatpush1.bf16.msra.mxu0 %v2904
    %4955 = vmatprep.subr.bf16.mxu0 %v2907
    %4956 = vmatpush1.bf16.msra.mxu0 %v2906
    %4957 = vmatprep.subr.bf16.mxu0 %v2909
    %4958 = vmatpush1.bf16.msra.mxu0 %v2908
    %4959 = vmatprep.subr.bf16.mxu0 %v2911
    %4960 = vmatpush1.bf16.msra.mxu0 %v2910
    %4961 = vmatprep.subr.bf16.mxu0 %v2913
    %4962 = vmatpush1.bf16.msra.mxu0 %v2912
    %4963 = vmatprep.subr.bf16.mxu0 %v2915
    %4964 = vmatpush1.bf16.msra.mxu0 %v2914
    %4965 = vmatprep.subr.bf16.mxu0 %v2917
    %4966 = vmatpush1.bf16.msra.mxu0 %v2916
    %4967 = vmatprep.subr.bf16.mxu0 %v2919
    %4968 = vmatpush1.bf16.msra.mxu0 %v2918
    %4969 = vmatprep.subr.bf16.mxu0 %v2921
    %4970 = vmatpush1.bf16.msra.mxu0 %v2920
    %4971 = vmatprep.subr.bf16.mxu0 %v2923
    %4972 = vmatpush1.bf16.msra.mxu0 %v2922
    %4973 = vmatprep.subr.bf16.mxu0 %v2925
    %4974 = vmatpush1.bf16.msra.mxu0 %v2924
    %4975 = vmatprep.subr.bf16.mxu0 %v2927
    %4976 = vmatpush1.bf16.msra.mxu0 %v2926
    %4977 = vmatprep.subr.bf16.mxu0 %v2929
    %4978 = vmatpush1.bf16.msra.mxu0 %v2928
    %4979 = vmatprep.subr.bf16.mxu0 %v2931
    %4980 = vmatpush1.bf16.msra.mxu0 %v2930
    %4981 = vmatprep.subr.bf16.mxu0 %v2933
    %4982 = vmatpush1.bf16.msra.mxu0 %v2932
    %4983 = vmatprep.mubr.bf16.mxu0 %v728
    %4984 = vmatmul.mubr.bf16.gmra.mrb[0].mxu0 %v727
    %v4985 = vpop.f32.mrb[0].mxu0
    %v4986 = vadd.f32 %v4945, %v4985
    %v4987 = vpop.f32.mrb[0].mxu0
    %v4988 = vadd.f32 %v4947, %v4987
    %v4989 = vpop.f32.mrb[0].mxu0
    %v4990 = vpop.f32.mrb[0].mxu0
    %4991 = vdwg.mxu0
    %4992 = vmatprep.subr.bf16.mxu0 %v2935
    %4993 = vmatpush1.bf16.msra.mxu0 %v2934
    %4994 = vmatprep.subr.bf16.mxu0 %v2937
    %4995 = vmatpush1.bf16.msra.mxu0 %v2936
    %4996 = vmatprep.subr.bf16.mxu0 %v2939
    %4997 = vmatpush1.bf16.msra.mxu0 %v2938
    %4998 = vmatprep.subr.bf16.mxu0 %v2941
    %4999 = vmatpush1.bf16.msra.mxu0 %v2940
    %5000 = vmatprep.subr.bf16.mxu0 %v2943
    %5001 = vmatpush1.bf16.msra.mxu0 %v2942
    %5002 = vmatprep.subr.bf16.mxu0 %v2945
    %5003 = vmatpush1.bf16.msra.mxu0 %v2944
    %5004 = vmatprep.subr.bf16.mxu0 %v2947
    %5005 = vmatpush1.bf16.msra.mxu0 %v2946
    %5006 = vmatprep.subr.bf16.mxu0 %v2949
    %5007 = vmatpush1.bf16.msra.mxu0 %v2948
    %5008 = vmatprep.subr.bf16.mxu0 %v2951
    %5009 = vmatpush1.bf16.msra.mxu0 %v2950
    %5010 = vmatprep.subr.bf16.mxu0 %v2953
    %5011 = vmatpush1.bf16.msra.mxu0 %v2952
    %5012 = vmatprep.subr.bf16.mxu0 %v2955
    %5013 = vmatpush1.bf16.msra.mxu0 %v2954
    %5014 = vmatprep.subr.bf16.mxu0 %v2957
    %5015 = vmatpush1.bf16.msra.mxu0 %v2956
    %5016 = vmatprep.subr.bf16.mxu0 %v2959
    %5017 = vmatpush1.bf16.msra.mxu0 %v2958
    %5018 = vmatprep.subr.bf16.mxu0 %v2961
    %5019 = vmatpush1.bf16.msra.mxu0 %v2960
    %5020 = vmatprep.subr.bf16.mxu0 %v2963
    %5021 = vmatpush1.bf16.msra.mxu0 %v2962
    %5022 = vmatprep.subr.bf16.mxu0 %v2965
    %5023 = vmatpush1.bf16.msra.mxu0 %v2964
    %5024 = vmatprep.mubr.bf16.mxu0 %v730
    %5025 = vmatmul.mubr.bf16.gmra.mrb[0].mxu0 %v729
    %v5026 = vpop.f32.mrb[0].mxu0
    %v5027 = vadd.f32 %v4986, %v5026
    %v5028 = vpop.f32.mrb[0].mxu0
    %v5029 = vadd.f32 %v4988, %v5028
    %v5030 = vpop.f32.mrb[0].mxu0
    %v5031 = vpop.f32.mrb[0].mxu0
    %5032 = vdwg.mxu0
    %5033 = vmatprep.subr.bf16.mxu0 %v2967
    %5034 = vmatpush1.bf16.msra.mxu0 %v2966
    %5035 = vmatprep.subr.bf16.mxu0 %v2969
    %5036 = vmatpush1.bf16.msra.mxu0 %v2968
    %5037 = vmatprep.subr.bf16.mxu0 %v2971
    %5038 = vmatpush1.bf16.msra.mxu0 %v2970
    %5039 = vmatprep.subr.bf16.mxu0 %v2973
    %5040 = vmatpush1.bf16.msra.mxu0 %v2972
    %5041 = vmatprep.subr.bf16.mxu0 %v2975
    %5042 = vmatpush1.bf16.msra.mxu0 %v2974
    %5043 = vmatprep.subr.bf16.mxu0 %v2977
    %5044 = vmatpush1.bf16.msra.mxu0 %v2976
    %5045 = vmatprep.subr.bf16.mxu0 %v2979
    %5046 = vmatpush1.bf16.msra.mxu0 %v2978
    %5047 = vmatprep.subr.bf16.mxu0 %v2981
    %5048 = vmatpush1.bf16.msra.mxu0 %v2980
    %5049 = vmatprep.subr.bf16.mxu0 %v2983
    %5050 = vmatpush1.bf16.msra.mxu0 %v2982
    %5051 = vmatprep.subr.bf16.mxu0 %v2985
    %5052 = vmatpush1.bf16.msra.mxu0 %v2984
    %5053 = vmatprep.subr.bf16.mxu0 %v2987
    %5054 = vmatpush1.bf16.msra.mxu0 %v2986
    %5055 = vmatprep.subr.bf16.mxu0 %v2989
    %5056 = vmatpush1.bf16.msra.mxu0 %v2988
    %5057 = vmatprep.subr.bf16.mxu0 %v2991
    %5058 = vmatpush1.bf16.msra.mxu0 %v2990
    %5059 = vmatprep.subr.bf16.mxu0 %v2993
    %5060 = vmatpush1.bf16.msra.mxu0 %v2992
    %5061 = vmatprep.subr.bf16.mxu0 %v2995
    %5062 = vmatpush1.bf16.msra.mxu0 %v2994
    %5063 = vmatprep.subr.bf16.mxu0 %v2997
    %5064 = vmatpush1.bf16.msra.mxu0 %v2996
    %5065 = vmatprep.mubr.bf16.mxu0 %v732
    %5066 = vmatmul.mubr.bf16.gmra.mrb[0].mxu0 %v731
    %v5067 = vpop.f32.mrb[0].mxu0
    %v5068 = vadd.f32 %v5027, %v5067
    %v5069 = vpop.f32.mrb[0].mxu0
    %v5070 = vadd.f32 %v5029, %v5069
    %v5071 = vpop.f32.mrb[0].mxu0
    %v5072 = vpop.f32.mrb[0].mxu0
    %5073 = vdwg.mxu0
    %5074 = vmatprep.subr.bf16.mxu0 %v2999
    %5075 = vmatpush1.bf16.msra.mxu0 %v2998
    %5076 = vmatprep.subr.bf16.mxu0 %v3001
    %5077 = vmatpush1.bf16.msra.mxu0 %v3000
    %5078 = vmatprep.subr.bf16.mxu0 %v3003
    %5079 = vmatpush1.bf16.msra.mxu0 %v3002
    %5080 = vmatprep.subr.bf16.mxu0 %v3005
    %5081 = vmatpush1.bf16.msra.mxu0 %v3004
    %5082 = vmatprep.subr.bf16.mxu0 %v3007
    %5083 = vmatpush1.bf16.msra.mxu0 %v3006
    %5084 = vmatprep.subr.bf16.mxu0 %v3009
    %5085 = vmatpush1.bf16.msra.mxu0 %v3008
    %5086 = vmatprep.subr.bf16.mxu0 %v3011
    %5087 = vmatpush1.bf16.msra.mxu0 %v3010
    %5088 = vmatprep.subr.bf16.mxu0 %v3013
    %5089 = vmatpush1.bf16.msra.mxu0 %v3012
    %5090 = vmatprep.subr.bf16.mxu0 %v3015
    %5091 = vmatpush1.bf16.msra.mxu0 %v3014
    %5092 = vmatprep.subr.bf16.mxu0 %v3017
    %5093 = vmatpush1.bf16.msra.mxu0 %v3016
    %5094 = vmatprep.subr.bf16.mxu0 %v3019
    %5095 = vmatpush1.bf16.msra.mxu0 %v3018
    %5096 = vmatprep.subr.bf16.mxu0 %v3021
    %5097 = vmatpush1.bf16.msra.mxu0 %v3020
    %5098 = vmatprep.subr.bf16.mxu0 %v3023
    %5099 = vmatpush1.bf16.msra.mxu0 %v3022
    %5100 = vmatprep.subr.bf16.mxu0 %v3025
    %5101 = vmatpush1.bf16.msra.mxu0 %v3024
    %5102 = vmatprep.subr.bf16.mxu0 %v3027
    %5103 = vmatpush1.bf16.msra.mxu0 %v3026
    %5104 = vmatprep.subr.bf16.mxu0 %v3029
    %5105 = vmatpush1.bf16.msra.mxu0 %v3028
    %5106 = vmatprep.mubr.bf16.mxu0 %v734
    %5107 = vmatmul.mubr.bf16.gmra.mrb[0].mxu0 %v733
    %v5108 = vpop.f32.mrb[0].mxu0
    %v5109 = vadd.f32 %v5068, %v5108
    %v5110 = vpop.f32.mrb[0].mxu0
    %v5111 = vadd.f32 %v5070, %v5110
    %v5112 = vpop.f32.mrb[0].mxu0
    %v5113 = vpop.f32.mrb[0].mxu0
    %5114 = vdwg.mxu0
    %5115 = vmatprep.subr.bf16.mxu0 %v3031
    %5116 = vmatpush1.bf16.msra.mxu0 %v3030
    %5117 = vmatprep.subr.bf16.mxu0 %v3033
    %5118 = vmatpush1.bf16.msra.mxu0 %v3032
    %5119 = vmatprep.subr.bf16.mxu0 %v3035
    %5120 = vmatpush1.bf16.msra.mxu0 %v3034
    %5121 = vmatprep.subr.bf16.mxu0 %v3037
    %5122 = vmatpush1.bf16.msra.mxu0 %v3036
    %5123 = vmatprep.subr.bf16.mxu0 %v3039
    %5124 = vmatpush1.bf16.msra.mxu0 %v3038
    %5125 = vmatprep.subr.bf16.mxu0 %v3041
    %5126 = vmatpush1.bf16.msra.mxu0 %v3040
    %5127 = vmatprep.subr.bf16.mxu0 %v3043
    %5128 = vmatpush1.bf16.msra.mxu0 %v3042
    %5129 = vmatprep.subr.bf16.mxu0 %v3045
    %5130 = vmatpush1.bf16.msra.mxu0 %v3044
    %5131 = vmatprep.subr.bf16.mxu0 %v3047
    %5132 = vmatpush1.bf16.msra.mxu0 %v3046
    %5133 = vmatprep.subr.bf16.mxu0 %v3049
    %5134 = vmatpush1.bf16.msra.mxu0 %v3048
    %5135 = vmatprep.subr.bf16.mxu0 %v3051
    %5136 = vmatpush1.bf16.msra.mxu0 %v3050
    %5137 = vmatprep.subr.bf16.mxu0 %v3053
    %5138 = vmatpush1.bf16.msra.mxu0 %v3052
    %5139 = vmatprep.subr.bf16.mxu0 %v3055
    %5140 = vmatpush1.bf16.msra.mxu0 %v3054
    %5141 = vmatprep.subr.bf16.mxu0 %v3057
    %5142 = vmatpush1.bf16.msra.mxu0 %v3056
    %5143 = vmatprep.subr.bf16.mxu0 %v3059
    %5144 = vmatpush1.bf16.msra.mxu0 %v3058
    %5145 = vmatprep.subr.bf16.mxu0 %v3061
    %5146 = vmatpush1.bf16.msra.mxu0 %v3060
    %5147 = vmatprep.mubr.bf16.mxu0 %v736
    %5148 = vmatmul.mubr.bf16.gmra.mrb[0].mxu0 %v735
    %v5149 = vpop.f32.mrb[0].mxu0
    %v5150 = vadd.f32 %v5109, %v5149
    %v5151 = vpop.f32.mrb[0].mxu0
    %v5152 = vadd.f32 %v5111, %v5151
    %v5153 = vpop.f32.mrb[0].mxu0
    %v5154 = vpop.f32.mrb[0].mxu0
    %5155 = vdwg.mxu0
    %5156 = vmatprep.subr.bf16.mxu0 %v3063
    %5157 = vmatpush1.bf16.msra.mxu0 %v3062
    %5158 = vmatprep.subr.bf16.mxu0 %v3065
    %5159 = vmatpush1.bf16.msra.mxu0 %v3064
    %5160 = vmatprep.subr.bf16.mxu0 %v3067
    %5161 = vmatpush1.bf16.msra.mxu0 %v3066
    %5162 = vmatprep.subr.bf16.mxu0 %v3069
    %5163 = vmatpush1.bf16.msra.mxu0 %v3068
    %5164 = vmatprep.subr.bf16.mxu0 %v3071
    %5165 = vmatpush1.bf16.msra.mxu0 %v3070
    %5166 = vmatprep.subr.bf16.mxu0 %v3073
    %5167 = vmatpush1.bf16.msra.mxu0 %v3072
    %5168 = vmatprep.subr.bf16.mxu0 %v3075
    %5169 = vmatpush1.bf16.msra.mxu0 %v3074
    %5170 = vmatprep.subr.bf16.mxu0 %v3077
    %5171 = vmatpush1.bf16.msra.mxu0 %v3076
    %5172 = vmatprep.subr.bf16.mxu0 %v3079
    %5173 = vmatpush1.bf16.msra.mxu0 %v3078
    %5174 = vmatprep.subr.bf16.mxu0 %v3081
    %5175 = vmatpush1.bf16.msra.mxu0 %v3080
    %5176 = vmatprep.subr.bf16.mxu0 %v3083
    %5177 = vmatpush1.bf16.msra.mxu0 %v3082
    %5178 = vmatprep.subr.bf16.mxu0 %v3085
    %5179 = vmatpush1.bf16.msra.mxu0 %v3084
    %5180 = vmatprep.subr.bf16.mxu0 %v3087
    %5181 = vmatpush1.bf16.msra.mxu0 %v3086
    %5182 = vmatprep.subr.bf16.mxu0 %v3089
    %5183 = vmatpush1.bf16.msra.mxu0 %v3088
    %5184 = vmatprep.subr.bf16.mxu0 %v3091
    %5185 = vmatpush1.bf16.msra.mxu0 %v3090
    %5186 = vmatprep.subr.bf16.mxu0 %v3093
    %5187 = vmatpush1.bf16.msra.mxu0 %v3092
    %5188 = vmatprep.mubr.bf16.mxu0 %v738
    %5189 = vmatmul.mubr.bf16.gmra.mrb[0].mxu0 %v737
    %v5190 = vpop.f32.mrb[0].mxu0
    %v5191 = vadd.f32 %v5150, %v5190
    %v5192 = vpop.f32.mrb[0].mxu0
    %v5193 = vadd.f32 %v5152, %v5192
    %v5194 = vpop.f32.mrb[0].mxu0
    %v5195 = vpop.f32.mrb[0].mxu0
    %5196 = vdwg.mxu0
    %5197 = vmatprep.subr.bf16.mxu0 %v3095
    %5198 = vmatpush1.bf16.msra.mxu0 %v3094
    %5199 = vmatprep.subr.bf16.mxu0 %v3097
    %5200 = vmatpush1.bf16.msra.mxu0 %v3096
    %5201 = vmatprep.subr.bf16.mxu0 %v3099
    %5202 = vmatpush1.bf16.msra.mxu0 %v3098
    %5203 = vmatprep.subr.bf16.mxu0 %v3101
    %5204 = vmatpush1.bf16.msra.mxu0 %v3100
    %5205 = vmatprep.subr.bf16.mxu0 %v3103
    %5206 = vmatpush1.bf16.msra.mxu0 %v3102
    %5207 = vmatprep.subr.bf16.mxu0 %v3105
    %5208 = vmatpush1.bf16.msra.mxu0 %v3104
    %5209 = vmatprep.subr.bf16.mxu0 %v3107
    %5210 = vmatpush1.bf16.msra.mxu0 %v3106
    %5211 = vmatprep.subr.bf16.mxu0 %v3109
    %5212 = vmatpush1.bf16.msra.mxu0 %v3108
    %5213 = vmatprep.subr.bf16.mxu0 %v3111
    %5214 = vmatpush1.bf16.msra.mxu0 %v3110
    %5215 = vmatprep.subr.bf16.mxu0 %v3113
    %5216 = vmatpush1.bf16.msra.mxu0 %v3112
    %5217 = vmatprep.subr.bf16.mxu0 %v3115
    %5218 = vmatpush1.bf16.msra.mxu0 %v3114
    %5219 = vmatprep.subr.bf16.mxu0 %v3117
    %5220 = vmatpush1.bf16.msra.mxu0 %v3116
    %5221 = vmatprep.subr.bf16.mxu0 %v3119
    %5222 = vmatpush1.bf16.msra.mxu0 %v3118
    %5223 = vmatprep.subr.bf16.mxu0 %v3121
    %5224 = vmatpush1.bf16.msra.mxu0 %v3120
    %5225 = vmatprep.subr.bf16.mxu0 %v3123
    %5226 = vmatpush1.bf16.msra.mxu0 %v3122
    %5227 = vmatprep.subr.bf16.mxu0 %v3125
    %5228 = vmatpush1.bf16.msra.mxu0 %v3124
    %5229 = vmatprep.mubr.bf16.mxu0 %v740
    %5230 = vmatmul.mubr.bf16.gmra.mrb[0].mxu0 %v739
    %v5231 = vpop.f32.mrb[0].mxu0
    %v5232 = vadd.f32 %v5191, %v5231
    %v5233 = vpop.f32.mrb[0].mxu0
    %v5234 = vadd.f32 %v5193, %v5233
    %v5235 = vpop.f32.mrb[0].mxu0
    %v5236 = vpop.f32.mrb[0].mxu0
    %5237 = vdwg.mxu0
    %5238 = vmatprep.subr.bf16.mxu0 %v3127
    %5239 = vmatpush1.bf16.msra.mxu0 %v3126
    %5240 = vmatprep.subr.bf16.mxu0 %v3129
    %5241 = vmatpush1.bf16.msra.mxu0 %v3128
    %5242 = vmatprep.subr.bf16.mxu0 %v3131
    %5243 = vmatpush1.bf16.msra.mxu0 %v3130
    %5244 = vmatprep.subr.bf16.mxu0 %v3133
    %5245 = vmatpush1.bf16.msra.mxu0 %v3132
    %5246 = vmatprep.subr.bf16.mxu0 %v3135
    %5247 = vmatpush1.bf16.msra.mxu0 %v3134
    %5248 = vmatprep.subr.bf16.mxu0 %v3137
    %5249 = vmatpush1.bf16.msra.mxu0 %v3136
    %5250 = vmatprep.subr.bf16.mxu0 %v3139
    %5251 = vmatpush1.bf16.msra.mxu0 %v3138
    %5252 = vmatprep.subr.bf16.mxu0 %v3141
    %5253 = vmatpush1.bf16.msra.mxu0 %v3140
    %5254 = vmatprep.subr.bf16.mxu0 %v3143
    %5255 = vmatpush1.bf16.msra.mxu0 %v3142
    %5256 = vmatprep.subr.bf16.mxu0 %v3145
    %5257 = vmatpush1.bf16.msra.mxu0 %v3144
    %5258 = vmatprep.subr.bf16.mxu0 %v3147
    %5259 = vmatpush1.bf16.msra.mxu0 %v3146
    %5260 = vmatprep.subr.bf16.mxu0 %v3149
    %5261 = vmatpush1.bf16.msra.mxu0 %v3148
    %5262 = vmatprep.subr.bf16.mxu0 %v3151
    %5263 = vmatpush1.bf16.msra.mxu0 %v3150
    %5264 = vmatprep.subr.bf16.mxu0 %v3153
    %5265 = vmatpush1.bf16.msra.mxu0 %v3152
    %5266 = vmatprep.subr.bf16.mxu0 %v3155
    %5267 = vmatpush1.bf16.msra.mxu0 %v3154
    %5268 = vmatprep.subr.bf16.mxu0 %v3157
    %5269 = vmatpush1.bf16.msra.mxu0 %v3156
    %5270 = vmatprep.mubr.bf16.mxu0 %v742
    %5271 = vmatmul.mubr.bf16.gmra.mrb[0].mxu0 %v741
    %v5272 = vpop.f32.mrb[0].mxu0
    %v5273 = vadd.f32 %v5232, %v5272
    %v5274 = vpop.f32.mrb[0].mxu0
    %v5275 = vadd.f32 %v5234, %v5274
    %v5276 = vpop.f32.mrb[0].mxu0
    %v5277 = vpop.f32.mrb[0].mxu0
    %5278 = vdwg.mxu0
    %5279 = vmatprep.subr.bf16.mxu0 %v3159
    %5280 = vmatpush1.bf16.msra.mxu0 %v3158
    %5281 = vmatprep.subr.bf16.mxu0 %v3161
    %5282 = vmatpush1.bf16.msra.mxu0 %v3160
    %5283 = vmatprep.subr.bf16.mxu0 %v3163
    %5284 = vmatpush1.bf16.msra.mxu0 %v3162
    %5285 = vmatprep.subr.bf16.mxu0 %v3165
    %5286 = vmatpush1.bf16.msra.mxu0 %v3164
    %5287 = vmatprep.subr.bf16.mxu0 %v3167
    %5288 = vmatpush1.bf16.msra.mxu0 %v3166
    %5289 = vmatprep.subr.bf16.mxu0 %v3169
    %5290 = vmatpush1.bf16.msra.mxu0 %v3168
    %5291 = vmatprep.subr.bf16.mxu0 %v3171
    %5292 = vmatpush1.bf16.msra.mxu0 %v3170
    %5293 = vmatprep.subr.bf16.mxu0 %v3173
    %5294 = vmatpush1.bf16.msra.mxu0 %v3172
    %5295 = vmatprep.subr.bf16.mxu0 %v3175
    %5296 = vmatpush1.bf16.msra.mxu0 %v3174
    %5297 = vmatprep.subr.bf16.mxu0 %v3177
    %5298 = vmatpush1.bf16.msra.mxu0 %v3176
    %5299 = vmatprep.subr.bf16.mxu0 %v3179
    %5300 = vmatpush1.bf16.msra.mxu0 %v3178
    %5301 = vmatprep.subr.bf16.mxu0 %v3181
    %5302 = vmatpush1.bf16.msra.mxu0 %v3180
    %5303 = vmatprep.subr.bf16.mxu0 %v3183
    %5304 = vmatpush1.bf16.msra.mxu0 %v3182
    %5305 = vmatprep.subr.bf16.mxu0 %v3185
    %5306 = vmatpush1.bf16.msra.mxu0 %v3184
    %5307 = vmatprep.subr.bf16.mxu0 %v3187
    %5308 = vmatpush1.bf16.msra.mxu0 %v3186
    %5309 = vmatprep.subr.bf16.mxu0 %v3189
    %5310 = vmatpush1.bf16.msra.mxu0 %v3188
    %5311 = vmatprep.mubr.bf16.mxu0 %v744
    %5312 = vmatmul.mubr.bf16.gmra.mrb[0].mxu0 %v743
    %v5313 = vpop.f32.mrb[0].mxu0
    %v5314 = vadd.f32 %v5273, %v5313
    %v5315 = vpop.f32.mrb[0].mxu0
    %v5316 = vadd.f32 %v5275, %v5315
    %v5317 = vpop.f32.mrb[0].mxu0
    %v5318 = vpop.f32.mrb[0].mxu0
    %5319 = vdwg.mxu0
    %5320 = vmatprep.subr.bf16.mxu0 %v3191
    %5321 = vmatpush1.bf16.msra.mxu0 %v3190
    %5322 = vmatprep.subr.bf16.mxu0 %v3193
    %5323 = vmatpush1.bf16.msra.mxu0 %v3192
    %5324 = vmatprep.subr.bf16.mxu0 %v3195
    %5325 = vmatpush1.bf16.msra.mxu0 %v3194
    %5326 = vmatprep.subr.bf16.mxu0 %v3197
    %5327 = vmatpush1.bf16.msra.mxu0 %v3196
    %5328 = vmatprep.subr.bf16.mxu0 %v3199
    %5329 = vmatpush1.bf16.msra.mxu0 %v3198
    %5330 = vmatprep.subr.bf16.mxu0 %v3201
    %5331 = vmatpush1.bf16.msra.mxu0 %v3200
    %5332 = vmatprep.subr.bf16.mxu0 %v3203
    %5333 = vmatpush1.bf16.msra.mxu0 %v3202
    %5334 = vmatprep.subr.bf16.mxu0 %v3205
    %5335 = vmatpush1.bf16.msra.mxu0 %v3204
    %5336 = vmatprep.subr.bf16.mxu0 %v3207
    %5337 = vmatpush1.bf16.msra.mxu0 %v3206
    %5338 = vmatprep.subr.bf16.mxu0 %v3209
    %5339 = vmatpush1.bf16.msra.mxu0 %v3208
    %5340 = vmatprep.subr.bf16.mxu0 %v3211
    %5341 = vmatpush1.bf16.msra.mxu0 %v3210
    %5342 = vmatprep.subr.bf16.mxu0 %v3213
    %5343 = vmatpush1.bf16.msra.mxu0 %v3212
    %5344 = vmatprep.subr.bf16.mxu0 %v3215
    %5345 = vmatpush1.bf16.msra.mxu0 %v3214
    %5346 = vmatprep.subr.bf16.mxu0 %v3217
    %5347 = vmatpush1.bf16.msra.mxu0 %v3216
    %5348 = vmatprep.subr.bf16.mxu0 %v3219
    %5349 = vmatpush1.bf16.msra.mxu0 %v3218
    %5350 = vmatprep.subr.bf16.mxu0 %v3221
    %5351 = vmatpush1.bf16.msra.mxu0 %v3220
    %5352 = vmatprep.mubr.bf16.mxu0 %v746
    %5353 = vmatmul.mubr.bf16.gmra.mrb[0].mxu0 %v745
    %v5354 = vpop.f32.mrb[0].mxu0
    %v5355 = vadd.f32 %v5314, %v5354
    %v5356 = vpop.f32.mrb[0].mxu0
    %v5357 = vadd.f32 %v5316, %v5356
    %v5358 = vpop.f32.mrb[0].mxu0
    %v5359 = vpop.f32.mrb[0].mxu0
    %5360 = vdwg.mxu0
    %5361 = vmatprep.subr.bf16.mxu0 %v3223
    %5362 = vmatpush1.bf16.msra.mxu0 %v3222
    %5363 = vmatprep.subr.bf16.mxu0 %v3225
    %5364 = vmatpush1.bf16.msra.mxu0 %v3224
    %5365 = vmatprep.subr.bf16.mxu0 %v3227
    %5366 = vmatpush1.bf16.msra.mxu0 %v3226
    %5367 = vmatprep.subr.bf16.mxu0 %v3229
    %5368 = vmatpush1.bf16.msra.mxu0 %v3228
    %5369 = vmatprep.subr.bf16.mxu0 %v3231
    %5370 = vmatpush1.bf16.msra.mxu0 %v3230
    %5371 = vmatprep.subr.bf16.mxu0 %v3233
    %5372 = vmatpush1.bf16.msra.mxu0 %v3232
    %5373 = vmatprep.subr.bf16.mxu0 %v3235
    %5374 = vmatpush1.bf16.msra.mxu0 %v3234
    %5375 = vmatprep.subr.bf16.mxu0 %v3237
    %5376 = vmatpush1.bf16.msra.mxu0 %v3236
    %5377 = vmatprep.subr.bf16.mxu0 %v3239
    %5378 = vmatpush1.bf16.msra.mxu0 %v3238
    %5379 = vmatprep.subr.bf16.mxu0 %v3241
    %5380 = vmatpush1.bf16.msra.mxu0 %v3240
    %5381 = vmatprep.subr.bf16.mxu0 %v3243
    %5382 = vmatpush1.bf16.msra.mxu0 %v3242
    %5383 = vmatprep.subr.bf16.mxu0 %v3245
    %5384 = vmatpush1.bf16.msra.mxu0 %v3244
    %5385 = vmatprep.subr.bf16.mxu0 %v3247
    %5386 = vmatpush1.bf16.msra.mxu0 %v3246
    %5387 = vmatprep.subr.bf16.mxu0 %v3249
    %5388 = vmatpush1.bf16.msra.mxu0 %v3248
    %5389 = vmatprep.subr.bf16.mxu0 %v3251
    %5390 = vmatpush1.bf16.msra.mxu0 %v3250
    %5391 = vmatprep.subr.bf16.mxu0 %v3253
    %5392 = vmatpush1.bf16.msra.mxu0 %v3252
    %5393 = vmatprep.mubr.bf16.mxu0 %v748
    %5394 = vmatmul.mubr.bf16.gmra.mrb[0].mxu0 %v747
    %v5395 = vpop.f32.mrb[0].mxu0
    %v5396 = vadd.f32 %v5355, %v5395
    %v5397 = vpop.f32.mrb[0].mxu0
    %v5398 = vadd.f32 %v5357, %v5397
    %v5399 = vpop.f32.mrb[0].mxu0
    %v5400 = vpop.f32.mrb[0].mxu0
    %5401 = vdwg.mxu0
    %5402 = vmatprep.subr.bf16.mxu0 %v3255
    %5403 = vmatpush1.bf16.msra.mxu0 %v3254
    %5404 = vmatprep.subr.bf16.mxu0 %v3257
    %5405 = vmatpush1.bf16.msra.mxu0 %v3256
    %5406 = vmatprep.subr.bf16.mxu0 %v3259
    %5407 = vmatpush1.bf16.msra.mxu0 %v3258
    %5408 = vmatprep.subr.bf16.mxu0 %v3261
    %5409 = vmatpush1.bf16.msra.mxu0 %v3260
    %5410 = vmatprep.subr.bf16.mxu0 %v3263
    %5411 = vmatpush1.bf16.msra.mxu0 %v3262
    %5412 = vmatprep.subr.bf16.mxu0 %v3265
    %5413 = vmatpush1.bf16.msra.mxu0 %v3264
    %5414 = vmatprep.subr.bf16.mxu0 %v3267
    %5415 = vmatpush1.bf16.msra.mxu0 %v3266
    %5416 = vmatprep.subr.bf16.mxu0 %v3269
    %5417 = vmatpush1.bf16.msra.mxu0 %v3268
    %5418 = vmatprep.subr.bf16.mxu0 0
    %5419 = vmatpush1.bf16.msra.mxu0 0
    %5420 = vmatprep.subr.bf16.mxu0 0
    %5421 = vmatpush1.bf16.msra.mxu0 0
    %5422 = vmatprep.subr.bf16.mxu0 0
    %5423 = vmatpush1.bf16.msra.mxu0 0
    %5424 = vmatprep.subr.bf16.mxu0 0
    %5425 = vmatpush1.bf16.msra.mxu0 0
    %5426 = vmatprep.subr.bf16.mxu0 0
    %5427 = vmatpush1.bf16.msra.mxu0 0
    %5428 = vmatprep.subr.bf16.mxu0 0
    %5429 = vmatpush1.bf16.msra.mxu0 0
    %5430 = vmatprep.subr.bf16.mxu0 0
    %5431 = vmatpush1.bf16.msra.mxu0 0
    %5432 = vmatprep.subr.bf16.mxu0 0
    %5433 = vmatpush1.bf16.msra.mxu0 0
    %5434 = vmatprep.mubr.bf16.mxu0 0
    %5435 = vmatmul.mubr.bf16.gmra.mrb[0].mxu0 %v749
    %v5436 = vpop.f32.mrb[0].mxu0
    %v5437 = vadd.f32 %v5396, %v5436
    %v5438 = vpop.f32.mrb[0].mxu0
    %v5439 = vadd.f32 %v5398, %v5438
    %v5440 = vpop.f32.mrb[0].mxu0
    %v5441 = vpop.f32.mrb[0].mxu0
    %5442 = vdwg.mxu0
    %v5443 = vld [vmem:[%s2] sm:$0x3]
    %v5445 = vlaneseq
    %v5446 = vshrl.u32 %v5445, 7
    %v5447 = vsub.s32 0, %v5446
    %v5448 = vrot.slane %v5443, %v5447
    %v5449 = vlaneseq
    %v5450 = vshrl.u32 %v5449, 7
    %v5451 = vsub.s32 1, %v5450
    %v5452 = vrot.slane %v5443, %v5451
    %v5455 = vmul.f32 %v5437, %v5448
    %v5456 = vmul.f32 %v5439, %v5452
    %v5457 = vld [vmem:[%s3] sm:$0x3]
    %v5459 = vlaneseq
    %v5460 = vshrl.u32 %v5459, 7
    %v5461 = vsub.s32 0, %v5460
    %v5462 = vrot.slane %v5457, %v5461
    %v5463 = vlaneseq
    %v5464 = vshrl.u32 %v5463, 7
    %v5465 = vsub.s32 1, %v5464
    %v5466 = vrot.slane %v5457, %v5465
    %v5469 = vadd.f32 %v5455, %v5462
    %v5470 = vadd.f32 %v5456, %v5466
    %v5471 = vmax.f32 %v5469, 0.0
    %v5472 = vmax.f32 %v5470, 0.0
    %v5473 = vld [vmem:[%s4] sm:$0x3]
    %v5474 = vld [vmem:[%s5] sm:$0xff]
    %v5475 = vld [vmem:[%s5 + $0x8] sm:$0xf]
    %v5476 = vld [vmem:[%s6] sm:$0x1]
    %v5478 = vlaneseq
    %v5479 = vshrl.u32 %v5478, 7
    %v5480 = vsub.s32 0, %v5479
    %v5481 = vrot.slane %v5476, %v5480
    %vm5483 = vcmask 97280
    %v5485 = vsel %vm5483, %v5473, 0
    %vm5487 = vcmask 1043456
    %v5489 = vsel %vm5487, %v5475, 0
    %5491 = vmatprep.subr.mxu0 0.0
    %5492 = vmatpush1.msra.mxu0 %v5474
    %5493 = vmatprep.subr.mxu0 0.0
    %5494 = vmatpush1.msra.mxu0 %v5489
    %5495 = vmatprep.subr.mxu0 0.0
    %5496 = vmatpush1.msra.mxu0 0.0
    %5497 = vmatprep.subr.mxu0 0.0
    %5498 = vmatpush1.msra.mxu0 0.0
    %5499 = vmatprep.subr.mxu0 0.0
    %5500 = vmatpush1.msra.mxu0 0.0
    %5501 = vmatprep.subr.mxu0 0.0
    %5502 = vmatpush1.msra.mxu0 0.0
    %5503 = vmatprep.subr.mxu0 0.0
    %5504 = vmatpush1.msra.mxu0 0.0
    %5505 = vmatprep.subr.mxu0 0.0
    %5506 = vmatpush1.msra.mxu0 0.0
    %5507 = vmatprep.subr.mxu0 0.0
    %5508 = vmatpush1.msra.mxu0 0.0
    %5509 = vmatprep.subr.mxu0 0.0
    %5510 = vmatpush1.msra.mxu0 0.0
    %5511 = vmatprep.subr.mxu0 0.0
    %5512 = vmatpush1.msra.mxu0 0.0
    %5513 = vmatprep.subr.mxu0 0.0
    %5514 = vmatpush1.msra.mxu0 0.0
    %5515 = vmatprep.subr.mxu0 0.0
    %5516 = vmatpush1.msra.mxu0 0.0
    %5517 = vmatprep.subr.mxu0 0.0
    %5518 = vmatpush1.msra.mxu0 0.0
    %5519 = vmatprep.subr.mxu0 0.0
    %5520 = vmatpush1.msra.mxu0 0.0
    %5521 = vmatprep.subr.mxu0 0.0
    %5522 = vmatpush1.msra.mxu0 0.0
    %5523 = vmatprep.subr.mxu0 0.0
    %5524 = vmatpush1.msra.mxu0 0.0
    %5525 = vmatprep.subr.mxu0 0.0
    %5526 = vmatpush1.msra.mxu0 0.0
    %5527 = vmatprep.subr.mxu0 0.0
    %5528 = vmatpush1.msra.mxu0 0.0
    %5529 = vmatprep.subr.mxu0 0.0
    %5530 = vmatpush1.msra.mxu0 0.0
    %5531 = vmatprep.subr.mxu0 0.0
    %5532 = vmatpush1.msra.mxu0 0.0
    %5533 = vmatprep.subr.mxu0 0.0
    %5534 = vmatpush1.msra.mxu0 0.0
    %5535 = vmatprep.subr.mxu0 0.0
    %5536 = vmatpush1.msra.mxu0 0.0
    %5537 = vmatprep.subr.mxu0 0.0
    %5538 = vmatpush1.msra.mxu0 0.0
    %5539 = vmatprep.subr.mxu0 0.0
    %5540 = vmatpush1.msra.mxu0 0.0
    %5541 = vmatprep.subr.mxu0 0.0
    %5542 = vmatpush1.msra.mxu0 0.0
    %5543 = vmatprep.subr.mxu0 0.0
    %5544 = vmatpush1.msra.mxu0 0.0
    %5545 = vmatprep.subr.mxu0 0.0
    %5546 = vmatpush1.msra.mxu0 0.0
    %5547 = vmatprep.subr.mxu0 0.0
    %5548 = vmatpush1.msra.mxu0 0.0
    %5549 = vmatprep.subr.mxu0 0.0
    %5550 = vmatpush1.msra.mxu0 0.0
    %5551 = vmatprep.subr.mxu0 0.0
    %5552 = vmatpush1.msra.mxu0 0.0
    %5553 = vmatprep.subr.mxu0 0.0
    %5554 = vmatpush1.msra.mxu0 0.0
    %5555 = vmatprep.mubr.f32.mxu0 0.0
    %5556 = vmatmul.mubr.f32.gmra.mrb[0].mxu0 %v5485
    %v5557 = vpop.f32.mrb[0].mxu0
    %v5558 = vadd.f32 %v5481, %v5557
    %v5559 = vpop.f32.mrb[0].mxu0
    %5560 = vdwg.mxu0
    %v5561 = vmax.f32 %v5558, 0.0
    %v5562 = vld [vmem:[%s7] sm:$0xff]
    %v5563 = vld [vmem:[%s7 + $0x8] sm:$0xff]
    %v5564 = vld [vmem:[%s7 + $0x10] sm:$0xff]
    %v5565 = vld [vmem:[%s7 + $0x18] sm:$0xff]
    %v5566 = vld [vmem:[%s7 + $0x20] sm:$0xff]
    %v5567 = vld [vmem:[%s7 + $0x28] sm:$0xff]
    %v5568 = vld [vmem:[%s7 + $0x30] sm:$0xff]
    %v5569 = vld [vmem:[%s7 + $0x38] sm:$0xff]
    %v5570 = vld [vmem:[%s7 + $0x40] sm:$0xff]
    %v5571 = vld [vmem:[%s7 + $0x48] sm:$0xff]
    %v5572 = vld [vmem:[%s7 + $0x50] sm:$0xff]
    %v5573 = vld [vmem:[%s7 + $0x58] sm:$0xff]
    %v5574 = vld [vmem:[%s7 + $0x60] sm:$0xff]
    %v5575 = vld [vmem:[%s7 + $0x68] sm:$0xff]
    %v5576 = vld [vmem:[%s7 + $0x70] sm:$0xff]
    %v5577 = vld [vmem:[%s7 + $0x78] sm:$0xff]
    %v5578 = vld [vmem:[%s7 + $0x80] sm:$0xff]
    %v5579 = vld [vmem:[%s7 + $0x88] sm:$0xff]
    %v5580 = vld [vmem:[%s7 + $0x90] sm:$0xff]
    %v5581 = vld [vmem:[%s7 + $0x98] sm:$0xff]
    %v5582 = vld [vmem:[%s7 + $0xa0] sm:$0xff]
    %v5583 = vld [vmem:[%s7 + $0xa8] sm:$0xff]
    %v5584 = vld [vmem:[%s7 + $0xb0] sm:$0xff]
    %v5585 = vld [vmem:[%s7 + $0xb8] sm:$0xff]
    %v5586 = vld [vmem:[%s7 + $0xc0] sm:$0xff]
    %v5587 = vld [vmem:[%s7 + $0xc8] sm:$0xff]
    %v5588 = vld [vmem:[%s7 + $0xd0] sm:$0xff]
    %v5589 = vld [vmem:[%s7 + $0xd8] sm:$0xff]
    %v5590 = vld [vmem:[%s7 + $0xe0] sm:$0xff]
    %v5591 = vld [vmem:[%s7 + $0xe8] sm:$0xff]
    %v5592 = vld [vmem:[%s7 + $0xf0] sm:$0xff]
    %v5593 = vld [vmem:[%s7 + $0xf8] sm:$0xff]
    %v5594 = vld [vmem:[%s8] sm:$0xff]
    %v5595 = vld [vmem:[%s8 + $0x8] sm:$0xff]
    %v5596 = vld [vmem:[%s8 + $0x10] sm:$0xff]
    %v5597 = vld [vmem:[%s8 + $0x18] sm:$0xff]
    %vm5598 = vcmask 261120
    %v5600 = vsel %vm5598, %v5561, 0
    %5602 = vmatprep.subr.mxu0 0.0
    %5603 = vmatpush1.msra.mxu0 %v5594
    %5604 = vmatprep.subr.mxu0 0.0
    %5605 = vmatpush1.msra.mxu0 %v5595
    %5606 = vmatprep.subr.mxu0 0.0
    %5607 = vmatpush1.msra.mxu0 %v5596
    %5608 = vmatprep.subr.mxu0 0.0
    %5609 = vmatpush1.msra.mxu0 %v5597
    %5610 = vmatprep.subr.mxu0 0.0
    %5611 = vmatpush1.msra.mxu0 0.0
    %5612 = vmatprep.subr.mxu0 0.0
    %5613 = vmatpush1.msra.mxu0 0.0
    %5614 = vmatprep.subr.mxu0 0.0
    %5615 = vmatpush1.msra.mxu0 0.0
    %5616 = vmatprep.subr.mxu0 0.0
    %5617 = vmatpush1.msra.mxu0 0.0
    %5618 = vmatprep.subr.mxu0 0.0
    %5619 = vmatpush1.msra.mxu0 0.0
    %5620 = vmatprep.subr.mxu0 0.0
    %5621 = vmatpush1.msra.mxu0 0.0
    %5622 = vmatprep.subr.mxu0 0.0
    %5623 = vmatpush1.msra.mxu0 0.0
    %5624 = vmatprep.subr.mxu0 0.0
    %5625 = vmatpush1.msra.mxu0 0.0
    %5626 = vmatprep.subr.mxu0 0.0
    %5627 = vmatpush1.msra.mxu0 0.0
    %5628 = vmatprep.subr.mxu0 0.0
    %5629 = vmatpush1.msra.mxu0 0.0
    %5630 = vmatprep.subr.mxu0 0.0
    %5631 = vmatpush1.msra.mxu0 0.0
    %5632 = vmatprep.subr.mxu0 0.0
    %5633 = vmatpush1.msra.mxu0 0.0
    %5634 = vmatprep.subr.mxu0 0.0
    %5635 = vmatpush1.msra.mxu0 0.0
    %5636 = vmatprep.subr.mxu0 0.0
    %5637 = vmatpush1.msra.mxu0 0.0
    %5638 = vmatprep.subr.mxu0 0.0
    %5639 = vmatpush1.msra.mxu0 0.0
    %5640 = vmatprep.subr.mxu0 0.0
    %5641 = vmatpush1.msra.mxu0 0.0
    %5642 = vmatprep.subr.mxu0 0.0
    %5643 = vmatpush1.msra.mxu0 0.0
    %5644 = vmatprep.subr.mxu0 0.0
    %5645 = vmatpush1.msra.mxu0 0.0
    %5646 = vmatprep.subr.mxu0 0.0
    %5647 = vmatpush1.msra.mxu0 0.0
    %5648 = vmatprep.subr.mxu0 0.0
    %5649 = vmatpush1.msra.mxu0 0.0
    %5650 = vmatprep.subr.mxu0 0.0
    %5651 = vmatpush1.msra.mxu0 0.0
    %5652 = vmatprep.subr.mxu0 0.0
    %5653 = vmatpush1.msra.mxu0 0.0
    %5654 = vmatprep.subr.mxu0 0.0
    %5655 = vmatpush1.msra.mxu0 0.0
    %5656 = vmatprep.subr.mxu0 0.0
    %5657 = vmatpush1.msra.mxu0 0.0
    %5658 = vmatprep.subr.mxu0 0.0
    %5659 = vmatpush1.msra.mxu0 0.0
    %5660 = vmatprep.subr.mxu0 0.0
    %5661 = vmatpush1.msra.mxu0 0.0
    %5662 = vmatprep.subr.mxu0 0.0
    %5663 = vmatpush1.msra.mxu0 0.0
    %5664 = vmatprep.subr.mxu0 0.0
    %5665 = vmatpush1.msra.mxu0 0.0
    %5666 = vmatprep.mubr.f32.mxu0 0.0
    %5667 = vmatmul.mubr.f32.gmra.mrb[0].mxu0 %v5600
    %v5668 = vpop.f32.mrb[0].mxu0
    %v5669 = vadd.f32 0.0, %v5668
    %v5670 = vpop.f32.mrb[0].mxu0
    %5671 = vdwg.mxu0
    %5672 = vmatprep.subr.mxu0 0.0
    %5673 = vmatpush1.msra.mxu0 %v5562
    %5674 = vmatprep.subr.mxu0 0.0
    %5675 = vmatpush1.msra.mxu0 %v5563
    %5676 = vmatprep.subr.mxu0 0.0
    %5677 = vmatpush1.msra.mxu0 %v5564
    %5678 = vmatprep.subr.mxu0 0.0
    %5679 = vmatpush1.msra.mxu0 %v5565
    %5680 = vmatprep.subr.mxu0 0.0
    %5681 = vmatpush1.msra.mxu0 %v5566
    %5682 = vmatprep.subr.mxu0 0.0
    %5683 = vmatpush1.msra.mxu0 %v5567
    %5684 = vmatprep.subr.mxu0 0.0
    %5685 = vmatpush1.msra.mxu0 %v5568
    %5686 = vmatprep.subr.mxu0 0.0
    %5687 = vmatpush1.msra.mxu0 %v5569
    %5688 = vmatprep.subr.mxu0 0.0
    %5689 = vmatpush1.msra.mxu0 %v5570
    %5690 = vmatprep.subr.mxu0 0.0
    %5691 = vmatpush1.msra.mxu0 %v5571
    %5692 = vmatprep.subr.mxu0 0.0
    %5693 = vmatpush1.msra.mxu0 %v5572
    %5694 = vmatprep.subr.mxu0 0.0
    %5695 = vmatpush1.msra.mxu0 %v5573
    %5696 = vmatprep.subr.mxu0 0.0
    %5697 = vmatpush1.msra.mxu0 %v5574
    %5698 = vmatprep.subr.mxu0 0.0
    %5699 = vmatpush1.msra.mxu0 %v5575
    %5700 = vmatprep.subr.mxu0 0.0
    %5701 = vmatpush1.msra.mxu0 %v5576
    %5702 = vmatprep.subr.mxu0 0.0
    %5703 = vmatpush1.msra.mxu0 %v5577
    %5704 = vmatprep.subr.mxu0 0.0
    %5705 = vmatpush1.msra.mxu0 %v5578
    %5706 = vmatprep.subr.mxu0 0.0
    %5707 = vmatpush1.msra.mxu0 %v5579
    %5708 = vmatprep.subr.mxu0 0.0
    %5709 = vmatpush1.msra.mxu0 %v5580
    %5710 = vmatprep.subr.mxu0 0.0
    %5711 = vmatpush1.msra.mxu0 %v5581
    %5712 = vmatprep.subr.mxu0 0.0
    %5713 = vmatpush1.msra.mxu0 %v5582
    %5714 = vmatprep.subr.mxu0 0.0
    %5715 = vmatpush1.msra.mxu0 %v5583
    %5716 = vmatprep.subr.mxu0 0.0
    %5717 = vmatpush1.msra.mxu0 %v5584
    %5718 = vmatprep.subr.mxu0 0.0
    %5719 = vmatpush1.msra.mxu0 %v5585
    %5720 = vmatprep.subr.mxu0 0.0
    %5721 = vmatpush1.msra.mxu0 %v5586
    %5722 = vmatprep.subr.mxu0 0.0
    %5723 = vmatpush1.msra.mxu0 %v5587
    %5724 = vmatprep.subr.mxu0 0.0
    %5725 = vmatpush1.msra.mxu0 %v5588
    %5726 = vmatprep.subr.mxu0 0.0
    %5727 = vmatpush1.msra.mxu0 %v5589
    %5728 = vmatprep.subr.mxu0 0.0
    %5729 = vmatpush1.msra.mxu0 %v5590
    %5730 = vmatprep.subr.mxu0 0.0
    %5731 = vmatpush1.msra.mxu0 %v5591
    %5732 = vmatprep.subr.mxu0 0.0
    %5733 = vmatpush1.msra.mxu0 %v5592
    %5734 = vmatprep.subr.mxu0 0.0
    %5735 = vmatpush1.msra.mxu0 %v5593
    %5736 = vmatprep.mubr.f32.mxu0 %v5472
    %5737 = vmatmul.mubr.f32.gmra.mrb[0].mxu0 %v5471
    %v5738 = vpop.f32.mrb[0].mxu0
    %v5739 = vadd.f32 %v5669, %v5738
    %v5740 = vpop.f32.mrb[0].mxu0
    %5741 = vdwg.mxu0
    %v5742 = vld [vmem:[%s9] sm:$0x1]
    %v5744 = vlaneseq
    %v5745 = vshrl.u32 %v5744, 7
    %v5746 = vsub.s32 0, %v5745
    %v5747 = vrot.slane %v5742, %v5746
    %v5749 = vadd.f32 %v5739, %v5747
    %vm5750 = vcmask 9216
    %5751 = vst.msk [vmem:[#allocation2] sm:$0x3] %vm5750, %v5749
    // Predicated region
    $region42: #{ercnn_forward.3} parent=1 // pred_check
      _
    $region43: #{ercnn_forward.3} parent=1 // pred_check_branch
      %5753 = sbr.rel (0) target = $region45
    $region44: #{ercnn_forward.3} parent=1 // pred_region
      %s5755 = ssub.s32 32, 32
      %5756 = vsyncadd [#allocation3], %s5755
      %s5758 = sshll.u32 [#allocation2], 4
      %s5759 = int_to_ptr.vmem [resolvable:$true] %s5758
      %5761 = dma.vmem_to_hbm [thread:$0]  %s5759, 32, %s10, [#allocation3]
    $region45: #{ercnn_forward.3} parent=1 // pred_fallthru
      _
    // Predicated region
    $region46: #{ercnn_forward.3} parent=1 // pred_check
      _
    $region47: #{ercnn_forward.3} parent=1 // pred_check_branch
      %5763 = sbr.rel (0) target = $region49
    $region48: #{ercnn_forward.3} parent=1 // pred_region
      %5764 = dma.done [#allocation3], 32
    $region49: #{ercnn_forward.3} parent=1 // pred_fallthru
      _
    %5765 = vsyncpa [#allocation3], 1

</llo_original>
